<compile_context>
chip_gen: v6e
topology: v6e:2x2x1
jax: 0.10.0
libtpu: 0.0.40
codegen_flags: <defaults>
</compile_context>

<pallas_src>
import jax
import jax.numpy as jnp
from jax.experimental import pallas as pl


HP = 128  # padded per-gate hidden width (lane-aligned)


def _round_up(n, m):
    return ((n + m - 1) // m) * m


# ------------------------------ fused kernel ---------------------------------

def _make_fused_kernel(num_layers, T):
    """Builds the fused kernel for a fixed number of LSTM layers and timesteps."""

    def kernel(x_ref, *refs):
        lstm_refs = refs[: 3 * num_layers]
        fc_refs = refs[3 * num_layers: 3 * num_layers + 8]
        o_ref = refs[3 * num_layers + 8]

        B = x_ref.shape[0]

        # Layer-0 inputs: per-timestep slices of x (batch-first layout).
        seq = [x_ref[:, t, :] for t in range(T)]

        h = None
        for l in range(num_layers):
            w_ih = lstm_refs[3 * l][...]      # (Din_pad, 4*HP)
            w_hh = lstm_refs[3 * l + 1][...]  # (HP, 4*HP)
            b = lstm_refs[3 * l + 2][...]     # (1, 4*HP)  (hoisted out of T loop)

            h = jnp.zeros((B, HP), jnp.float32)
            c = jnp.zeros((B, HP), jnp.float32)
            last_layer = (l == num_layers - 1)
            new_seq = []

            for t in range(T):
                gates = (jnp.dot(seq[t], w_ih, preferred_element_type=jnp.float32)
                         + jnp.dot(h, w_hh, preferred_element_type=jnp.float32)
                         + b)                                   # (B, 4*HP)
                # Each gate is a full 128-lane block (vreg-aligned slices).
                i_g = jax.nn.sigmoid(gates[:, 0 * HP:1 * HP])
                f_g = jax.nn.sigmoid(gates[:, 1 * HP:2 * HP])
                g_g = jnp.tanh(gates[:, 2 * HP:3 * HP])
                o_g = jax.nn.sigmoid(gates[:, 3 * HP:4 * HP])

                c = f_g * c + i_g * g_g
                h = o_g * jnp.tanh(c)
                if not last_layer:
                    new_seq.append(h)       # kept in registers/VMEM values

            if not last_layer:
                seq = new_seq  # next layer consumes the full sequence

        # MLP head on the last-layer final hidden state (padded to 128 lanes).
        w1, b1, w2, b2, w3, b3, w4, b4 = (r[...] for r in fc_refs)
        z = jnp.maximum(
            jnp.dot(h, w1, preferred_element_type=jnp.float32) + b1, 0.0)
        z = jnp.maximum(
            jnp.dot(z, w2, preferred_element_type=jnp.float32) + b2, 0.0)
        z = jnp.maximum(
            jnp.dot(z, w3, preferred_element_type=jnp.float32) + b3, 0.0)
        o_ref[...] = jnp.dot(z, w4, preferred_element_type=jnp.float32) + b4

    return kernel


# ---------------------------- parameter padding -------------------------------

def _pad2(w, rows, cols):
    return jnp.pad(w, ((0, rows - w.shape[0]), (0, cols - w.shape[1])))


def _pad_gate_cols(w, H):
    """[rows, 4H] (gate order i,f,g,o) -> [rows, 4*HP], each gate padded to HP."""
    parts = [jnp.pad(w[:, k * H:(k + 1) * H], ((0, 0), (0, HP - H)))
             for k in range(4)]
    return jnp.concatenate(parts, axis=1)


def _pad_lstm_layer(w_ih, w_hh, b, d_in_pad):
    H = w_hh.shape[0]
    w_ih_p = _pad_gate_cols(w_ih, H)
    w_ih_p = jnp.pad(w_ih_p, ((0, d_in_pad - w_ih.shape[0]), (0, 0)))
    w_hh_p = jnp.pad(_pad_gate_cols(w_hh, H), ((0, HP - H), (0, 0)))
    b_p = _pad_gate_cols(b, H)
    return w_ih_p, w_hh_p, b_p


def _pad_fc(fc_params):
    """Pad MLP weights to lane-multiple widths; first layer's rows to HP."""
    flat = []
    rows_pad = HP  # input to fc1 is the HP-padded hidden state
    for (w, b) in fc_params:
        cols_pad = _round_up(w.shape[1], 128)
        flat.append(_pad2(w, rows_pad, cols_pad))
        flat.append(_pad2(b, 1, cols_pad))
        rows_pad = cols_pad
    return flat


# --------------------------------- full model ---------------------------------

def distance_estimator_forward(x, params):
    """x: [B, T, D] (batch_first, like PyTorch). Returns [B, 1]."""
    x = x.astype(jnp.float32)
    B, T, D = x.shape

    lstm_flat = []
    for li, (w_ih, w_hh, b) in enumerate(params["lstm"]):
        d_in_pad = w_ih.shape[0] if li == 0 else HP
        lstm_flat += list(_pad_lstm_layer(w_ih, w_hh, b, d_in_pad))
    fc_flat = _pad_fc(params["fc"])

    kernel = _make_fused_kernel(len(params["lstm"]), T)
    out_padded = pl.pallas_call(
        kernel,
        out_shape=jax.ShapeDtypeStruct((B, HP), jnp.float32),
    )(x, *lstm_flat, *fc_flat)
    return out_padded[:, :1]


def init_params(key, input_dim, hidden_dim, layer_dim):
    layersize = [306, 154, 76]
    lstm_params = []
    d_in = input_dim
    for _ in range(layer_dim):
        key, k1, k2, k3 = jax.random.split(key, 4)
        scale = 0.1
        # Stored pre-transposed: x @ W_ih, h @ W_hh ; gate order i,f,g,o.
        w_ih = scale * jax.random.normal(k1, (d_in, 4 * hidden_dim), jnp.float32)
        w_hh = scale * jax.random.normal(k2, (hidden_dim, 4 * hidden_dim), jnp.float32)
        b = scale * jax.random.normal(k3, (1, 4 * hidden_dim), jnp.float32)  # b_ih+b_hh
        lstm_params.append((w_ih, w_hh, b))
        d_in = hidden_dim

    fc_params = []
    n_in = hidden_dim
    for n_out in layersize + [1]:
        key, k1, k2 = jax.random.split(key, 3)
        w = 0.1 * jax.random.normal(k1, (n_in, n_out), jnp.float32)
        b = 0.1 * jax.random.normal(k2, (1, n_out), jnp.float32)
        fc_params.append((w, b))
        n_in = n_out

    return {"lstm": lstm_params, "fc": fc_params}


# ---------------------------- pure-JAX reference ------------------------------

def _reference_forward(x, params):
    B, T, D = x.shape
    h_seq = jnp.transpose(x, (1, 0, 2)).astype(jnp.float32)
    for (w_ih, w_hh, b) in params["lstm"]:
        H = w_hh.shape[0]
        h = jnp.zeros((B, H), jnp.float32)
        c = jnp.zeros((B, H), jnp.float32)
        outs = []
        for t in range(T):
            g = h_seq[t] @ w_ih + h @ w_hh + b
            i = jax.nn.sigmoid(g[:, 0 * H:1 * H])
            f = jax.nn.sigmoid(g[:, 1 * H:2 * H])
            gg = jnp.tanh(g[:, 2 * H:3 * H])
            o = jax.nn.sigmoid(g[:, 3 * H:4 * H])
            c = f * c + i * gg
            h = o * jnp.tanh(c)
            outs.append(h)
        h_seq = jnp.stack(outs, axis=0)
    z = h_seq[-1]
    for k, (w, b) in enumerate(params["fc"]):
        z = z @ w + b
        if k < len(params["fc"]) - 1:
            z = jnp.maximum(z, 0.0)
    return z


if __name__ == "__main__":
    B, T, INPUT_DIM, HIDDEN_DIM, LAYER_DIM = 2, 8, 16, 32, 2

    key = jax.random.PRNGKey(0)
    key, kx = jax.random.split(key)
    x = jax.random.normal(kx, (B, T, INPUT_DIM), jnp.float32)

    params = init_params(key, INPUT_DIM, HIDDEN_DIM, LAYER_DIM)

    fwd = jax.jit(distance_estimator_forward)
    out = jax.block_until_ready(fwd(x, params))

    ref = _reference_forward(x, params)
    assert out.shape == (B, 1)
    assert jnp.allclose(out, ref, atol=1e-4, rtol=1e-4), (out, ref)

    print("KERNEL_OK")
</pallas_src>

<mosaic_0001>
module attributes {stable_mosaic.version = 11 : i64} {
  func.func @kernel(%arg0: memref<2x8x16xf32, #tpu.memory_space<vmem>>, %arg1: memref<16x512xf32, #tpu.memory_space<vmem>>, %arg2: memref<128x512xf32, #tpu.memory_space<vmem>>, %arg3: memref<1x512xf32, #tpu.memory_space<vmem>>, %arg4: memref<128x512xf32, #tpu.memory_space<vmem>>, %arg5: memref<128x512xf32, #tpu.memory_space<vmem>>, %arg6: memref<1x512xf32, #tpu.memory_space<vmem>>, %arg7: memref<128x384xf32, #tpu.memory_space<vmem>>, %arg8: memref<1x384xf32, #tpu.memory_space<vmem>>, %arg9: memref<384x256xf32, #tpu.memory_space<vmem>>, %arg10: memref<1x256xf32, #tpu.memory_space<vmem>>, %arg11: memref<256x128xf32, #tpu.memory_space<vmem>>, %arg12: memref<1x128xf32, #tpu.memory_space<vmem>>, %arg13: memref<128x128xf32, #tpu.memory_space<vmem>>, %arg14: memref<1x128xf32, #tpu.memory_space<vmem>>, %arg15: memref<2x128xf32, #tpu.memory_space<vmem>>) attributes {dimension_semantics = [], scalar_prefetch = 0 : i64, scratch_operands = 0 : i64, tpu.core_type = #tpu.core_type<tc>} {
    %c0 = arith.constant 0 : index
    %c0_0 = arith.constant 0 : index
    %c0_1 = arith.constant 0 : index
    %0 = vector.load %arg0[%c0, %c0_0, %c0_1] : memref<2x8x16xf32, #tpu.memory_space<vmem>>, vector<2x1x16xf32>
    %1 = vector.shape_cast %0 : vector<2x1x16xf32> to vector<2x16xf32>
    %c0_2 = arith.constant 0 : index
    %c1 = arith.constant 1 : index
    %c0_3 = arith.constant 0 : index
    %2 = vector.load %arg0[%c0_2, %c1, %c0_3] : memref<2x8x16xf32, #tpu.memory_space<vmem>>, vector<2x1x16xf32>
    %3 = vector.shape_cast %2 : vector<2x1x16xf32> to vector<2x16xf32>
    %c0_4 = arith.constant 0 : index
    %c2 = arith.constant 2 : index
    %c0_5 = arith.constant 0 : index
    %4 = vector.load %arg0[%c0_4, %c2, %c0_5] : memref<2x8x16xf32, #tpu.memory_space<vmem>>, vector<2x1x16xf32>
    %5 = vector.shape_cast %4 : vector<2x1x16xf32> to vector<2x16xf32>
    %c0_6 = arith.constant 0 : index
    %c3 = arith.constant 3 : index
    %c0_7 = arith.constant 0 : index
    %6 = vector.load %arg0[%c0_6, %c3, %c0_7] : memref<2x8x16xf32, #tpu.memory_space<vmem>>, vector<2x1x16xf32>
    %7 = vector.shape_cast %6 : vector<2x1x16xf32> to vector<2x16xf32>
    %c0_8 = arith.constant 0 : index
    %c4 = arith.constant 4 : index
    %c0_9 = arith.constant 0 : index
    %8 = vector.load %arg0[%c0_8, %c4, %c0_9] : memref<2x8x16xf32, #tpu.memory_space<vmem>>, vector<2x1x16xf32>
    %9 = vector.shape_cast %8 : vector<2x1x16xf32> to vector<2x16xf32>
    %c0_10 = arith.constant 0 : index
    %c5 = arith.constant 5 : index
    %c0_11 = arith.constant 0 : index
    %10 = vector.load %arg0[%c0_10, %c5, %c0_11] : memref<2x8x16xf32, #tpu.memory_space<vmem>>, vector<2x1x16xf32>
    %11 = vector.shape_cast %10 : vector<2x1x16xf32> to vector<2x16xf32>
    %c0_12 = arith.constant 0 : index
    %c6 = arith.constant 6 : index
    %c0_13 = arith.constant 0 : index
    %12 = vector.load %arg0[%c0_12, %c6, %c0_13] : memref<2x8x16xf32, #tpu.memory_space<vmem>>, vector<2x1x16xf32>
    %13 = vector.shape_cast %12 : vector<2x1x16xf32> to vector<2x16xf32>
    %c0_14 = arith.constant 0 : index
    %c7 = arith.constant 7 : index
    %c0_15 = arith.constant 0 : index
    %14 = vector.load %arg0[%c0_14, %c7, %c0_15] : memref<2x8x16xf32, #tpu.memory_space<vmem>>, vector<2x1x16xf32>
    %15 = vector.shape_cast %14 : vector<2x1x16xf32> to vector<2x16xf32>
    %c0_16 = arith.constant 0 : index
    %c0_17 = arith.constant 0 : index
    %16 = vector.load %arg1[%c0_16, %c0_17] : memref<16x512xf32, #tpu.memory_space<vmem>>, vector<16x512xf32>
    %c0_18 = arith.constant 0 : index
    %c0_19 = arith.constant 0 : index
    %17 = vector.load %arg2[%c0_18, %c0_19] : memref<128x512xf32, #tpu.memory_space<vmem>>, vector<128x512xf32>
    %c0_20 = arith.constant 0 : index
    %c0_21 = arith.constant 0 : index
    %18 = vector.load %arg3[%c0_20, %c0_21] : memref<1x512xf32, #tpu.memory_space<vmem>>, vector<1x512xf32>
    %cst = arith.constant 0.000000e+00 : f32
    %19 = vector.broadcast %cst : f32 to vector<2x128xf32>
    %cst_22 = arith.constant 0.000000e+00 : f32
    %20 = vector.broadcast %cst_22 : f32 to vector<2x128xf32>
    %cst_23 = arith.constant dense<0.000000e+00> : vector<2x512xf32>
    %21 = tpu.matmul %1, %16, %cst_23 {dimension_numbers = #tpu.dot_dimension_numbers<[1], [0], [0], [1], [0, 0, 1, 1], [], []>} : vector<2x16xf32>, vector<16x512xf32>, vector<2x512xf32> -> vector<2x512xf32>
    %cst_24 = arith.constant dense<0.000000e+00> : vector<2x512xf32>
    %22 = tpu.matmul %19, %17, %cst_24 {dimension_numbers = #tpu.dot_dimension_numbers<[1], [0], [0], [1], [0, 0, 1, 1], [], []>} : vector<2x128xf32>, vector<128x512xf32>, vector<2x512xf32> -> vector<2x512xf32>
    %23 = arith.addf %21, %22 : vector<2x512xf32>
    %24 = vector.broadcast %18 : vector<1x512xf32> to vector<2x512xf32>
    %25 = arith.addf %23, %24 : vector<2x512xf32>
    %26 = vector.extract_strided_slice %25 {offsets = [0, 0], sizes = [2, 128], strides = [1, 1]} : vector<2x512xf32> to vector<2x128xf32>
    %27 = arith.negf %26 : vector<2x128xf32>
    %28 = math.exp %27 : vector<2x128xf32>
    %cst_25 = arith.constant 1.000000e+00 : f32
    %29 = vector.broadcast %cst_25 : f32 to vector<2x128xf32>
    %30 = arith.addf %29, %28 : vector<2x128xf32>
    %31 = arith.divf %29, %30 : vector<2x128xf32>
    %32 = vector.extract_strided_slice %25 {offsets = [0, 128], sizes = [2, 128], strides = [1, 1]} : vector<2x512xf32> to vector<2x128xf32>
    %33 = arith.negf %32 : vector<2x128xf32>
    %34 = math.exp %33 : vector<2x128xf32>
    %cst_26 = arith.constant 1.000000e+00 : f32
    %35 = vector.broadcast %cst_26 : f32 to vector<2x128xf32>
    %36 = arith.addf %35, %34 : vector<2x128xf32>
    %37 = arith.divf %35, %36 : vector<2x128xf32>
    %38 = vector.extract_strided_slice %25 {offsets = [0, 256], sizes = [2, 128], strides = [1, 1]} : vector<2x512xf32> to vector<2x128xf32>
    %39 = math.tanh %38 : vector<2x128xf32>
    %40 = vector.extract_strided_slice %25 {offsets = [0, 384], sizes = [2, 128], strides = [1, 1]} : vector<2x512xf32> to vector<2x128xf32>
    %41 = arith.negf %40 : vector<2x128xf32>
    %42 = math.exp %41 : vector<2x128xf32>
    %cst_27 = arith.constant 1.000000e+00 : f32
    %43 = vector.broadcast %cst_27 : f32 to vector<2x128xf32>
    %44 = arith.addf %43, %42 : vector<2x128xf32>
    %45 = arith.divf %43, %44 : vector<2x128xf32>
    %46 = arith.mulf %37, %20 : vector<2x128xf32>
    %47 = arith.mulf %31, %39 : vector<2x128xf32>
    %48 = arith.addf %46, %47 : vector<2x128xf32>
    %49 = math.tanh %48 : vector<2x128xf32>
    %50 = arith.mulf %45, %49 : vector<2x128xf32>
    %cst_28 = arith.constant dense<0.000000e+00> : vector<2x512xf32>
    %51 = tpu.matmul %3, %16, %cst_28 {dimension_numbers = #tpu.dot_dimension_numbers<[1], [0], [0], [1], [0, 0, 1, 1], [], []>} : vector<2x16xf32>, vector<16x512xf32>, vector<2x512xf32> -> vector<2x512xf32>
    %cst_29 = arith.constant dense<0.000000e+00> : vector<2x512xf32>
    %52 = tpu.matmul %50, %17, %cst_29 {dimension_numbers = #tpu.dot_dimension_numbers<[1], [0], [0], [1], [0, 0, 1, 1], [], []>} : vector<2x128xf32>, vector<128x512xf32>, vector<2x512xf32> -> vector<2x512xf32>
    %53 = arith.addf %51, %52 : vector<2x512xf32>
    %54 = vector.broadcast %18 : vector<1x512xf32> to vector<2x512xf32>
    %55 = arith.addf %53, %54 : vector<2x512xf32>
    %56 = vector.extract_strided_slice %55 {offsets = [0, 0], sizes = [2, 128], strides = [1, 1]} : vector<2x512xf32> to vector<2x128xf32>
    %57 = arith.negf %56 : vector<2x128xf32>
    %58 = math.exp %57 : vector<2x128xf32>
    %cst_30 = arith.constant 1.000000e+00 : f32
    %59 = vector.broadcast %cst_30 : f32 to vector<2x128xf32>
    %60 = arith.addf %59, %58 : vector<2x128xf32>
    %61 = arith.divf %59, %60 : vector<2x128xf32>
    %62 = vector.extract_strided_slice %55 {offsets = [0, 128], sizes = [2, 128], strides = [1, 1]} : vector<2x512xf32> to vector<2x128xf32>
    %63 = arith.negf %62 : vector<2x128xf32>
    %64 = math.exp %63 : vector<2x128xf32>
    %cst_31 = arith.constant 1.000000e+00 : f32
    %65 = vector.broadcast %cst_31 : f32 to vector<2x128xf32>
    %66 = arith.addf %65, %64 : vector<2x128xf32>
    %67 = arith.divf %65, %66 : vector<2x128xf32>
    %68 = vector.extract_strided_slice %55 {offsets = [0, 256], sizes = [2, 128], strides = [1, 1]} : vector<2x512xf32> to vector<2x128xf32>
    %69 = math.tanh %68 : vector<2x128xf32>
    %70 = vector.extract_strided_slice %55 {offsets = [0, 384], sizes = [2, 128], strides = [1, 1]} : vector<2x512xf32> to vector<2x128xf32>
    %71 = arith.negf %70 : vector<2x128xf32>
    %72 = math.exp %71 : vector<2x128xf32>
    %cst_32 = arith.constant 1.000000e+00 : f32
    %73 = vector.broadcast %cst_32 : f32 to vector<2x128xf32>
    %74 = arith.addf %73, %72 : vector<2x128xf32>
    %75 = arith.divf %73, %74 : vector<2x128xf32>
    %76 = arith.mulf %67, %48 : vector<2x128xf32>
    %77 = arith.mulf %61, %69 : vector<2x128xf32>
    %78 = arith.addf %76, %77 : vector<2x128xf32>
    %79 = math.tanh %78 : vector<2x128xf32>
    %80 = arith.mulf %75, %79 : vector<2x128xf32>
    %cst_33 = arith.constant dense<0.000000e+00> : vector<2x512xf32>
    %81 = tpu.matmul %5, %16, %cst_33 {dimension_numbers = #tpu.dot_dimension_numbers<[1], [0], [0], [1], [0, 0, 1, 1], [], []>} : vector<2x16xf32>, vector<16x512xf32>, vector<2x512xf32> -> vector<2x512xf32>
    %cst_34 = arith.constant dense<0.000000e+00> : vector<2x512xf32>
    %82 = tpu.matmul %80, %17, %cst_34 {dimension_numbers = #tpu.dot_dimension_numbers<[1], [0], [0], [1], [0, 0, 1, 1], [], []>} : vector<2x128xf32>, vector<128x512xf32>, vector<2x512xf32> -> vector<2x512xf32>
    %83 = arith.addf %81, %82 : vector<2x512xf32>
    %84 = vector.broadcast %18 : vector<1x512xf32> to vector<2x512xf32>
    %85 = arith.addf %83, %84 : vector<2x512xf32>
    %86 = vector.extract_strided_slice %85 {offsets = [0, 0], sizes = [2, 128], strides = [1, 1]} : vector<2x512xf32> to vector<2x128xf32>
    %87 = arith.negf %86 : vector<2x128xf32>
    %88 = math.exp %87 : vector<2x128xf32>
    %cst_35 = arith.constant 1.000000e+00 : f32
    %89 = vector.broadcast %cst_35 : f32 to vector<2x128xf32>
    %90 = arith.addf %89, %88 : vector<2x128xf32>
    %91 = arith.divf %89, %90 : vector<2x128xf32>
    %92 = vector.extract_strided_slice %85 {offsets = [0, 128], sizes = [2, 128], strides = [1, 1]} : vector<2x512xf32> to vector<2x128xf32>
    %93 = arith.negf %92 : vector<2x128xf32>
    %94 = math.exp %93 : vector<2x128xf32>
    %cst_36 = arith.constant 1.000000e+00 : f32
    %95 = vector.broadcast %cst_36 : f32 to vector<2x128xf32>
    %96 = arith.addf %95, %94 : vector<2x128xf32>
    %97 = arith.divf %95, %96 : vector<2x128xf32>
    %98 = vector.extract_strided_slice %85 {offsets = [0, 256], sizes = [2, 128], strides = [1, 1]} : vector<2x512xf32> to vector<2x128xf32>
    %99 = math.tanh %98 : vector<2x128xf32>
    %100 = vector.extract_strided_slice %85 {offsets = [0, 384], sizes = [2, 128], strides = [1, 1]} : vector<2x512xf32> to vector<2x128xf32>
    %101 = arith.negf %100 : vector<2x128xf32>
    %102 = math.exp %101 : vector<2x128xf32>
    %cst_37 = arith.constant 1.000000e+00 : f32
    %103 = vector.broadcast %cst_37 : f32 to vector<2x128xf32>
    %104 = arith.addf %103, %102 : vector<2x128xf32>
    %105 = arith.divf %103, %104 : vector<2x128xf32>
    %106 = arith.mulf %97, %78 : vector<2x128xf32>
    %107 = arith.mulf %91, %99 : vector<2x128xf32>
    %108 = arith.addf %106, %107 : vector<2x128xf32>
    %109 = math.tanh %108 : vector<2x128xf32>
    %110 = arith.mulf %105, %109 : vector<2x128xf32>
    %cst_38 = arith.constant dense<0.000000e+00> : vector<2x512xf32>
    %111 = tpu.matmul %7, %16, %cst_38 {dimension_numbers = #tpu.dot_dimension_numbers<[1], [0], [0], [1], [0, 0, 1, 1], [], []>} : vector<2x16xf32>, vector<16x512xf32>, vector<2x512xf32> -> vector<2x512xf32>
    %cst_39 = arith.constant dense<0.000000e+00> : vector<2x512xf32>
    %112 = tpu.matmul %110, %17, %cst_39 {dimension_numbers = #tpu.dot_dimension_numbers<[1], [0], [0], [1], [0, 0, 1, 1], [], []>} : vector<2x128xf32>, vector<128x512xf32>, vector<2x512xf32> -> vector<2x512xf32>
    %113 = arith.addf %111, %112 : vector<2x512xf32>
    %114 = vector.broadcast %18 : vector<1x512xf32> to vector<2x512xf32>
    %115 = arith.addf %113, %114 : vector<2x512xf32>
    %116 = vector.extract_strided_slice %115 {offsets = [0, 0], sizes = [2, 128], strides = [1, 1]} : vector<2x512xf32> to vector<2x128xf32>
    %117 = arith.negf %116 : vector<2x128xf32>
    %118 = math.exp %117 : vector<2x128xf32>
    %cst_40 = arith.constant 1.000000e+00 : f32
    %119 = vector.broadcast %cst_40 : f32 to vector<2x128xf32>
    %120 = arith.addf %119, %118 : vector<2x128xf32>
    %121 = arith.divf %119, %120 : vector<2x128xf32>
    %122 = vector.extract_strided_slice %115 {offsets = [0, 128], sizes = [2, 128], strides = [1, 1]} : vector<2x512xf32> to vector<2x128xf32>
    %123 = arith.negf %122 : vector<2x128xf32>
    %124 = math.exp %123 : vector<2x128xf32>
    %cst_41 = arith.constant 1.000000e+00 : f32
    %125 = vector.broadcast %cst_41 : f32 to vector<2x128xf32>
    %126 = arith.addf %125, %124 : vector<2x128xf32>
    %127 = arith.divf %125, %126 : vector<2x128xf32>
    %128 = vector.extract_strided_slice %115 {offsets = [0, 256], sizes = [2, 128], strides = [1, 1]} : vector<2x512xf32> to vector<2x128xf32>
    %129 = math.tanh %128 : vector<2x128xf32>
    %130 = vector.extract_strided_slice %115 {offsets = [0, 384], sizes = [2, 128], strides = [1, 1]} : vector<2x512xf32> to vector<2x128xf32>
    %131 = arith.negf %130 : vector<2x128xf32>
    %132 = math.exp %131 : vector<2x128xf32>
    %cst_42 = arith.constant 1.000000e+00 : f32
    %133 = vector.broadcast %cst_42 : f32 to vector<2x128xf32>
    %134 = arith.addf %133, %132 : vector<2x128xf32>
    %135 = arith.divf %133, %134 : vector<2x128xf32>
    %136 = arith.mulf %127, %108 : vector<2x128xf32>
    %137 = arith.mulf %121, %129 : vector<2x128xf32>
    %138 = arith.addf %136, %137 : vector<2x128xf32>
    %139 = math.tanh %138 : vector<2x128xf32>
    %140 = arith.mulf %135, %139 : vector<2x128xf32>
    %cst_43 = arith.constant dense<0.000000e+00> : vector<2x512xf32>
    %141 = tpu.matmul %9, %16, %cst_43 {dimension_numbers = #tpu.dot_dimension_numbers<[1], [0], [0], [1], [0, 0, 1, 1], [], []>} : vector<2x16xf32>, vector<16x512xf32>, vector<2x512xf32> -> vector<2x512xf32>
    %cst_44 = arith.constant dense<0.000000e+00> : vector<2x512xf32>
    %142 = tpu.matmul %140, %17, %cst_44 {dimension_numbers = #tpu.dot_dimension_numbers<[1], [0], [0], [1], [0, 0, 1, 1], [], []>} : vector<2x128xf32>, vector<128x512xf32>, vector<2x512xf32> -> vector<2x512xf32>
    %143 = arith.addf %141, %142 : vector<2x512xf32>
    %144 = vector.broadcast %18 : vector<1x512xf32> to vector<2x512xf32>
    %145 = arith.addf %143, %144 : vector<2x512xf32>
    %146 = vector.extract_strided_slice %145 {offsets = [0, 0], sizes = [2, 128], strides = [1, 1]} : vector<2x512xf32> to vector<2x128xf32>
    %147 = arith.negf %146 : vector<2x128xf32>
    %148 = math.exp %147 : vector<2x128xf32>
    %cst_45 = arith.constant 1.000000e+00 : f32
    %149 = vector.broadcast %cst_45 : f32 to vector<2x128xf32>
    %150 = arith.addf %149, %148 : vector<2x128xf32>
    %151 = arith.divf %149, %150 : vector<2x128xf32>
    %152 = vector.extract_strided_slice %145 {offsets = [0, 128], sizes = [2, 128], strides = [1, 1]} : vector<2x512xf32> to vector<2x128xf32>
    %153 = arith.negf %152 : vector<2x128xf32>
    %154 = math.exp %153 : vector<2x128xf32>
    %cst_46 = arith.constant 1.000000e+00 : f32
    %155 = vector.broadcast %cst_46 : f32 to vector<2x128xf32>
    %156 = arith.addf %155, %154 : vector<2x128xf32>
    %157 = arith.divf %155, %156 : vector<2x128xf32>
    %158 = vector.extract_strided_slice %145 {offsets = [0, 256], sizes = [2, 128], strides = [1, 1]} : vector<2x512xf32> to vector<2x128xf32>
    %159 = math.tanh %158 : vector<2x128xf32>
    %160 = vector.extract_strided_slice %145 {offsets = [0, 384], sizes = [2, 128], strides = [1, 1]} : vector<2x512xf32> to vector<2x128xf32>
    %161 = arith.negf %160 : vector<2x128xf32>
    %162 = math.exp %161 : vector<2x128xf32>
    %cst_47 = arith.constant 1.000000e+00 : f32
    %163 = vector.broadcast %cst_47 : f32 to vector<2x128xf32>
    %164 = arith.addf %163, %162 : vector<2x128xf32>
    %165 = arith.divf %163, %164 : vector<2x128xf32>
    %166 = arith.mulf %157, %138 : vector<2x128xf32>
    %167 = arith.mulf %151, %159 : vector<2x128xf32>
    %168 = arith.addf %166, %167 : vector<2x128xf32>
    %169 = math.tanh %168 : vector<2x128xf32>
    %170 = arith.mulf %165, %169 : vector<2x128xf32>
    %cst_48 = arith.constant dense<0.000000e+00> : vector<2x512xf32>
    %171 = tpu.matmul %11, %16, %cst_48 {dimension_numbers = #tpu.dot_dimension_numbers<[1], [0], [0], [1], [0, 0, 1, 1], [], []>} : vector<2x16xf32>, vector<16x512xf32>, vector<2x512xf32> -> vector<2x512xf32>
    %cst_49 = arith.constant dense<0.000000e+00> : vector<2x512xf32>
    %172 = tpu.matmul %170, %17, %cst_49 {dimension_numbers = #tpu.dot_dimension_numbers<[1], [0], [0], [1], [0, 0, 1, 1], [], []>} : vector<2x128xf32>, vector<128x512xf32>, vector<2x512xf32> -> vector<2x512xf32>
    %173 = arith.addf %171, %172 : vector<2x512xf32>
    %174 = vector.broadcast %18 : vector<1x512xf32> to vector<2x512xf32>
    %175 = arith.addf %173, %174 : vector<2x512xf32>
    %176 = vector.extract_strided_slice %175 {offsets = [0, 0], sizes = [2, 128], strides = [1, 1]} : vector<2x512xf32> to vector<2x128xf32>
    %177 = arith.negf %176 : vector<2x128xf32>
    %178 = math.exp %177 : vector<2x128xf32>
    %cst_50 = arith.constant 1.000000e+00 : f32
    %179 = vector.broadcast %cst_50 : f32 to vector<2x128xf32>
    %180 = arith.addf %179, %178 : vector<2x128xf32>
    %181 = arith.divf %179, %180 : vector<2x128xf32>
    %182 = vector.extract_strided_slice %175 {offsets = [0, 128], sizes = [2, 128], strides = [1, 1]} : vector<2x512xf32> to vector<2x128xf32>
    %183 = arith.negf %182 : vector<2x128xf32>
    %184 = math.exp %183 : vector<2x128xf32>
    %cst_51 = arith.constant 1.000000e+00 : f32
    %185 = vector.broadcast %cst_51 : f32 to vector<2x128xf32>
    %186 = arith.addf %185, %184 : vector<2x128xf32>
    %187 = arith.divf %185, %186 : vector<2x128xf32>
    %188 = vector.extract_strided_slice %175 {offsets = [0, 256], sizes = [2, 128], strides = [1, 1]} : vector<2x512xf32> to vector<2x128xf32>
    %189 = math.tanh %188 : vector<2x128xf32>
    %190 = vector.extract_strided_slice %175 {offsets = [0, 384], sizes = [2, 128], strides = [1, 1]} : vector<2x512xf32> to vector<2x128xf32>
    %191 = arith.negf %190 : vector<2x128xf32>
    %192 = math.exp %191 : vector<2x128xf32>
    %cst_52 = arith.constant 1.000000e+00 : f32
    %193 = vector.broadcast %cst_52 : f32 to vector<2x128xf32>
    %194 = arith.addf %193, %192 : vector<2x128xf32>
    %195 = arith.divf %193, %194 : vector<2x128xf32>
    %196 = arith.mulf %187, %168 : vector<2x128xf32>
    %197 = arith.mulf %181, %189 : vector<2x128xf32>
    %198 = arith.addf %196, %197 : vector<2x128xf32>
    %199 = math.tanh %198 : vector<2x128xf32>
    %200 = arith.mulf %195, %199 : vector<2x128xf32>
    %cst_53 = arith.constant dense<0.000000e+00> : vector<2x512xf32>
    %201 = tpu.matmul %13, %16, %cst_53 {dimension_numbers = #tpu.dot_dimension_numbers<[1], [0], [0], [1], [0, 0, 1, 1], [], []>} : vector<2x16xf32>, vector<16x512xf32>, vector<2x512xf32> -> vector<2x512xf32>
    %cst_54 = arith.constant dense<0.000000e+00> : vector<2x512xf32>
    %202 = tpu.matmul %200, %17, %cst_54 {dimension_numbers = #tpu.dot_dimension_numbers<[1], [0], [0], [1], [0, 0, 1, 1], [], []>} : vector<2x128xf32>, vector<128x512xf32>, vector<2x512xf32> -> vector<2x512xf32>
    %203 = arith.addf %201, %202 : vector<2x512xf32>
    %204 = vector.broadcast %18 : vector<1x512xf32> to vector<2x512xf32>
    %205 = arith.addf %203, %204 : vector<2x512xf32>
    %206 = vector.extract_strided_slice %205 {offsets = [0, 0], sizes = [2, 128], strides = [1, 1]} : vector<2x512xf32> to vector<2x128xf32>
    %207 = arith.negf %206 : vector<2x128xf32>
    %208 = math.exp %207 : vector<2x128xf32>
    %cst_55 = arith.constant 1.000000e+00 : f32
    %209 = vector.broadcast %cst_55 : f32 to vector<2x128xf32>
    %210 = arith.addf %209, %208 : vector<2x128xf32>
    %211 = arith.divf %209, %210 : vector<2x128xf32>
    %212 = vector.extract_strided_slice %205 {offsets = [0, 128], sizes = [2, 128], strides = [1, 1]} : vector<2x512xf32> to vector<2x128xf32>
    %213 = arith.negf %212 : vector<2x128xf32>
    %214 = math.exp %213 : vector<2x128xf32>
    %cst_56 = arith.constant 1.000000e+00 : f32
    %215 = vector.broadcast %cst_56 : f32 to vector<2x128xf32>
    %216 = arith.addf %215, %214 : vector<2x128xf32>
    %217 = arith.divf %215, %216 : vector<2x128xf32>
    %218 = vector.extract_strided_slice %205 {offsets = [0, 256], sizes = [2, 128], strides = [1, 1]} : vector<2x512xf32> to vector<2x128xf32>
    %219 = math.tanh %218 : vector<2x128xf32>
    %220 = vector.extract_strided_slice %205 {offsets = [0, 384], sizes = [2, 128], strides = [1, 1]} : vector<2x512xf32> to vector<2x128xf32>
    %221 = arith.negf %220 : vector<2x128xf32>
    %222 = math.exp %221 : vector<2x128xf32>
    %cst_57 = arith.constant 1.000000e+00 : f32
    %223 = vector.broadcast %cst_57 : f32 to vector<2x128xf32>
    %224 = arith.addf %223, %222 : vector<2x128xf32>
    %225 = arith.divf %223, %224 : vector<2x128xf32>
    %226 = arith.mulf %217, %198 : vector<2x128xf32>
    %227 = arith.mulf %211, %219 : vector<2x128xf32>
    %228 = arith.addf %226, %227 : vector<2x128xf32>
    %229 = math.tanh %228 : vector<2x128xf32>
    %230 = arith.mulf %225, %229 : vector<2x128xf32>
    %cst_58 = arith.constant dense<0.000000e+00> : vector<2x512xf32>
    %231 = tpu.matmul %15, %16, %cst_58 {dimension_numbers = #tpu.dot_dimension_numbers<[1], [0], [0], [1], [0, 0, 1, 1], [], []>} : vector<2x16xf32>, vector<16x512xf32>, vector<2x512xf32> -> vector<2x512xf32>
    %cst_59 = arith.constant dense<0.000000e+00> : vector<2x512xf32>
    %232 = tpu.matmul %230, %17, %cst_59 {dimension_numbers = #tpu.dot_dimension_numbers<[1], [0], [0], [1], [0, 0, 1, 1], [], []>} : vector<2x128xf32>, vector<128x512xf32>, vector<2x512xf32> -> vector<2x512xf32>
    %233 = arith.addf %231, %232 : vector<2x512xf32>
    %234 = vector.broadcast %18 : vector<1x512xf32> to vector<2x512xf32>
    %235 = arith.addf %233, %234 : vector<2x512xf32>
    %236 = vector.extract_strided_slice %235 {offsets = [0, 0], sizes = [2, 128], strides = [1, 1]} : vector<2x512xf32> to vector<2x128xf32>
    %237 = arith.negf %236 : vector<2x128xf32>
    %238 = math.exp %237 : vector<2x128xf32>
    %cst_60 = arith.constant 1.000000e+00 : f32
    %239 = vector.broadcast %cst_60 : f32 to vector<2x128xf32>
    %240 = arith.addf %239, %238 : vector<2x128xf32>
    %241 = arith.divf %239, %240 : vector<2x128xf32>
    %242 = vector.extract_strided_slice %235 {offsets = [0, 128], sizes = [2, 128], strides = [1, 1]} : vector<2x512xf32> to vector<2x128xf32>
    %243 = arith.negf %242 : vector<2x128xf32>
    %244 = math.exp %243 : vector<2x128xf32>
    %cst_61 = arith.constant 1.000000e+00 : f32
    %245 = vector.broadcast %cst_61 : f32 to vector<2x128xf32>
    %246 = arith.addf %245, %244 : vector<2x128xf32>
    %247 = arith.divf %245, %246 : vector<2x128xf32>
    %248 = vector.extract_strided_slice %235 {offsets = [0, 256], sizes = [2, 128], strides = [1, 1]} : vector<2x512xf32> to vector<2x128xf32>
    %249 = math.tanh %248 : vector<2x128xf32>
    %250 = vector.extract_strided_slice %235 {offsets = [0, 384], sizes = [2, 128], strides = [1, 1]} : vector<2x512xf32> to vector<2x128xf32>
    %251 = arith.negf %250 : vector<2x128xf32>
    %252 = math.exp %251 : vector<2x128xf32>
    %cst_62 = arith.constant 1.000000e+00 : f32
    %253 = vector.broadcast %cst_62 : f32 to vector<2x128xf32>
    %254 = arith.addf %253, %252 : vector<2x128xf32>
    %255 = arith.divf %253, %254 : vector<2x128xf32>
    %256 = arith.mulf %247, %228 : vector<2x128xf32>
    %257 = arith.mulf %241, %249 : vector<2x128xf32>
    %258 = arith.addf %256, %257 : vector<2x128xf32>
    %259 = math.tanh %258 : vector<2x128xf32>
    %260 = arith.mulf %255, %259 : vector<2x128xf32>
    %c0_63 = arith.constant 0 : index
    %c0_64 = arith.constant 0 : index
    %261 = vector.load %arg4[%c0_63, %c0_64] : memref<128x512xf32, #tpu.memory_space<vmem>>, vector<128x512xf32>
    %c0_65 = arith.constant 0 : index
    %c0_66 = arith.constant 0 : index
    %262 = vector.load %arg5[%c0_65, %c0_66] : memref<128x512xf32, #tpu.memory_space<vmem>>, vector<128x512xf32>
    %c0_67 = arith.constant 0 : index
    %c0_68 = arith.constant 0 : index
    %263 = vector.load %arg6[%c0_67, %c0_68] : memref<1x512xf32, #tpu.memory_space<vmem>>, vector<1x512xf32>
    %cst_69 = arith.constant 0.000000e+00 : f32
    %264 = vector.broadcast %cst_69 : f32 to vector<2x128xf32>
    %cst_70 = arith.constant 0.000000e+00 : f32
    %265 = vector.broadcast %cst_70 : f32 to vector<2x128xf32>
    %cst_71 = arith.constant dense<0.000000e+00> : vector<2x512xf32>
    %266 = tpu.matmul %50, %261, %cst_71 {dimension_numbers = #tpu.dot_dimension_numbers<[1], [0], [0], [1], [0, 0, 1, 1], [], []>} : vector<2x128xf32>, vector<128x512xf32>, vector<2x512xf32> -> vector<2x512xf32>
    %cst_72 = arith.constant dense<0.000000e+00> : vector<2x512xf32>
    %267 = tpu.matmul %264, %262, %cst_72 {dimension_numbers = #tpu.dot_dimension_numbers<[1], [0], [0], [1], [0, 0, 1, 1], [], []>} : vector<2x128xf32>, vector<128x512xf32>, vector<2x512xf32> -> vector<2x512xf32>
    %268 = arith.addf %266, %267 : vector<2x512xf32>
    %269 = vector.broadcast %263 : vector<1x512xf32> to vector<2x512xf32>
    %270 = arith.addf %268, %269 : vector<2x512xf32>
    %271 = vector.extract_strided_slice %270 {offsets = [0, 0], sizes = [2, 128], strides = [1, 1]} : vector<2x512xf32> to vector<2x128xf32>
    %272 = arith.negf %271 : vector<2x128xf32>
    %273 = math.exp %272 : vector<2x128xf32>
    %cst_73 = arith.constant 1.000000e+00 : f32
    %274 = vector.broadcast %cst_73 : f32 to vector<2x128xf32>
    %275 = arith.addf %274, %273 : vector<2x128xf32>
    %276 = arith.divf %274, %275 : vector<2x128xf32>
    %277 = vector.extract_strided_slice %270 {offsets = [0, 128], sizes = [2, 128], strides = [1, 1]} : vector<2x512xf32> to vector<2x128xf32>
    %278 = arith.negf %277 : vector<2x128xf32>
    %279 = math.exp %278 : vector<2x128xf32>
    %cst_74 = arith.constant 1.000000e+00 : f32
    %280 = vector.broadcast %cst_74 : f32 to vector<2x128xf32>
    %281 = arith.addf %280, %279 : vector<2x128xf32>
    %282 = arith.divf %280, %281 : vector<2x128xf32>
    %283 = vector.extract_strided_slice %270 {offsets = [0, 256], sizes = [2, 128], strides = [1, 1]} : vector<2x512xf32> to vector<2x128xf32>
    %284 = math.tanh %283 : vector<2x128xf32>
    %285 = vector.extract_strided_slice %270 {offsets = [0, 384], sizes = [2, 128], strides = [1, 1]} : vector<2x512xf32> to vector<2x128xf32>
    %286 = arith.negf %285 : vector<2x128xf32>
    %287 = math.exp %286 : vector<2x128xf32>
    %cst_75 = arith.constant 1.000000e+00 : f32
    %288 = vector.broadcast %cst_75 : f32 to vector<2x128xf32>
    %289 = arith.addf %288, %287 : vector<2x128xf32>
    %290 = arith.divf %288, %289 : vector<2x128xf32>
    %291 = arith.mulf %282, %265 : vector<2x128xf32>
    %292 = arith.mulf %276, %284 : vector<2x128xf32>
    %293 = arith.addf %291, %292 : vector<2x128xf32>
    %294 = math.tanh %293 : vector<2x128xf32>
    %295 = arith.mulf %290, %294 : vector<2x128xf32>
    %cst_76 = arith.constant dense<0.000000e+00> : vector<2x512xf32>
    %296 = tpu.matmul %80, %261, %cst_76 {dimension_numbers = #tpu.dot_dimension_numbers<[1], [0], [0], [1], [0, 0, 1, 1], [], []>} : vector<2x128xf32>, vector<128x512xf32>, vector<2x512xf32> -> vector<2x512xf32>
    %cst_77 = arith.constant dense<0.000000e+00> : vector<2x512xf32>
    %297 = tpu.matmul %295, %262, %cst_77 {dimension_numbers = #tpu.dot_dimension_numbers<[1], [0], [0], [1], [0, 0, 1, 1], [], []>} : vector<2x128xf32>, vector<128x512xf32>, vector<2x512xf32> -> vector<2x512xf32>
    %298 = arith.addf %296, %297 : vector<2x512xf32>
    %299 = vector.broadcast %263 : vector<1x512xf32> to vector<2x512xf32>
    %300 = arith.addf %298, %299 : vector<2x512xf32>
    %301 = vector.extract_strided_slice %300 {offsets = [0, 0], sizes = [2, 128], strides = [1, 1]} : vector<2x512xf32> to vector<2x128xf32>
    %302 = arith.negf %301 : vector<2x128xf32>
    %303 = math.exp %302 : vector<2x128xf32>
    %cst_78 = arith.constant 1.000000e+00 : f32
    %304 = vector.broadcast %cst_78 : f32 to vector<2x128xf32>
    %305 = arith.addf %304, %303 : vector<2x128xf32>
    %306 = arith.divf %304, %305 : vector<2x128xf32>
    %307 = vector.extract_strided_slice %300 {offsets = [0, 128], sizes = [2, 128], strides = [1, 1]} : vector<2x512xf32> to vector<2x128xf32>
    %308 = arith.negf %307 : vector<2x128xf32>
    %309 = math.exp %308 : vector<2x128xf32>
    %cst_79 = arith.constant 1.000000e+00 : f32
    %310 = vector.broadcast %cst_79 : f32 to vector<2x128xf32>
    %311 = arith.addf %310, %309 : vector<2x128xf32>
    %312 = arith.divf %310, %311 : vector<2x128xf32>
    %313 = vector.extract_strided_slice %300 {offsets = [0, 256], sizes = [2, 128], strides = [1, 1]} : vector<2x512xf32> to vector<2x128xf32>
    %314 = math.tanh %313 : vector<2x128xf32>
    %315 = vector.extract_strided_slice %300 {offsets = [0, 384], sizes = [2, 128], strides = [1, 1]} : vector<2x512xf32> to vector<2x128xf32>
    %316 = arith.negf %315 : vector<2x128xf32>
    %317 = math.exp %316 : vector<2x128xf32>
    %cst_80 = arith.constant 1.000000e+00 : f32
    %318 = vector.broadcast %cst_80 : f32 to vector<2x128xf32>
    %319 = arith.addf %318, %317 : vector<2x128xf32>
    %320 = arith.divf %318, %319 : vector<2x128xf32>
    %321 = arith.mulf %312, %293 : vector<2x128xf32>
    %322 = arith.mulf %306, %314 : vector<2x128xf32>
    %323 = arith.addf %321, %322 : vector<2x128xf32>
    %324 = math.tanh %323 : vector<2x128xf32>
    %325 = arith.mulf %320, %324 : vector<2x128xf32>
    %cst_81 = arith.constant dense<0.000000e+00> : vector<2x512xf32>
    %326 = tpu.matmul %110, %261, %cst_81 {dimension_numbers = #tpu.dot_dimension_numbers<[1], [0], [0], [1], [0, 0, 1, 1], [], []>} : vector<2x128xf32>, vector<128x512xf32>, vector<2x512xf32> -> vector<2x512xf32>
    %cst_82 = arith.constant dense<0.000000e+00> : vector<2x512xf32>
    %327 = tpu.matmul %325, %262, %cst_82 {dimension_numbers = #tpu.dot_dimension_numbers<[1], [0], [0], [1], [0, 0, 1, 1], [], []>} : vector<2x128xf32>, vector<128x512xf32>, vector<2x512xf32> -> vector<2x512xf32>
    %328 = arith.addf %326, %327 : vector<2x512xf32>
    %329 = vector.broadcast %263 : vector<1x512xf32> to vector<2x512xf32>
    %330 = arith.addf %328, %329 : vector<2x512xf32>
    %331 = vector.extract_strided_slice %330 {offsets = [0, 0], sizes = [2, 128], strides = [1, 1]} : vector<2x512xf32> to vector<2x128xf32>
    %332 = arith.negf %331 : vector<2x128xf32>
    %333 = math.exp %332 : vector<2x128xf32>
    %cst_83 = arith.constant 1.000000e+00 : f32
    %334 = vector.broadcast %cst_83 : f32 to vector<2x128xf32>
    %335 = arith.addf %334, %333 : vector<2x128xf32>
    %336 = arith.divf %334, %335 : vector<2x128xf32>
    %337 = vector.extract_strided_slice %330 {offsets = [0, 128], sizes = [2, 128], strides = [1, 1]} : vector<2x512xf32> to vector<2x128xf32>
    %338 = arith.negf %337 : vector<2x128xf32>
    %339 = math.exp %338 : vector<2x128xf32>
    %cst_84 = arith.constant 1.000000e+00 : f32
    %340 = vector.broadcast %cst_84 : f32 to vector<2x128xf32>
    %341 = arith.addf %340, %339 : vector<2x128xf32>
    %342 = arith.divf %340, %341 : vector<2x128xf32>
    %343 = vector.extract_strided_slice %330 {offsets = [0, 256], sizes = [2, 128], strides = [1, 1]} : vector<2x512xf32> to vector<2x128xf32>
    %344 = math.tanh %343 : vector<2x128xf32>
    %345 = vector.extract_strided_slice %330 {offsets = [0, 384], sizes = [2, 128], strides = [1, 1]} : vector<2x512xf32> to vector<2x128xf32>
    %346 = arith.negf %345 : vector<2x128xf32>
    %347 = math.exp %346 : vector<2x128xf32>
    %cst_85 = arith.constant 1.000000e+00 : f32
    %348 = vector.broadcast %cst_85 : f32 to vector<2x128xf32>
    %349 = arith.addf %348, %347 : vector<2x128xf32>
    %350 = arith.divf %348, %349 : vector<2x128xf32>
    %351 = arith.mulf %342, %323 : vector<2x128xf32>
    %352 = arith.mulf %336, %344 : vector<2x128xf32>
    %353 = arith.addf %351, %352 : vector<2x128xf32>
    %354 = math.tanh %353 : vector<2x128xf32>
    %355 = arith.mulf %350, %354 : vector<2x128xf32>
    %cst_86 = arith.constant dense<0.000000e+00> : vector<2x512xf32>
    %356 = tpu.matmul %140, %261, %cst_86 {dimension_numbers = #tpu.dot_dimension_numbers<[1], [0], [0], [1], [0, 0, 1, 1], [], []>} : vector<2x128xf32>, vector<128x512xf32>, vector<2x512xf32> -> vector<2x512xf32>
    %cst_87 = arith.constant dense<0.000000e+00> : vector<2x512xf32>
    %357 = tpu.matmul %355, %262, %cst_87 {dimension_numbers = #tpu.dot_dimension_numbers<[1], [0], [0], [1], [0, 0, 1, 1], [], []>} : vector<2x128xf32>, vector<128x512xf32>, vector<2x512xf32> -> vector<2x512xf32>
    %358 = arith.addf %356, %357 : vector<2x512xf32>
    %359 = vector.broadcast %263 : vector<1x512xf32> to vector<2x512xf32>
    %360 = arith.addf %358, %359 : vector<2x512xf32>
    %361 = vector.extract_strided_slice %360 {offsets = [0, 0], sizes = [2, 128], strides = [1, 1]} : vector<2x512xf32> to vector<2x128xf32>
    %362 = arith.negf %361 : vector<2x128xf32>
    %363 = math.exp %362 : vector<2x128xf32>
    %cst_88 = arith.constant 1.000000e+00 : f32
    %364 = vector.broadcast %cst_88 : f32 to vector<2x128xf32>
    %365 = arith.addf %364, %363 : vector<2x128xf32>
    %366 = arith.divf %364, %365 : vector<2x128xf32>
    %367 = vector.extract_strided_slice %360 {offsets = [0, 128], sizes = [2, 128], strides = [1, 1]} : vector<2x512xf32> to vector<2x128xf32>
    %368 = arith.negf %367 : vector<2x128xf32>
    %369 = math.exp %368 : vector<2x128xf32>
    %cst_89 = arith.constant 1.000000e+00 : f32
    %370 = vector.broadcast %cst_89 : f32 to vector<2x128xf32>
    %371 = arith.addf %370, %369 : vector<2x128xf32>
    %372 = arith.divf %370, %371 : vector<2x128xf32>
    %373 = vector.extract_strided_slice %360 {offsets = [0, 256], sizes = [2, 128], strides = [1, 1]} : vector<2x512xf32> to vector<2x128xf32>
    %374 = math.tanh %373 : vector<2x128xf32>
    %375 = vector.extract_strided_slice %360 {offsets = [0, 384], sizes = [2, 128], strides = [1, 1]} : vector<2x512xf32> to vector<2x128xf32>
    %376 = arith.negf %375 : vector<2x128xf32>
    %377 = math.exp %376 : vector<2x128xf32>
    %cst_90 = arith.constant 1.000000e+00 : f32
    %378 = vector.broadcast %cst_90 : f32 to vector<2x128xf32>
    %379 = arith.addf %378, %377 : vector<2x128xf32>
    %380 = arith.divf %378, %379 : vector<2x128xf32>
    %381 = arith.mulf %372, %353 : vector<2x128xf32>
    %382 = arith.mulf %366, %374 : vector<2x128xf32>
    %383 = arith.addf %381, %382 : vector<2x128xf32>
    %384 = math.tanh %383 : vector<2x128xf32>
    %385 = arith.mulf %380, %384 : vector<2x128xf32>
    %cst_91 = arith.constant dense<0.000000e+00> : vector<2x512xf32>
    %386 = tpu.matmul %170, %261, %cst_91 {dimension_numbers = #tpu.dot_dimension_numbers<[1], [0], [0], [1], [0, 0, 1, 1], [], []>} : vector<2x128xf32>, vector<128x512xf32>, vector<2x512xf32> -> vector<2x512xf32>
    %cst_92 = arith.constant dense<0.000000e+00> : vector<2x512xf32>
    %387 = tpu.matmul %385, %262, %cst_92 {dimension_numbers = #tpu.dot_dimension_numbers<[1], [0], [0], [1], [0, 0, 1, 1], [], []>} : vector<2x128xf32>, vector<128x512xf32>, vector<2x512xf32> -> vector<2x512xf32>
    %388 = arith.addf %386, %387 : vector<2x512xf32>
    %389 = vector.broadcast %263 : vector<1x512xf32> to vector<2x512xf32>
    %390 = arith.addf %388, %389 : vector<2x512xf32>
    %391 = vector.extract_strided_slice %390 {offsets = [0, 0], sizes = [2, 128], strides = [1, 1]} : vector<2x512xf32> to vector<2x128xf32>
    %392 = arith.negf %391 : vector<2x128xf32>
    %393 = math.exp %392 : vector<2x128xf32>
    %cst_93 = arith.constant 1.000000e+00 : f32
    %394 = vector.broadcast %cst_93 : f32 to vector<2x128xf32>
    %395 = arith.addf %394, %393 : vector<2x128xf32>
    %396 = arith.divf %394, %395 : vector<2x128xf32>
    %397 = vector.extract_strided_slice %390 {offsets = [0, 128], sizes = [2, 128], strides = [1, 1]} : vector<2x512xf32> to vector<2x128xf32>
    %398 = arith.negf %397 : vector<2x128xf32>
    %399 = math.exp %398 : vector<2x128xf32>
    %cst_94 = arith.constant 1.000000e+00 : f32
    %400 = vector.broadcast %cst_94 : f32 to vector<2x128xf32>
    %401 = arith.addf %400, %399 : vector<2x128xf32>
    %402 = arith.divf %400, %401 : vector<2x128xf32>
    %403 = vector.extract_strided_slice %390 {offsets = [0, 256], sizes = [2, 128], strides = [1, 1]} : vector<2x512xf32> to vector<2x128xf32>
    %404 = math.tanh %403 : vector<2x128xf32>
    %405 = vector.extract_strided_slice %390 {offsets = [0, 384], sizes = [2, 128], strides = [1, 1]} : vector<2x512xf32> to vector<2x128xf32>
    %406 = arith.negf %405 : vector<2x128xf32>
    %407 = math.exp %406 : vector<2x128xf32>
    %cst_95 = arith.constant 1.000000e+00 : f32
    %408 = vector.broadcast %cst_95 : f32 to vector<2x128xf32>
    %409 = arith.addf %408, %407 : vector<2x128xf32>
    %410 = arith.divf %408, %409 : vector<2x128xf32>
    %411 = arith.mulf %402, %383 : vector<2x128xf32>
    %412 = arith.mulf %396, %404 : vector<2x128xf32>
    %413 = arith.addf %411, %412 : vector<2x128xf32>
    %414 = math.tanh %413 : vector<2x128xf32>
    %415 = arith.mulf %410, %414 : vector<2x128xf32>
    %cst_96 = arith.constant dense<0.000000e+00> : vector<2x512xf32>
    %416 = tpu.matmul %200, %261, %cst_96 {dimension_numbers = #tpu.dot_dimension_numbers<[1], [0], [0], [1], [0, 0, 1, 1], [], []>} : vector<2x128xf32>, vector<128x512xf32>, vector<2x512xf32> -> vector<2x512xf32>
    %cst_97 = arith.constant dense<0.000000e+00> : vector<2x512xf32>
    %417 = tpu.matmul %415, %262, %cst_97 {dimension_numbers = #tpu.dot_dimension_numbers<[1], [0], [0], [1], [0, 0, 1, 1], [], []>} : vector<2x128xf32>, vector<128x512xf32>, vector<2x512xf32> -> vector<2x512xf32>
    %418 = arith.addf %416, %417 : vector<2x512xf32>
    %419 = vector.broadcast %263 : vector<1x512xf32> to vector<2x512xf32>
    %420 = arith.addf %418, %419 : vector<2x512xf32>
    %421 = vector.extract_strided_slice %420 {offsets = [0, 0], sizes = [2, 128], strides = [1, 1]} : vector<2x512xf32> to vector<2x128xf32>
    %422 = arith.negf %421 : vector<2x128xf32>
    %423 = math.exp %422 : vector<2x128xf32>
    %cst_98 = arith.constant 1.000000e+00 : f32
    %424 = vector.broadcast %cst_98 : f32 to vector<2x128xf32>
    %425 = arith.addf %424, %423 : vector<2x128xf32>
    %426 = arith.divf %424, %425 : vector<2x128xf32>
    %427 = vector.extract_strided_slice %420 {offsets = [0, 128], sizes = [2, 128], strides = [1, 1]} : vector<2x512xf32> to vector<2x128xf32>
    %428 = arith.negf %427 : vector<2x128xf32>
    %429 = math.exp %428 : vector<2x128xf32>
    %cst_99 = arith.constant 1.000000e+00 : f32
    %430 = vector.broadcast %cst_99 : f32 to vector<2x128xf32>
    %431 = arith.addf %430, %429 : vector<2x128xf32>
    %432 = arith.divf %430, %431 : vector<2x128xf32>
    %433 = vector.extract_strided_slice %420 {offsets = [0, 256], sizes = [2, 128], strides = [1, 1]} : vector<2x512xf32> to vector<2x128xf32>
    %434 = math.tanh %433 : vector<2x128xf32>
    %435 = vector.extract_strided_slice %420 {offsets = [0, 384], sizes = [2, 128], strides = [1, 1]} : vector<2x512xf32> to vector<2x128xf32>
    %436 = arith.negf %435 : vector<2x128xf32>
    %437 = math.exp %436 : vector<2x128xf32>
    %cst_100 = arith.constant 1.000000e+00 : f32
    %438 = vector.broadcast %cst_100 : f32 to vector<2x128xf32>
    %439 = arith.addf %438, %437 : vector<2x128xf32>
    %440 = arith.divf %438, %439 : vector<2x128xf32>
    %441 = arith.mulf %432, %413 : vector<2x128xf32>
    %442 = arith.mulf %426, %434 : vector<2x128xf32>
    %443 = arith.addf %441, %442 : vector<2x128xf32>
    %444 = math.tanh %443 : vector<2x128xf32>
    %445 = arith.mulf %440, %444 : vector<2x128xf32>
    %cst_101 = arith.constant dense<0.000000e+00> : vector<2x512xf32>
    %446 = tpu.matmul %230, %261, %cst_101 {dimension_numbers = #tpu.dot_dimension_numbers<[1], [0], [0], [1], [0, 0, 1, 1], [], []>} : vector<2x128xf32>, vector<128x512xf32>, vector<2x512xf32> -> vector<2x512xf32>
    %cst_102 = arith.constant dense<0.000000e+00> : vector<2x512xf32>
    %447 = tpu.matmul %445, %262, %cst_102 {dimension_numbers = #tpu.dot_dimension_numbers<[1], [0], [0], [1], [0, 0, 1, 1], [], []>} : vector<2x128xf32>, vector<128x512xf32>, vector<2x512xf32> -> vector<2x512xf32>
    %448 = arith.addf %446, %447 : vector<2x512xf32>
    %449 = vector.broadcast %263 : vector<1x512xf32> to vector<2x512xf32>
    %450 = arith.addf %448, %449 : vector<2x512xf32>
    %451 = vector.extract_strided_slice %450 {offsets = [0, 0], sizes = [2, 128], strides = [1, 1]} : vector<2x512xf32> to vector<2x128xf32>
    %452 = arith.negf %451 : vector<2x128xf32>
    %453 = math.exp %452 : vector<2x128xf32>
    %cst_103 = arith.constant 1.000000e+00 : f32
    %454 = vector.broadcast %cst_103 : f32 to vector<2x128xf32>
    %455 = arith.addf %454, %453 : vector<2x128xf32>
    %456 = arith.divf %454, %455 : vector<2x128xf32>
    %457 = vector.extract_strided_slice %450 {offsets = [0, 128], sizes = [2, 128], strides = [1, 1]} : vector<2x512xf32> to vector<2x128xf32>
    %458 = arith.negf %457 : vector<2x128xf32>
    %459 = math.exp %458 : vector<2x128xf32>
    %cst_104 = arith.constant 1.000000e+00 : f32
    %460 = vector.broadcast %cst_104 : f32 to vector<2x128xf32>
    %461 = arith.addf %460, %459 : vector<2x128xf32>
    %462 = arith.divf %460, %461 : vector<2x128xf32>
    %463 = vector.extract_strided_slice %450 {offsets = [0, 256], sizes = [2, 128], strides = [1, 1]} : vector<2x512xf32> to vector<2x128xf32>
    %464 = math.tanh %463 : vector<2x128xf32>
    %465 = vector.extract_strided_slice %450 {offsets = [0, 384], sizes = [2, 128], strides = [1, 1]} : vector<2x512xf32> to vector<2x128xf32>
    %466 = arith.negf %465 : vector<2x128xf32>
    %467 = math.exp %466 : vector<2x128xf32>
    %cst_105 = arith.constant 1.000000e+00 : f32
    %468 = vector.broadcast %cst_105 : f32 to vector<2x128xf32>
    %469 = arith.addf %468, %467 : vector<2x128xf32>
    %470 = arith.divf %468, %469 : vector<2x128xf32>
    %471 = arith.mulf %462, %443 : vector<2x128xf32>
    %472 = arith.mulf %456, %464 : vector<2x128xf32>
    %473 = arith.addf %471, %472 : vector<2x128xf32>
    %474 = math.tanh %473 : vector<2x128xf32>
    %475 = arith.mulf %470, %474 : vector<2x128xf32>
    %cst_106 = arith.constant dense<0.000000e+00> : vector<2x512xf32>
    %476 = tpu.matmul %260, %261, %cst_106 {dimension_numbers = #tpu.dot_dimension_numbers<[1], [0], [0], [1], [0, 0, 1, 1], [], []>} : vector<2x128xf32>, vector<128x512xf32>, vector<2x512xf32> -> vector<2x512xf32>
    %cst_107 = arith.constant dense<0.000000e+00> : vector<2x512xf32>
    %477 = tpu.matmul %475, %262, %cst_107 {dimension_numbers = #tpu.dot_dimension_numbers<[1], [0], [0], [1], [0, 0, 1, 1], [], []>} : vector<2x128xf32>, vector<128x512xf32>, vector<2x512xf32> -> vector<2x512xf32>
    %478 = arith.addf %476, %477 : vector<2x512xf32>
    %479 = vector.broadcast %263 : vector<1x512xf32> to vector<2x512xf32>
    %480 = arith.addf %478, %479 : vector<2x512xf32>
    %481 = vector.extract_strided_slice %480 {offsets = [0, 0], sizes = [2, 128], strides = [1, 1]} : vector<2x512xf32> to vector<2x128xf32>
    %482 = arith.negf %481 : vector<2x128xf32>
    %483 = math.exp %482 : vector<2x128xf32>
    %cst_108 = arith.constant 1.000000e+00 : f32
    %484 = vector.broadcast %cst_108 : f32 to vector<2x128xf32>
    %485 = arith.addf %484, %483 : vector<2x128xf32>
    %486 = arith.divf %484, %485 : vector<2x128xf32>
    %487 = vector.extract_strided_slice %480 {offsets = [0, 128], sizes = [2, 128], strides = [1, 1]} : vector<2x512xf32> to vector<2x128xf32>
    %488 = arith.negf %487 : vector<2x128xf32>
    %489 = math.exp %488 : vector<2x128xf32>
    %cst_109 = arith.constant 1.000000e+00 : f32
    %490 = vector.broadcast %cst_109 : f32 to vector<2x128xf32>
    %491 = arith.addf %490, %489 : vector<2x128xf32>
    %492 = arith.divf %490, %491 : vector<2x128xf32>
    %493 = vector.extract_strided_slice %480 {offsets = [0, 256], sizes = [2, 128], strides = [1, 1]} : vector<2x512xf32> to vector<2x128xf32>
    %494 = math.tanh %493 : vector<2x128xf32>
    %495 = vector.extract_strided_slice %480 {offsets = [0, 384], sizes = [2, 128], strides = [1, 1]} : vector<2x512xf32> to vector<2x128xf32>
    %496 = arith.negf %495 : vector<2x128xf32>
    %497 = math.exp %496 : vector<2x128xf32>
    %cst_110 = arith.constant 1.000000e+00 : f32
    %498 = vector.broadcast %cst_110 : f32 to vector<2x128xf32>
    %499 = arith.addf %498, %497 : vector<2x128xf32>
    %500 = arith.divf %498, %499 : vector<2x128xf32>
    %501 = arith.mulf %492, %473 : vector<2x128xf32>
    %502 = arith.mulf %486, %494 : vector<2x128xf32>
    %503 = arith.addf %501, %502 : vector<2x128xf32>
    %504 = math.tanh %503 : vector<2x128xf32>
    %505 = arith.mulf %500, %504 : vector<2x128xf32>
    %c0_111 = arith.constant 0 : index
    %c0_112 = arith.constant 0 : index
    %506 = vector.load %arg7[%c0_111, %c0_112] : memref<128x384xf32, #tpu.memory_space<vmem>>, vector<128x384xf32>
    %c0_113 = arith.constant 0 : index
    %c0_114 = arith.constant 0 : index
    %507 = vector.load %arg8[%c0_113, %c0_114] : memref<1x384xf32, #tpu.memory_space<vmem>>, vector<1x384xf32>
    %c0_115 = arith.constant 0 : index
    %c0_116 = arith.constant 0 : index
    %508 = vector.load %arg9[%c0_115, %c0_116] : memref<384x256xf32, #tpu.memory_space<vmem>>, vector<384x256xf32>
    %c0_117 = arith.constant 0 : index
    %c0_118 = arith.constant 0 : index
    %509 = vector.load %arg10[%c0_117, %c0_118] : memref<1x256xf32, #tpu.memory_space<vmem>>, vector<1x256xf32>
    %c0_119 = arith.constant 0 : index
    %c0_120 = arith.constant 0 : index
    %510 = vector.load %arg11[%c0_119, %c0_120] : memref<256x128xf32, #tpu.memory_space<vmem>>, vector<256x128xf32>
    %c0_121 = arith.constant 0 : index
    %c0_122 = arith.constant 0 : index
    %511 = vector.load %arg12[%c0_121, %c0_122] : memref<1x128xf32, #tpu.memory_space<vmem>>, vector<1x128xf32>
    %c0_123 = arith.constant 0 : index
    %c0_124 = arith.constant 0 : index
    %512 = vector.load %arg13[%c0_123, %c0_124] : memref<128x128xf32, #tpu.memory_space<vmem>>, vector<128x128xf32>
    %c0_125 = arith.constant 0 : index
    %c0_126 = arith.constant 0 : index
    %513 = vector.load %arg14[%c0_125, %c0_126] : memref<1x128xf32, #tpu.memory_space<vmem>>, vector<1x128xf32>
    %cst_127 = arith.constant dense<0.000000e+00> : vector<2x384xf32>
    %514 = tpu.matmul %505, %506, %cst_127 {dimension_numbers = #tpu.dot_dimension_numbers<[1], [0], [0], [1], [0, 0, 1, 1], [], []>} : vector<2x128xf32>, vector<128x384xf32>, vector<2x384xf32> -> vector<2x384xf32>
    %515 = vector.broadcast %507 : vector<1x384xf32> to vector<2x384xf32>
    %516 = arith.addf %514, %515 : vector<2x384xf32>
    %cst_128 = arith.constant 0.000000e+00 : f32
    %517 = vector.broadcast %cst_128 : f32 to vector<2x384xf32>
    %518 = arith.maximumf %516, %517 : vector<2x384xf32>
    %cst_129 = arith.constant dense<0.000000e+00> : vector<2x256xf32>
    %519 = tpu.matmul %518, %508, %cst_129 {dimension_numbers = #tpu.dot_dimension_numbers<[1], [0], [0], [1], [0, 0, 1, 1], [], []>} : vector<2x384xf32>, vector<384x256xf32>, vector<2x256xf32> -> vector<2x256xf32>
    %520 = vector.broadcast %509 : vector<1x256xf32> to vector<2x256xf32>
    %521 = arith.addf %519, %520 : vector<2x256xf32>
    %cst_130 = arith.constant 0.000000e+00 : f32
    %522 = vector.broadcast %cst_130 : f32 to vector<2x256xf32>
    %523 = arith.maximumf %521, %522 : vector<2x256xf32>
    %cst_131 = arith.constant dense<0.000000e+00> : vector<2x128xf32>
    %524 = tpu.matmul %523, %510, %cst_131 {dimension_numbers = #tpu.dot_dimension_numbers<[1], [0], [0], [1], [0, 0, 1, 1], [], []>} : vector<2x256xf32>, vector<256x128xf32>, vector<2x128xf32> -> vector<2x128xf32>
    %525 = vector.broadcast %511 : vector<1x128xf32> to vector<2x128xf32>
    %526 = arith.addf %524, %525 : vector<2x128xf32>
    %cst_132 = arith.constant 0.000000e+00 : f32
    %527 = vector.broadcast %cst_132 : f32 to vector<2x128xf32>
    %528 = arith.maximumf %526, %527 : vector<2x128xf32>
    %cst_133 = arith.constant dense<0.000000e+00> : vector<2x128xf32>
    %529 = tpu.matmul %528, %512, %cst_133 {dimension_numbers = #tpu.dot_dimension_numbers<[1], [0], [0], [1], [0, 0, 1, 1], [], []>} : vector<2x128xf32>, vector<128x128xf32>, vector<2x128xf32> -> vector<2x128xf32>
    %530 = vector.broadcast %513 : vector<1x128xf32> to vector<2x128xf32>
    %531 = arith.addf %529, %530 : vector<2x128xf32>
    %c0_134 = arith.constant 0 : index
    %c0_135 = arith.constant 0 : index
    %532 = vector.load %arg15[%c0_134, %c0_135] : memref<2x128xf32, #tpu.memory_space<vmem>>, vector<2x128xf32>
    tpu.vector_store %arg15[%c0_134, %c0_135], %531 {strides = array<i32>} : memref<2x128xf32, #tpu.memory_space<vmem>>, vector<2x128xf32>,
    return
  }
}

</mosaic_0001>

<llo_original>
// kernel: distance_estimator_forward.1
$region0: #{distance_estimator_forward.1}
  #allocation0 [shape = 'u32[]', space=smem, size = 0x4, offset = 0x4, fixed_abs, tag = 'smem constant byte address 0x4 - core index']
  #allocation1 [shape = 'u32[144,128]{1,0:T(1,128)}', space=vmem, size = 0x12000, scoped, tag = 'internal scratch']
  %s0 = inlined_call_operand.vmem [shape: f32[2,8,16], index: 0, kind: input, shape index: {}]
  %s1 = inlined_call_operand.vmem [shape: f32[16,512], index: 1, kind: input, shape index: {}]
  %s2 = inlined_call_operand.vmem [shape: f32[128,512], index: 2, kind: input, shape index: {}]
  %s3 = inlined_call_operand.vmem [shape: f32[1,512], index: 3, kind: input, shape index: {}]
  %s4 = inlined_call_operand.vmem [shape: f32[128,512], index: 4, kind: input, shape index: {}]
  %s5 = inlined_call_operand.vmem [shape: f32[128,512], index: 5, kind: input, shape index: {}]
  %s6 = inlined_call_operand.vmem [shape: f32[1,512], index: 6, kind: input, shape index: {}]
  %s7 = inlined_call_operand.vmem [shape: f32[128,384], index: 7, kind: input, shape index: {}]
  %s8 = inlined_call_operand.vmem [shape: f32[1,384], index: 8, kind: input, shape index: {}]
  %s9 = inlined_call_operand.vmem [shape: f32[384,256], index: 9, kind: input, shape index: {}]
  %s10 = inlined_call_operand.vmem [shape: f32[1,256], index: 10, kind: input, shape index: {}]
  %s11 = inlined_call_operand.vmem [shape: f32[256,128], index: 11, kind: input, shape index: {}]
  %s12 = inlined_call_operand.vmem [shape: f32[1,128], index: 12, kind: input, shape index: {}]
  %s13 = inlined_call_operand.vmem [shape: f32[128,128], index: 13, kind: input, shape index: {}]
  %s14 = inlined_call_operand.vmem [shape: f32[1,128], index: 14, kind: input, shape index: {}]
  %s15 = inlined_call_operand.vmem [shape: f32[2,128], index: 15, kind: output, shape index: {}]
  %s16 = sld [smem:[#allocation0]]
  $region70: #{distance_estimator_forward.1} parent=0
    _
  %s18 = ssub.s32 1, %s16
  %s19 = scalar_select 0, %s18, %s16
  // Predicated region
  $region2: #{distance_estimator_forward.1} parent=0 // pred_check
    _
  $region3: #{distance_estimator_forward.1} parent=0 // pred_check_branch
    %21 = sbr.rel (0) target = $region5
  $region4: #{distance_estimator_forward.1} parent=0 // pred_region
    _
  $region5: #{distance_estimator_forward.1} parent=0 // pred_fallthru
    _
  // Predicated region
  $region6: #{distance_estimator_forward.1} parent=0 // pred_check
    _
  $region7: #{distance_estimator_forward.1} parent=0 // pred_check_branch
    %23 = sbr.rel (0) target = $region9
  $region8: #{distance_estimator_forward.1} parent=0 // pred_region
    _
  $region9: #{distance_estimator_forward.1} parent=0 // pred_fallthru
    _
  // Predicated region
  $region10: #{distance_estimator_forward.1} parent=0 // pred_check
    _
  $region11: #{distance_estimator_forward.1} parent=0 // pred_check_branch
    %25 = sbr.rel (0) target = $region13
  $region12: #{distance_estimator_forward.1} parent=0 // pred_region
    _
  $region13: #{distance_estimator_forward.1} parent=0 // pred_fallthru
    _
  // Predicated region
  $region14: #{distance_estimator_forward.1} parent=0 // pred_check
    _
  $region15: #{distance_estimator_forward.1} parent=0 // pred_check_branch
    %27 = sbr.rel (0) target = $region17
  $region16: #{distance_estimator_forward.1} parent=0 // pred_region
    _
  $region17: #{distance_estimator_forward.1} parent=0 // pred_fallthru
    _
  // Predicated region
  $region18: #{distance_estimator_forward.1} parent=0 // pred_check
    _
  $region19: #{distance_estimator_forward.1} parent=0 // pred_check_branch
    %29 = sbr.rel (0) target = $region21
  $region20: #{distance_estimator_forward.1} parent=0 // pred_region
    _
  $region21: #{distance_estimator_forward.1} parent=0 // pred_fallthru
    _
  // Predicated region
  $region22: #{distance_estimator_forward.1} parent=0 // pred_check
    _
  $region23: #{distance_estimator_forward.1} parent=0 // pred_check_branch
    %31 = sbr.rel (0) target = $region25
  $region24: #{distance_estimator_forward.1} parent=0 // pred_region
    _
  $region25: #{distance_estimator_forward.1} parent=0 // pred_fallthru
    _
  // Predicated region
  $region26: #{distance_estimator_forward.1} parent=0 // pred_check
    _
  $region27: #{distance_estimator_forward.1} parent=0 // pred_check_branch
    %33 = sbr.rel (0) target = $region29
  $region28: #{distance_estimator_forward.1} parent=0 // pred_region
    _
  $region29: #{distance_estimator_forward.1} parent=0 // pred_fallthru
    _
  // Predicated region
  $region30: #{distance_estimator_forward.1} parent=0 // pred_check
    _
  $region31: #{distance_estimator_forward.1} parent=0 // pred_check_branch
    %35 = sbr.rel (0) target = $region33
  $region32: #{distance_estimator_forward.1} parent=0 // pred_region
    _
  $region33: #{distance_estimator_forward.1} parent=0 // pred_fallthru
    _
  // Predicated region
  $region34: #{distance_estimator_forward.1} parent=0 // pred_check
    _
  $region35: #{distance_estimator_forward.1} parent=0 // pred_check_branch
    %37 = sbr.rel (0) target = $region37
  $region36: #{distance_estimator_forward.1} parent=0 // pred_region
    _
  $region37: #{distance_estimator_forward.1} parent=0 // pred_fallthru
    _
  // Predicated region
  $region38: #{distance_estimator_forward.1} parent=0 // pred_check
    _
  $region39: #{distance_estimator_forward.1} parent=0 // pred_check_branch
    %39 = sbr.rel (0) target = $region41
  $region40: #{distance_estimator_forward.1} parent=0 // pred_region
    _
  $region41: #{distance_estimator_forward.1} parent=0 // pred_fallthru
    _
  // Predicated region
  $region42: #{distance_estimator_forward.1} parent=0 // pred_check
    _
  $region43: #{distance_estimator_forward.1} parent=0 // pred_check_branch
    %41 = sbr.rel (0) target = $region45
  $region44: #{distance_estimator_forward.1} parent=0 // pred_region
    _
  $region45: #{distance_estimator_forward.1} parent=0 // pred_fallthru
    _
  // Predicated region
  $region46: #{distance_estimator_forward.1} parent=0 // pred_check
    _
  $region47: #{distance_estimator_forward.1} parent=0 // pred_check_branch
    %43 = sbr.rel (0) target = $region49
  $region48: #{distance_estimator_forward.1} parent=0 // pred_region
    _
  $region49: #{distance_estimator_forward.1} parent=0 // pred_fallthru
    _
  // Predicated region
  $region50: #{distance_estimator_forward.1} parent=0 // pred_check
    _
  $region51: #{distance_estimator_forward.1} parent=0 // pred_check_branch
    %45 = sbr.rel (0) target = $region53
  $region52: #{distance_estimator_forward.1} parent=0 // pred_region
    _
  $region53: #{distance_estimator_forward.1} parent=0 // pred_fallthru
    _
  // Predicated region
  $region54: #{distance_estimator_forward.1} parent=0 // pred_check
    _
  $region55: #{distance_estimator_forward.1} parent=0 // pred_check_branch
    %47 = sbr.rel (0) target = $region57
  $region56: #{distance_estimator_forward.1} parent=0 // pred_region
    _
  $region57: #{distance_estimator_forward.1} parent=0 // pred_fallthru
    _
  // Predicated region
  $region58: #{distance_estimator_forward.1} parent=0 // pred_check
    _
  $region59: #{distance_estimator_forward.1} parent=0 // pred_check_branch
    %49 = sbr.rel (0) target = $region61
  $region60: #{distance_estimator_forward.1} parent=0 // pred_region
    _
  $region61: #{distance_estimator_forward.1} parent=0 // pred_fallthru
    _
  %v50 = vld [vmem:[%s0] sm:$0x1]
  %v51 = vld [vmem:[%s0 + $0x8] sm:$0x1]
  %v52 = vld [vmem:[%s0 + $0x1] sm:$0x1]
  %v53 = vld [vmem:[%s0 + $0x9] sm:$0x1]
  %v54 = vld [vmem:[%s0 + $0x2] sm:$0x1]
  %v55 = vld [vmem:[%s0 + $0xa] sm:$0x1]
  %v56 = vld [vmem:[%s0 + $0x3] sm:$0x1]
  %v57 = vld [vmem:[%s0 + $0xb] sm:$0x1]
  %v58 = vld [vmem:[%s0 + $0x4] sm:$0x1]
  %v59 = vld [vmem:[%s0 + $0xc] sm:$0x1]
  %v60 = vld [vmem:[%s0 + $0x5] sm:$0x1]
  %v61 = vld [vmem:[%s0 + $0xd] sm:$0x1]
  %v62 = vld [vmem:[%s0 + $0x6] sm:$0x1]
  %v63 = vld [vmem:[%s0 + $0xe] sm:$0x1]
  %v64 = vld [vmem:[%s0 + $0x7] sm:$0x1]
  %v65 = vld [vmem:[%s0 + $0xf] sm:$0x1]
  %v66 = vld [vmem:[%s1] sm:$0xff]
  %v67 = vld [vmem:[%s1 + $0x8] sm:$0xff]
  %v68 = vld [vmem:[%s1 + $0x10] sm:$0xff]
  %v69 = vld [vmem:[%s1 + $0x18] sm:$0xff]
  %v70 = vld [vmem:[%s1 + $0x20] sm:$0xff]
  %v71 = vld [vmem:[%s1 + $0x28] sm:$0xff]
  %v72 = vld [vmem:[%s1 + $0x30] sm:$0xff]
  %v73 = vld [vmem:[%s1 + $0x38] sm:$0xff]
  %v74 = vld [vmem:[%s2] sm:$0xff]
  %v75 = vld [vmem:[%s2 + $0x8] sm:$0xff]
  %v76 = vld [vmem:[%s2 + $0x10] sm:$0xff]
  %v77 = vld [vmem:[%s2 + $0x18] sm:$0xff]
  %v78 = vld [vmem:[%s2 + $0x20] sm:$0xff]
  %v79 = vld [vmem:[%s2 + $0x28] sm:$0xff]
  %v80 = vld [vmem:[%s2 + $0x30] sm:$0xff]
  %v81 = vld [vmem:[%s2 + $0x38] sm:$0xff]
  %v82 = vld [vmem:[%s2 + $0x40] sm:$0xff]
  %v83 = vld [vmem:[%s2 + $0x48] sm:$0xff]
  %v84 = vld [vmem:[%s2 + $0x50] sm:$0xff]
  %v85 = vld [vmem:[%s2 + $0x58] sm:$0xff]
  %v86 = vld [vmem:[%s2 + $0x60] sm:$0xff]
  %v87 = vld [vmem:[%s2 + $0x68] sm:$0xff]
  %v88 = vld [vmem:[%s2 + $0x70] sm:$0xff]
  %v89 = vld [vmem:[%s2 + $0x78] sm:$0xff]
  %v90 = vld [vmem:[%s2 + $0x80] sm:$0xff]
  %v91 = vld [vmem:[%s2 + $0x88] sm:$0xff]
  %v92 = vld [vmem:[%s2 + $0x90] sm:$0xff]
  %v93 = vld [vmem:[%s2 + $0x98] sm:$0xff]
  %v94 = vld [vmem:[%s2 + $0xa0] sm:$0xff]
  %v95 = vld [vmem:[%s2 + $0xa8] sm:$0xff]
  %v96 = vld [vmem:[%s2 + $0xb0] sm:$0xff]
  %v97 = vld [vmem:[%s2 + $0xb8] sm:$0xff]
  %v98 = vld [vmem:[%s2 + $0xc0] sm:$0xff]
  %v99 = vld [vmem:[%s2 + $0xc8] sm:$0xff]
  %v100 = vld [vmem:[%s2 + $0xd0] sm:$0xff]
  %v101 = vld [vmem:[%s2 + $0xd8] sm:$0xff]
  %v102 = vld [vmem:[%s2 + $0xe0] sm:$0xff]
  %v103 = vld [vmem:[%s2 + $0xe8] sm:$0xff]
  %v104 = vld [vmem:[%s2 + $0xf0] sm:$0xff]
  %v105 = vld [vmem:[%s2 + $0xf8] sm:$0xff]
  %v106 = vld [vmem:[%s2 + $0x100] sm:$0xff]
  %v107 = vld [vmem:[%s2 + $0x108] sm:$0xff]
  %v108 = vld [vmem:[%s2 + $0x110] sm:$0xff]
  %v109 = vld [vmem:[%s2 + $0x118] sm:$0xff]
  %v110 = vld [vmem:[%s2 + $0x120] sm:$0xff]
  %v111 = vld [vmem:[%s2 + $0x128] sm:$0xff]
  %v112 = vld [vmem:[%s2 + $0x130] sm:$0xff]
  %v113 = vld [vmem:[%s2 + $0x138] sm:$0xff]
  %v114 = vld [vmem:[%s2 + $0x140] sm:$0xff]
  %v115 = vld [vmem:[%s2 + $0x148] sm:$0xff]
  %v116 = vld [vmem:[%s2 + $0x150] sm:$0xff]
  %v117 = vld [vmem:[%s2 + $0x158] sm:$0xff]
  %v118 = vld [vmem:[%s2 + $0x160] sm:$0xff]
  %v119 = vld [vmem:[%s2 + $0x168] sm:$0xff]
  %v120 = vld [vmem:[%s2 + $0x170] sm:$0xff]
  %v121 = vld [vmem:[%s2 + $0x178] sm:$0xff]
  %v122 = vld [vmem:[%s2 + $0x180] sm:$0xff]
  %v123 = vld [vmem:[%s2 + $0x188] sm:$0xff]
  %v124 = vld [vmem:[%s2 + $0x190] sm:$0xff]
  %v125 = vld [vmem:[%s2 + $0x198] sm:$0xff]
  %v126 = vld [vmem:[%s2 + $0x1a0] sm:$0xff]
  %v127 = vld [vmem:[%s2 + $0x1a8] sm:$0xff]
  %v128 = vld [vmem:[%s2 + $0x1b0] sm:$0xff]
  %v129 = vld [vmem:[%s2 + $0x1b8] sm:$0xff]
  %v130 = vld [vmem:[%s2 + $0x1c0] sm:$0xff]
  %v131 = vld [vmem:[%s2 + $0x1c8] sm:$0xff]
  %v132 = vld [vmem:[%s2 + $0x1d0] sm:$0xff]
  %v133 = vld [vmem:[%s2 + $0x1d8] sm:$0xff]
  %v134 = vld [vmem:[%s2 + $0x1e0] sm:$0xff]
  %v135 = vld [vmem:[%s2 + $0x1e8] sm:$0xff]
  %v136 = vld [vmem:[%s2 + $0x1f0] sm:$0xff]
  %v137 = vld [vmem:[%s2 + $0x1f8] sm:$0xff]
  %v138 = vld [vmem:[%s3] sm:$0xf]
  %139 = vmatprep.subr.mxu0 %v135
  %140 = vmatpush1.msra.mxu0 %v134
  %141 = vmatprep.subr.mxu0 %v131
  %142 = vmatpush1.msra.mxu0 %v130
  %143 = vmatprep.subr.mxu0 %v127
  %144 = vmatpush1.msra.mxu0 %v126
  %145 = vmatprep.subr.mxu0 %v123
  %146 = vmatpush1.msra.mxu0 %v122
  %147 = vmatprep.subr.mxu0 %v119
  %148 = vmatpush1.msra.mxu0 %v118
  %149 = vmatprep.subr.mxu0 %v115
  %150 = vmatpush1.msra.mxu0 %v114
  %151 = vmatprep.subr.mxu0 %v111
  %152 = vmatpush1.msra.mxu0 %v110
  %153 = vmatprep.subr.mxu0 %v107
  %154 = vmatpush1.msra.mxu0 %v106
  %155 = vmatprep.subr.mxu0 %v103
  %156 = vmatpush1.msra.mxu0 %v102
  %157 = vmatprep.subr.mxu0 %v99
  %158 = vmatpush1.msra.mxu0 %v98
  %159 = vmatprep.subr.mxu0 %v95
  %160 = vmatpush1.msra.mxu0 %v94
  %161 = vmatprep.subr.mxu0 %v91
  %162 = vmatpush1.msra.mxu0 %v90
  %163 = vmatprep.subr.mxu0 %v87
  %164 = vmatpush1.msra.mxu0 %v86
  %165 = vmatprep.subr.mxu0 %v83
  %166 = vmatpush1.msra.mxu0 %v82
  %167 = vmatprep.subr.mxu0 %v79
  %168 = vmatpush1.msra.mxu0 %v78
  %169 = vmatprep.subr.mxu0 %v75
  %170 = vmatpush1.msra.mxu0 %v74
  %171 = vmatprep.subr.mxu0 0.0
  %172 = vmatpush2.msra.mxu0 0.0
  %173 = vmatprep.subr.mxu0 0.0
  %174 = vmatpush2.msra.mxu0 0.0
  %175 = vmatprep.subr.mxu0 0.0
  %176 = vmatpush2.msra.mxu0 0.0
  %177 = vmatprep.subr.mxu0 0.0
  %178 = vmatpush2.msra.mxu0 0.0
  %179 = vmatprep.subr.mxu0 0.0
  %180 = vmatpush2.msra.mxu0 0.0
  %181 = vmatprep.subr.mxu0 0.0
  %182 = vmatpush2.msra.mxu0 0.0
  %183 = vmatprep.subr.mxu0 0.0
  %184 = vmatpush2.msra.mxu0 0.0
  %185 = vmatprep.subr.mxu0 0.0
  %186 = vmatpush2.msra.mxu0 0.0
  %187 = vmatprep.subr.mxu0 0.0
  %188 = vmatpush2.msra.mxu0 0.0
  %189 = vmatprep.subr.mxu0 0.0
  %190 = vmatpush2.msra.mxu0 0.0
  %191 = vmatprep.subr.mxu0 0.0
  %192 = vmatpush2.msra.mxu0 0.0
  %193 = vmatprep.subr.mxu0 0.0
  %194 = vmatpush2.msra.mxu0 0.0
  %195 = vmatprep.subr.mxu0 0.0
  %196 = vmatpush2.msra.mxu0 0.0
  %197 = vmatprep.subr.mxu0 0.0
  %198 = vmatpush2.msra.mxu0 0.0
  %199 = vmatprep.subr.mxu0 0.0
  %200 = vmatpush2.msra.mxu0 0.0
  %201 = vmatprep.subr.mxu0 0.0
  %202 = vmatpush2.msra.mxu0 0.0
  %203 = vmatprep.mubr.f32.mxu0 0.0
  %204 = vmatmul.mubr.f32.gmra.mxu0 0.0
  %v205 = vpop.f32.mrf.mxu0
  %v206 = vadd.f32 0.0, %v205
  %v207 = vpop.f32.mrf.mxu0
  %v208 = vadd.f32 0.0, %v207
  %209 = vdwg.mxu0
  %210 = vmatprep.subr.mxu0 %v137
  %211 = vmatpush1.msra.mxu0 %v136
  %212 = vmatprep.subr.mxu0 %v133
  %213 = vmatpush1.msra.mxu0 %v132
  %214 = vmatprep.subr.mxu0 %v129
  %215 = vmatpush1.msra.mxu0 %v128
  %216 = vmatprep.subr.mxu0 %v125
  %217 = vmatpush1.msra.mxu0 %v124
  %218 = vmatprep.subr.mxu0 %v121
  %219 = vmatpush1.msra.mxu0 %v120
  %220 = vmatprep.subr.mxu0 %v117
  %221 = vmatpush1.msra.mxu0 %v116
  %222 = vmatprep.subr.mxu0 %v113
  %223 = vmatpush1.msra.mxu0 %v112
  %224 = vmatprep.subr.mxu0 %v109
  %225 = vmatpush1.msra.mxu0 %v108
  %226 = vmatprep.subr.mxu0 %v105
  %227 = vmatpush1.msra.mxu0 %v104
  %228 = vmatprep.subr.mxu0 %v101
  %229 = vmatpush1.msra.mxu0 %v100
  %230 = vmatprep.subr.mxu0 %v97
  %231 = vmatpush1.msra.mxu0 %v96
  %232 = vmatprep.subr.mxu0 %v93
  %233 = vmatpush1.msra.mxu0 %v92
  %234 = vmatprep.subr.mxu0 %v89
  %235 = vmatpush1.msra.mxu0 %v88
  %236 = vmatprep.subr.mxu0 %v85
  %237 = vmatpush1.msra.mxu0 %v84
  %238 = vmatprep.subr.mxu0 %v81
  %239 = vmatpush1.msra.mxu0 %v80
  %240 = vmatprep.subr.mxu0 %v77
  %241 = vmatpush1.msra.mxu0 %v76
  %242 = vmatprep.subr.mxu0 0.0
  %243 = vmatpush2.msra.mxu0 0.0
  %244 = vmatprep.subr.mxu0 0.0
  %245 = vmatpush2.msra.mxu0 0.0
  %246 = vmatprep.subr.mxu0 0.0
  %247 = vmatpush2.msra.mxu0 0.0
  %248 = vmatprep.subr.mxu0 0.0
  %249 = vmatpush2.msra.mxu0 0.0
  %250 = vmatprep.subr.mxu0 0.0
  %251 = vmatpush2.msra.mxu0 0.0
  %252 = vmatprep.subr.mxu0 0.0
  %253 = vmatpush2.msra.mxu0 0.0
  %254 = vmatprep.subr.mxu0 0.0
  %255 = vmatpush2.msra.mxu0 0.0
  %256 = vmatprep.subr.mxu0 0.0
  %257 = vmatpush2.msra.mxu0 0.0
  %258 = vmatprep.subr.mxu0 0.0
  %259 = vmatpush2.msra.mxu0 0.0
  %260 = vmatprep.subr.mxu0 0.0
  %261 = vmatpush2.msra.mxu0 0.0
  %262 = vmatprep.subr.mxu0 0.0
  %263 = vmatpush2.msra.mxu0 0.0
  %264 = vmatprep.subr.mxu0 0.0
  %265 = vmatpush2.msra.mxu0 0.0
  %266 = vmatprep.subr.mxu0 0.0
  %267 = vmatpush2.msra.mxu0 0.0
  %268 = vmatprep.subr.mxu0 0.0
  %269 = vmatpush2.msra.mxu0 0.0
  %270 = vmatprep.subr.mxu0 0.0
  %271 = vmatpush2.msra.mxu0 0.0
  %272 = vmatprep.subr.mxu0 0.0
  %273 = vmatpush2.msra.mxu0 0.0
  %274 = vmatprep.mubr.f32.mxu0 0.0
  %275 = vmatmul.mubr.f32.gmra.mxu0 0.0
  %v276 = vpop.f32.mrf.mxu0
  %v277 = vadd.f32 0.0, %v276
  %v278 = vpop.f32.mrf.mxu0
  %v279 = vadd.f32 0.0, %v278
  %280 = vdwg.mxu0
  %v283 = vrot.slane %v51, 7
  %vm284 = vcmask 1041409
  %v285 = vsel %vm284, %v283, %v50
  %vm286 = vcmask 130048
  %v287 = vsel %vm286, %v285, 0
  %289 = vmatprep.subr.mxu0 0.0
  %290 = vmatpush1.msra.mxu0 0.0
  %291 = vmatprep.subr.mxu0 0.0
  %292 = vmatpush1.msra.mxu0 0.0
  %293 = vmatprep.subr.mxu0 0.0
  %294 = vmatpush1.msra.mxu0 0.0
  %295 = vmatprep.subr.mxu0 0.0
  %296 = vmatpush1.msra.mxu0 0.0
  %297 = vmatprep.subr.mxu0 0.0
  %298 = vmatpush1.msra.mxu0 0.0
  %299 = vmatprep.subr.mxu0 0.0
  %300 = vmatpush1.msra.mxu0 0.0
  %301 = vmatprep.subr.mxu0 0.0
  %302 = vmatpush1.msra.mxu0 0.0
  %303 = vmatprep.subr.mxu0 0.0
  %304 = vmatpush1.msra.mxu0 0.0
  %305 = vmatprep.subr.mxu0 0.0
  %306 = vmatpush1.msra.mxu0 0.0
  %307 = vmatprep.subr.mxu0 0.0
  %308 = vmatpush1.msra.mxu0 0.0
  %309 = vmatprep.subr.mxu0 0.0
  %310 = vmatpush1.msra.mxu0 0.0
  %311 = vmatprep.subr.mxu0 0.0
  %312 = vmatpush1.msra.mxu0 0.0
  %313 = vmatprep.subr.mxu0 0.0
  %314 = vmatpush1.msra.mxu0 0.0
  %315 = vmatprep.subr.mxu0 0.0
  %316 = vmatpush1.msra.mxu0 0.0
  %317 = vmatprep.subr.mxu0 %v71
  %318 = vmatpush1.msra.mxu0 %v70
  %319 = vmatprep.subr.mxu0 %v67
  %320 = vmatpush1.msra.mxu0 %v66
  %321 = vmatprep.subr.mxu0 0.0
  %322 = vmatpush2.msra.mxu0 0.0
  %323 = vmatprep.subr.mxu0 0.0
  %324 = vmatpush2.msra.mxu0 0.0
  %325 = vmatprep.subr.mxu0 0.0
  %326 = vmatpush2.msra.mxu0 0.0
  %327 = vmatprep.subr.mxu0 0.0
  %328 = vmatpush2.msra.mxu0 0.0
  %329 = vmatprep.subr.mxu0 0.0
  %330 = vmatpush2.msra.mxu0 0.0
  %331 = vmatprep.subr.mxu0 0.0
  %332 = vmatpush2.msra.mxu0 0.0
  %333 = vmatprep.subr.mxu0 0.0
  %334 = vmatpush2.msra.mxu0 0.0
  %335 = vmatprep.subr.mxu0 0.0
  %336 = vmatpush2.msra.mxu0 0.0
  %337 = vmatprep.subr.mxu0 0.0
  %338 = vmatpush2.msra.mxu0 0.0
  %339 = vmatprep.subr.mxu0 0.0
  %340 = vmatpush2.msra.mxu0 0.0
  %341 = vmatprep.subr.mxu0 0.0
  %342 = vmatpush2.msra.mxu0 0.0
  %343 = vmatprep.subr.mxu0 0.0
  %344 = vmatpush2.msra.mxu0 0.0
  %345 = vmatprep.subr.mxu0 0.0
  %346 = vmatpush2.msra.mxu0 0.0
  %347 = vmatprep.subr.mxu0 0.0
  %348 = vmatpush2.msra.mxu0 0.0
  %349 = vmatprep.subr.mxu0 0.0
  %350 = vmatpush2.msra.mxu0 0.0
  %351 = vmatprep.subr.mxu0 0.0
  %352 = vmatpush2.msra.mxu0 0.0
  %353 = vmatprep.mubr.f32.mxu0 0.0
  %354 = vmatmul.mubr.f32.gmra.mxu0 %v287
  %v355 = vpop.f32.mrf.mxu0
  %v356 = vadd.f32 %v206, %v355
  %v357 = vpop.f32.mrf.mxu0
  %v358 = vadd.f32 %v208, %v357
  %359 = vdwg.mxu0
  %360 = vmatprep.subr.mxu0 0.0
  %361 = vmatpush1.msra.mxu0 0.0
  %362 = vmatprep.subr.mxu0 0.0
  %363 = vmatpush1.msra.mxu0 0.0
  %364 = vmatprep.subr.mxu0 0.0
  %365 = vmatpush1.msra.mxu0 0.0
  %366 = vmatprep.subr.mxu0 0.0
  %367 = vmatpush1.msra.mxu0 0.0
  %368 = vmatprep.subr.mxu0 0.0
  %369 = vmatpush1.msra.mxu0 0.0
  %370 = vmatprep.subr.mxu0 0.0
  %371 = vmatpush1.msra.mxu0 0.0
  %372 = vmatprep.subr.mxu0 0.0
  %373 = vmatpush1.msra.mxu0 0.0
  %374 = vmatprep.subr.mxu0 0.0
  %375 = vmatpush1.msra.mxu0 0.0
  %376 = vmatprep.subr.mxu0 0.0
  %377 = vmatpush1.msra.mxu0 0.0
  %378 = vmatprep.subr.mxu0 0.0
  %379 = vmatpush1.msra.mxu0 0.0
  %380 = vmatprep.subr.mxu0 0.0
  %381 = vmatpush1.msra.mxu0 0.0
  %382 = vmatprep.subr.mxu0 0.0
  %383 = vmatpush1.msra.mxu0 0.0
  %384 = vmatprep.subr.mxu0 0.0
  %385 = vmatpush1.msra.mxu0 0.0
  %386 = vmatprep.subr.mxu0 0.0
  %387 = vmatpush1.msra.mxu0 0.0
  %388 = vmatprep.subr.mxu0 %v73
  %389 = vmatpush1.msra.mxu0 %v72
  %390 = vmatprep.subr.mxu0 %v69
  %391 = vmatpush1.msra.mxu0 %v68
  %392 = vmatprep.subr.mxu0 0.0
  %393 = vmatpush2.msra.mxu0 0.0
  %394 = vmatprep.subr.mxu0 0.0
  %395 = vmatpush2.msra.mxu0 0.0
  %396 = vmatprep.subr.mxu0 0.0
  %397 = vmatpush2.msra.mxu0 0.0
  %398 = vmatprep.subr.mxu0 0.0
  %399 = vmatpush2.msra.mxu0 0.0
  %400 = vmatprep.subr.mxu0 0.0
  %401 = vmatpush2.msra.mxu0 0.0
  %402 = vmatprep.subr.mxu0 0.0
  %403 = vmatpush2.msra.mxu0 0.0
  %404 = vmatprep.subr.mxu0 0.0
  %405 = vmatpush2.msra.mxu0 0.0
  %406 = vmatprep.subr.mxu0 0.0
  %407 = vmatpush2.msra.mxu0 0.0
  %408 = vmatprep.subr.mxu0 0.0
  %409 = vmatpush2.msra.mxu0 0.0
  %410 = vmatprep.subr.mxu0 0.0
  %411 = vmatpush2.msra.mxu0 0.0
  %412 = vmatprep.subr.mxu0 0.0
  %413 = vmatpush2.msra.mxu0 0.0
  %414 = vmatprep.subr.mxu0 0.0
  %415 = vmatpush2.msra.mxu0 0.0
  %416 = vmatprep.subr.mxu0 0.0
  %417 = vmatpush2.msra.mxu0 0.0
  %418 = vmatprep.subr.mxu0 0.0
  %419 = vmatpush2.msra.mxu0 0.0
  %420 = vmatprep.subr.mxu0 0.0
  %421 = vmatpush2.msra.mxu0 0.0
  %422 = vmatprep.subr.mxu0 0.0
  %423 = vmatpush2.msra.mxu0 0.0
  %424 = vmatprep.mubr.f32.mxu0 0.0
  %425 = vmatmul.mubr.f32.gmra.mxu0 %v287
  %v426 = vpop.f32.mrf.mxu0
  %v427 = vadd.f32 %v277, %v426
  %v428 = vpop.f32.mrf.mxu0
  %v429 = vadd.f32 %v279, %v428
  %430 = vdwg.mxu0
  %v432 = vlaneseq
  %v433 = vshrl.u32 %v432, 7
  %v434 = vsub.s32 0, %v433
  %v435 = vrot.slane %v138, %v434
  %v436 = vlaneseq
  %v437 = vshrl.u32 %v436, 7
  %v438 = vsub.s32 1, %v437
  %v439 = vrot.slane %v138, %v438
  %v440 = vlaneseq
  %v441 = vshrl.u32 %v440, 7
  %v442 = vsub.s32 2, %v441
  %v443 = vrot.slane %v138, %v442
  %v444 = vlaneseq
  %v445 = vshrl.u32 %v444, 7
  %v446 = vsub.s32 3, %v445
  %v447 = vrot.slane %v138, %v446
  %v452 = vadd.f32 %v356, %v435
  %v453 = vadd.f32 %v358, %v439
  %v454 = vadd.f32 %v427, %v443
  %v455 = vadd.f32 %v429, %v447
  %v456 = vxor.u32 %v452, 2147483648
  %v457 = vmul.f32 %v456, 1.442695
  %v458 = vpow.pop %v457
  %v459 = vadd.f32 %v458, 1.0
  %v460 = vrcp.pop %v459
  %v461 = vmul.f32 1.0, %v460
  %v462 = vxor.u32 %v453, 2147483648
  %v463 = vmul.f32 %v462, 1.442695
  %v464 = vpow.pop %v463
  %v465 = vadd.f32 %v464, 1.0
  %v466 = vrcp.pop %v465
  %v467 = vmul.f32 1.0, %v466
  %v468 = vtanh.pop %v454
  %v469 = vxor.u32 %v455, 2147483648
  %v470 = vmul.f32 %v469, 1.442695
  %v471 = vpow.pop %v470
  %v472 = vadd.f32 %v471, 1.0
  %v473 = vrcp.pop %v472
  %v474 = vmul.f32 1.0, %v473
  %v475 = vmul.f32 %v467, 0.0
  %v476 = vmul.f32 %v461, %v468
  %v477 = vadd.f32 %v475, %v476
  %v478 = vtanh.pop %v477
  %v479 = vmul.f32 %v474, %v478
  %480 = vmatprep.subr.mxu0 %v135
  %481 = vmatpush1.msra.mxu0 %v134
  %482 = vmatprep.subr.mxu0 %v131
  %483 = vmatpush1.msra.mxu0 %v130
  %484 = vmatprep.subr.mxu0 %v127
  %485 = vmatpush1.msra.mxu0 %v126
  %486 = vmatprep.subr.mxu0 %v123
  %487 = vmatpush1.msra.mxu0 %v122
  %488 = vmatprep.subr.mxu0 %v119
  %489 = vmatpush1.msra.mxu0 %v118
  %490 = vmatprep.subr.mxu0 %v115
  %491 = vmatpush1.msra.mxu0 %v114
  %492 = vmatprep.subr.mxu0 %v111
  %493 = vmatpush1.msra.mxu0 %v110
  %494 = vmatprep.subr.mxu0 %v107
  %495 = vmatpush1.msra.mxu0 %v106
  %496 = vmatprep.subr.mxu0 %v103
  %497 = vmatpush1.msra.mxu0 %v102
  %498 = vmatprep.subr.mxu0 %v99
  %499 = vmatpush1.msra.mxu0 %v98
  %500 = vmatprep.subr.mxu0 %v95
  %501 = vmatpush1.msra.mxu0 %v94
  %502 = vmatprep.subr.mxu0 %v91
  %503 = vmatpush1.msra.mxu0 %v90
  %504 = vmatprep.subr.mxu0 %v87
  %505 = vmatpush1.msra.mxu0 %v86
  %506 = vmatprep.subr.mxu0 %v83
  %507 = vmatpush1.msra.mxu0 %v82
  %508 = vmatprep.subr.mxu0 %v79
  %509 = vmatpush1.msra.mxu0 %v78
  %510 = vmatprep.subr.mxu0 %v75
  %511 = vmatpush1.msra.mxu0 %v74
  %512 = vmatprep.subr.mxu0 0.0
  %513 = vmatpush2.msra.mxu0 0.0
  %514 = vmatprep.subr.mxu0 0.0
  %515 = vmatpush2.msra.mxu0 0.0
  %516 = vmatprep.subr.mxu0 0.0
  %517 = vmatpush2.msra.mxu0 0.0
  %518 = vmatprep.subr.mxu0 0.0
  %519 = vmatpush2.msra.mxu0 0.0
  %520 = vmatprep.subr.mxu0 0.0
  %521 = vmatpush2.msra.mxu0 0.0
  %522 = vmatprep.subr.mxu0 0.0
  %523 = vmatpush2.msra.mxu0 0.0
  %524 = vmatprep.subr.mxu0 0.0
  %525 = vmatpush2.msra.mxu0 0.0
  %526 = vmatprep.subr.mxu0 0.0
  %527 = vmatpush2.msra.mxu0 0.0
  %528 = vmatprep.subr.mxu0 0.0
  %529 = vmatpush2.msra.mxu0 0.0
  %530 = vmatprep.subr.mxu0 0.0
  %531 = vmatpush2.msra.mxu0 0.0
  %532 = vmatprep.subr.mxu0 0.0
  %533 = vmatpush2.msra.mxu0 0.0
  %534 = vmatprep.subr.mxu0 0.0
  %535 = vmatpush2.msra.mxu0 0.0
  %536 = vmatprep.subr.mxu0 0.0
  %537 = vmatpush2.msra.mxu0 0.0
  %538 = vmatprep.subr.mxu0 0.0
  %539 = vmatpush2.msra.mxu0 0.0
  %540 = vmatprep.subr.mxu0 0.0
  %541 = vmatpush2.msra.mxu0 0.0
  %542 = vmatprep.subr.mxu0 0.0
  %543 = vmatpush2.msra.mxu0 0.0
  %544 = vmatprep.mubr.f32.mxu0 0.0
  %545 = vmatmul.mubr.f32.gmra.mxu0 %v479
  %v546 = vpop.f32.mrf.mxu0
  %v547 = vadd.f32 0.0, %v546
  %v548 = vpop.f32.mrf.mxu0
  %v549 = vadd.f32 0.0, %v548
  %550 = vdwg.mxu0
  %551 = vmatprep.subr.mxu0 %v137
  %552 = vmatpush1.msra.mxu0 %v136
  %553 = vmatprep.subr.mxu0 %v133
  %554 = vmatpush1.msra.mxu0 %v132
  %555 = vmatprep.subr.mxu0 %v129
  %556 = vmatpush1.msra.mxu0 %v128
  %557 = vmatprep.subr.mxu0 %v125
  %558 = vmatpush1.msra.mxu0 %v124
  %559 = vmatprep.subr.mxu0 %v121
  %560 = vmatpush1.msra.mxu0 %v120
  %561 = vmatprep.subr.mxu0 %v117
  %562 = vmatpush1.msra.mxu0 %v116
  %563 = vmatprep.subr.mxu0 %v113
  %564 = vmatpush1.msra.mxu0 %v112
  %565 = vmatprep.subr.mxu0 %v109
  %566 = vmatpush1.msra.mxu0 %v108
  %567 = vmatprep.subr.mxu0 %v105
  %568 = vmatpush1.msra.mxu0 %v104
  %569 = vmatprep.subr.mxu0 %v101
  %570 = vmatpush1.msra.mxu0 %v100
  %571 = vmatprep.subr.mxu0 %v97
  %572 = vmatpush1.msra.mxu0 %v96
  %573 = vmatprep.subr.mxu0 %v93
  %574 = vmatpush1.msra.mxu0 %v92
  %575 = vmatprep.subr.mxu0 %v89
  %576 = vmatpush1.msra.mxu0 %v88
  %577 = vmatprep.subr.mxu0 %v85
  %578 = vmatpush1.msra.mxu0 %v84
  %579 = vmatprep.subr.mxu0 %v81
  %580 = vmatpush1.msra.mxu0 %v80
  %581 = vmatprep.subr.mxu0 %v77
  %582 = vmatpush1.msra.mxu0 %v76
  %583 = vmatprep.subr.mxu0 0.0
  %584 = vmatpush2.msra.mxu0 0.0
  %585 = vmatprep.subr.mxu0 0.0
  %586 = vmatpush2.msra.mxu0 0.0
  %587 = vmatprep.subr.mxu0 0.0
  %588 = vmatpush2.msra.mxu0 0.0
  %589 = vmatprep.subr.mxu0 0.0
  %590 = vmatpush2.msra.mxu0 0.0
  %591 = vmatprep.subr.mxu0 0.0
  %592 = vmatpush2.msra.mxu0 0.0
  %593 = vmatprep.subr.mxu0 0.0
  %594 = vmatpush2.msra.mxu0 0.0
  %595 = vmatprep.subr.mxu0 0.0
  %596 = vmatpush2.msra.mxu0 0.0
  %597 = vmatprep.subr.mxu0 0.0
  %598 = vmatpush2.msra.mxu0 0.0
  %599 = vmatprep.subr.mxu0 0.0
  %600 = vmatpush2.msra.mxu0 0.0
  %601 = vmatprep.subr.mxu0 0.0
  %602 = vmatpush2.msra.mxu0 0.0
  %603 = vmatprep.subr.mxu0 0.0
  %604 = vmatpush2.msra.mxu0 0.0
  %605 = vmatprep.subr.mxu0 0.0
  %606 = vmatpush2.msra.mxu0 0.0
  %607 = vmatprep.subr.mxu0 0.0
  %608 = vmatpush2.msra.mxu0 0.0
  %609 = vmatprep.subr.mxu0 0.0
  %610 = vmatpush2.msra.mxu0 0.0
  %611 = vmatprep.subr.mxu0 0.0
  %612 = vmatpush2.msra.mxu0 0.0
  %613 = vmatprep.subr.mxu0 0.0
  %614 = vmatpush2.msra.mxu0 0.0
  %615 = vmatprep.mubr.f32.mxu0 0.0
  %616 = vmatmul.mubr.f32.gmra.mxu0 %v479
  %v617 = vpop.f32.mrf.mxu0
  %v618 = vadd.f32 0.0, %v617
  %v619 = vpop.f32.mrf.mxu0
  %v620 = vadd.f32 0.0, %v619
  %621 = vdwg.mxu0
  %v624 = vrot.slane %v53, 7
  %v625 = vsel %vm284, %v624, %v52
  %v626 = vsel %vm286, %v625, 0
  %628 = vmatprep.subr.mxu0 0.0
  %629 = vmatpush1.msra.mxu0 0.0
  %630 = vmatprep.subr.mxu0 0.0
  %631 = vmatpush1.msra.mxu0 0.0
  %632 = vmatprep.subr.mxu0 0.0
  %633 = vmatpush1.msra.mxu0 0.0
  %634 = vmatprep.subr.mxu0 0.0
  %635 = vmatpush1.msra.mxu0 0.0
  %636 = vmatprep.subr.mxu0 0.0
  %637 = vmatpush1.msra.mxu0 0.0
  %638 = vmatprep.subr.mxu0 0.0
  %639 = vmatpush1.msra.mxu0 0.0
  %640 = vmatprep.subr.mxu0 0.0
  %641 = vmatpush1.msra.mxu0 0.0
  %642 = vmatprep.subr.mxu0 0.0
  %643 = vmatpush1.msra.mxu0 0.0
  %644 = vmatprep.subr.mxu0 0.0
  %645 = vmatpush1.msra.mxu0 0.0
  %646 = vmatprep.subr.mxu0 0.0
  %647 = vmatpush1.msra.mxu0 0.0
  %648 = vmatprep.subr.mxu0 0.0
  %649 = vmatpush1.msra.mxu0 0.0
  %650 = vmatprep.subr.mxu0 0.0
  %651 = vmatpush1.msra.mxu0 0.0
  %652 = vmatprep.subr.mxu0 0.0
  %653 = vmatpush1.msra.mxu0 0.0
  %654 = vmatprep.subr.mxu0 0.0
  %655 = vmatpush1.msra.mxu0 0.0
  %656 = vmatprep.subr.mxu0 %v71
  %657 = vmatpush1.msra.mxu0 %v70
  %658 = vmatprep.subr.mxu0 %v67
  %659 = vmatpush1.msra.mxu0 %v66
  %660 = vmatprep.subr.mxu0 0.0
  %661 = vmatpush2.msra.mxu0 0.0
  %662 = vmatprep.subr.mxu0 0.0
  %663 = vmatpush2.msra.mxu0 0.0
  %664 = vmatprep.subr.mxu0 0.0
  %665 = vmatpush2.msra.mxu0 0.0
  %666 = vmatprep.subr.mxu0 0.0
  %667 = vmatpush2.msra.mxu0 0.0
  %668 = vmatprep.subr.mxu0 0.0
  %669 = vmatpush2.msra.mxu0 0.0
  %670 = vmatprep.subr.mxu0 0.0
  %671 = vmatpush2.msra.mxu0 0.0
  %672 = vmatprep.subr.mxu0 0.0
  %673 = vmatpush2.msra.mxu0 0.0
  %674 = vmatprep.subr.mxu0 0.0
  %675 = vmatpush2.msra.mxu0 0.0
  %676 = vmatprep.subr.mxu0 0.0
  %677 = vmatpush2.msra.mxu0 0.0
  %678 = vmatprep.subr.mxu0 0.0
  %679 = vmatpush2.msra.mxu0 0.0
  %680 = vmatprep.subr.mxu0 0.0
  %681 = vmatpush2.msra.mxu0 0.0
  %682 = vmatprep.subr.mxu0 0.0
  %683 = vmatpush2.msra.mxu0 0.0
  %684 = vmatprep.subr.mxu0 0.0
  %685 = vmatpush2.msra.mxu0 0.0
  %686 = vmatprep.subr.mxu0 0.0
  %687 = vmatpush2.msra.mxu0 0.0
  %688 = vmatprep.subr.mxu0 0.0
  %689 = vmatpush2.msra.mxu0 0.0
  %690 = vmatprep.subr.mxu0 0.0
  %691 = vmatpush2.msra.mxu0 0.0
  %692 = vmatprep.mubr.f32.mxu0 0.0
  %693 = vmatmul.mubr.f32.gmra.mxu0 %v626
  %v694 = vpop.f32.mrf.mxu0
  %v695 = vadd.f32 %v547, %v694
  %v696 = vpop.f32.mrf.mxu0
  %v697 = vadd.f32 %v549, %v696
  %698 = vdwg.mxu0
  %699 = vmatprep.subr.mxu0 0.0
  %700 = vmatpush1.msra.mxu0 0.0
  %701 = vmatprep.subr.mxu0 0.0
  %702 = vmatpush1.msra.mxu0 0.0
  %703 = vmatprep.subr.mxu0 0.0
  %704 = vmatpush1.msra.mxu0 0.0
  %705 = vmatprep.subr.mxu0 0.0
  %706 = vmatpush1.msra.mxu0 0.0
  %707 = vmatprep.subr.mxu0 0.0
  %708 = vmatpush1.msra.mxu0 0.0
  %709 = vmatprep.subr.mxu0 0.0
  %710 = vmatpush1.msra.mxu0 0.0
  %711 = vmatprep.subr.mxu0 0.0
  %712 = vmatpush1.msra.mxu0 0.0
  %713 = vmatprep.subr.mxu0 0.0
  %714 = vmatpush1.msra.mxu0 0.0
  %715 = vmatprep.subr.mxu0 0.0
  %716 = vmatpush1.msra.mxu0 0.0
  %717 = vmatprep.subr.mxu0 0.0
  %718 = vmatpush1.msra.mxu0 0.0
  %719 = vmatprep.subr.mxu0 0.0
  %720 = vmatpush1.msra.mxu0 0.0
  %721 = vmatprep.subr.mxu0 0.0
  %722 = vmatpush1.msra.mxu0 0.0
  %723 = vmatprep.subr.mxu0 0.0
  %724 = vmatpush1.msra.mxu0 0.0
  %725 = vmatprep.subr.mxu0 0.0
  %726 = vmatpush1.msra.mxu0 0.0
  %727 = vmatprep.subr.mxu0 %v73
  %728 = vmatpush1.msra.mxu0 %v72
  %729 = vmatprep.subr.mxu0 %v69
  %730 = vmatpush1.msra.mxu0 %v68
  %731 = vmatprep.subr.mxu0 0.0
  %732 = vmatpush2.msra.mxu0 0.0
  %733 = vmatprep.subr.mxu0 0.0
  %734 = vmatpush2.msra.mxu0 0.0
  %735 = vmatprep.subr.mxu0 0.0
  %736 = vmatpush2.msra.mxu0 0.0
  %737 = vmatprep.subr.mxu0 0.0
  %738 = vmatpush2.msra.mxu0 0.0
  %739 = vmatprep.subr.mxu0 0.0
  %740 = vmatpush2.msra.mxu0 0.0
  %741 = vmatprep.subr.mxu0 0.0
  %742 = vmatpush2.msra.mxu0 0.0
  %743 = vmatprep.subr.mxu0 0.0
  %744 = vmatpush2.msra.mxu0 0.0
  %745 = vmatprep.subr.mxu0 0.0
  %746 = vmatpush2.msra.mxu0 0.0
  %747 = vmatprep.subr.mxu0 0.0
  %748 = vmatpush2.msra.mxu0 0.0
  %749 = vmatprep.subr.mxu0 0.0
  %750 = vmatpush2.msra.mxu0 0.0
  %751 = vmatprep.subr.mxu0 0.0
  %752 = vmatpush2.msra.mxu0 0.0
  %753 = vmatprep.subr.mxu0 0.0
  %754 = vmatpush2.msra.mxu0 0.0
  %755 = vmatprep.subr.mxu0 0.0
  %756 = vmatpush2.msra.mxu0 0.0
  %757 = vmatprep.subr.mxu0 0.0
  %758 = vmatpush2.msra.mxu0 0.0
  %759 = vmatprep.subr.mxu0 0.0
  %760 = vmatpush2.msra.mxu0 0.0
  %761 = vmatprep.subr.mxu0 0.0
  %762 = vmatpush2.msra.mxu0 0.0
  %763 = vmatprep.mubr.f32.mxu0 0.0
  %764 = vmatmul.mubr.f32.gmra.mxu0 %v626
  %v765 = vpop.f32.mrf.mxu0
  %v766 = vadd.f32 %v618, %v765
  %v767 = vpop.f32.mrf.mxu0
  %v768 = vadd.f32 %v620, %v767
  %769 = vdwg.mxu0
  %v770 = vadd.f32 %v695, %v435
  %v771 = vadd.f32 %v697, %v439
  %v772 = vadd.f32 %v766, %v443
  %v773 = vadd.f32 %v768, %v447
  %v774 = vxor.u32 %v770, 2147483648
  %v775 = vmul.f32 %v774, 1.442695
  %v776 = vpow.pop %v775
  %v777 = vadd.f32 %v776, 1.0
  %v778 = vrcp.pop %v777
  %v779 = vmul.f32 1.0, %v778
  %v780 = vxor.u32 %v771, 2147483648
  %v781 = vmul.f32 %v780, 1.442695
  %v782 = vpow.pop %v781
  %v783 = vadd.f32 %v782, 1.0
  %v784 = vrcp.pop %v783
  %v785 = vmul.f32 1.0, %v784
  %v786 = vtanh.pop %v772
  %v787 = vxor.u32 %v773, 2147483648
  %v788 = vmul.f32 %v787, 1.442695
  %v789 = vpow.pop %v788
  %v790 = vadd.f32 %v789, 1.0
  %v791 = vrcp.pop %v790
  %v792 = vmul.f32 1.0, %v791
  %v793 = vmul.f32 %v785, %v477
  %v794 = vmul.f32 %v779, %v786
  %v795 = vadd.f32 %v793, %v794
  %v796 = vtanh.pop %v795
  %v797 = vmul.f32 %v792, %v796
  %798 = vmatprep.subr.mxu0 %v135
  %799 = vmatpush1.msra.mxu0 %v134
  %800 = vmatprep.subr.mxu0 %v131
  %801 = vmatpush1.msra.mxu0 %v130
  %802 = vmatprep.subr.mxu0 %v127
  %803 = vmatpush1.msra.mxu0 %v126
  %804 = vmatprep.subr.mxu0 %v123
  %805 = vmatpush1.msra.mxu0 %v122
  %806 = vmatprep.subr.mxu0 %v119
  %807 = vmatpush1.msra.mxu0 %v118
  %808 = vmatprep.subr.mxu0 %v115
  %809 = vmatpush1.msra.mxu0 %v114
  %810 = vmatprep.subr.mxu0 %v111
  %811 = vmatpush1.msra.mxu0 %v110
  %812 = vmatprep.subr.mxu0 %v107
  %813 = vmatpush1.msra.mxu0 %v106
  %814 = vmatprep.subr.mxu0 %v103
  %815 = vmatpush1.msra.mxu0 %v102
  %816 = vmatprep.subr.mxu0 %v99
  %817 = vmatpush1.msra.mxu0 %v98
  %818 = vmatprep.subr.mxu0 %v95
  %819 = vmatpush1.msra.mxu0 %v94
  %820 = vmatprep.subr.mxu0 %v91
  %821 = vmatpush1.msra.mxu0 %v90
  %822 = vmatprep.subr.mxu0 %v87
  %823 = vmatpush1.msra.mxu0 %v86
  %824 = vmatprep.subr.mxu0 %v83
  %825 = vmatpush1.msra.mxu0 %v82
  %826 = vmatprep.subr.mxu0 %v79
  %827 = vmatpush1.msra.mxu0 %v78
  %828 = vmatprep.subr.mxu0 %v75
  %829 = vmatpush1.msra.mxu0 %v74
  %830 = vmatprep.subr.mxu0 0.0
  %831 = vmatpush2.msra.mxu0 0.0
  %832 = vmatprep.subr.mxu0 0.0
  %833 = vmatpush2.msra.mxu0 0.0
  %834 = vmatprep.subr.mxu0 0.0
  %835 = vmatpush2.msra.mxu0 0.0
  %836 = vmatprep.subr.mxu0 0.0
  %837 = vmatpush2.msra.mxu0 0.0
  %838 = vmatprep.subr.mxu0 0.0
  %839 = vmatpush2.msra.mxu0 0.0
  %840 = vmatprep.subr.mxu0 0.0
  %841 = vmatpush2.msra.mxu0 0.0
  %842 = vmatprep.subr.mxu0 0.0
  %843 = vmatpush2.msra.mxu0 0.0
  %844 = vmatprep.subr.mxu0 0.0
  %845 = vmatpush2.msra.mxu0 0.0
  %846 = vmatprep.subr.mxu0 0.0
  %847 = vmatpush2.msra.mxu0 0.0
  %848 = vmatprep.subr.mxu0 0.0
  %849 = vmatpush2.msra.mxu0 0.0
  %850 = vmatprep.subr.mxu0 0.0
  %851 = vmatpush2.msra.mxu0 0.0
  %852 = vmatprep.subr.mxu0 0.0
  %853 = vmatpush2.msra.mxu0 0.0
  %854 = vmatprep.subr.mxu0 0.0
  %855 = vmatpush2.msra.mxu0 0.0
  %856 = vmatprep.subr.mxu0 0.0
  %857 = vmatpush2.msra.mxu0 0.0
  %858 = vmatprep.subr.mxu0 0.0
  %859 = vmatpush2.msra.mxu0 0.0
  %860 = vmatprep.subr.mxu0 0.0
  %861 = vmatpush2.msra.mxu0 0.0
  %862 = vmatprep.mubr.f32.mxu0 0.0
  %863 = vmatmul.mubr.f32.gmra.mxu0 %v797
  %v864 = vpop.f32.mrf.mxu0
  %v865 = vadd.f32 0.0, %v864
  %v866 = vpop.f32.mrf.mxu0
  %v867 = vadd.f32 0.0, %v866
  %868 = vdwg.mxu0
  %869 = vmatprep.subr.mxu0 %v137
  %870 = vmatpush1.msra.mxu0 %v136
  %871 = vmatprep.subr.mxu0 %v133
  %872 = vmatpush1.msra.mxu0 %v132
  %873 = vmatprep.subr.mxu0 %v129
  %874 = vmatpush1.msra.mxu0 %v128
  %875 = vmatprep.subr.mxu0 %v125
  %876 = vmatpush1.msra.mxu0 %v124
  %877 = vmatprep.subr.mxu0 %v121
  %878 = vmatpush1.msra.mxu0 %v120
  %879 = vmatprep.subr.mxu0 %v117
  %880 = vmatpush1.msra.mxu0 %v116
  %881 = vmatprep.subr.mxu0 %v113
  %882 = vmatpush1.msra.mxu0 %v112
  %883 = vmatprep.subr.mxu0 %v109
  %884 = vmatpush1.msra.mxu0 %v108
  %885 = vmatprep.subr.mxu0 %v105
  %886 = vmatpush1.msra.mxu0 %v104
  %887 = vmatprep.subr.mxu0 %v101
  %888 = vmatpush1.msra.mxu0 %v100
  %889 = vmatprep.subr.mxu0 %v97
  %890 = vmatpush1.msra.mxu0 %v96
  %891 = vmatprep.subr.mxu0 %v93
  %892 = vmatpush1.msra.mxu0 %v92
  %893 = vmatprep.subr.mxu0 %v89
  %894 = vmatpush1.msra.mxu0 %v88
  %895 = vmatprep.subr.mxu0 %v85
  %896 = vmatpush1.msra.mxu0 %v84
  %897 = vmatprep.subr.mxu0 %v81
  %898 = vmatpush1.msra.mxu0 %v80
  %899 = vmatprep.subr.mxu0 %v77
  %900 = vmatpush1.msra.mxu0 %v76
  %901 = vmatprep.subr.mxu0 0.0
  %902 = vmatpush2.msra.mxu0 0.0
  %903 = vmatprep.subr.mxu0 0.0
  %904 = vmatpush2.msra.mxu0 0.0
  %905 = vmatprep.subr.mxu0 0.0
  %906 = vmatpush2.msra.mxu0 0.0
  %907 = vmatprep.subr.mxu0 0.0
  %908 = vmatpush2.msra.mxu0 0.0
  %909 = vmatprep.subr.mxu0 0.0
  %910 = vmatpush2.msra.mxu0 0.0
  %911 = vmatprep.subr.mxu0 0.0
  %912 = vmatpush2.msra.mxu0 0.0
  %913 = vmatprep.subr.mxu0 0.0
  %914 = vmatpush2.msra.mxu0 0.0
  %915 = vmatprep.subr.mxu0 0.0
  %916 = vmatpush2.msra.mxu0 0.0
  %917 = vmatprep.subr.mxu0 0.0
  %918 = vmatpush2.msra.mxu0 0.0
  %919 = vmatprep.subr.mxu0 0.0
  %920 = vmatpush2.msra.mxu0 0.0
  %921 = vmatprep.subr.mxu0 0.0
  %922 = vmatpush2.msra.mxu0 0.0
  %923 = vmatprep.subr.mxu0 0.0
  %924 = vmatpush2.msra.mxu0 0.0
  %925 = vmatprep.subr.mxu0 0.0
  %926 = vmatpush2.msra.mxu0 0.0
  %927 = vmatprep.subr.mxu0 0.0
  %928 = vmatpush2.msra.mxu0 0.0
  %929 = vmatprep.subr.mxu0 0.0
  %930 = vmatpush2.msra.mxu0 0.0
  %931 = vmatprep.subr.mxu0 0.0
  %932 = vmatpush2.msra.mxu0 0.0
  %933 = vmatprep.mubr.f32.mxu0 0.0
  %934 = vmatmul.mubr.f32.gmra.mxu0 %v797
  %v935 = vpop.f32.mrf.mxu0
  %v936 = vadd.f32 0.0, %v935
  %v937 = vpop.f32.mrf.mxu0
  %v938 = vadd.f32 0.0, %v937
  %939 = vdwg.mxu0
  %v942 = vrot.slane %v55, 7
  %v943 = vsel %vm284, %v942, %v54
  %v944 = vsel %vm286, %v943, 0
  %946 = vmatprep.subr.mxu0 0.0
  %947 = vmatpush1.msra.mxu0 0.0
  %948 = vmatprep.subr.mxu0 0.0
  %949 = vmatpush1.msra.mxu0 0.0
  %950 = vmatprep.subr.mxu0 0.0
  %951 = vmatpush1.msra.mxu0 0.0
  %952 = vmatprep.subr.mxu0 0.0
  %953 = vmatpush1.msra.mxu0 0.0
  %954 = vmatprep.subr.mxu0 0.0
  %955 = vmatpush1.msra.mxu0 0.0
  %956 = vmatprep.subr.mxu0 0.0
  %957 = vmatpush1.msra.mxu0 0.0
  %958 = vmatprep.subr.mxu0 0.0
  %959 = vmatpush1.msra.mxu0 0.0
  %960 = vmatprep.subr.mxu0 0.0
  %961 = vmatpush1.msra.mxu0 0.0
  %962 = vmatprep.subr.mxu0 0.0
  %963 = vmatpush1.msra.mxu0 0.0
  %964 = vmatprep.subr.mxu0 0.0
  %965 = vmatpush1.msra.mxu0 0.0
  %966 = vmatprep.subr.mxu0 0.0
  %967 = vmatpush1.msra.mxu0 0.0
  %968 = vmatprep.subr.mxu0 0.0
  %969 = vmatpush1.msra.mxu0 0.0
  %970 = vmatprep.subr.mxu0 0.0
  %971 = vmatpush1.msra.mxu0 0.0
  %972 = vmatprep.subr.mxu0 0.0
  %973 = vmatpush1.msra.mxu0 0.0
  %974 = vmatprep.subr.mxu0 %v71
  %975 = vmatpush1.msra.mxu0 %v70
  %976 = vmatprep.subr.mxu0 %v67
  %977 = vmatpush1.msra.mxu0 %v66
  %978 = vmatprep.subr.mxu0 0.0
  %979 = vmatpush2.msra.mxu0 0.0
  %980 = vmatprep.subr.mxu0 0.0
  %981 = vmatpush2.msra.mxu0 0.0
  %982 = vmatprep.subr.mxu0 0.0
  %983 = vmatpush2.msra.mxu0 0.0
  %984 = vmatprep.subr.mxu0 0.0
  %985 = vmatpush2.msra.mxu0 0.0
  %986 = vmatprep.subr.mxu0 0.0
  %987 = vmatpush2.msra.mxu0 0.0
  %988 = vmatprep.subr.mxu0 0.0
  %989 = vmatpush2.msra.mxu0 0.0
  %990 = vmatprep.subr.mxu0 0.0
  %991 = vmatpush2.msra.mxu0 0.0
  %992 = vmatprep.subr.mxu0 0.0
  %993 = vmatpush2.msra.mxu0 0.0
  %994 = vmatprep.subr.mxu0 0.0
  %995 = vmatpush2.msra.mxu0 0.0
  %996 = vmatprep.subr.mxu0 0.0
  %997 = vmatpush2.msra.mxu0 0.0
  %998 = vmatprep.subr.mxu0 0.0
  %999 = vmatpush2.msra.mxu0 0.0
  %1000 = vmatprep.subr.mxu0 0.0
  %1001 = vmatpush2.msra.mxu0 0.0
  %1002 = vmatprep.subr.mxu0 0.0
  %1003 = vmatpush2.msra.mxu0 0.0
  %1004 = vmatprep.subr.mxu0 0.0
  %1005 = vmatpush2.msra.mxu0 0.0
  %1006 = vmatprep.subr.mxu0 0.0
  %1007 = vmatpush2.msra.mxu0 0.0
  %1008 = vmatprep.subr.mxu0 0.0
  %1009 = vmatpush2.msra.mxu0 0.0
  %1010 = vmatprep.mubr.f32.mxu0 0.0
  %1011 = vmatmul.mubr.f32.gmra.mxu0 %v944
  %v1012 = vpop.f32.mrf.mxu0
  %v1013 = vadd.f32 %v865, %v1012
  %v1014 = vpop.f32.mrf.mxu0
  %v1015 = vadd.f32 %v867, %v1014
  %1016 = vdwg.mxu0
  %1017 = vmatprep.subr.mxu0 0.0
  %1018 = vmatpush1.msra.mxu0 0.0
  %1019 = vmatprep.subr.mxu0 0.0
  %1020 = vmatpush1.msra.mxu0 0.0
  %1021 = vmatprep.subr.mxu0 0.0
  %1022 = vmatpush1.msra.mxu0 0.0
  %1023 = vmatprep.subr.mxu0 0.0
  %1024 = vmatpush1.msra.mxu0 0.0
  %1025 = vmatprep.subr.mxu0 0.0
  %1026 = vmatpush1.msra.mxu0 0.0
  %1027 = vmatprep.subr.mxu0 0.0
  %1028 = vmatpush1.msra.mxu0 0.0
  %1029 = vmatprep.subr.mxu0 0.0
  %1030 = vmatpush1.msra.mxu0 0.0
  %1031 = vmatprep.subr.mxu0 0.0
  %1032 = vmatpush1.msra.mxu0 0.0
  %1033 = vmatprep.subr.mxu0 0.0
  %1034 = vmatpush1.msra.mxu0 0.0
  %1035 = vmatprep.subr.mxu0 0.0
  %1036 = vmatpush1.msra.mxu0 0.0
  %1037 = vmatprep.subr.mxu0 0.0
  %1038 = vmatpush1.msra.mxu0 0.0
  %1039 = vmatprep.subr.mxu0 0.0
  %1040 = vmatpush1.msra.mxu0 0.0
  %1041 = vmatprep.subr.mxu0 0.0
  %1042 = vmatpush1.msra.mxu0 0.0
  %1043 = vmatprep.subr.mxu0 0.0
  %1044 = vmatpush1.msra.mxu0 0.0
  %1045 = vmatprep.subr.mxu0 %v73
  %1046 = vmatpush1.msra.mxu0 %v72
  %1047 = vmatprep.subr.mxu0 %v69
  %1048 = vmatpush1.msra.mxu0 %v68
  %1049 = vmatprep.subr.mxu0 0.0
  %1050 = vmatpush2.msra.mxu0 0.0
  %1051 = vmatprep.subr.mxu0 0.0
  %1052 = vmatpush2.msra.mxu0 0.0
  %1053 = vmatprep.subr.mxu0 0.0
  %1054 = vmatpush2.msra.mxu0 0.0
  %1055 = vmatprep.subr.mxu0 0.0
  %1056 = vmatpush2.msra.mxu0 0.0
  %1057 = vmatprep.subr.mxu0 0.0
  %1058 = vmatpush2.msra.mxu0 0.0
  %1059 = vmatprep.subr.mxu0 0.0
  %1060 = vmatpush2.msra.mxu0 0.0
  %1061 = vmatprep.subr.mxu0 0.0
  %1062 = vmatpush2.msra.mxu0 0.0
  %1063 = vmatprep.subr.mxu0 0.0
  %1064 = vmatpush2.msra.mxu0 0.0
  %1065 = vmatprep.subr.mxu0 0.0
  %1066 = vmatpush2.msra.mxu0 0.0
  %1067 = vmatprep.subr.mxu0 0.0
  %1068 = vmatpush2.msra.mxu0 0.0
  %1069 = vmatprep.subr.mxu0 0.0
  %1070 = vmatpush2.msra.mxu0 0.0
  %1071 = vmatprep.subr.mxu0 0.0
  %1072 = vmatpush2.msra.mxu0 0.0
  %1073 = vmatprep.subr.mxu0 0.0
  %1074 = vmatpush2.msra.mxu0 0.0
  %1075 = vmatprep.subr.mxu0 0.0
  %1076 = vmatpush2.msra.mxu0 0.0
  %1077 = vmatprep.subr.mxu0 0.0
  %1078 = vmatpush2.msra.mxu0 0.0
  %1079 = vmatprep.subr.mxu0 0.0
  %1080 = vmatpush2.msra.mxu0 0.0
  %1081 = vmatprep.mubr.f32.mxu0 0.0
  %1082 = vmatmul.mubr.f32.gmra.mxu0 %v944
  %v1083 = vpop.f32.mrf.mxu0
  %v1084 = vadd.f32 %v936, %v1083
  %v1085 = vpop.f32.mrf.mxu0
  %v1086 = vadd.f32 %v938, %v1085
  %1087 = vdwg.mxu0
  %v1088 = vadd.f32 %v1013, %v435
  %v1089 = vadd.f32 %v1015, %v439
  %v1090 = vadd.f32 %v1084, %v443
  %v1091 = vadd.f32 %v1086, %v447
  %v1092 = vxor.u32 %v1088, 2147483648
  %v1093 = vmul.f32 %v1092, 1.442695
  %v1094 = vpow.pop %v1093
  %v1095 = vadd.f32 %v1094, 1.0
  %v1096 = vrcp.pop %v1095
  %v1097 = vmul.f32 1.0, %v1096
  %v1098 = vxor.u32 %v1089, 2147483648
  %v1099 = vmul.f32 %v1098, 1.442695
  %v1100 = vpow.pop %v1099
  %v1101 = vadd.f32 %v1100, 1.0
  %v1102 = vrcp.pop %v1101
  %v1103 = vmul.f32 1.0, %v1102
  %v1104 = vtanh.pop %v1090
  %v1105 = vxor.u32 %v1091, 2147483648
  %v1106 = vmul.f32 %v1105, 1.442695
  %v1107 = vpow.pop %v1106
  %v1108 = vadd.f32 %v1107, 1.0
  %v1109 = vrcp.pop %v1108
  %v1110 = vmul.f32 1.0, %v1109
  %v1111 = vmul.f32 %v1103, %v795
  %v1112 = vmul.f32 %v1097, %v1104
  %v1113 = vadd.f32 %v1111, %v1112
  %v1114 = vtanh.pop %v1113
  %v1115 = vmul.f32 %v1110, %v1114
  %1116 = vmatprep.subr.mxu0 %v135
  %1117 = vmatpush1.msra.mxu0 %v134
  %1118 = vmatprep.subr.mxu0 %v131
  %1119 = vmatpush1.msra.mxu0 %v130
  %1120 = vmatprep.subr.mxu0 %v127
  %1121 = vmatpush1.msra.mxu0 %v126
  %1122 = vmatprep.subr.mxu0 %v123
  %1123 = vmatpush1.msra.mxu0 %v122
  %1124 = vmatprep.subr.mxu0 %v119
  %1125 = vmatpush1.msra.mxu0 %v118
  %1126 = vmatprep.subr.mxu0 %v115
  %1127 = vmatpush1.msra.mxu0 %v114
  %1128 = vmatprep.subr.mxu0 %v111
  %1129 = vmatpush1.msra.mxu0 %v110
  %1130 = vmatprep.subr.mxu0 %v107
  %1131 = vmatpush1.msra.mxu0 %v106
  %1132 = vmatprep.subr.mxu0 %v103
  %1133 = vmatpush1.msra.mxu0 %v102
  %1134 = vmatprep.subr.mxu0 %v99
  %1135 = vmatpush1.msra.mxu0 %v98
  %1136 = vmatprep.subr.mxu0 %v95
  %1137 = vmatpush1.msra.mxu0 %v94
  %1138 = vmatprep.subr.mxu0 %v91
  %1139 = vmatpush1.msra.mxu0 %v90
  %1140 = vmatprep.subr.mxu0 %v87
  %1141 = vmatpush1.msra.mxu0 %v86
  %1142 = vmatprep.subr.mxu0 %v83
  %1143 = vmatpush1.msra.mxu0 %v82
  %1144 = vmatprep.subr.mxu0 %v79
  %1145 = vmatpush1.msra.mxu0 %v78
  %1146 = vmatprep.subr.mxu0 %v75
  %1147 = vmatpush1.msra.mxu0 %v74
  %1148 = vmatprep.subr.mxu0 0.0
  %1149 = vmatpush2.msra.mxu0 0.0
  %1150 = vmatprep.subr.mxu0 0.0
  %1151 = vmatpush2.msra.mxu0 0.0
  %1152 = vmatprep.subr.mxu0 0.0
  %1153 = vmatpush2.msra.mxu0 0.0
  %1154 = vmatprep.subr.mxu0 0.0
  %1155 = vmatpush2.msra.mxu0 0.0
  %1156 = vmatprep.subr.mxu0 0.0
  %1157 = vmatpush2.msra.mxu0 0.0
  %1158 = vmatprep.subr.mxu0 0.0
  %1159 = vmatpush2.msra.mxu0 0.0
  %1160 = vmatprep.subr.mxu0 0.0
  %1161 = vmatpush2.msra.mxu0 0.0
  %1162 = vmatprep.subr.mxu0 0.0
  %1163 = vmatpush2.msra.mxu0 0.0
  %1164 = vmatprep.subr.mxu0 0.0
  %1165 = vmatpush2.msra.mxu0 0.0
  %1166 = vmatprep.subr.mxu0 0.0
  %1167 = vmatpush2.msra.mxu0 0.0
  %1168 = vmatprep.subr.mxu0 0.0
  %1169 = vmatpush2.msra.mxu0 0.0
  %1170 = vmatprep.subr.mxu0 0.0
  %1171 = vmatpush2.msra.mxu0 0.0
  %1172 = vmatprep.subr.mxu0 0.0
  %1173 = vmatpush2.msra.mxu0 0.0
  %1174 = vmatprep.subr.mxu0 0.0
  %1175 = vmatpush2.msra.mxu0 0.0
  %1176 = vmatprep.subr.mxu0 0.0
  %1177 = vmatpush2.msra.mxu0 0.0
  %1178 = vmatprep.subr.mxu0 0.0
  %1179 = vmatpush2.msra.mxu0 0.0
  %1180 = vmatprep.mubr.f32.mxu0 0.0
  %1181 = vmatmul.mubr.f32.gmra.mxu0 %v1115
  %v1182 = vpop.f32.mrf.mxu0
  %v1183 = vadd.f32 0.0, %v1182
  %v1184 = vpop.f32.mrf.mxu0
  %v1185 = vadd.f32 0.0, %v1184
  %1186 = vdwg.mxu0
  %1187 = vmatprep.subr.mxu0 %v137
  %1188 = vmatpush1.msra.mxu0 %v136
  %1189 = vmatprep.subr.mxu0 %v133
  %1190 = vmatpush1.msra.mxu0 %v132
  %1191 = vmatprep.subr.mxu0 %v129
  %1192 = vmatpush1.msra.mxu0 %v128
  %1193 = vmatprep.subr.mxu0 %v125
  %1194 = vmatpush1.msra.mxu0 %v124
  %1195 = vmatprep.subr.mxu0 %v121
  %1196 = vmatpush1.msra.mxu0 %v120
  %1197 = vmatprep.subr.mxu0 %v117
  %1198 = vmatpush1.msra.mxu0 %v116
  %1199 = vmatprep.subr.mxu0 %v113
  %1200 = vmatpush1.msra.mxu0 %v112
  %1201 = vmatprep.subr.mxu0 %v109
  %1202 = vmatpush1.msra.mxu0 %v108
  %1203 = vmatprep.subr.mxu0 %v105
  %1204 = vmatpush1.msra.mxu0 %v104
  %1205 = vmatprep.subr.mxu0 %v101
  %1206 = vmatpush1.msra.mxu0 %v100
  %1207 = vmatprep.subr.mxu0 %v97
  %1208 = vmatpush1.msra.mxu0 %v96
  %1209 = vmatprep.subr.mxu0 %v93
  %1210 = vmatpush1.msra.mxu0 %v92
  %1211 = vmatprep.subr.mxu0 %v89
  %1212 = vmatpush1.msra.mxu0 %v88
  %1213 = vmatprep.subr.mxu0 %v85
  %1214 = vmatpush1.msra.mxu0 %v84
  %1215 = vmatprep.subr.mxu0 %v81
  %1216 = vmatpush1.msra.mxu0 %v80
  %1217 = vmatprep.subr.mxu0 %v77
  %1218 = vmatpush1.msra.mxu0 %v76
  %1219 = vmatprep.subr.mxu0 0.0
  %1220 = vmatpush2.msra.mxu0 0.0
  %1221 = vmatprep.subr.mxu0 0.0
  %1222 = vmatpush2.msra.mxu0 0.0
  %1223 = vmatprep.subr.mxu0 0.0
  %1224 = vmatpush2.msra.mxu0 0.0
  %1225 = vmatprep.subr.mxu0 0.0
  %1226 = vmatpush2.msra.mxu0 0.0
  %1227 = vmatprep.subr.mxu0 0.0
  %1228 = vmatpush2.msra.mxu0 0.0
  %1229 = vmatprep.subr.mxu0 0.0
  %1230 = vmatpush2.msra.mxu0 0.0
  %1231 = vmatprep.subr.mxu0 0.0
  %1232 = vmatpush2.msra.mxu0 0.0
  %1233 = vmatprep.subr.mxu0 0.0
  %1234 = vmatpush2.msra.mxu0 0.0
  %1235 = vmatprep.subr.mxu0 0.0
  %1236 = vmatpush2.msra.mxu0 0.0
  %1237 = vmatprep.subr.mxu0 0.0
  %1238 = vmatpush2.msra.mxu0 0.0
  %1239 = vmatprep.subr.mxu0 0.0
  %1240 = vmatpush2.msra.mxu0 0.0
  %1241 = vmatprep.subr.mxu0 0.0
  %1242 = vmatpush2.msra.mxu0 0.0
  %1243 = vmatprep.subr.mxu0 0.0
  %1244 = vmatpush2.msra.mxu0 0.0
  %1245 = vmatprep.subr.mxu0 0.0
  %1246 = vmatpush2.msra.mxu0 0.0
  %1247 = vmatprep.subr.mxu0 0.0
  %1248 = vmatpush2.msra.mxu0 0.0
  %1249 = vmatprep.subr.mxu0 0.0
  %1250 = vmatpush2.msra.mxu0 0.0
  %1251 = vmatprep.mubr.f32.mxu0 0.0
  %1252 = vmatmul.mubr.f32.gmra.mxu0 %v1115
  %v1253 = vpop.f32.mrf.mxu0
  %v1254 = vadd.f32 0.0, %v1253
  %v1255 = vpop.f32.mrf.mxu0
  %v1256 = vadd.f32 0.0, %v1255
  %1257 = vdwg.mxu0
  %v1260 = vrot.slane %v57, 7
  %v1261 = vsel %vm284, %v1260, %v56
  %v1262 = vsel %vm286, %v1261, 0
  %1264 = vmatprep.subr.mxu0 0.0
  %1265 = vmatpush1.msra.mxu0 0.0
  %1266 = vmatprep.subr.mxu0 0.0
  %1267 = vmatpush1.msra.mxu0 0.0
  %1268 = vmatprep.subr.mxu0 0.0
  %1269 = vmatpush1.msra.mxu0 0.0
  %1270 = vmatprep.subr.mxu0 0.0
  %1271 = vmatpush1.msra.mxu0 0.0
  %1272 = vmatprep.subr.mxu0 0.0
  %1273 = vmatpush1.msra.mxu0 0.0
  %1274 = vmatprep.subr.mxu0 0.0
  %1275 = vmatpush1.msra.mxu0 0.0
  %1276 = vmatprep.subr.mxu0 0.0
  %1277 = vmatpush1.msra.mxu0 0.0
  %1278 = vmatprep.subr.mxu0 0.0
  %1279 = vmatpush1.msra.mxu0 0.0
  %1280 = vmatprep.subr.mxu0 0.0
  %1281 = vmatpush1.msra.mxu0 0.0
  %1282 = vmatprep.subr.mxu0 0.0
  %1283 = vmatpush1.msra.mxu0 0.0
  %1284 = vmatprep.subr.mxu0 0.0
  %1285 = vmatpush1.msra.mxu0 0.0
  %1286 = vmatprep.subr.mxu0 0.0
  %1287 = vmatpush1.msra.mxu0 0.0
  %1288 = vmatprep.subr.mxu0 0.0
  %1289 = vmatpush1.msra.mxu0 0.0
  %1290 = vmatprep.subr.mxu0 0.0
  %1291 = vmatpush1.msra.mxu0 0.0
  %1292 = vmatprep.subr.mxu0 %v71
  %1293 = vmatpush1.msra.mxu0 %v70
  %1294 = vmatprep.subr.mxu0 %v67
  %1295 = vmatpush1.msra.mxu0 %v66
  %1296 = vmatprep.subr.mxu0 0.0
  %1297 = vmatpush2.msra.mxu0 0.0
  %1298 = vmatprep.subr.mxu0 0.0
  %1299 = vmatpush2.msra.mxu0 0.0
  %1300 = vmatprep.subr.mxu0 0.0
  %1301 = vmatpush2.msra.mxu0 0.0
  %1302 = vmatprep.subr.mxu0 0.0
  %1303 = vmatpush2.msra.mxu0 0.0
  %1304 = vmatprep.subr.mxu0 0.0
  %1305 = vmatpush2.msra.mxu0 0.0
  %1306 = vmatprep.subr.mxu0 0.0
  %1307 = vmatpush2.msra.mxu0 0.0
  %1308 = vmatprep.subr.mxu0 0.0
  %1309 = vmatpush2.msra.mxu0 0.0
  %1310 = vmatprep.subr.mxu0 0.0
  %1311 = vmatpush2.msra.mxu0 0.0
  %1312 = vmatprep.subr.mxu0 0.0
  %1313 = vmatpush2.msra.mxu0 0.0
  %1314 = vmatprep.subr.mxu0 0.0
  %1315 = vmatpush2.msra.mxu0 0.0
  %1316 = vmatprep.subr.mxu0 0.0
  %1317 = vmatpush2.msra.mxu0 0.0
  %1318 = vmatprep.subr.mxu0 0.0
  %1319 = vmatpush2.msra.mxu0 0.0
  %1320 = vmatprep.subr.mxu0 0.0
  %1321 = vmatpush2.msra.mxu0 0.0
  %1322 = vmatprep.subr.mxu0 0.0
  %1323 = vmatpush2.msra.mxu0 0.0
  %1324 = vmatprep.subr.mxu0 0.0
  %1325 = vmatpush2.msra.mxu0 0.0
  %1326 = vmatprep.subr.mxu0 0.0
  %1327 = vmatpush2.msra.mxu0 0.0
  %1328 = vmatprep.mubr.f32.mxu0 0.0
  %1329 = vmatmul.mubr.f32.gmra.mxu0 %v1262
  %v1330 = vpop.f32.mrf.mxu0
  %v1331 = vadd.f32 %v1183, %v1330
  %v1332 = vpop.f32.mrf.mxu0
  %v1333 = vadd.f32 %v1185, %v1332
  %1334 = vdwg.mxu0
  %1335 = vmatprep.subr.mxu0 0.0
  %1336 = vmatpush1.msra.mxu0 0.0
  %1337 = vmatprep.subr.mxu0 0.0
  %1338 = vmatpush1.msra.mxu0 0.0
  %1339 = vmatprep.subr.mxu0 0.0
  %1340 = vmatpush1.msra.mxu0 0.0
  %1341 = vmatprep.subr.mxu0 0.0
  %1342 = vmatpush1.msra.mxu0 0.0
  %1343 = vmatprep.subr.mxu0 0.0
  %1344 = vmatpush1.msra.mxu0 0.0
  %1345 = vmatprep.subr.mxu0 0.0
  %1346 = vmatpush1.msra.mxu0 0.0
  %1347 = vmatprep.subr.mxu0 0.0
  %1348 = vmatpush1.msra.mxu0 0.0
  %1349 = vmatprep.subr.mxu0 0.0
  %1350 = vmatpush1.msra.mxu0 0.0
  %1351 = vmatprep.subr.mxu0 0.0
  %1352 = vmatpush1.msra.mxu0 0.0
  %1353 = vmatprep.subr.mxu0 0.0
  %1354 = vmatpush1.msra.mxu0 0.0
  %1355 = vmatprep.subr.mxu0 0.0
  %1356 = vmatpush1.msra.mxu0 0.0
  %1357 = vmatprep.subr.mxu0 0.0
  %1358 = vmatpush1.msra.mxu0 0.0
  %1359 = vmatprep.subr.mxu0 0.0
  %1360 = vmatpush1.msra.mxu0 0.0
  %1361 = vmatprep.subr.mxu0 0.0
  %1362 = vmatpush1.msra.mxu0 0.0
  %1363 = vmatprep.subr.mxu0 %v73
  %1364 = vmatpush1.msra.mxu0 %v72
  %1365 = vmatprep.subr.mxu0 %v69
  %1366 = vmatpush1.msra.mxu0 %v68
  %1367 = vmatprep.subr.mxu0 0.0
  %1368 = vmatpush2.msra.mxu0 0.0
  %1369 = vmatprep.subr.mxu0 0.0
  %1370 = vmatpush2.msra.mxu0 0.0
  %1371 = vmatprep.subr.mxu0 0.0
  %1372 = vmatpush2.msra.mxu0 0.0
  %1373 = vmatprep.subr.mxu0 0.0
  %1374 = vmatpush2.msra.mxu0 0.0
  %1375 = vmatprep.subr.mxu0 0.0
  %1376 = vmatpush2.msra.mxu0 0.0
  %1377 = vmatprep.subr.mxu0 0.0
  %1378 = vmatpush2.msra.mxu0 0.0
  %1379 = vmatprep.subr.mxu0 0.0
  %1380 = vmatpush2.msra.mxu0 0.0
  %1381 = vmatprep.subr.mxu0 0.0
  %1382 = vmatpush2.msra.mxu0 0.0
  %1383 = vmatprep.subr.mxu0 0.0
  %1384 = vmatpush2.msra.mxu0 0.0
  %1385 = vmatprep.subr.mxu0 0.0
  %1386 = vmatpush2.msra.mxu0 0.0
  %1387 = vmatprep.subr.mxu0 0.0
  %1388 = vmatpush2.msra.mxu0 0.0
  %1389 = vmatprep.subr.mxu0 0.0
  %1390 = vmatpush2.msra.mxu0 0.0
  %1391 = vmatprep.subr.mxu0 0.0
  %1392 = vmatpush2.msra.mxu0 0.0
  %1393 = vmatprep.subr.mxu0 0.0
  %1394 = vmatpush2.msra.mxu0 0.0
  %1395 = vmatprep.subr.mxu0 0.0
  %1396 = vmatpush2.msra.mxu0 0.0
  %1397 = vmatprep.subr.mxu0 0.0
  %1398 = vmatpush2.msra.mxu0 0.0
  %1399 = vmatprep.mubr.f32.mxu0 0.0
  %1400 = vmatmul.mubr.f32.gmra.mxu0 %v1262
  %v1401 = vpop.f32.mrf.mxu0
  %v1402 = vadd.f32 %v1254, %v1401
  %v1403 = vpop.f32.mrf.mxu0
  %v1404 = vadd.f32 %v1256, %v1403
  %1405 = vdwg.mxu0
  %v1406 = vadd.f32 %v1331, %v435
  %v1407 = vadd.f32 %v1333, %v439
  %v1408 = vadd.f32 %v1402, %v443
  %v1409 = vadd.f32 %v1404, %v447
  %v1410 = vxor.u32 %v1406, 2147483648
  %v1411 = vmul.f32 %v1410, 1.442695
  %v1412 = vpow.pop %v1411
  %v1413 = vadd.f32 %v1412, 1.0
  %v1414 = vrcp.pop %v1413
  %v1415 = vmul.f32 1.0, %v1414
  %v1416 = vxor.u32 %v1407, 2147483648
  %v1417 = vmul.f32 %v1416, 1.442695
  %v1418 = vpow.pop %v1417
  %v1419 = vadd.f32 %v1418, 1.0
  %v1420 = vrcp.pop %v1419
  %v1421 = vmul.f32 1.0, %v1420
  %v1422 = vtanh.pop %v1408
  %v1423 = vxor.u32 %v1409, 2147483648
  %v1424 = vmul.f32 %v1423, 1.442695
  %v1425 = vpow.pop %v1424
  %v1426 = vadd.f32 %v1425, 1.0
  %v1427 = vrcp.pop %v1426
  %v1428 = vmul.f32 1.0, %v1427
  %v1429 = vmul.f32 %v1421, %v1113
  %v1430 = vmul.f32 %v1415, %v1422
  %v1431 = vadd.f32 %v1429, %v1430
  %v1432 = vtanh.pop %v1431
  %v1433 = vmul.f32 %v1428, %v1432
  %1434 = vmatprep.subr.mxu0 %v135
  %1435 = vmatpush1.msra.mxu0 %v134
  %1436 = vmatprep.subr.mxu0 %v131
  %1437 = vmatpush1.msra.mxu0 %v130
  %1438 = vmatprep.subr.mxu0 %v127
  %1439 = vmatpush1.msra.mxu0 %v126
  %1440 = vmatprep.subr.mxu0 %v123
  %1441 = vmatpush1.msra.mxu0 %v122
  %1442 = vmatprep.subr.mxu0 %v119
  %1443 = vmatpush1.msra.mxu0 %v118
  %1444 = vmatprep.subr.mxu0 %v115
  %1445 = vmatpush1.msra.mxu0 %v114
  %1446 = vmatprep.subr.mxu0 %v111
  %1447 = vmatpush1.msra.mxu0 %v110
  %1448 = vmatprep.subr.mxu0 %v107
  %1449 = vmatpush1.msra.mxu0 %v106
  %1450 = vmatprep.subr.mxu0 %v103
  %1451 = vmatpush1.msra.mxu0 %v102
  %1452 = vmatprep.subr.mxu0 %v99
  %1453 = vmatpush1.msra.mxu0 %v98
  %1454 = vmatprep.subr.mxu0 %v95
  %1455 = vmatpush1.msra.mxu0 %v94
  %1456 = vmatprep.subr.mxu0 %v91
  %1457 = vmatpush1.msra.mxu0 %v90
  %1458 = vmatprep.subr.mxu0 %v87
  %1459 = vmatpush1.msra.mxu0 %v86
  %1460 = vmatprep.subr.mxu0 %v83
  %1461 = vmatpush1.msra.mxu0 %v82
  %1462 = vmatprep.subr.mxu0 %v79
  %1463 = vmatpush1.msra.mxu0 %v78
  %1464 = vmatprep.subr.mxu0 %v75
  %1465 = vmatpush1.msra.mxu0 %v74
  %1466 = vmatprep.subr.mxu0 0.0
  %1467 = vmatpush2.msra.mxu0 0.0
  %1468 = vmatprep.subr.mxu0 0.0
  %1469 = vmatpush2.msra.mxu0 0.0
  %1470 = vmatprep.subr.mxu0 0.0
  %1471 = vmatpush2.msra.mxu0 0.0
  %1472 = vmatprep.subr.mxu0 0.0
  %1473 = vmatpush2.msra.mxu0 0.0
  %1474 = vmatprep.subr.mxu0 0.0
  %1475 = vmatpush2.msra.mxu0 0.0
  %1476 = vmatprep.subr.mxu0 0.0
  %1477 = vmatpush2.msra.mxu0 0.0
  %1478 = vmatprep.subr.mxu0 0.0
  %1479 = vmatpush2.msra.mxu0 0.0
  %1480 = vmatprep.subr.mxu0 0.0
  %1481 = vmatpush2.msra.mxu0 0.0
  %1482 = vmatprep.subr.mxu0 0.0
  %1483 = vmatpush2.msra.mxu0 0.0
  %1484 = vmatprep.subr.mxu0 0.0
  %1485 = vmatpush2.msra.mxu0 0.0
  %1486 = vmatprep.subr.mxu0 0.0
  %1487 = vmatpush2.msra.mxu0 0.0
  %1488 = vmatprep.subr.mxu0 0.0
  %1489 = vmatpush2.msra.mxu0 0.0
  %1490 = vmatprep.subr.mxu0 0.0
  %1491 = vmatpush2.msra.mxu0 0.0
  %1492 = vmatprep.subr.mxu0 0.0
  %1493 = vmatpush2.msra.mxu0 0.0
  %1494 = vmatprep.subr.mxu0 0.0
  %1495 = vmatpush2.msra.mxu0 0.0
  %1496 = vmatprep.subr.mxu0 0.0
  %1497 = vmatpush2.msra.mxu0 0.0
  %1498 = vmatprep.mubr.f32.mxu0 0.0
  %1499 = vmatmul.mubr.f32.gmra.mxu0 %v1433
  %v1500 = vpop.f32.mrf.mxu0
  %v1501 = vadd.f32 0.0, %v1500
  %v1502 = vpop.f32.mrf.mxu0
  %v1503 = vadd.f32 0.0, %v1502
  %1504 = vdwg.mxu0
  %1505 = vmatprep.subr.mxu0 %v137
  %1506 = vmatpush1.msra.mxu0 %v136
  %1507 = vmatprep.subr.mxu0 %v133
  %1508 = vmatpush1.msra.mxu0 %v132
  %1509 = vmatprep.subr.mxu0 %v129
  %1510 = vmatpush1.msra.mxu0 %v128
  %1511 = vmatprep.subr.mxu0 %v125
  %1512 = vmatpush1.msra.mxu0 %v124
  %1513 = vmatprep.subr.mxu0 %v121
  %1514 = vmatpush1.msra.mxu0 %v120
  %1515 = vmatprep.subr.mxu0 %v117
  %1516 = vmatpush1.msra.mxu0 %v116
  %1517 = vmatprep.subr.mxu0 %v113
  %1518 = vmatpush1.msra.mxu0 %v112
  %1519 = vmatprep.subr.mxu0 %v109
  %1520 = vmatpush1.msra.mxu0 %v108
  %1521 = vmatprep.subr.mxu0 %v105
  %1522 = vmatpush1.msra.mxu0 %v104
  %1523 = vmatprep.subr.mxu0 %v101
  %1524 = vmatpush1.msra.mxu0 %v100
  %1525 = vmatprep.subr.mxu0 %v97
  %1526 = vmatpush1.msra.mxu0 %v96
  %1527 = vmatprep.subr.mxu0 %v93
  %1528 = vmatpush1.msra.mxu0 %v92
  %1529 = vmatprep.subr.mxu0 %v89
  %1530 = vmatpush1.msra.mxu0 %v88
  %1531 = vmatprep.subr.mxu0 %v85
  %1532 = vmatpush1.msra.mxu0 %v84
  %1533 = vmatprep.subr.mxu0 %v81
  %1534 = vmatpush1.msra.mxu0 %v80
  %1535 = vmatprep.subr.mxu0 %v77
  %1536 = vmatpush1.msra.mxu0 %v76
  %1537 = vmatprep.subr.mxu0 0.0
  %1538 = vmatpush2.msra.mxu0 0.0
  %1539 = vmatprep.subr.mxu0 0.0
  %1540 = vmatpush2.msra.mxu0 0.0
  %1541 = vmatprep.subr.mxu0 0.0
  %1542 = vmatpush2.msra.mxu0 0.0
  %1543 = vmatprep.subr.mxu0 0.0
  %1544 = vmatpush2.msra.mxu0 0.0
  %1545 = vmatprep.subr.mxu0 0.0
  %1546 = vmatpush2.msra.mxu0 0.0
  %1547 = vmatprep.subr.mxu0 0.0
  %1548 = vmatpush2.msra.mxu0 0.0
  %1549 = vmatprep.subr.mxu0 0.0
  %1550 = vmatpush2.msra.mxu0 0.0
  %1551 = vmatprep.subr.mxu0 0.0
  %1552 = vmatpush2.msra.mxu0 0.0
  %1553 = vmatprep.subr.mxu0 0.0
  %1554 = vmatpush2.msra.mxu0 0.0
  %1555 = vmatprep.subr.mxu0 0.0
  %1556 = vmatpush2.msra.mxu0 0.0
  %1557 = vmatprep.subr.mxu0 0.0
  %1558 = vmatpush2.msra.mxu0 0.0
  %1559 = vmatprep.subr.mxu0 0.0
  %1560 = vmatpush2.msra.mxu0 0.0
  %1561 = vmatprep.subr.mxu0 0.0
  %1562 = vmatpush2.msra.mxu0 0.0
  %1563 = vmatprep.subr.mxu0 0.0
  %1564 = vmatpush2.msra.mxu0 0.0
  %1565 = vmatprep.subr.mxu0 0.0
  %1566 = vmatpush2.msra.mxu0 0.0
  %1567 = vmatprep.subr.mxu0 0.0
  %1568 = vmatpush2.msra.mxu0 0.0
  %1569 = vmatprep.mubr.f32.mxu0 0.0
  %1570 = vmatmul.mubr.f32.gmra.mxu0 %v1433
  %v1571 = vpop.f32.mrf.mxu0
  %v1572 = vadd.f32 0.0, %v1571
  %v1573 = vpop.f32.mrf.mxu0
  %v1574 = vadd.f32 0.0, %v1573
  %1575 = vdwg.mxu0
  %v1578 = vrot.slane %v59, 7
  %v1579 = vsel %vm284, %v1578, %v58
  %v1580 = vsel %vm286, %v1579, 0
  %1582 = vmatprep.subr.mxu0 0.0
  %1583 = vmatpush1.msra.mxu0 0.0
  %1584 = vmatprep.subr.mxu0 0.0
  %1585 = vmatpush1.msra.mxu0 0.0
  %1586 = vmatprep.subr.mxu0 0.0
  %1587 = vmatpush1.msra.mxu0 0.0
  %1588 = vmatprep.subr.mxu0 0.0
  %1589 = vmatpush1.msra.mxu0 0.0
  %1590 = vmatprep.subr.mxu0 0.0
  %1591 = vmatpush1.msra.mxu0 0.0
  %1592 = vmatprep.subr.mxu0 0.0
  %1593 = vmatpush1.msra.mxu0 0.0
  %1594 = vmatprep.subr.mxu0 0.0
  %1595 = vmatpush1.msra.mxu0 0.0
  %1596 = vmatprep.subr.mxu0 0.0
  %1597 = vmatpush1.msra.mxu0 0.0
  %1598 = vmatprep.subr.mxu0 0.0
  %1599 = vmatpush1.msra.mxu0 0.0
  %1600 = vmatprep.subr.mxu0 0.0
  %1601 = vmatpush1.msra.mxu0 0.0
  %1602 = vmatprep.subr.mxu0 0.0
  %1603 = vmatpush1.msra.mxu0 0.0
  %1604 = vmatprep.subr.mxu0 0.0
  %1605 = vmatpush1.msra.mxu0 0.0
  %1606 = vmatprep.subr.mxu0 0.0
  %1607 = vmatpush1.msra.mxu0 0.0
  %1608 = vmatprep.subr.mxu0 0.0
  %1609 = vmatpush1.msra.mxu0 0.0
  %1610 = vmatprep.subr.mxu0 %v71
  %1611 = vmatpush1.msra.mxu0 %v70
  %1612 = vmatprep.subr.mxu0 %v67
  %1613 = vmatpush1.msra.mxu0 %v66
  %1614 = vmatprep.subr.mxu0 0.0
  %1615 = vmatpush2.msra.mxu0 0.0
  %1616 = vmatprep.subr.mxu0 0.0
  %1617 = vmatpush2.msra.mxu0 0.0
  %1618 = vmatprep.subr.mxu0 0.0
  %1619 = vmatpush2.msra.mxu0 0.0
  %1620 = vmatprep.subr.mxu0 0.0
  %1621 = vmatpush2.msra.mxu0 0.0
  %1622 = vmatprep.subr.mxu0 0.0
  %1623 = vmatpush2.msra.mxu0 0.0
  %1624 = vmatprep.subr.mxu0 0.0
  %1625 = vmatpush2.msra.mxu0 0.0
  %1626 = vmatprep.subr.mxu0 0.0
  %1627 = vmatpush2.msra.mxu0 0.0
  %1628 = vmatprep.subr.mxu0 0.0
  %1629 = vmatpush2.msra.mxu0 0.0
  %1630 = vmatprep.subr.mxu0 0.0
  %1631 = vmatpush2.msra.mxu0 0.0
  %1632 = vmatprep.subr.mxu0 0.0
  %1633 = vmatpush2.msra.mxu0 0.0
  %1634 = vmatprep.subr.mxu0 0.0
  %1635 = vmatpush2.msra.mxu0 0.0
  %1636 = vmatprep.subr.mxu0 0.0
  %1637 = vmatpush2.msra.mxu0 0.0
  %1638 = vmatprep.subr.mxu0 0.0
  %1639 = vmatpush2.msra.mxu0 0.0
  %1640 = vmatprep.subr.mxu0 0.0
  %1641 = vmatpush2.msra.mxu0 0.0
  %1642 = vmatprep.subr.mxu0 0.0
  %1643 = vmatpush2.msra.mxu0 0.0
  %1644 = vmatprep.subr.mxu0 0.0
  %1645 = vmatpush2.msra.mxu0 0.0
  %1646 = vmatprep.mubr.f32.mxu0 0.0
  %1647 = vmatmul.mubr.f32.gmra.mxu0 %v1580
  %v1648 = vpop.f32.mrf.mxu0
  %v1649 = vadd.f32 %v1501, %v1648
  %v1650 = vpop.f32.mrf.mxu0
  %v1651 = vadd.f32 %v1503, %v1650
  %1652 = vdwg.mxu0
  %1653 = vmatprep.subr.mxu0 0.0
  %1654 = vmatpush1.msra.mxu0 0.0
  %1655 = vmatprep.subr.mxu0 0.0
  %1656 = vmatpush1.msra.mxu0 0.0
  %1657 = vmatprep.subr.mxu0 0.0
  %1658 = vmatpush1.msra.mxu0 0.0
  %1659 = vmatprep.subr.mxu0 0.0
  %1660 = vmatpush1.msra.mxu0 0.0
  %1661 = vmatprep.subr.mxu0 0.0
  %1662 = vmatpush1.msra.mxu0 0.0
  %1663 = vmatprep.subr.mxu0 0.0
  %1664 = vmatpush1.msra.mxu0 0.0
  %1665 = vmatprep.subr.mxu0 0.0
  %1666 = vmatpush1.msra.mxu0 0.0
  %1667 = vmatprep.subr.mxu0 0.0
  %1668 = vmatpush1.msra.mxu0 0.0
  %1669 = vmatprep.subr.mxu0 0.0
  %1670 = vmatpush1.msra.mxu0 0.0
  %1671 = vmatprep.subr.mxu0 0.0
  %1672 = vmatpush1.msra.mxu0 0.0
  %1673 = vmatprep.subr.mxu0 0.0
  %1674 = vmatpush1.msra.mxu0 0.0
  %1675 = vmatprep.subr.mxu0 0.0
  %1676 = vmatpush1.msra.mxu0 0.0
  %1677 = vmatprep.subr.mxu0 0.0
  %1678 = vmatpush1.msra.mxu0 0.0
  %1679 = vmatprep.subr.mxu0 0.0
  %1680 = vmatpush1.msra.mxu0 0.0
  %1681 = vmatprep.subr.mxu0 %v73
  %1682 = vmatpush1.msra.mxu0 %v72
  %1683 = vmatprep.subr.mxu0 %v69
  %1684 = vmatpush1.msra.mxu0 %v68
  %1685 = vmatprep.subr.mxu0 0.0
  %1686 = vmatpush2.msra.mxu0 0.0
  %1687 = vmatprep.subr.mxu0 0.0
  %1688 = vmatpush2.msra.mxu0 0.0
  %1689 = vmatprep.subr.mxu0 0.0
  %1690 = vmatpush2.msra.mxu0 0.0
  %1691 = vmatprep.subr.mxu0 0.0
  %1692 = vmatpush2.msra.mxu0 0.0
  %1693 = vmatprep.subr.mxu0 0.0
  %1694 = vmatpush2.msra.mxu0 0.0
  %1695 = vmatprep.subr.mxu0 0.0
  %1696 = vmatpush2.msra.mxu0 0.0
  %1697 = vmatprep.subr.mxu0 0.0
  %1698 = vmatpush2.msra.mxu0 0.0
  %1699 = vmatprep.subr.mxu0 0.0
  %1700 = vmatpush2.msra.mxu0 0.0
  %1701 = vmatprep.subr.mxu0 0.0
  %1702 = vmatpush2.msra.mxu0 0.0
  %1703 = vmatprep.subr.mxu0 0.0
  %1704 = vmatpush2.msra.mxu0 0.0
  %1705 = vmatprep.subr.mxu0 0.0
  %1706 = vmatpush2.msra.mxu0 0.0
  %1707 = vmatprep.subr.mxu0 0.0
  %1708 = vmatpush2.msra.mxu0 0.0
  %1709 = vmatprep.subr.mxu0 0.0
  %1710 = vmatpush2.msra.mxu0 0.0
  %1711 = vmatprep.subr.mxu0 0.0
  %1712 = vmatpush2.msra.mxu0 0.0
  %1713 = vmatprep.subr.mxu0 0.0
  %1714 = vmatpush2.msra.mxu0 0.0
  %1715 = vmatprep.subr.mxu0 0.0
  %1716 = vmatpush2.msra.mxu0 0.0
  %1717 = vmatprep.mubr.f32.mxu0 0.0
  %1718 = vmatmul.mubr.f32.gmra.mxu0 %v1580
  %v1719 = vpop.f32.mrf.mxu0
  %v1720 = vadd.f32 %v1572, %v1719
  %v1721 = vpop.f32.mrf.mxu0
  %v1722 = vadd.f32 %v1574, %v1721
  %1723 = vdwg.mxu0
  %v1724 = vadd.f32 %v1649, %v435
  %v1725 = vadd.f32 %v1651, %v439
  %v1726 = vadd.f32 %v1720, %v443
  %v1727 = vadd.f32 %v1722, %v447
  %v1728 = vxor.u32 %v1724, 2147483648
  %v1729 = vmul.f32 %v1728, 1.442695
  %v1730 = vpow.pop %v1729
  %v1731 = vadd.f32 %v1730, 1.0
  %v1732 = vrcp.pop %v1731
  %v1733 = vmul.f32 1.0, %v1732
  %v1734 = vxor.u32 %v1725, 2147483648
  %v1735 = vmul.f32 %v1734, 1.442695
  %v1736 = vpow.pop %v1735
  %v1737 = vadd.f32 %v1736, 1.0
  %v1738 = vrcp.pop %v1737
  %v1739 = vmul.f32 1.0, %v1738
  %v1740 = vtanh.pop %v1726
  %v1741 = vxor.u32 %v1727, 2147483648
  %v1742 = vmul.f32 %v1741, 1.442695
  %v1743 = vpow.pop %v1742
  %v1744 = vadd.f32 %v1743, 1.0
  %v1745 = vrcp.pop %v1744
  %v1746 = vmul.f32 1.0, %v1745
  %v1747 = vmul.f32 %v1739, %v1431
  %v1748 = vmul.f32 %v1733, %v1740
  %v1749 = vadd.f32 %v1747, %v1748
  %v1750 = vtanh.pop %v1749
  %v1751 = vmul.f32 %v1746, %v1750
  %1752 = vmatprep.subr.mxu0 %v135
  %1753 = vmatpush1.msra.mxu0 %v134
  %1754 = vmatprep.subr.mxu0 %v131
  %1755 = vmatpush1.msra.mxu0 %v130
  %1756 = vmatprep.subr.mxu0 %v127
  %1757 = vmatpush1.msra.mxu0 %v126
  %1758 = vmatprep.subr.mxu0 %v123
  %1759 = vmatpush1.msra.mxu0 %v122
  %1760 = vmatprep.subr.mxu0 %v119
  %1761 = vmatpush1.msra.mxu0 %v118
  %1762 = vmatprep.subr.mxu0 %v115
  %1763 = vmatpush1.msra.mxu0 %v114
  %1764 = vmatprep.subr.mxu0 %v111
  %1765 = vmatpush1.msra.mxu0 %v110
  %1766 = vmatprep.subr.mxu0 %v107
  %1767 = vmatpush1.msra.mxu0 %v106
  %1768 = vmatprep.subr.mxu0 %v103
  %1769 = vmatpush1.msra.mxu0 %v102
  %1770 = vmatprep.subr.mxu0 %v99
  %1771 = vmatpush1.msra.mxu0 %v98
  %1772 = vmatprep.subr.mxu0 %v95
  %1773 = vmatpush1.msra.mxu0 %v94
  %1774 = vmatprep.subr.mxu0 %v91
  %1775 = vmatpush1.msra.mxu0 %v90
  %1776 = vmatprep.subr.mxu0 %v87
  %1777 = vmatpush1.msra.mxu0 %v86
  %1778 = vmatprep.subr.mxu0 %v83
  %1779 = vmatpush1.msra.mxu0 %v82
  %1780 = vmatprep.subr.mxu0 %v79
  %1781 = vmatpush1.msra.mxu0 %v78
  %1782 = vmatprep.subr.mxu0 %v75
  %1783 = vmatpush1.msra.mxu0 %v74
  %1784 = vmatprep.subr.mxu0 0.0
  %1785 = vmatpush2.msra.mxu0 0.0
  %1786 = vmatprep.subr.mxu0 0.0
  %1787 = vmatpush2.msra.mxu0 0.0
  %1788 = vmatprep.subr.mxu0 0.0
  %1789 = vmatpush2.msra.mxu0 0.0
  %1790 = vmatprep.subr.mxu0 0.0
  %1791 = vmatpush2.msra.mxu0 0.0
  %1792 = vmatprep.subr.mxu0 0.0
  %1793 = vmatpush2.msra.mxu0 0.0
  %1794 = vmatprep.subr.mxu0 0.0
  %1795 = vmatpush2.msra.mxu0 0.0
  %1796 = vmatprep.subr.mxu0 0.0
  %1797 = vmatpush2.msra.mxu0 0.0
  %1798 = vmatprep.subr.mxu0 0.0
  %1799 = vmatpush2.msra.mxu0 0.0
  %1800 = vmatprep.subr.mxu0 0.0
  %1801 = vmatpush2.msra.mxu0 0.0
  %1802 = vmatprep.subr.mxu0 0.0
  %1803 = vmatpush2.msra.mxu0 0.0
  %1804 = vmatprep.subr.mxu0 0.0
  %1805 = vmatpush2.msra.mxu0 0.0
  %1806 = vmatprep.subr.mxu0 0.0
  %1807 = vmatpush2.msra.mxu0 0.0
  %1808 = vmatprep.subr.mxu0 0.0
  %1809 = vmatpush2.msra.mxu0 0.0
  %1810 = vmatprep.subr.mxu0 0.0
  %1811 = vmatpush2.msra.mxu0 0.0
  %1812 = vmatprep.subr.mxu0 0.0
  %1813 = vmatpush2.msra.mxu0 0.0
  %1814 = vmatprep.subr.mxu0 0.0
  %1815 = vmatpush2.msra.mxu0 0.0
  %1816 = vmatprep.mubr.f32.mxu0 0.0
  %1817 = vmatmul.mubr.f32.gmra.mxu0 %v1751
  %v1818 = vpop.f32.mrf.mxu0
  %v1819 = vadd.f32 0.0, %v1818
  %v1820 = vpop.f32.mrf.mxu0
  %v1821 = vadd.f32 0.0, %v1820
  %1822 = vdwg.mxu0
  %1823 = vmatprep.subr.mxu0 %v137
  %1824 = vmatpush1.msra.mxu0 %v136
  %1825 = vmatprep.subr.mxu0 %v133
  %1826 = vmatpush1.msra.mxu0 %v132
  %1827 = vmatprep.subr.mxu0 %v129
  %1828 = vmatpush1.msra.mxu0 %v128
  %1829 = vmatprep.subr.mxu0 %v125
  %1830 = vmatpush1.msra.mxu0 %v124
  %1831 = vmatprep.subr.mxu0 %v121
  %1832 = vmatpush1.msra.mxu0 %v120
  %1833 = vmatprep.subr.mxu0 %v117
  %1834 = vmatpush1.msra.mxu0 %v116
  %1835 = vmatprep.subr.mxu0 %v113
  %1836 = vmatpush1.msra.mxu0 %v112
  %1837 = vmatprep.subr.mxu0 %v109
  %1838 = vmatpush1.msra.mxu0 %v108
  %1839 = vmatprep.subr.mxu0 %v105
  %1840 = vmatpush1.msra.mxu0 %v104
  %1841 = vmatprep.subr.mxu0 %v101
  %1842 = vmatpush1.msra.mxu0 %v100
  %1843 = vmatprep.subr.mxu0 %v97
  %1844 = vmatpush1.msra.mxu0 %v96
  %1845 = vmatprep.subr.mxu0 %v93
  %1846 = vmatpush1.msra.mxu0 %v92
  %1847 = vmatprep.subr.mxu0 %v89
  %1848 = vmatpush1.msra.mxu0 %v88
  %1849 = vmatprep.subr.mxu0 %v85
  %1850 = vmatpush1.msra.mxu0 %v84
  %1851 = vmatprep.subr.mxu0 %v81
  %1852 = vmatpush1.msra.mxu0 %v80
  %1853 = vmatprep.subr.mxu0 %v77
  %1854 = vmatpush1.msra.mxu0 %v76
  %1855 = vmatprep.subr.mxu0 0.0
  %1856 = vmatpush2.msra.mxu0 0.0
  %1857 = vmatprep.subr.mxu0 0.0
  %1858 = vmatpush2.msra.mxu0 0.0
  %1859 = vmatprep.subr.mxu0 0.0
  %1860 = vmatpush2.msra.mxu0 0.0
  %1861 = vmatprep.subr.mxu0 0.0
  %1862 = vmatpush2.msra.mxu0 0.0
  %1863 = vmatprep.subr.mxu0 0.0
  %1864 = vmatpush2.msra.mxu0 0.0
  %1865 = vmatprep.subr.mxu0 0.0
  %1866 = vmatpush2.msra.mxu0 0.0
  %1867 = vmatprep.subr.mxu0 0.0
  %1868 = vmatpush2.msra.mxu0 0.0
  %1869 = vmatprep.subr.mxu0 0.0
  %1870 = vmatpush2.msra.mxu0 0.0
  %1871 = vmatprep.subr.mxu0 0.0
  %1872 = vmatpush2.msra.mxu0 0.0
  %1873 = vmatprep.subr.mxu0 0.0
  %1874 = vmatpush2.msra.mxu0 0.0
  %1875 = vmatprep.subr.mxu0 0.0
  %1876 = vmatpush2.msra.mxu0 0.0
  %1877 = vmatprep.subr.mxu0 0.0
  %1878 = vmatpush2.msra.mxu0 0.0
  %1879 = vmatprep.subr.mxu0 0.0
  %1880 = vmatpush2.msra.mxu0 0.0
  %1881 = vmatprep.subr.mxu0 0.0
  %1882 = vmatpush2.msra.mxu0 0.0
  %1883 = vmatprep.subr.mxu0 0.0
  %1884 = vmatpush2.msra.mxu0 0.0
  %1885 = vmatprep.subr.mxu0 0.0
  %1886 = vmatpush2.msra.mxu0 0.0
  %1887 = vmatprep.mubr.f32.mxu0 0.0
  %1888 = vmatmul.mubr.f32.gmra.mxu0 %v1751
  %v1889 = vpop.f32.mrf.mxu0
  %v1890 = vadd.f32 0.0, %v1889
  %v1891 = vpop.f32.mrf.mxu0
  %v1892 = vadd.f32 0.0, %v1891
  %1893 = vdwg.mxu0
  %v1896 = vrot.slane %v61, 7
  %v1897 = vsel %vm284, %v1896, %v60
  %v1898 = vsel %vm286, %v1897, 0
  %1900 = vmatprep.subr.mxu0 0.0
  %1901 = vmatpush1.msra.mxu0 0.0
  %1902 = vmatprep.subr.mxu0 0.0
  %1903 = vmatpush1.msra.mxu0 0.0
  %1904 = vmatprep.subr.mxu0 0.0
  %1905 = vmatpush1.msra.mxu0 0.0
  %1906 = vmatprep.subr.mxu0 0.0
  %1907 = vmatpush1.msra.mxu0 0.0
  %1908 = vmatprep.subr.mxu0 0.0
  %1909 = vmatpush1.msra.mxu0 0.0
  %1910 = vmatprep.subr.mxu0 0.0
  %1911 = vmatpush1.msra.mxu0 0.0
  %1912 = vmatprep.subr.mxu0 0.0
  %1913 = vmatpush1.msra.mxu0 0.0
  %1914 = vmatprep.subr.mxu0 0.0
  %1915 = vmatpush1.msra.mxu0 0.0
  %1916 = vmatprep.subr.mxu0 0.0
  %1917 = vmatpush1.msra.mxu0 0.0
  %1918 = vmatprep.subr.mxu0 0.0
  %1919 = vmatpush1.msra.mxu0 0.0
  %1920 = vmatprep.subr.mxu0 0.0
  %1921 = vmatpush1.msra.mxu0 0.0
  %1922 = vmatprep.subr.mxu0 0.0
  %1923 = vmatpush1.msra.mxu0 0.0
  %1924 = vmatprep.subr.mxu0 0.0
  %1925 = vmatpush1.msra.mxu0 0.0
  %1926 = vmatprep.subr.mxu0 0.0
  %1927 = vmatpush1.msra.mxu0 0.0
  %1928 = vmatprep.subr.mxu0 %v71
  %1929 = vmatpush1.msra.mxu0 %v70
  %1930 = vmatprep.subr.mxu0 %v67
  %1931 = vmatpush1.msra.mxu0 %v66
  %1932 = vmatprep.subr.mxu0 0.0
  %1933 = vmatpush2.msra.mxu0 0.0
  %1934 = vmatprep.subr.mxu0 0.0
  %1935 = vmatpush2.msra.mxu0 0.0
  %1936 = vmatprep.subr.mxu0 0.0
  %1937 = vmatpush2.msra.mxu0 0.0
  %1938 = vmatprep.subr.mxu0 0.0
  %1939 = vmatpush2.msra.mxu0 0.0
  %1940 = vmatprep.subr.mxu0 0.0
  %1941 = vmatpush2.msra.mxu0 0.0
  %1942 = vmatprep.subr.mxu0 0.0
  %1943 = vmatpush2.msra.mxu0 0.0
  %1944 = vmatprep.subr.mxu0 0.0
  %1945 = vmatpush2.msra.mxu0 0.0
  %1946 = vmatprep.subr.mxu0 0.0
  %1947 = vmatpush2.msra.mxu0 0.0
  %1948 = vmatprep.subr.mxu0 0.0
  %1949 = vmatpush2.msra.mxu0 0.0
  %1950 = vmatprep.subr.mxu0 0.0
  %1951 = vmatpush2.msra.mxu0 0.0
  %1952 = vmatprep.subr.mxu0 0.0
  %1953 = vmatpush2.msra.mxu0 0.0
  %1954 = vmatprep.subr.mxu0 0.0
  %1955 = vmatpush2.msra.mxu0 0.0
  %1956 = vmatprep.subr.mxu0 0.0
  %1957 = vmatpush2.msra.mxu0 0.0
  %1958 = vmatprep.subr.mxu0 0.0
  %1959 = vmatpush2.msra.mxu0 0.0
  %1960 = vmatprep.subr.mxu0 0.0
  %1961 = vmatpush2.msra.mxu0 0.0
  %1962 = vmatprep.subr.mxu0 0.0
  %1963 = vmatpush2.msra.mxu0 0.0
  %1964 = vmatprep.mubr.f32.mxu0 0.0
  %1965 = vmatmul.mubr.f32.gmra.mxu0 %v1898
  %v1966 = vpop.f32.mrf.mxu0
  %v1967 = vadd.f32 %v1819, %v1966
  %v1968 = vpop.f32.mrf.mxu0
  %v1969 = vadd.f32 %v1821, %v1968
  %1970 = vdwg.mxu0
  %1971 = vmatprep.subr.mxu0 0.0
  %1972 = vmatpush1.msra.mxu0 0.0
  %1973 = vmatprep.subr.mxu0 0.0
  %1974 = vmatpush1.msra.mxu0 0.0
  %1975 = vmatprep.subr.mxu0 0.0
  %1976 = vmatpush1.msra.mxu0 0.0
  %1977 = vmatprep.subr.mxu0 0.0
  %1978 = vmatpush1.msra.mxu0 0.0
  %1979 = vmatprep.subr.mxu0 0.0
  %1980 = vmatpush1.msra.mxu0 0.0
  %1981 = vmatprep.subr.mxu0 0.0
  %1982 = vmatpush1.msra.mxu0 0.0
  %1983 = vmatprep.subr.mxu0 0.0
  %1984 = vmatpush1.msra.mxu0 0.0
  %1985 = vmatprep.subr.mxu0 0.0
  %1986 = vmatpush1.msra.mxu0 0.0
  %1987 = vmatprep.subr.mxu0 0.0
  %1988 = vmatpush1.msra.mxu0 0.0
  %1989 = vmatprep.subr.mxu0 0.0
  %1990 = vmatpush1.msra.mxu0 0.0
  %1991 = vmatprep.subr.mxu0 0.0
  %1992 = vmatpush1.msra.mxu0 0.0
  %1993 = vmatprep.subr.mxu0 0.0
  %1994 = vmatpush1.msra.mxu0 0.0
  %1995 = vmatprep.subr.mxu0 0.0
  %1996 = vmatpush1.msra.mxu0 0.0
  %1997 = vmatprep.subr.mxu0 0.0
  %1998 = vmatpush1.msra.mxu0 0.0
  %1999 = vmatprep.subr.mxu0 %v73
  %2000 = vmatpush1.msra.mxu0 %v72
  %2001 = vmatprep.subr.mxu0 %v69
  %2002 = vmatpush1.msra.mxu0 %v68
  %2003 = vmatprep.subr.mxu0 0.0
  %2004 = vmatpush2.msra.mxu0 0.0
  %2005 = vmatprep.subr.mxu0 0.0
  %2006 = vmatpush2.msra.mxu0 0.0
  %2007 = vmatprep.subr.mxu0 0.0
  %2008 = vmatpush2.msra.mxu0 0.0
  %2009 = vmatprep.subr.mxu0 0.0
  %2010 = vmatpush2.msra.mxu0 0.0
  %2011 = vmatprep.subr.mxu0 0.0
  %2012 = vmatpush2.msra.mxu0 0.0
  %2013 = vmatprep.subr.mxu0 0.0
  %2014 = vmatpush2.msra.mxu0 0.0
  %2015 = vmatprep.subr.mxu0 0.0
  %2016 = vmatpush2.msra.mxu0 0.0
  %2017 = vmatprep.subr.mxu0 0.0
  %2018 = vmatpush2.msra.mxu0 0.0
  %2019 = vmatprep.subr.mxu0 0.0
  %2020 = vmatpush2.msra.mxu0 0.0
  %2021 = vmatprep.subr.mxu0 0.0
  %2022 = vmatpush2.msra.mxu0 0.0
  %2023 = vmatprep.subr.mxu0 0.0
  %2024 = vmatpush2.msra.mxu0 0.0
  %2025 = vmatprep.subr.mxu0 0.0
  %2026 = vmatpush2.msra.mxu0 0.0
  %2027 = vmatprep.subr.mxu0 0.0
  %2028 = vmatpush2.msra.mxu0 0.0
  %2029 = vmatprep.subr.mxu0 0.0
  %2030 = vmatpush2.msra.mxu0 0.0
  %2031 = vmatprep.subr.mxu0 0.0
  %2032 = vmatpush2.msra.mxu0 0.0
  %2033 = vmatprep.subr.mxu0 0.0
  %2034 = vmatpush2.msra.mxu0 0.0
  %2035 = vmatprep.mubr.f32.mxu0 0.0
  %2036 = vmatmul.mubr.f32.gmra.mxu0 %v1898
  %v2037 = vpop.f32.mrf.mxu0
  %v2038 = vadd.f32 %v1890, %v2037
  %v2039 = vpop.f32.mrf.mxu0
  %v2040 = vadd.f32 %v1892, %v2039
  %2041 = vdwg.mxu0
  %v2042 = vadd.f32 %v1967, %v435
  %v2043 = vadd.f32 %v1969, %v439
  %v2044 = vadd.f32 %v2038, %v443
  %v2045 = vadd.f32 %v2040, %v447
  %v2046 = vxor.u32 %v2042, 2147483648
  %v2047 = vmul.f32 %v2046, 1.442695
  %v2048 = vpow.pop %v2047
  %v2049 = vadd.f32 %v2048, 1.0
  %v2050 = vrcp.pop %v2049
  %v2051 = vmul.f32 1.0, %v2050
  %v2052 = vxor.u32 %v2043, 2147483648
  %v2053 = vmul.f32 %v2052, 1.442695
  %v2054 = vpow.pop %v2053
  %v2055 = vadd.f32 %v2054, 1.0
  %v2056 = vrcp.pop %v2055
  %v2057 = vmul.f32 1.0, %v2056
  %v2058 = vtanh.pop %v2044
  %v2059 = vxor.u32 %v2045, 2147483648
  %v2060 = vmul.f32 %v2059, 1.442695
  %v2061 = vpow.pop %v2060
  %v2062 = vadd.f32 %v2061, 1.0
  %v2063 = vrcp.pop %v2062
  %v2064 = vmul.f32 1.0, %v2063
  %v2065 = vmul.f32 %v2057, %v1749
  %v2066 = vmul.f32 %v2051, %v2058
  %v2067 = vadd.f32 %v2065, %v2066
  %v2068 = vtanh.pop %v2067
  %v2069 = vmul.f32 %v2064, %v2068
  %2070 = vmatprep.subr.mxu0 %v135
  %2071 = vmatpush1.msra.mxu0 %v134
  %2072 = vmatprep.subr.mxu0 %v131
  %2073 = vmatpush1.msra.mxu0 %v130
  %2074 = vmatprep.subr.mxu0 %v127
  %2075 = vmatpush1.msra.mxu0 %v126
  %2076 = vmatprep.subr.mxu0 %v123
  %2077 = vmatpush1.msra.mxu0 %v122
  %2078 = vmatprep.subr.mxu0 %v119
  %2079 = vmatpush1.msra.mxu0 %v118
  %2080 = vmatprep.subr.mxu0 %v115
  %2081 = vmatpush1.msra.mxu0 %v114
  %2082 = vmatprep.subr.mxu0 %v111
  %2083 = vmatpush1.msra.mxu0 %v110
  %2084 = vmatprep.subr.mxu0 %v107
  %2085 = vmatpush1.msra.mxu0 %v106
  %2086 = vmatprep.subr.mxu0 %v103
  %2087 = vmatpush1.msra.mxu0 %v102
  %2088 = vmatprep.subr.mxu0 %v99
  %2089 = vmatpush1.msra.mxu0 %v98
  %2090 = vmatprep.subr.mxu0 %v95
  %2091 = vmatpush1.msra.mxu0 %v94
  %2092 = vmatprep.subr.mxu0 %v91
  %2093 = vmatpush1.msra.mxu0 %v90
  %2094 = vmatprep.subr.mxu0 %v87
  %2095 = vmatpush1.msra.mxu0 %v86
  %2096 = vmatprep.subr.mxu0 %v83
  %2097 = vmatpush1.msra.mxu0 %v82
  %2098 = vmatprep.subr.mxu0 %v79
  %2099 = vmatpush1.msra.mxu0 %v78
  %2100 = vmatprep.subr.mxu0 %v75
  %2101 = vmatpush1.msra.mxu0 %v74
  %2102 = vmatprep.subr.mxu0 0.0
  %2103 = vmatpush2.msra.mxu0 0.0
  %2104 = vmatprep.subr.mxu0 0.0
  %2105 = vmatpush2.msra.mxu0 0.0
  %2106 = vmatprep.subr.mxu0 0.0
  %2107 = vmatpush2.msra.mxu0 0.0
  %2108 = vmatprep.subr.mxu0 0.0
  %2109 = vmatpush2.msra.mxu0 0.0
  %2110 = vmatprep.subr.mxu0 0.0
  %2111 = vmatpush2.msra.mxu0 0.0
  %2112 = vmatprep.subr.mxu0 0.0
  %2113 = vmatpush2.msra.mxu0 0.0
  %2114 = vmatprep.subr.mxu0 0.0
  %2115 = vmatpush2.msra.mxu0 0.0
  %2116 = vmatprep.subr.mxu0 0.0
  %2117 = vmatpush2.msra.mxu0 0.0
  %2118 = vmatprep.subr.mxu0 0.0
  %2119 = vmatpush2.msra.mxu0 0.0
  %2120 = vmatprep.subr.mxu0 0.0
  %2121 = vmatpush2.msra.mxu0 0.0
  %2122 = vmatprep.subr.mxu0 0.0
  %2123 = vmatpush2.msra.mxu0 0.0
  %2124 = vmatprep.subr.mxu0 0.0
  %2125 = vmatpush2.msra.mxu0 0.0
  %2126 = vmatprep.subr.mxu0 0.0
  %2127 = vmatpush2.msra.mxu0 0.0
  %2128 = vmatprep.subr.mxu0 0.0
  %2129 = vmatpush2.msra.mxu0 0.0
  %2130 = vmatprep.subr.mxu0 0.0
  %2131 = vmatpush2.msra.mxu0 0.0
  %2132 = vmatprep.subr.mxu0 0.0
  %2133 = vmatpush2.msra.mxu0 0.0
  %2134 = vmatprep.mubr.f32.mxu0 0.0
  %2135 = vmatmul.mubr.f32.gmra.mxu0 %v2069
  %v2136 = vpop.f32.mrf.mxu0
  %v2137 = vadd.f32 0.0, %v2136
  %v2138 = vpop.f32.mrf.mxu0
  %v2139 = vadd.f32 0.0, %v2138
  %2140 = vdwg.mxu0
  %2141 = vmatprep.subr.mxu0 %v137
  %2142 = vmatpush1.msra.mxu0 %v136
  %2143 = vmatprep.subr.mxu0 %v133
  %2144 = vmatpush1.msra.mxu0 %v132
  %2145 = vmatprep.subr.mxu0 %v129
  %2146 = vmatpush1.msra.mxu0 %v128
  %2147 = vmatprep.subr.mxu0 %v125
  %2148 = vmatpush1.msra.mxu0 %v124
  %2149 = vmatprep.subr.mxu0 %v121
  %2150 = vmatpush1.msra.mxu0 %v120
  %2151 = vmatprep.subr.mxu0 %v117
  %2152 = vmatpush1.msra.mxu0 %v116
  %2153 = vmatprep.subr.mxu0 %v113
  %2154 = vmatpush1.msra.mxu0 %v112
  %2155 = vmatprep.subr.mxu0 %v109
  %2156 = vmatpush1.msra.mxu0 %v108
  %2157 = vmatprep.subr.mxu0 %v105
  %2158 = vmatpush1.msra.mxu0 %v104
  %2159 = vmatprep.subr.mxu0 %v101
  %2160 = vmatpush1.msra.mxu0 %v100
  %2161 = vmatprep.subr.mxu0 %v97
  %2162 = vmatpush1.msra.mxu0 %v96
  %2163 = vmatprep.subr.mxu0 %v93
  %2164 = vmatpush1.msra.mxu0 %v92
  %2165 = vmatprep.subr.mxu0 %v89
  %2166 = vmatpush1.msra.mxu0 %v88
  %2167 = vmatprep.subr.mxu0 %v85
  %2168 = vmatpush1.msra.mxu0 %v84
  %2169 = vmatprep.subr.mxu0 %v81
  %2170 = vmatpush1.msra.mxu0 %v80
  %2171 = vmatprep.subr.mxu0 %v77
  %2172 = vmatpush1.msra.mxu0 %v76
  %2173 = vmatprep.subr.mxu0 0.0
  %2174 = vmatpush2.msra.mxu0 0.0
  %2175 = vmatprep.subr.mxu0 0.0
  %2176 = vmatpush2.msra.mxu0 0.0
  %2177 = vmatprep.subr.mxu0 0.0
  %2178 = vmatpush2.msra.mxu0 0.0
  %2179 = vmatprep.subr.mxu0 0.0
  %2180 = vmatpush2.msra.mxu0 0.0
  %2181 = vmatprep.subr.mxu0 0.0
  %2182 = vmatpush2.msra.mxu0 0.0
  %2183 = vmatprep.subr.mxu0 0.0
  %2184 = vmatpush2.msra.mxu0 0.0
  %2185 = vmatprep.subr.mxu0 0.0
  %2186 = vmatpush2.msra.mxu0 0.0
  %2187 = vmatprep.subr.mxu0 0.0
  %2188 = vmatpush2.msra.mxu0 0.0
  %2189 = vmatprep.subr.mxu0 0.0
  %2190 = vmatpush2.msra.mxu0 0.0
  %2191 = vmatprep.subr.mxu0 0.0
  %2192 = vmatpush2.msra.mxu0 0.0
  %2193 = vmatprep.subr.mxu0 0.0
  %2194 = vmatpush2.msra.mxu0 0.0
  %2195 = vmatprep.subr.mxu0 0.0
  %2196 = vmatpush2.msra.mxu0 0.0
  %2197 = vmatprep.subr.mxu0 0.0
  %2198 = vmatpush2.msra.mxu0 0.0
  %2199 = vmatprep.subr.mxu0 0.0
  %2200 = vmatpush2.msra.mxu0 0.0
  %2201 = vmatprep.subr.mxu0 0.0
  %2202 = vmatpush2.msra.mxu0 0.0
  %2203 = vmatprep.subr.mxu0 0.0
  %2204 = vmatpush2.msra.mxu0 0.0
  %2205 = vmatprep.mubr.f32.mxu0 0.0
  %2206 = vmatmul.mubr.f32.gmra.mxu0 %v2069
  %v2207 = vpop.f32.mrf.mxu0
  %v2208 = vadd.f32 0.0, %v2207
  %v2209 = vpop.f32.mrf.mxu0
  %v2210 = vadd.f32 0.0, %v2209
  %2211 = vdwg.mxu0
  %v2214 = vrot.slane %v63, 7
  %v2215 = vsel %vm284, %v2214, %v62
  %v2216 = vsel %vm286, %v2215, 0
  %2218 = vmatprep.subr.mxu0 0.0
  %2219 = vmatpush1.msra.mxu0 0.0
  %2220 = vmatprep.subr.mxu0 0.0
  %2221 = vmatpush1.msra.mxu0 0.0
  %2222 = vmatprep.subr.mxu0 0.0
  %2223 = vmatpush1.msra.mxu0 0.0
  %2224 = vmatprep.subr.mxu0 0.0
  %2225 = vmatpush1.msra.mxu0 0.0
  %2226 = vmatprep.subr.mxu0 0.0
  %2227 = vmatpush1.msra.mxu0 0.0
  %2228 = vmatprep.subr.mxu0 0.0
  %2229 = vmatpush1.msra.mxu0 0.0
  %2230 = vmatprep.subr.mxu0 0.0
  %2231 = vmatpush1.msra.mxu0 0.0
  %2232 = vmatprep.subr.mxu0 0.0
  %2233 = vmatpush1.msra.mxu0 0.0
  %2234 = vmatprep.subr.mxu0 0.0
  %2235 = vmatpush1.msra.mxu0 0.0
  %2236 = vmatprep.subr.mxu0 0.0
  %2237 = vmatpush1.msra.mxu0 0.0
  %2238 = vmatprep.subr.mxu0 0.0
  %2239 = vmatpush1.msra.mxu0 0.0
  %2240 = vmatprep.subr.mxu0 0.0
  %2241 = vmatpush1.msra.mxu0 0.0
  %2242 = vmatprep.subr.mxu0 0.0
  %2243 = vmatpush1.msra.mxu0 0.0
  %2244 = vmatprep.subr.mxu0 0.0
  %2245 = vmatpush1.msra.mxu0 0.0
  %2246 = vmatprep.subr.mxu0 %v71
  %2247 = vmatpush1.msra.mxu0 %v70
  %2248 = vmatprep.subr.mxu0 %v67
  %2249 = vmatpush1.msra.mxu0 %v66
  %2250 = vmatprep.subr.mxu0 0.0
  %2251 = vmatpush2.msra.mxu0 0.0
  %2252 = vmatprep.subr.mxu0 0.0
  %2253 = vmatpush2.msra.mxu0 0.0
  %2254 = vmatprep.subr.mxu0 0.0
  %2255 = vmatpush2.msra.mxu0 0.0
  %2256 = vmatprep.subr.mxu0 0.0
  %2257 = vmatpush2.msra.mxu0 0.0
  %2258 = vmatprep.subr.mxu0 0.0
  %2259 = vmatpush2.msra.mxu0 0.0
  %2260 = vmatprep.subr.mxu0 0.0
  %2261 = vmatpush2.msra.mxu0 0.0
  %2262 = vmatprep.subr.mxu0 0.0
  %2263 = vmatpush2.msra.mxu0 0.0
  %2264 = vmatprep.subr.mxu0 0.0
  %2265 = vmatpush2.msra.mxu0 0.0
  %2266 = vmatprep.subr.mxu0 0.0
  %2267 = vmatpush2.msra.mxu0 0.0
  %2268 = vmatprep.subr.mxu0 0.0
  %2269 = vmatpush2.msra.mxu0 0.0
  %2270 = vmatprep.subr.mxu0 0.0
  %2271 = vmatpush2.msra.mxu0 0.0
  %2272 = vmatprep.subr.mxu0 0.0
  %2273 = vmatpush2.msra.mxu0 0.0
  %2274 = vmatprep.subr.mxu0 0.0
  %2275 = vmatpush2.msra.mxu0 0.0
  %2276 = vmatprep.subr.mxu0 0.0
  %2277 = vmatpush2.msra.mxu0 0.0
  %2278 = vmatprep.subr.mxu0 0.0
  %2279 = vmatpush2.msra.mxu0 0.0
  %2280 = vmatprep.subr.mxu0 0.0
  %2281 = vmatpush2.msra.mxu0 0.0
  %2282 = vmatprep.mubr.f32.mxu0 0.0
  %2283 = vmatmul.mubr.f32.gmra.mxu0 %v2216
  %v2284 = vpop.f32.mrf.mxu0
  %v2285 = vadd.f32 %v2137, %v2284
  %v2286 = vpop.f32.mrf.mxu0
  %v2287 = vadd.f32 %v2139, %v2286
  %2288 = vdwg.mxu0
  %2289 = vmatprep.subr.mxu0 0.0
  %2290 = vmatpush1.msra.mxu0 0.0
  %2291 = vmatprep.subr.mxu0 0.0
  %2292 = vmatpush1.msra.mxu0 0.0
  %2293 = vmatprep.subr.mxu0 0.0
  %2294 = vmatpush1.msra.mxu0 0.0
  %2295 = vmatprep.subr.mxu0 0.0
  %2296 = vmatpush1.msra.mxu0 0.0
  %2297 = vmatprep.subr.mxu0 0.0
  %2298 = vmatpush1.msra.mxu0 0.0
  %2299 = vmatprep.subr.mxu0 0.0
  %2300 = vmatpush1.msra.mxu0 0.0
  %2301 = vmatprep.subr.mxu0 0.0
  %2302 = vmatpush1.msra.mxu0 0.0
  %2303 = vmatprep.subr.mxu0 0.0
  %2304 = vmatpush1.msra.mxu0 0.0
  %2305 = vmatprep.subr.mxu0 0.0
  %2306 = vmatpush1.msra.mxu0 0.0
  %2307 = vmatprep.subr.mxu0 0.0
  %2308 = vmatpush1.msra.mxu0 0.0
  %2309 = vmatprep.subr.mxu0 0.0
  %2310 = vmatpush1.msra.mxu0 0.0
  %2311 = vmatprep.subr.mxu0 0.0
  %2312 = vmatpush1.msra.mxu0 0.0
  %2313 = vmatprep.subr.mxu0 0.0
  %2314 = vmatpush1.msra.mxu0 0.0
  %2315 = vmatprep.subr.mxu0 0.0
  %2316 = vmatpush1.msra.mxu0 0.0
  %2317 = vmatprep.subr.mxu0 %v73
  %2318 = vmatpush1.msra.mxu0 %v72
  %2319 = vmatprep.subr.mxu0 %v69
  %2320 = vmatpush1.msra.mxu0 %v68
  %2321 = vmatprep.subr.mxu0 0.0
  %2322 = vmatpush2.msra.mxu0 0.0
  %2323 = vmatprep.subr.mxu0 0.0
  %2324 = vmatpush2.msra.mxu0 0.0
  %2325 = vmatprep.subr.mxu0 0.0
  %2326 = vmatpush2.msra.mxu0 0.0
  %2327 = vmatprep.subr.mxu0 0.0
  %2328 = vmatpush2.msra.mxu0 0.0
  %2329 = vmatprep.subr.mxu0 0.0
  %2330 = vmatpush2.msra.mxu0 0.0
  %2331 = vmatprep.subr.mxu0 0.0
  %2332 = vmatpush2.msra.mxu0 0.0
  %2333 = vmatprep.subr.mxu0 0.0
  %2334 = vmatpush2.msra.mxu0 0.0
  %2335 = vmatprep.subr.mxu0 0.0
  %2336 = vmatpush2.msra.mxu0 0.0
  %2337 = vmatprep.subr.mxu0 0.0
  %2338 = vmatpush2.msra.mxu0 0.0
  %2339 = vmatprep.subr.mxu0 0.0
  %2340 = vmatpush2.msra.mxu0 0.0
  %2341 = vmatprep.subr.mxu0 0.0
  %2342 = vmatpush2.msra.mxu0 0.0
  %2343 = vmatprep.subr.mxu0 0.0
  %2344 = vmatpush2.msra.mxu0 0.0
  %2345 = vmatprep.subr.mxu0 0.0
  %2346 = vmatpush2.msra.mxu0 0.0
  %2347 = vmatprep.subr.mxu0 0.0
  %2348 = vmatpush2.msra.mxu0 0.0
  %2349 = vmatprep.subr.mxu0 0.0
  %2350 = vmatpush2.msra.mxu0 0.0
  %2351 = vmatprep.subr.mxu0 0.0
  %2352 = vmatpush2.msra.mxu0 0.0
  %2353 = vmatprep.mubr.f32.mxu0 0.0
  %2354 = vmatmul.mubr.f32.gmra.mxu0 %v2216
  %v2355 = vpop.f32.mrf.mxu0
  %v2356 = vadd.f32 %v2208, %v2355
  %v2357 = vpop.f32.mrf.mxu0
  %v2358 = vadd.f32 %v2210, %v2357
  %2359 = vdwg.mxu0
  %v2360 = vadd.f32 %v2285, %v435
  %v2361 = vadd.f32 %v2287, %v439
  %v2362 = vadd.f32 %v2356, %v443
  %v2363 = vadd.f32 %v2358, %v447
  %v2364 = vxor.u32 %v2360, 2147483648
  %v2365 = vmul.f32 %v2364, 1.442695
  %v2366 = vpow.pop %v2365
  %v2367 = vadd.f32 %v2366, 1.0
  %v2368 = vrcp.pop %v2367
  %v2369 = vmul.f32 1.0, %v2368
  %v2370 = vxor.u32 %v2361, 2147483648
  %v2371 = vmul.f32 %v2370, 1.442695
  %v2372 = vpow.pop %v2371
  %v2373 = vadd.f32 %v2372, 1.0
  %v2374 = vrcp.pop %v2373
  %v2375 = vmul.f32 1.0, %v2374
  %v2376 = vtanh.pop %v2362
  %v2377 = vxor.u32 %v2363, 2147483648
  %v2378 = vmul.f32 %v2377, 1.442695
  %v2379 = vpow.pop %v2378
  %v2380 = vadd.f32 %v2379, 1.0
  %v2381 = vrcp.pop %v2380
  %v2382 = vmul.f32 1.0, %v2381
  %v2383 = vmul.f32 %v2375, %v2067
  %v2384 = vmul.f32 %v2369, %v2376
  %v2385 = vadd.f32 %v2383, %v2384
  %v2386 = vtanh.pop %v2385
  %v2387 = vmul.f32 %v2382, %v2386
  %2388 = vmatprep.subr.mxu0 %v135
  %2389 = vmatpush1.msra.mxu0 %v134
  %2390 = vmatprep.subr.mxu0 %v131
  %2391 = vmatpush1.msra.mxu0 %v130
  %2392 = vmatprep.subr.mxu0 %v127
  %2393 = vmatpush1.msra.mxu0 %v126
  %2394 = vmatprep.subr.mxu0 %v123
  %2395 = vmatpush1.msra.mxu0 %v122
  %2396 = vmatprep.subr.mxu0 %v119
  %2397 = vmatpush1.msra.mxu0 %v118
  %2398 = vmatprep.subr.mxu0 %v115
  %2399 = vmatpush1.msra.mxu0 %v114
  %2400 = vmatprep.subr.mxu0 %v111
  %2401 = vmatpush1.msra.mxu0 %v110
  %2402 = vmatprep.subr.mxu0 %v107
  %2403 = vmatpush1.msra.mxu0 %v106
  %2404 = vmatprep.subr.mxu0 %v103
  %2405 = vmatpush1.msra.mxu0 %v102
  %2406 = vmatprep.subr.mxu0 %v99
  %2407 = vmatpush1.msra.mxu0 %v98
  %2408 = vmatprep.subr.mxu0 %v95
  %2409 = vmatpush1.msra.mxu0 %v94
  %2410 = vmatprep.subr.mxu0 %v91
  %2411 = vmatpush1.msra.mxu0 %v90
  %2412 = vmatprep.subr.mxu0 %v87
  %2413 = vmatpush1.msra.mxu0 %v86
  %2414 = vmatprep.subr.mxu0 %v83
  %2415 = vmatpush1.msra.mxu0 %v82
  %2416 = vmatprep.subr.mxu0 %v79
  %2417 = vmatpush1.msra.mxu0 %v78
  %2418 = vmatprep.subr.mxu0 %v75
  %2419 = vmatpush1.msra.mxu0 %v74
  %2420 = vmatprep.subr.mxu0 0.0
  %2421 = vmatpush2.msra.mxu0 0.0
  %2422 = vmatprep.subr.mxu0 0.0
  %2423 = vmatpush2.msra.mxu0 0.0
  %2424 = vmatprep.subr.mxu0 0.0
  %2425 = vmatpush2.msra.mxu0 0.0
  %2426 = vmatprep.subr.mxu0 0.0
  %2427 = vmatpush2.msra.mxu0 0.0
  %2428 = vmatprep.subr.mxu0 0.0
  %2429 = vmatpush2.msra.mxu0 0.0
  %2430 = vmatprep.subr.mxu0 0.0
  %2431 = vmatpush2.msra.mxu0 0.0
  %2432 = vmatprep.subr.mxu0 0.0
  %2433 = vmatpush2.msra.mxu0 0.0
  %2434 = vmatprep.subr.mxu0 0.0
  %2435 = vmatpush2.msra.mxu0 0.0
  %2436 = vmatprep.subr.mxu0 0.0
  %2437 = vmatpush2.msra.mxu0 0.0
  %2438 = vmatprep.subr.mxu0 0.0
  %2439 = vmatpush2.msra.mxu0 0.0
  %2440 = vmatprep.subr.mxu0 0.0
  %2441 = vmatpush2.msra.mxu0 0.0
  %2442 = vmatprep.subr.mxu0 0.0
  %2443 = vmatpush2.msra.mxu0 0.0
  %2444 = vmatprep.subr.mxu0 0.0
  %2445 = vmatpush2.msra.mxu0 0.0
  %2446 = vmatprep.subr.mxu0 0.0
  %2447 = vmatpush2.msra.mxu0 0.0
  %2448 = vmatprep.subr.mxu0 0.0
  %2449 = vmatpush2.msra.mxu0 0.0
  %2450 = vmatprep.subr.mxu0 0.0
  %2451 = vmatpush2.msra.mxu0 0.0
  %2452 = vmatprep.mubr.f32.mxu0 0.0
  %2453 = vmatmul.mubr.f32.gmra.mxu0 %v2387
  %v2454 = vpop.f32.mrf.mxu0
  %v2455 = vadd.f32 0.0, %v2454
  %v2456 = vpop.f32.mrf.mxu0
  %v2457 = vadd.f32 0.0, %v2456
  %2458 = vdwg.mxu0
  %2459 = vmatprep.subr.mxu0 %v137
  %2460 = vmatpush1.msra.mxu0 %v136
  %2461 = vmatprep.subr.mxu0 %v133
  %2462 = vmatpush1.msra.mxu0 %v132
  %2463 = vmatprep.subr.mxu0 %v129
  %2464 = vmatpush1.msra.mxu0 %v128
  %2465 = vmatprep.subr.mxu0 %v125
  %2466 = vmatpush1.msra.mxu0 %v124
  %2467 = vmatprep.subr.mxu0 %v121
  %2468 = vmatpush1.msra.mxu0 %v120
  %2469 = vmatprep.subr.mxu0 %v117
  %2470 = vmatpush1.msra.mxu0 %v116
  %2471 = vmatprep.subr.mxu0 %v113
  %2472 = vmatpush1.msra.mxu0 %v112
  %2473 = vmatprep.subr.mxu0 %v109
  %2474 = vmatpush1.msra.mxu0 %v108
  %2475 = vmatprep.subr.mxu0 %v105
  %2476 = vmatpush1.msra.mxu0 %v104
  %2477 = vmatprep.subr.mxu0 %v101
  %2478 = vmatpush1.msra.mxu0 %v100
  %2479 = vmatprep.subr.mxu0 %v97
  %2480 = vmatpush1.msra.mxu0 %v96
  %2481 = vmatprep.subr.mxu0 %v93
  %2482 = vmatpush1.msra.mxu0 %v92
  %2483 = vmatprep.subr.mxu0 %v89
  %2484 = vmatpush1.msra.mxu0 %v88
  %2485 = vmatprep.subr.mxu0 %v85
  %2486 = vmatpush1.msra.mxu0 %v84
  %2487 = vmatprep.subr.mxu0 %v81
  %2488 = vmatpush1.msra.mxu0 %v80
  %2489 = vmatprep.subr.mxu0 %v77
  %2490 = vmatpush1.msra.mxu0 %v76
  %2491 = vmatprep.subr.mxu0 0.0
  %2492 = vmatpush2.msra.mxu0 0.0
  %2493 = vmatprep.subr.mxu0 0.0
  %2494 = vmatpush2.msra.mxu0 0.0
  %2495 = vmatprep.subr.mxu0 0.0
  %2496 = vmatpush2.msra.mxu0 0.0
  %2497 = vmatprep.subr.mxu0 0.0
  %2498 = vmatpush2.msra.mxu0 0.0
  %2499 = vmatprep.subr.mxu0 0.0
  %2500 = vmatpush2.msra.mxu0 0.0
  %2501 = vmatprep.subr.mxu0 0.0
  %2502 = vmatpush2.msra.mxu0 0.0
  %2503 = vmatprep.subr.mxu0 0.0
  %2504 = vmatpush2.msra.mxu0 0.0
  %2505 = vmatprep.subr.mxu0 0.0
  %2506 = vmatpush2.msra.mxu0 0.0
  %2507 = vmatprep.subr.mxu0 0.0
  %2508 = vmatpush2.msra.mxu0 0.0
  %2509 = vmatprep.subr.mxu0 0.0
  %2510 = vmatpush2.msra.mxu0 0.0
  %2511 = vmatprep.subr.mxu0 0.0
  %2512 = vmatpush2.msra.mxu0 0.0
  %2513 = vmatprep.subr.mxu0 0.0
  %2514 = vmatpush2.msra.mxu0 0.0
  %2515 = vmatprep.subr.mxu0 0.0
  %2516 = vmatpush2.msra.mxu0 0.0
  %2517 = vmatprep.subr.mxu0 0.0
  %2518 = vmatpush2.msra.mxu0 0.0
  %2519 = vmatprep.subr.mxu0 0.0
  %2520 = vmatpush2.msra.mxu0 0.0
  %2521 = vmatprep.subr.mxu0 0.0
  %2522 = vmatpush2.msra.mxu0 0.0
  %2523 = vmatprep.mubr.f32.mxu0 0.0
  %2524 = vmatmul.mubr.f32.gmra.mxu0 %v2387
  %v2525 = vpop.f32.mrf.mxu0
  %v2526 = vadd.f32 0.0, %v2525
  %v2527 = vpop.f32.mrf.mxu0
  %v2528 = vadd.f32 0.0, %v2527
  %2529 = vdwg.mxu0
  %v2532 = vrot.slane %v65, 7
  %v2533 = vsel %vm284, %v2532, %v64
  %v2534 = vsel %vm286, %v2533, 0
  %2536 = vmatprep.subr.mxu0 0.0
  %2537 = vmatpush1.msra.mxu0 0.0
  %2538 = vmatprep.subr.mxu0 0.0
  %2539 = vmatpush1.msra.mxu0 0.0
  %2540 = vmatprep.subr.mxu0 0.0
  %2541 = vmatpush1.msra.mxu0 0.0
  %2542 = vmatprep.subr.mxu0 0.0
  %2543 = vmatpush1.msra.mxu0 0.0
  %2544 = vmatprep.subr.mxu0 0.0
  %2545 = vmatpush1.msra.mxu0 0.0
  %2546 = vmatprep.subr.mxu0 0.0
  %2547 = vmatpush1.msra.mxu0 0.0
  %2548 = vmatprep.subr.mxu0 0.0
  %2549 = vmatpush1.msra.mxu0 0.0
  %2550 = vmatprep.subr.mxu0 0.0
  %2551 = vmatpush1.msra.mxu0 0.0
  %2552 = vmatprep.subr.mxu0 0.0
  %2553 = vmatpush1.msra.mxu0 0.0
  %2554 = vmatprep.subr.mxu0 0.0
  %2555 = vmatpush1.msra.mxu0 0.0
  %2556 = vmatprep.subr.mxu0 0.0
  %2557 = vmatpush1.msra.mxu0 0.0
  %2558 = vmatprep.subr.mxu0 0.0
  %2559 = vmatpush1.msra.mxu0 0.0
  %2560 = vmatprep.subr.mxu0 0.0
  %2561 = vmatpush1.msra.mxu0 0.0
  %2562 = vmatprep.subr.mxu0 0.0
  %2563 = vmatpush1.msra.mxu0 0.0
  %2564 = vmatprep.subr.mxu0 %v71
  %2565 = vmatpush1.msra.mxu0 %v70
  %2566 = vmatprep.subr.mxu0 %v67
  %2567 = vmatpush1.msra.mxu0 %v66
  %2568 = vmatprep.subr.mxu0 0.0
  %2569 = vmatpush2.msra.mxu0 0.0
  %2570 = vmatprep.subr.mxu0 0.0
  %2571 = vmatpush2.msra.mxu0 0.0
  %2572 = vmatprep.subr.mxu0 0.0
  %2573 = vmatpush2.msra.mxu0 0.0
  %2574 = vmatprep.subr.mxu0 0.0
  %2575 = vmatpush2.msra.mxu0 0.0
  %2576 = vmatprep.subr.mxu0 0.0
  %2577 = vmatpush2.msra.mxu0 0.0
  %2578 = vmatprep.subr.mxu0 0.0
  %2579 = vmatpush2.msra.mxu0 0.0
  %2580 = vmatprep.subr.mxu0 0.0
  %2581 = vmatpush2.msra.mxu0 0.0
  %2582 = vmatprep.subr.mxu0 0.0
  %2583 = vmatpush2.msra.mxu0 0.0
  %2584 = vmatprep.subr.mxu0 0.0
  %2585 = vmatpush2.msra.mxu0 0.0
  %2586 = vmatprep.subr.mxu0 0.0
  %2587 = vmatpush2.msra.mxu0 0.0
  %2588 = vmatprep.subr.mxu0 0.0
  %2589 = vmatpush2.msra.mxu0 0.0
  %2590 = vmatprep.subr.mxu0 0.0
  %2591 = vmatpush2.msra.mxu0 0.0
  %2592 = vmatprep.subr.mxu0 0.0
  %2593 = vmatpush2.msra.mxu0 0.0
  %2594 = vmatprep.subr.mxu0 0.0
  %2595 = vmatpush2.msra.mxu0 0.0
  %2596 = vmatprep.subr.mxu0 0.0
  %2597 = vmatpush2.msra.mxu0 0.0
  %2598 = vmatprep.subr.mxu0 0.0
  %2599 = vmatpush2.msra.mxu0 0.0
  %2600 = vmatprep.mubr.f32.mxu0 0.0
  %2601 = vmatmul.mubr.f32.gmra.mxu0 %v2534
  %v2602 = vpop.f32.mrf.mxu0
  %v2603 = vadd.f32 %v2455, %v2602
  %v2604 = vpop.f32.mrf.mxu0
  %v2605 = vadd.f32 %v2457, %v2604
  %2606 = vdwg.mxu0
  %2607 = vmatprep.subr.mxu0 0.0
  %2608 = vmatpush1.msra.mxu0 0.0
  %2609 = vmatprep.subr.mxu0 0.0
  %2610 = vmatpush1.msra.mxu0 0.0
  %2611 = vmatprep.subr.mxu0 0.0
  %2612 = vmatpush1.msra.mxu0 0.0
  %2613 = vmatprep.subr.mxu0 0.0
  %2614 = vmatpush1.msra.mxu0 0.0
  %2615 = vmatprep.subr.mxu0 0.0
  %2616 = vmatpush1.msra.mxu0 0.0
  %2617 = vmatprep.subr.mxu0 0.0
  %2618 = vmatpush1.msra.mxu0 0.0
  %2619 = vmatprep.subr.mxu0 0.0
  %2620 = vmatpush1.msra.mxu0 0.0
  %2621 = vmatprep.subr.mxu0 0.0
  %2622 = vmatpush1.msra.mxu0 0.0
  %2623 = vmatprep.subr.mxu0 0.0
  %2624 = vmatpush1.msra.mxu0 0.0
  %2625 = vmatprep.subr.mxu0 0.0
  %2626 = vmatpush1.msra.mxu0 0.0
  %2627 = vmatprep.subr.mxu0 0.0
  %2628 = vmatpush1.msra.mxu0 0.0
  %2629 = vmatprep.subr.mxu0 0.0
  %2630 = vmatpush1.msra.mxu0 0.0
  %2631 = vmatprep.subr.mxu0 0.0
  %2632 = vmatpush1.msra.mxu0 0.0
  %2633 = vmatprep.subr.mxu0 0.0
  %2634 = vmatpush1.msra.mxu0 0.0
  %2635 = vmatprep.subr.mxu0 %v73
  %2636 = vmatpush1.msra.mxu0 %v72
  %2637 = vmatprep.subr.mxu0 %v69
  %2638 = vmatpush1.msra.mxu0 %v68
  %2639 = vmatprep.subr.mxu0 0.0
  %2640 = vmatpush2.msra.mxu0 0.0
  %2641 = vmatprep.subr.mxu0 0.0
  %2642 = vmatpush2.msra.mxu0 0.0
  %2643 = vmatprep.subr.mxu0 0.0
  %2644 = vmatpush2.msra.mxu0 0.0
  %2645 = vmatprep.subr.mxu0 0.0
  %2646 = vmatpush2.msra.mxu0 0.0
  %2647 = vmatprep.subr.mxu0 0.0
  %2648 = vmatpush2.msra.mxu0 0.0
  %2649 = vmatprep.subr.mxu0 0.0
  %2650 = vmatpush2.msra.mxu0 0.0
  %2651 = vmatprep.subr.mxu0 0.0
  %2652 = vmatpush2.msra.mxu0 0.0
  %2653 = vmatprep.subr.mxu0 0.0
  %2654 = vmatpush2.msra.mxu0 0.0
  %2655 = vmatprep.subr.mxu0 0.0
  %2656 = vmatpush2.msra.mxu0 0.0
  %2657 = vmatprep.subr.mxu0 0.0
  %2658 = vmatpush2.msra.mxu0 0.0
  %2659 = vmatprep.subr.mxu0 0.0
  %2660 = vmatpush2.msra.mxu0 0.0
  %2661 = vmatprep.subr.mxu0 0.0
  %2662 = vmatpush2.msra.mxu0 0.0
  %2663 = vmatprep.subr.mxu0 0.0
  %2664 = vmatpush2.msra.mxu0 0.0
  %2665 = vmatprep.subr.mxu0 0.0
  %2666 = vmatpush2.msra.mxu0 0.0
  %2667 = vmatprep.subr.mxu0 0.0
  %2668 = vmatpush2.msra.mxu0 0.0
  %2669 = vmatprep.subr.mxu0 0.0
  %2670 = vmatpush2.msra.mxu0 0.0
  %2671 = vmatprep.mubr.f32.mxu0 0.0
  %2672 = vmatmul.mubr.f32.gmra.mxu0 %v2534
  %v2673 = vpop.f32.mrf.mxu0
  %v2674 = vadd.f32 %v2526, %v2673
  %v2675 = vpop.f32.mrf.mxu0
  %v2676 = vadd.f32 %v2528, %v2675
  %2677 = vdwg.mxu0
  %v2678 = vadd.f32 %v2603, %v435
  %v2679 = vadd.f32 %v2605, %v439
  %v2680 = vadd.f32 %v2674, %v443
  %v2681 = vadd.f32 %v2676, %v447
  %v2682 = vxor.u32 %v2678, 2147483648
  %v2683 = vmul.f32 %v2682, 1.442695
  %v2684 = vpow.pop %v2683
  %v2685 = vadd.f32 %v2684, 1.0
  %v2686 = vrcp.pop %v2685
  %v2687 = vmul.f32 1.0, %v2686
  %v2688 = vxor.u32 %v2679, 2147483648
  %v2689 = vmul.f32 %v2688, 1.442695
  %v2690 = vpow.pop %v2689
  %v2691 = vadd.f32 %v2690, 1.0
  %v2692 = vrcp.pop %v2691
  %v2693 = vmul.f32 1.0, %v2692
  %v2694 = vtanh.pop %v2680
  %v2695 = vxor.u32 %v2681, 2147483648
  %v2696 = vmul.f32 %v2695, 1.442695
  %v2697 = vpow.pop %v2696
  %v2698 = vadd.f32 %v2697, 1.0
  %v2699 = vrcp.pop %v2698
  %v2700 = vmul.f32 1.0, %v2699
  %v2701 = vmul.f32 %v2693, %v2385
  %v2702 = vmul.f32 %v2687, %v2694
  %v2703 = vadd.f32 %v2701, %v2702
  %v2704 = vtanh.pop %v2703
  %v2705 = vmul.f32 %v2700, %v2704
  %v2706 = vld [vmem:[%s4] sm:$0xff]
  %v2707 = vld [vmem:[%s4 + $0x8] sm:$0xff]
  %v2708 = vld [vmem:[%s4 + $0x10] sm:$0xff]
  %v2709 = vld [vmem:[%s4 + $0x18] sm:$0xff]
  %v2710 = vld [vmem:[%s4 + $0x20] sm:$0xff]
  %v2711 = vld [vmem:[%s4 + $0x28] sm:$0xff]
  %v2712 = vld [vmem:[%s4 + $0x30] sm:$0xff]
  %v2713 = vld [vmem:[%s4 + $0x38] sm:$0xff]
  %v2714 = vld [vmem:[%s4 + $0x40] sm:$0xff]
  %v2715 = vld [vmem:[%s4 + $0x48] sm:$0xff]
  %v2716 = vld [vmem:[%s4 + $0x50] sm:$0xff]
  %v2717 = vld [vmem:[%s4 + $0x58] sm:$0xff]
  %v2718 = vld [vmem:[%s4 + $0x60] sm:$0xff]
  %v2719 = vld [vmem:[%s4 + $0x68] sm:$0xff]
  %v2720 = vld [vmem:[%s4 + $0x70] sm:$0xff]
  %v2721 = vld [vmem:[%s4 + $0x78] sm:$0xff]
  %v2722 = vld [vmem:[%s4 + $0x80] sm:$0xff]
  %v2723 = vld [vmem:[%s4 + $0x88] sm:$0xff]
  %v2724 = vld [vmem:[%s4 + $0x90] sm:$0xff]
  %v2725 = vld [vmem:[%s4 + $0x98] sm:$0xff]
  %v2726 = vld [vmem:[%s4 + $0xa0] sm:$0xff]
  %v2727 = vld [vmem:[%s4 + $0xa8] sm:$0xff]
  %v2728 = vld [vmem:[%s4 + $0xb0] sm:$0xff]
  %v2729 = vld [vmem:[%s4 + $0xb8] sm:$0xff]
  %v2730 = vld [vmem:[%s4 + $0xc0] sm:$0xff]
  %v2731 = vld [vmem:[%s4 + $0xc8] sm:$0xff]
  %v2732 = vld [vmem:[%s4 + $0xd0] sm:$0xff]
  %v2733 = vld [vmem:[%s4 + $0xd8] sm:$0xff]
  %v2734 = vld [vmem:[%s4 + $0xe0] sm:$0xff]
  %v2735 = vld [vmem:[%s4 + $0xe8] sm:$0xff]
  %v2736 = vld [vmem:[%s4 + $0xf0] sm:$0xff]
  %v2737 = vld [vmem:[%s4 + $0xf8] sm:$0xff]
  %v2738 = vld [vmem:[%s4 + $0x100] sm:$0xff]
  %v2739 = vld [vmem:[%s4 + $0x108] sm:$0xff]
  %v2740 = vld [vmem:[%s4 + $0x110] sm:$0xff]
  %v2741 = vld [vmem:[%s4 + $0x118] sm:$0xff]
  %v2742 = vld [vmem:[%s4 + $0x120] sm:$0xff]
  %v2743 = vld [vmem:[%s4 + $0x128] sm:$0xff]
  %v2744 = vld [vmem:[%s4 + $0x130] sm:$0xff]
  %v2745 = vld [vmem:[%s4 + $0x138] sm:$0xff]
  %v2746 = vld [vmem:[%s4 + $0x140] sm:$0xff]
  %v2747 = vld [vmem:[%s4 + $0x148] sm:$0xff]
  %v2748 = vld [vmem:[%s4 + $0x150] sm:$0xff]
  %v2749 = vld [vmem:[%s4 + $0x158] sm:$0xff]
  %v2750 = vld [vmem:[%s4 + $0x160] sm:$0xff]
  %v2751 = vld [vmem:[%s4 + $0x168] sm:$0xff]
  %v2752 = vld [vmem:[%s4 + $0x170] sm:$0xff]
  %v2753 = vld [vmem:[%s4 + $0x178] sm:$0xff]
  %v2754 = vld [vmem:[%s4 + $0x180] sm:$0xff]
  %v2755 = vld [vmem:[%s4 + $0x188] sm:$0xff]
  %v2756 = vld [vmem:[%s4 + $0x190] sm:$0xff]
  %v2757 = vld [vmem:[%s4 + $0x198] sm:$0xff]
  %v2758 = vld [vmem:[%s4 + $0x1a0] sm:$0xff]
  %v2759 = vld [vmem:[%s4 + $0x1a8] sm:$0xff]
  %v2760 = vld [vmem:[%s4 + $0x1b0] sm:$0xff]
  %v2761 = vld [vmem:[%s4 + $0x1b8] sm:$0xff]
  %v2762 = vld [vmem:[%s4 + $0x1c0] sm:$0xff]
  %v2763 = vld [vmem:[%s4 + $0x1c8] sm:$0xff]
  %v2764 = vld [vmem:[%s4 + $0x1d0] sm:$0xff]
  %v2765 = vld [vmem:[%s4 + $0x1d8] sm:$0xff]
  %v2766 = vld [vmem:[%s4 + $0x1e0] sm:$0xff]
  %v2767 = vld [vmem:[%s4 + $0x1e8] sm:$0xff]
  %v2768 = vld [vmem:[%s4 + $0x1f0] sm:$0xff]
  %v2769 = vld [vmem:[%s4 + $0x1f8] sm:$0xff]
  %v2770 = vld [vmem:[%s5] sm:$0xff]
  %v2771 = vld [vmem:[%s5 + $0x8] sm:$0xff]
  %v2772 = vld [vmem:[%s5 + $0x10] sm:$0xff]
  %v2773 = vld [vmem:[%s5 + $0x18] sm:$0xff]
  %v2774 = vld [vmem:[%s5 + $0x20] sm:$0xff]
  %v2775 = vld [vmem:[%s5 + $0x28] sm:$0xff]
  %v2776 = vld [vmem:[%s5 + $0x30] sm:$0xff]
  %v2777 = vld [vmem:[%s5 + $0x38] sm:$0xff]
  %v2778 = vld [vmem:[%s5 + $0x40] sm:$0xff]
  %v2779 = vld [vmem:[%s5 + $0x48] sm:$0xff]
  %v2780 = vld [vmem:[%s5 + $0x50] sm:$0xff]
  %v2781 = vld [vmem:[%s5 + $0x58] sm:$0xff]
  %v2782 = vld [vmem:[%s5 + $0x60] sm:$0xff]
  %v2783 = vld [vmem:[%s5 + $0x68] sm:$0xff]
  %v2784 = vld [vmem:[%s5 + $0x70] sm:$0xff]
  %v2785 = vld [vmem:[%s5 + $0x78] sm:$0xff]
  %v2786 = vld [vmem:[%s5 + $0x80] sm:$0xff]
  %v2787 = vld [vmem:[%s5 + $0x88] sm:$0xff]
  %v2788 = vld [vmem:[%s5 + $0x90] sm:$0xff]
  %v2789 = vld [vmem:[%s5 + $0x98] sm:$0xff]
  %v2790 = vld [vmem:[%s5 + $0xa0] sm:$0xff]
  %v2791 = vld [vmem:[%s5 + $0xa8] sm:$0xff]
  %v2792 = vld [vmem:[%s5 + $0xb0] sm:$0xff]
  %v2793 = vld [vmem:[%s5 + $0xb8] sm:$0xff]
  %v2794 = vld [vmem:[%s5 + $0xc0] sm:$0xff]
  %v2795 = vld [vmem:[%s5 + $0xc8] sm:$0xff]
  %v2796 = vld [vmem:[%s5 + $0xd0] sm:$0xff]
  %v2797 = vld [vmem:[%s5 + $0xd8] sm:$0xff]
  %v2798 = vld [vmem:[%s5 + $0xe0] sm:$0xff]
  %v2799 = vld [vmem:[%s5 + $0xe8] sm:$0xff]
  %v2800 = vld [vmem:[%s5 + $0xf0] sm:$0xff]
  %v2801 = vld [vmem:[%s5 + $0xf8] sm:$0xff]
  %v2802 = vld [vmem:[%s5 + $0x100] sm:$0xff]
  %v2803 = vld [vmem:[%s5 + $0x108] sm:$0xff]
  %v2804 = vld [vmem:[%s5 + $0x110] sm:$0xff]
  %v2805 = vld [vmem:[%s5 + $0x118] sm:$0xff]
  %v2806 = vld [vmem:[%s5 + $0x120] sm:$0xff]
  %v2807 = vld [vmem:[%s5 + $0x128] sm:$0xff]
  %v2808 = vld [vmem:[%s5 + $0x130] sm:$0xff]
  %v2809 = vld [vmem:[%s5 + $0x138] sm:$0xff]
  %v2810 = vld [vmem:[%s5 + $0x140] sm:$0xff]
  %v2811 = vld [vmem:[%s5 + $0x148] sm:$0xff]
  %v2812 = vld [vmem:[%s5 + $0x150] sm:$0xff]
  %v2813 = vld [vmem:[%s5 + $0x158] sm:$0xff]
  %v2814 = vld [vmem:[%s5 + $0x160] sm:$0xff]
  %v2815 = vld [vmem:[%s5 + $0x168] sm:$0xff]
  %v2816 = vld [vmem:[%s5 + $0x170] sm:$0xff]
  %v2817 = vld [vmem:[%s5 + $0x178] sm:$0xff]
  %v2818 = vld [vmem:[%s5 + $0x180] sm:$0xff]
  %v2819 = vld [vmem:[%s5 + $0x188] sm:$0xff]
  %v2820 = vld [vmem:[%s5 + $0x190] sm:$0xff]
  %v2821 = vld [vmem:[%s5 + $0x198] sm:$0xff]
  %v2822 = vld [vmem:[%s5 + $0x1a0] sm:$0xff]
  %v2823 = vld [vmem:[%s5 + $0x1a8] sm:$0xff]
  %v2824 = vld [vmem:[%s5 + $0x1b0] sm:$0xff]
  %v2825 = vld [vmem:[%s5 + $0x1b8] sm:$0xff]
  %v2826 = vld [vmem:[%s5 + $0x1c0] sm:$0xff]
  %v2827 = vld [vmem:[%s5 + $0x1c8] sm:$0xff]
  %v2828 = vld [vmem:[%s5 + $0x1d0] sm:$0xff]
  %v2829 = vld [vmem:[%s5 + $0x1d8] sm:$0xff]
  %v2830 = vld [vmem:[%s5 + $0x1e0] sm:$0xff]
  %v2831 = vld [vmem:[%s5 + $0x1e8] sm:$0xff]
  %v2832 = vld [vmem:[%s5 + $0x1f0] sm:$0xff]
  %v2833 = vld [vmem:[%s5 + $0x1f8] sm:$0xff]
  %v2834 = vld [vmem:[%s6] sm:$0xf]
  %2835 = vmatprep.subr.mxu0 %v2831
  %2836 = vmatpush1.msra.mxu0 %v2830
  %2837 = vmatprep.subr.mxu0 %v2827
  %2838 = vmatpush1.msra.mxu0 %v2826
  %2839 = vmatprep.subr.mxu0 %v2823
  %2840 = vmatpush1.msra.mxu0 %v2822
  %2841 = vmatprep.subr.mxu0 %v2819
  %2842 = vmatpush1.msra.mxu0 %v2818
  %2843 = vmatprep.subr.mxu0 %v2815
  %2844 = vmatpush1.msra.mxu0 %v2814
  %2845 = vmatprep.subr.mxu0 %v2811
  %2846 = vmatpush1.msra.mxu0 %v2810
  %2847 = vmatprep.subr.mxu0 %v2807
  %2848 = vmatpush1.msra.mxu0 %v2806
  %2849 = vmatprep.subr.mxu0 %v2803
  %2850 = vmatpush1.msra.mxu0 %v2802
  %2851 = vmatprep.subr.mxu0 %v2799
  %2852 = vmatpush1.msra.mxu0 %v2798
  %2853 = vmatprep.subr.mxu0 %v2795
  %2854 = vmatpush1.msra.mxu0 %v2794
  %2855 = vmatprep.subr.mxu0 %v2791
  %2856 = vmatpush1.msra.mxu0 %v2790
  %2857 = vmatprep.subr.mxu0 %v2787
  %2858 = vmatpush1.msra.mxu0 %v2786
  %2859 = vmatprep.subr.mxu0 %v2783
  %2860 = vmatpush1.msra.mxu0 %v2782
  %2861 = vmatprep.subr.mxu0 %v2779
  %2862 = vmatpush1.msra.mxu0 %v2778
  %2863 = vmatprep.subr.mxu0 %v2775
  %2864 = vmatpush1.msra.mxu0 %v2774
  %2865 = vmatprep.subr.mxu0 %v2771
  %2866 = vmatpush1.msra.mxu0 %v2770
  %2867 = vmatprep.subr.mxu0 0.0
  %2868 = vmatpush2.msra.mxu0 0.0
  %2869 = vmatprep.subr.mxu0 0.0
  %2870 = vmatpush2.msra.mxu0 0.0
  %2871 = vmatprep.subr.mxu0 0.0
  %2872 = vmatpush2.msra.mxu0 0.0
  %2873 = vmatprep.subr.mxu0 0.0
  %2874 = vmatpush2.msra.mxu0 0.0
  %2875 = vmatprep.subr.mxu0 0.0
  %2876 = vmatpush2.msra.mxu0 0.0
  %2877 = vmatprep.subr.mxu0 0.0
  %2878 = vmatpush2.msra.mxu0 0.0
  %2879 = vmatprep.subr.mxu0 0.0
  %2880 = vmatpush2.msra.mxu0 0.0
  %2881 = vmatprep.subr.mxu0 0.0
  %2882 = vmatpush2.msra.mxu0 0.0
  %2883 = vmatprep.subr.mxu0 0.0
  %2884 = vmatpush2.msra.mxu0 0.0
  %2885 = vmatprep.subr.mxu0 0.0
  %2886 = vmatpush2.msra.mxu0 0.0
  %2887 = vmatprep.subr.mxu0 0.0
  %2888 = vmatpush2.msra.mxu0 0.0
  %2889 = vmatprep.subr.mxu0 0.0
  %2890 = vmatpush2.msra.mxu0 0.0
  %2891 = vmatprep.subr.mxu0 0.0
  %2892 = vmatpush2.msra.mxu0 0.0
  %2893 = vmatprep.subr.mxu0 0.0
  %2894 = vmatpush2.msra.mxu0 0.0
  %2895 = vmatprep.subr.mxu0 0.0
  %2896 = vmatpush2.msra.mxu0 0.0
  %2897 = vmatprep.subr.mxu0 0.0
  %2898 = vmatpush2.msra.mxu0 0.0
  %2899 = vmatprep.mubr.f32.mxu0 0.0
  %2900 = vmatmul.mubr.f32.gmra.mxu0 0.0
  %v2901 = vpop.f32.mrf.mxu0
  %v2902 = vadd.f32 0.0, %v2901
  %v2903 = vpop.f32.mrf.mxu0
  %v2904 = vadd.f32 0.0, %v2903
  %2905 = vdwg.mxu0
  %2906 = vmatprep.subr.mxu0 %v2833
  %2907 = vmatpush1.msra.mxu0 %v2832
  %2908 = vmatprep.subr.mxu0 %v2829
  %2909 = vmatpush1.msra.mxu0 %v2828
  %2910 = vmatprep.subr.mxu0 %v2825
  %2911 = vmatpush1.msra.mxu0 %v2824
  %2912 = vmatprep.subr.mxu0 %v2821
  %2913 = vmatpush1.msra.mxu0 %v2820
  %2914 = vmatprep.subr.mxu0 %v2817
  %2915 = vmatpush1.msra.mxu0 %v2816
  %2916 = vmatprep.subr.mxu0 %v2813
  %2917 = vmatpush1.msra.mxu0 %v2812
  %2918 = vmatprep.subr.mxu0 %v2809
  %2919 = vmatpush1.msra.mxu0 %v2808
  %2920 = vmatprep.subr.mxu0 %v2805
  %2921 = vmatpush1.msra.mxu0 %v2804
  %2922 = vmatprep.subr.mxu0 %v2801
  %2923 = vmatpush1.msra.mxu0 %v2800
  %2924 = vmatprep.subr.mxu0 %v2797
  %2925 = vmatpush1.msra.mxu0 %v2796
  %2926 = vmatprep.subr.mxu0 %v2793
  %2927 = vmatpush1.msra.mxu0 %v2792
  %2928 = vmatprep.subr.mxu0 %v2789
  %2929 = vmatpush1.msra.mxu0 %v2788
  %2930 = vmatprep.subr.mxu0 %v2785
  %2931 = vmatpush1.msra.mxu0 %v2784
  %2932 = vmatprep.subr.mxu0 %v2781
  %2933 = vmatpush1.msra.mxu0 %v2780
  %2934 = vmatprep.subr.mxu0 %v2777
  %2935 = vmatpush1.msra.mxu0 %v2776
  %2936 = vmatprep.subr.mxu0 %v2773
  %2937 = vmatpush1.msra.mxu0 %v2772
  %2938 = vmatprep.subr.mxu0 0.0
  %2939 = vmatpush2.msra.mxu0 0.0
  %2940 = vmatprep.subr.mxu0 0.0
  %2941 = vmatpush2.msra.mxu0 0.0
  %2942 = vmatprep.subr.mxu0 0.0
  %2943 = vmatpush2.msra.mxu0 0.0
  %2944 = vmatprep.subr.mxu0 0.0
  %2945 = vmatpush2.msra.mxu0 0.0
  %2946 = vmatprep.subr.mxu0 0.0
  %2947 = vmatpush2.msra.mxu0 0.0
  %2948 = vmatprep.subr.mxu0 0.0
  %2949 = vmatpush2.msra.mxu0 0.0
  %2950 = vmatprep.subr.mxu0 0.0
  %2951 = vmatpush2.msra.mxu0 0.0
  %2952 = vmatprep.subr.mxu0 0.0
  %2953 = vmatpush2.msra.mxu0 0.0
  %2954 = vmatprep.subr.mxu0 0.0
  %2955 = vmatpush2.msra.mxu0 0.0
  %2956 = vmatprep.subr.mxu0 0.0
  %2957 = vmatpush2.msra.mxu0 0.0
  %2958 = vmatprep.subr.mxu0 0.0
  %2959 = vmatpush2.msra.mxu0 0.0
  %2960 = vmatprep.subr.mxu0 0.0
  %2961 = vmatpush2.msra.mxu0 0.0
  %2962 = vmatprep.subr.mxu0 0.0
  %2963 = vmatpush2.msra.mxu0 0.0
  %2964 = vmatprep.subr.mxu0 0.0
  %2965 = vmatpush2.msra.mxu0 0.0
  %2966 = vmatprep.subr.mxu0 0.0
  %2967 = vmatpush2.msra.mxu0 0.0
  %2968 = vmatprep.subr.mxu0 0.0
  %2969 = vmatpush2.msra.mxu0 0.0
  %2970 = vmatprep.mubr.f32.mxu0 0.0
  %2971 = vmatmul.mubr.f32.gmra.mxu0 0.0
  %v2972 = vpop.f32.mrf.mxu0
  %v2973 = vadd.f32 0.0, %v2972
  %v2974 = vpop.f32.mrf.mxu0
  %v2975 = vadd.f32 0.0, %v2974
  %2976 = vdwg.mxu0
  %2977 = vmatprep.subr.mxu0 %v2767
  %2978 = vmatpush1.msra.mxu0 %v2766
  %2979 = vmatprep.subr.mxu0 %v2763
  %2980 = vmatpush1.msra.mxu0 %v2762
  %2981 = vmatprep.subr.mxu0 %v2759
  %2982 = vmatpush1.msra.mxu0 %v2758
  %2983 = vmatprep.subr.mxu0 %v2755
  %2984 = vmatpush1.msra.mxu0 %v2754
  %2985 = vmatprep.subr.mxu0 %v2751
  %2986 = vmatpush1.msra.mxu0 %v2750
  %2987 = vmatprep.subr.mxu0 %v2747
  %2988 = vmatpush1.msra.mxu0 %v2746
  %2989 = vmatprep.subr.mxu0 %v2743
  %2990 = vmatpush1.msra.mxu0 %v2742
  %2991 = vmatprep.subr.mxu0 %v2739
  %2992 = vmatpush1.msra.mxu0 %v2738
  %2993 = vmatprep.subr.mxu0 %v2735
  %2994 = vmatpush1.msra.mxu0 %v2734
  %2995 = vmatprep.subr.mxu0 %v2731
  %2996 = vmatpush1.msra.mxu0 %v2730
  %2997 = vmatprep.subr.mxu0 %v2727
  %2998 = vmatpush1.msra.mxu0 %v2726
  %2999 = vmatprep.subr.mxu0 %v2723
  %3000 = vmatpush1.msra.mxu0 %v2722
  %3001 = vmatprep.subr.mxu0 %v2719
  %3002 = vmatpush1.msra.mxu0 %v2718
  %3003 = vmatprep.subr.mxu0 %v2715
  %3004 = vmatpush1.msra.mxu0 %v2714
  %3005 = vmatprep.subr.mxu0 %v2711
  %3006 = vmatpush1.msra.mxu0 %v2710
  %3007 = vmatprep.subr.mxu0 %v2707
  %3008 = vmatpush1.msra.mxu0 %v2706
  %3009 = vmatprep.subr.mxu0 0.0
  %3010 = vmatpush2.msra.mxu0 0.0
  %3011 = vmatprep.subr.mxu0 0.0
  %3012 = vmatpush2.msra.mxu0 0.0
  %3013 = vmatprep.subr.mxu0 0.0
  %3014 = vmatpush2.msra.mxu0 0.0
  %3015 = vmatprep.subr.mxu0 0.0
  %3016 = vmatpush2.msra.mxu0 0.0
  %3017 = vmatprep.subr.mxu0 0.0
  %3018 = vmatpush2.msra.mxu0 0.0
  %3019 = vmatprep.subr.mxu0 0.0
  %3020 = vmatpush2.msra.mxu0 0.0
  %3021 = vmatprep.subr.mxu0 0.0
  %3022 = vmatpush2.msra.mxu0 0.0
  %3023 = vmatprep.subr.mxu0 0.0
  %3024 = vmatpush2.msra.mxu0 0.0
  %3025 = vmatprep.subr.mxu0 0.0
  %3026 = vmatpush2.msra.mxu0 0.0
  %3027 = vmatprep.subr.mxu0 0.0
  %3028 = vmatpush2.msra.mxu0 0.0
  %3029 = vmatprep.subr.mxu0 0.0
  %3030 = vmatpush2.msra.mxu0 0.0
  %3031 = vmatprep.subr.mxu0 0.0
  %3032 = vmatpush2.msra.mxu0 0.0
  %3033 = vmatprep.subr.mxu0 0.0
  %3034 = vmatpush2.msra.mxu0 0.0
  %3035 = vmatprep.subr.mxu0 0.0
  %3036 = vmatpush2.msra.mxu0 0.0
  %3037 = vmatprep.subr.mxu0 0.0
  %3038 = vmatpush2.msra.mxu0 0.0
  %3039 = vmatprep.subr.mxu0 0.0
  %3040 = vmatpush2.msra.mxu0 0.0
  %3041 = vmatprep.mubr.f32.mxu0 0.0
  %3042 = vmatmul.mubr.f32.gmra.mxu0 %v479
  %v3043 = vpop.f32.mrf.mxu0
  %v3044 = vadd.f32 %v2902, %v3043
  %v3045 = vpop.f32.mrf.mxu0
  %v3046 = vadd.f32 %v2904, %v3045
  %3047 = vdwg.mxu0
  %3048 = vmatprep.subr.mxu0 %v2769
  %3049 = vmatpush1.msra.mxu0 %v2768
  %3050 = vmatprep.subr.mxu0 %v2765
  %3051 = vmatpush1.msra.mxu0 %v2764
  %3052 = vmatprep.subr.mxu0 %v2761
  %3053 = vmatpush1.msra.mxu0 %v2760
  %3054 = vmatprep.subr.mxu0 %v2757
  %3055 = vmatpush1.msra.mxu0 %v2756
  %3056 = vmatprep.subr.mxu0 %v2753
  %3057 = vmatpush1.msra.mxu0 %v2752
  %3058 = vmatprep.subr.mxu0 %v2749
  %3059 = vmatpush1.msra.mxu0 %v2748
  %3060 = vmatprep.subr.mxu0 %v2745
  %3061 = vmatpush1.msra.mxu0 %v2744
  %3062 = vmatprep.subr.mxu0 %v2741
  %3063 = vmatpush1.msra.mxu0 %v2740
  %3064 = vmatprep.subr.mxu0 %v2737
  %3065 = vmatpush1.msra.mxu0 %v2736
  %3066 = vmatprep.subr.mxu0 %v2733
  %3067 = vmatpush1.msra.mxu0 %v2732
  %3068 = vmatprep.subr.mxu0 %v2729
  %3069 = vmatpush1.msra.mxu0 %v2728
  %3070 = vmatprep.subr.mxu0 %v2725
  %3071 = vmatpush1.msra.mxu0 %v2724
  %3072 = vmatprep.subr.mxu0 %v2721
  %3073 = vmatpush1.msra.mxu0 %v2720
  %3074 = vmatprep.subr.mxu0 %v2717
  %3075 = vmatpush1.msra.mxu0 %v2716
  %3076 = vmatprep.subr.mxu0 %v2713
  %3077 = vmatpush1.msra.mxu0 %v2712
  %3078 = vmatprep.subr.mxu0 %v2709
  %3079 = vmatpush1.msra.mxu0 %v2708
  %3080 = vmatprep.subr.mxu0 0.0
  %3081 = vmatpush2.msra.mxu0 0.0
  %3082 = vmatprep.subr.mxu0 0.0
  %3083 = vmatpush2.msra.mxu0 0.0
  %3084 = vmatprep.subr.mxu0 0.0
  %3085 = vmatpush2.msra.mxu0 0.0
  %3086 = vmatprep.subr.mxu0 0.0
  %3087 = vmatpush2.msra.mxu0 0.0
  %3088 = vmatprep.subr.mxu0 0.0
  %3089 = vmatpush2.msra.mxu0 0.0
  %3090 = vmatprep.subr.mxu0 0.0
  %3091 = vmatpush2.msra.mxu0 0.0
  %3092 = vmatprep.subr.mxu0 0.0
  %3093 = vmatpush2.msra.mxu0 0.0
  %3094 = vmatprep.subr.mxu0 0.0
  %3095 = vmatpush2.msra.mxu0 0.0
  %3096 = vmatprep.subr.mxu0 0.0
  %3097 = vmatpush2.msra.mxu0 0.0
  %3098 = vmatprep.subr.mxu0 0.0
  %3099 = vmatpush2.msra.mxu0 0.0
  %3100 = vmatprep.subr.mxu0 0.0
  %3101 = vmatpush2.msra.mxu0 0.0
  %3102 = vmatprep.subr.mxu0 0.0
  %3103 = vmatpush2.msra.mxu0 0.0
  %3104 = vmatprep.subr.mxu0 0.0
  %3105 = vmatpush2.msra.mxu0 0.0
  %3106 = vmatprep.subr.mxu0 0.0
  %3107 = vmatpush2.msra.mxu0 0.0
  %3108 = vmatprep.subr.mxu0 0.0
  %3109 = vmatpush2.msra.mxu0 0.0
  %3110 = vmatprep.subr.mxu0 0.0
  %3111 = vmatpush2.msra.mxu0 0.0
  %3112 = vmatprep.mubr.f32.mxu0 0.0
  %3113 = vmatmul.mubr.f32.gmra.mxu0 %v479
  %v3114 = vpop.f32.mrf.mxu0
  %v3115 = vadd.f32 %v2973, %v3114
  %v3116 = vpop.f32.mrf.mxu0
  %v3117 = vadd.f32 %v2975, %v3116
  %3118 = vdwg.mxu0
  %v3120 = vlaneseq
  %v3121 = vshrl.u32 %v3120, 7
  %v3122 = vsub.s32 0, %v3121
  %v3123 = vrot.slane %v2834, %v3122
  %v3124 = vlaneseq
  %v3125 = vshrl.u32 %v3124, 7
  %v3126 = vsub.s32 1, %v3125
  %v3127 = vrot.slane %v2834, %v3126
  %v3128 = vlaneseq
  %v3129 = vshrl.u32 %v3128, 7
  %v3130 = vsub.s32 2, %v3129
  %v3131 = vrot.slane %v2834, %v3130
  %v3132 = vlaneseq
  %v3133 = vshrl.u32 %v3132, 7
  %v3134 = vsub.s32 3, %v3133
  %v3135 = vrot.slane %v2834, %v3134
  %v3140 = vadd.f32 %v3044, %v3123
  %v3141 = vadd.f32 %v3046, %v3127
  %v3142 = vadd.f32 %v3115, %v3131
  %v3143 = vadd.f32 %v3117, %v3135
  %v3144 = vxor.u32 %v3140, 2147483648
  %v3145 = vmul.f32 %v3144, 1.442695
  %v3146 = vpow.pop %v3145
  %v3147 = vadd.f32 %v3146, 1.0
  %v3148 = vrcp.pop %v3147
  %v3149 = vmul.f32 1.0, %v3148
  %v3150 = vxor.u32 %v3141, 2147483648
  %v3151 = vmul.f32 %v3150, 1.442695
  %v3152 = vpow.pop %v3151
  %v3153 = vadd.f32 %v3152, 1.0
  %v3154 = vrcp.pop %v3153
  %v3155 = vmul.f32 1.0, %v3154
  %v3156 = vtanh.pop %v3142
  %v3157 = vxor.u32 %v3143, 2147483648
  %v3158 = vmul.f32 %v3157, 1.442695
  %v3159 = vpow.pop %v3158
  %v3160 = vadd.f32 %v3159, 1.0
  %v3161 = vrcp.pop %v3160
  %v3162 = vmul.f32 1.0, %v3161
  %v3163 = vmul.f32 %v3155, 0.0
  %v3164 = vmul.f32 %v3149, %v3156
  %v3165 = vadd.f32 %v3163, %v3164
  %v3166 = vtanh.pop %v3165
  %v3167 = vmul.f32 %v3162, %v3166
  %3168 = vmatprep.subr.mxu0 %v2831
  %3169 = vmatpush1.msra.mxu0 %v2830
  %3170 = vmatprep.subr.mxu0 %v2827
  %3171 = vmatpush1.msra.mxu0 %v2826
  %3172 = vmatprep.subr.mxu0 %v2823
  %3173 = vmatpush1.msra.mxu0 %v2822
  %3174 = vmatprep.subr.mxu0 %v2819
  %3175 = vmatpush1.msra.mxu0 %v2818
  %3176 = vmatprep.subr.mxu0 %v2815
  %3177 = vmatpush1.msra.mxu0 %v2814
  %3178 = vmatprep.subr.mxu0 %v2811
  %3179 = vmatpush1.msra.mxu0 %v2810
  %3180 = vmatprep.subr.mxu0 %v2807
  %3181 = vmatpush1.msra.mxu0 %v2806
  %3182 = vmatprep.subr.mxu0 %v2803
  %3183 = vmatpush1.msra.mxu0 %v2802
  %3184 = vmatprep.subr.mxu0 %v2799
  %3185 = vmatpush1.msra.mxu0 %v2798
  %3186 = vmatprep.subr.mxu0 %v2795
  %3187 = vmatpush1.msra.mxu0 %v2794
  %3188 = vmatprep.subr.mxu0 %v2791
  %3189 = vmatpush1.msra.mxu0 %v2790
  %3190 = vmatprep.subr.mxu0 %v2787
  %3191 = vmatpush1.msra.mxu0 %v2786
  %3192 = vmatprep.subr.mxu0 %v2783
  %3193 = vmatpush1.msra.mxu0 %v2782
  %3194 = vmatprep.subr.mxu0 %v2779
  %3195 = vmatpush1.msra.mxu0 %v2778
  %3196 = vmatprep.subr.mxu0 %v2775
  %3197 = vmatpush1.msra.mxu0 %v2774
  %3198 = vmatprep.subr.mxu0 %v2771
  %3199 = vmatpush1.msra.mxu0 %v2770
  %3200 = vmatprep.subr.mxu0 0.0
  %3201 = vmatpush2.msra.mxu0 0.0
  %3202 = vmatprep.subr.mxu0 0.0
  %3203 = vmatpush2.msra.mxu0 0.0
  %3204 = vmatprep.subr.mxu0 0.0
  %3205 = vmatpush2.msra.mxu0 0.0
  %3206 = vmatprep.subr.mxu0 0.0
  %3207 = vmatpush2.msra.mxu0 0.0
  %3208 = vmatprep.subr.mxu0 0.0
  %3209 = vmatpush2.msra.mxu0 0.0
  %3210 = vmatprep.subr.mxu0 0.0
  %3211 = vmatpush2.msra.mxu0 0.0
  %3212 = vmatprep.subr.mxu0 0.0
  %3213 = vmatpush2.msra.mxu0 0.0
  %3214 = vmatprep.subr.mxu0 0.0
  %3215 = vmatpush2.msra.mxu0 0.0
  %3216 = vmatprep.subr.mxu0 0.0
  %3217 = vmatpush2.msra.mxu0 0.0
  %3218 = vmatprep.subr.mxu0 0.0
  %3219 = vmatpush2.msra.mxu0 0.0
  %3220 = vmatprep.subr.mxu0 0.0
  %3221 = vmatpush2.msra.mxu0 0.0
  %3222 = vmatprep.subr.mxu0 0.0
  %3223 = vmatpush2.msra.mxu0 0.0
  %3224 = vmatprep.subr.mxu0 0.0
  %3225 = vmatpush2.msra.mxu0 0.0
  %3226 = vmatprep.subr.mxu0 0.0
  %3227 = vmatpush2.msra.mxu0 0.0
  %3228 = vmatprep.subr.mxu0 0.0
  %3229 = vmatpush2.msra.mxu0 0.0
  %3230 = vmatprep.subr.mxu0 0.0
  %3231 = vmatpush2.msra.mxu0 0.0
  %3232 = vmatprep.mubr.f32.mxu0 0.0
  %3233 = vmatmul.mubr.f32.gmra.mxu0 %v3167
  %v3234 = vpop.f32.mrf.mxu0
  %v3235 = vadd.f32 0.0, %v3234
  %v3236 = vpop.f32.mrf.mxu0
  %v3237 = vadd.f32 0.0, %v3236
  %3238 = vdwg.mxu0
  %3239 = vmatprep.subr.mxu0 %v2833
  %3240 = vmatpush1.msra.mxu0 %v2832
  %3241 = vmatprep.subr.mxu0 %v2829
  %3242 = vmatpush1.msra.mxu0 %v2828
  %3243 = vmatprep.subr.mxu0 %v2825
  %3244 = vmatpush1.msra.mxu0 %v2824
  %3245 = vmatprep.subr.mxu0 %v2821
  %3246 = vmatpush1.msra.mxu0 %v2820
  %3247 = vmatprep.subr.mxu0 %v2817
  %3248 = vmatpush1.msra.mxu0 %v2816
  %3249 = vmatprep.subr.mxu0 %v2813
  %3250 = vmatpush1.msra.mxu0 %v2812
  %3251 = vmatprep.subr.mxu0 %v2809
  %3252 = vmatpush1.msra.mxu0 %v2808
  %3253 = vmatprep.subr.mxu0 %v2805
  %3254 = vmatpush1.msra.mxu0 %v2804
  %3255 = vmatprep.subr.mxu0 %v2801
  %3256 = vmatpush1.msra.mxu0 %v2800
  %3257 = vmatprep.subr.mxu0 %v2797
  %3258 = vmatpush1.msra.mxu0 %v2796
  %3259 = vmatprep.subr.mxu0 %v2793
  %3260 = vmatpush1.msra.mxu0 %v2792
  %3261 = vmatprep.subr.mxu0 %v2789
  %3262 = vmatpush1.msra.mxu0 %v2788
  %3263 = vmatprep.subr.mxu0 %v2785
  %3264 = vmatpush1.msra.mxu0 %v2784
  %3265 = vmatprep.subr.mxu0 %v2781
  %3266 = vmatpush1.msra.mxu0 %v2780
  %3267 = vmatprep.subr.mxu0 %v2777
  %3268 = vmatpush1.msra.mxu0 %v2776
  %3269 = vmatprep.subr.mxu0 %v2773
  %3270 = vmatpush1.msra.mxu0 %v2772
  %3271 = vmatprep.subr.mxu0 0.0
  %3272 = vmatpush2.msra.mxu0 0.0
  %3273 = vmatprep.subr.mxu0 0.0
  %3274 = vmatpush2.msra.mxu0 0.0
  %3275 = vmatprep.subr.mxu0 0.0
  %3276 = vmatpush2.msra.mxu0 0.0
  %3277 = vmatprep.subr.mxu0 0.0
  %3278 = vmatpush2.msra.mxu0 0.0
  %3279 = vmatprep.subr.mxu0 0.0
  %3280 = vmatpush2.msra.mxu0 0.0
  %3281 = vmatprep.subr.mxu0 0.0
  %3282 = vmatpush2.msra.mxu0 0.0
  %3283 = vmatprep.subr.mxu0 0.0
  %3284 = vmatpush2.msra.mxu0 0.0
  %3285 = vmatprep.subr.mxu0 0.0
  %3286 = vmatpush2.msra.mxu0 0.0
  %3287 = vmatprep.subr.mxu0 0.0
  %3288 = vmatpush2.msra.mxu0 0.0
  %3289 = vmatprep.subr.mxu0 0.0
  %3290 = vmatpush2.msra.mxu0 0.0
  %3291 = vmatprep.subr.mxu0 0.0
  %3292 = vmatpush2.msra.mxu0 0.0
  %3293 = vmatprep.subr.mxu0 0.0
  %3294 = vmatpush2.msra.mxu0 0.0
  %3295 = vmatprep.subr.mxu0 0.0
  %3296 = vmatpush2.msra.mxu0 0.0
  %3297 = vmatprep.subr.mxu0 0.0
  %3298 = vmatpush2.msra.mxu0 0.0
  %3299 = vmatprep.subr.mxu0 0.0
  %3300 = vmatpush2.msra.mxu0 0.0
  %3301 = vmatprep.subr.mxu0 0.0
  %3302 = vmatpush2.msra.mxu0 0.0
  %3303 = vmatprep.mubr.f32.mxu0 0.0
  %3304 = vmatmul.mubr.f32.gmra.mxu0 %v3167
  %v3305 = vpop.f32.mrf.mxu0
  %v3306 = vadd.f32 0.0, %v3305
  %v3307 = vpop.f32.mrf.mxu0
  %v3308 = vadd.f32 0.0, %v3307
  %3309 = vdwg.mxu0
  %3310 = vmatprep.subr.mxu0 %v2767
  %3311 = vmatpush1.msra.mxu0 %v2766
  %3312 = vmatprep.subr.mxu0 %v2763
  %3313 = vmatpush1.msra.mxu0 %v2762
  %3314 = vmatprep.subr.mxu0 %v2759
  %3315 = vmatpush1.msra.mxu0 %v2758
  %3316 = vmatprep.subr.mxu0 %v2755
  %3317 = vmatpush1.msra.mxu0 %v2754
  %3318 = vmatprep.subr.mxu0 %v2751
  %3319 = vmatpush1.msra.mxu0 %v2750
  %3320 = vmatprep.subr.mxu0 %v2747
  %3321 = vmatpush1.msra.mxu0 %v2746
  %3322 = vmatprep.subr.mxu0 %v2743
  %3323 = vmatpush1.msra.mxu0 %v2742
  %3324 = vmatprep.subr.mxu0 %v2739
  %3325 = vmatpush1.msra.mxu0 %v2738
  %3326 = vmatprep.subr.mxu0 %v2735
  %3327 = vmatpush1.msra.mxu0 %v2734
  %3328 = vmatprep.subr.mxu0 %v2731
  %3329 = vmatpush1.msra.mxu0 %v2730
  %3330 = vmatprep.subr.mxu0 %v2727
  %3331 = vmatpush1.msra.mxu0 %v2726
  %3332 = vmatprep.subr.mxu0 %v2723
  %3333 = vmatpush1.msra.mxu0 %v2722
  %3334 = vmatprep.subr.mxu0 %v2719
  %3335 = vmatpush1.msra.mxu0 %v2718
  %3336 = vmatprep.subr.mxu0 %v2715
  %3337 = vmatpush1.msra.mxu0 %v2714
  %3338 = vmatprep.subr.mxu0 %v2711
  %3339 = vmatpush1.msra.mxu0 %v2710
  %3340 = vmatprep.subr.mxu0 %v2707
  %3341 = vmatpush1.msra.mxu0 %v2706
  %3342 = vmatprep.subr.mxu0 0.0
  %3343 = vmatpush2.msra.mxu0 0.0
  %3344 = vmatprep.subr.mxu0 0.0
  %3345 = vmatpush2.msra.mxu0 0.0
  %3346 = vmatprep.subr.mxu0 0.0
  %3347 = vmatpush2.msra.mxu0 0.0
  %3348 = vmatprep.subr.mxu0 0.0
  %3349 = vmatpush2.msra.mxu0 0.0
  %3350 = vmatprep.subr.mxu0 0.0
  %3351 = vmatpush2.msra.mxu0 0.0
  %3352 = vmatprep.subr.mxu0 0.0
  %3353 = vmatpush2.msra.mxu0 0.0
  %3354 = vmatprep.subr.mxu0 0.0
  %3355 = vmatpush2.msra.mxu0 0.0
  %3356 = vmatprep.subr.mxu0 0.0
  %3357 = vmatpush2.msra.mxu0 0.0
  %3358 = vmatprep.subr.mxu0 0.0
  %3359 = vmatpush2.msra.mxu0 0.0
  %3360 = vmatprep.subr.mxu0 0.0
  %3361 = vmatpush2.msra.mxu0 0.0
  %3362 = vmatprep.subr.mxu0 0.0
  %3363 = vmatpush2.msra.mxu0 0.0
  %3364 = vmatprep.subr.mxu0 0.0
  %3365 = vmatpush2.msra.mxu0 0.0
  %3366 = vmatprep.subr.mxu0 0.0
  %3367 = vmatpush2.msra.mxu0 0.0
  %3368 = vmatprep.subr.mxu0 0.0
  %3369 = vmatpush2.msra.mxu0 0.0
  %3370 = vmatprep.subr.mxu0 0.0
  %3371 = vmatpush2.msra.mxu0 0.0
  %3372 = vmatprep.subr.mxu0 0.0
  %3373 = vmatpush2.msra.mxu0 0.0
  %3374 = vmatprep.mubr.f32.mxu0 0.0
  %3375 = vmatmul.mubr.f32.gmra.mxu0 %v797
  %v3376 = vpop.f32.mrf.mxu0
  %v3377 = vadd.f32 %v3235, %v3376
  %v3378 = vpop.f32.mrf.mxu0
  %v3379 = vadd.f32 %v3237, %v3378
  %3380 = vdwg.mxu0
  %3381 = vmatprep.subr.mxu0 %v2769
  %3382 = vmatpush1.msra.mxu0 %v2768
  %3383 = vmatprep.subr.mxu0 %v2765
  %3384 = vmatpush1.msra.mxu0 %v2764
  %3385 = vmatprep.subr.mxu0 %v2761
  %3386 = vmatpush1.msra.mxu0 %v2760
  %3387 = vmatprep.subr.mxu0 %v2757
  %3388 = vmatpush1.msra.mxu0 %v2756
  %3389 = vmatprep.subr.mxu0 %v2753
  %3390 = vmatpush1.msra.mxu0 %v2752
  %3391 = vmatprep.subr.mxu0 %v2749
  %3392 = vmatpush1.msra.mxu0 %v2748
  %3393 = vmatprep.subr.mxu0 %v2745
  %3394 = vmatpush1.msra.mxu0 %v2744
  %3395 = vmatprep.subr.mxu0 %v2741
  %3396 = vmatpush1.msra.mxu0 %v2740
  %3397 = vmatprep.subr.mxu0 %v2737
  %3398 = vmatpush1.msra.mxu0 %v2736
  %3399 = vmatprep.subr.mxu0 %v2733
  %3400 = vmatpush1.msra.mxu0 %v2732
  %3401 = vmatprep.subr.mxu0 %v2729
  %3402 = vmatpush1.msra.mxu0 %v2728
  %3403 = vmatprep.subr.mxu0 %v2725
  %3404 = vmatpush1.msra.mxu0 %v2724
  %3405 = vmatprep.subr.mxu0 %v2721
  %3406 = vmatpush1.msra.mxu0 %v2720
  %3407 = vmatprep.subr.mxu0 %v2717
  %3408 = vmatpush1.msra.mxu0 %v2716
  %3409 = vmatprep.subr.mxu0 %v2713
  %3410 = vmatpush1.msra.mxu0 %v2712
  %3411 = vmatprep.subr.mxu0 %v2709
  %3412 = vmatpush1.msra.mxu0 %v2708
  %3413 = vmatprep.subr.mxu0 0.0
  %3414 = vmatpush2.msra.mxu0 0.0
  %3415 = vmatprep.subr.mxu0 0.0
  %3416 = vmatpush2.msra.mxu0 0.0
  %3417 = vmatprep.subr.mxu0 0.0
  %3418 = vmatpush2.msra.mxu0 0.0
  %3419 = vmatprep.subr.mxu0 0.0
  %3420 = vmatpush2.msra.mxu0 0.0
  %3421 = vmatprep.subr.mxu0 0.0
  %3422 = vmatpush2.msra.mxu0 0.0
  %3423 = vmatprep.subr.mxu0 0.0
  %3424 = vmatpush2.msra.mxu0 0.0
  %3425 = vmatprep.subr.mxu0 0.0
  %3426 = vmatpush2.msra.mxu0 0.0
  %3427 = vmatprep.subr.mxu0 0.0
  %3428 = vmatpush2.msra.mxu0 0.0
  %3429 = vmatprep.subr.mxu0 0.0
  %3430 = vmatpush2.msra.mxu0 0.0
  %3431 = vmatprep.subr.mxu0 0.0
  %3432 = vmatpush2.msra.mxu0 0.0
  %3433 = vmatprep.subr.mxu0 0.0
  %3434 = vmatpush2.msra.mxu0 0.0
  %3435 = vmatprep.subr.mxu0 0.0
  %3436 = vmatpush2.msra.mxu0 0.0
  %3437 = vmatprep.subr.mxu0 0.0
  %3438 = vmatpush2.msra.mxu0 0.0
  %3439 = vmatprep.subr.mxu0 0.0
  %3440 = vmatpush2.msra.mxu0 0.0
  %3441 = vmatprep.subr.mxu0 0.0
  %3442 = vmatpush2.msra.mxu0 0.0
  %3443 = vmatprep.subr.mxu0 0.0
  %3444 = vmatpush2.msra.mxu0 0.0
  %3445 = vmatprep.mubr.f32.mxu0 0.0
  %3446 = vmatmul.mubr.f32.gmra.mxu0 %v797
  %v3447 = vpop.f32.mrf.mxu0
  %v3448 = vadd.f32 %v3306, %v3447
  %v3449 = vpop.f32.mrf.mxu0
  %v3450 = vadd.f32 %v3308, %v3449
  %3451 = vdwg.mxu0
  %v3452 = vadd.f32 %v3377, %v3123
  %v3453 = vadd.f32 %v3379, %v3127
  %v3454 = vadd.f32 %v3448, %v3131
  %v3455 = vadd.f32 %v3450, %v3135
  %v3456 = vxor.u32 %v3452, 2147483648
  %v3457 = vmul.f32 %v3456, 1.442695
  %v3458 = vpow.pop %v3457
  %v3459 = vadd.f32 %v3458, 1.0
  %v3460 = vrcp.pop %v3459
  %v3461 = vmul.f32 1.0, %v3460
  %v3462 = vxor.u32 %v3453, 2147483648
  %v3463 = vmul.f32 %v3462, 1.442695
  %v3464 = vpow.pop %v3463
  %v3465 = vadd.f32 %v3464, 1.0
  %v3466 = vrcp.pop %v3465
  %v3467 = vmul.f32 1.0, %v3466
  %v3468 = vtanh.pop %v3454
  %v3469 = vxor.u32 %v3455, 2147483648
  %v3470 = vmul.f32 %v3469, 1.442695
  %v3471 = vpow.pop %v3470
  %v3472 = vadd.f32 %v3471, 1.0
  %v3473 = vrcp.pop %v3472
  %v3474 = vmul.f32 1.0, %v3473
  %v3475 = vmul.f32 %v3467, %v3165
  %v3476 = vmul.f32 %v3461, %v3468
  %v3477 = vadd.f32 %v3475, %v3476
  %v3478 = vtanh.pop %v3477
  %v3479 = vmul.f32 %v3474, %v3478
  %3480 = vmatprep.subr.mxu0 %v2831
  %3481 = vmatpush1.msra.mxu0 %v2830
  %3482 = vmatprep.subr.mxu0 %v2827
  %3483 = vmatpush1.msra.mxu0 %v2826
  %3484 = vmatprep.subr.mxu0 %v2823
  %3485 = vmatpush1.msra.mxu0 %v2822
  %3486 = vmatprep.subr.mxu0 %v2819
  %3487 = vmatpush1.msra.mxu0 %v2818
  %3488 = vmatprep.subr.mxu0 %v2815
  %3489 = vmatpush1.msra.mxu0 %v2814
  %3490 = vmatprep.subr.mxu0 %v2811
  %3491 = vmatpush1.msra.mxu0 %v2810
  %3492 = vmatprep.subr.mxu0 %v2807
  %3493 = vmatpush1.msra.mxu0 %v2806
  %3494 = vmatprep.subr.mxu0 %v2803
  %3495 = vmatpush1.msra.mxu0 %v2802
  %3496 = vmatprep.subr.mxu0 %v2799
  %3497 = vmatpush1.msra.mxu0 %v2798
  %3498 = vmatprep.subr.mxu0 %v2795
  %3499 = vmatpush1.msra.mxu0 %v2794
  %3500 = vmatprep.subr.mxu0 %v2791
  %3501 = vmatpush1.msra.mxu0 %v2790
  %3502 = vmatprep.subr.mxu0 %v2787
  %3503 = vmatpush1.msra.mxu0 %v2786
  %3504 = vmatprep.subr.mxu0 %v2783
  %3505 = vmatpush1.msra.mxu0 %v2782
  %3506 = vmatprep.subr.mxu0 %v2779
  %3507 = vmatpush1.msra.mxu0 %v2778
  %3508 = vmatprep.subr.mxu0 %v2775
  %3509 = vmatpush1.msra.mxu0 %v2774
  %3510 = vmatprep.subr.mxu0 %v2771
  %3511 = vmatpush1.msra.mxu0 %v2770
  %3512 = vmatprep.subr.mxu0 0.0
  %3513 = vmatpush2.msra.mxu0 0.0
  %3514 = vmatprep.subr.mxu0 0.0
  %3515 = vmatpush2.msra.mxu0 0.0
  %3516 = vmatprep.subr.mxu0 0.0
  %3517 = vmatpush2.msra.mxu0 0.0
  %3518 = vmatprep.subr.mxu0 0.0
  %3519 = vmatpush2.msra.mxu0 0.0
  %3520 = vmatprep.subr.mxu0 0.0
  %3521 = vmatpush2.msra.mxu0 0.0
  %3522 = vmatprep.subr.mxu0 0.0
  %3523 = vmatpush2.msra.mxu0 0.0
  %3524 = vmatprep.subr.mxu0 0.0
  %3525 = vmatpush2.msra.mxu0 0.0
  %3526 = vmatprep.subr.mxu0 0.0
  %3527 = vmatpush2.msra.mxu0 0.0
  %3528 = vmatprep.subr.mxu0 0.0
  %3529 = vmatpush2.msra.mxu0 0.0
  %3530 = vmatprep.subr.mxu0 0.0
  %3531 = vmatpush2.msra.mxu0 0.0
  %3532 = vmatprep.subr.mxu0 0.0
  %3533 = vmatpush2.msra.mxu0 0.0
  %3534 = vmatprep.subr.mxu0 0.0
  %3535 = vmatpush2.msra.mxu0 0.0
  %3536 = vmatprep.subr.mxu0 0.0
  %3537 = vmatpush2.msra.mxu0 0.0
  %3538 = vmatprep.subr.mxu0 0.0
  %3539 = vmatpush2.msra.mxu0 0.0
  %3540 = vmatprep.subr.mxu0 0.0
  %3541 = vmatpush2.msra.mxu0 0.0
  %3542 = vmatprep.subr.mxu0 0.0
  %3543 = vmatpush2.msra.mxu0 0.0
  %3544 = vmatprep.mubr.f32.mxu0 0.0
  %3545 = vmatmul.mubr.f32.gmra.mxu0 %v3479
  %v3546 = vpop.f32.mrf.mxu0
  %v3547 = vadd.f32 0.0, %v3546
  %v3548 = vpop.f32.mrf.mxu0
  %v3549 = vadd.f32 0.0, %v3548
  %3550 = vdwg.mxu0
  %3551 = vmatprep.subr.mxu0 %v2833
  %3552 = vmatpush1.msra.mxu0 %v2832
  %3553 = vmatprep.subr.mxu0 %v2829
  %3554 = vmatpush1.msra.mxu0 %v2828
  %3555 = vmatprep.subr.mxu0 %v2825
  %3556 = vmatpush1.msra.mxu0 %v2824
  %3557 = vmatprep.subr.mxu0 %v2821
  %3558 = vmatpush1.msra.mxu0 %v2820
  %3559 = vmatprep.subr.mxu0 %v2817
  %3560 = vmatpush1.msra.mxu0 %v2816
  %3561 = vmatprep.subr.mxu0 %v2813
  %3562 = vmatpush1.msra.mxu0 %v2812
  %3563 = vmatprep.subr.mxu0 %v2809
  %3564 = vmatpush1.msra.mxu0 %v2808
  %3565 = vmatprep.subr.mxu0 %v2805
  %3566 = vmatpush1.msra.mxu0 %v2804
  %3567 = vmatprep.subr.mxu0 %v2801
  %3568 = vmatpush1.msra.mxu0 %v2800
  %3569 = vmatprep.subr.mxu0 %v2797
  %3570 = vmatpush1.msra.mxu0 %v2796
  %3571 = vmatprep.subr.mxu0 %v2793
  %3572 = vmatpush1.msra.mxu0 %v2792
  %3573 = vmatprep.subr.mxu0 %v2789
  %3574 = vmatpush1.msra.mxu0 %v2788
  %3575 = vmatprep.subr.mxu0 %v2785
  %3576 = vmatpush1.msra.mxu0 %v2784
  %3577 = vmatprep.subr.mxu0 %v2781
  %3578 = vmatpush1.msra.mxu0 %v2780
  %3579 = vmatprep.subr.mxu0 %v2777
  %3580 = vmatpush1.msra.mxu0 %v2776
  %3581 = vmatprep.subr.mxu0 %v2773
  %3582 = vmatpush1.msra.mxu0 %v2772
  %3583 = vmatprep.subr.mxu0 0.0
  %3584 = vmatpush2.msra.mxu0 0.0
  %3585 = vmatprep.subr.mxu0 0.0
  %3586 = vmatpush2.msra.mxu0 0.0
  %3587 = vmatprep.subr.mxu0 0.0
  %3588 = vmatpush2.msra.mxu0 0.0
  %3589 = vmatprep.subr.mxu0 0.0
  %3590 = vmatpush2.msra.mxu0 0.0
  %3591 = vmatprep.subr.mxu0 0.0
  %3592 = vmatpush2.msra.mxu0 0.0
  %3593 = vmatprep.subr.mxu0 0.0
  %3594 = vmatpush2.msra.mxu0 0.0
  %3595 = vmatprep.subr.mxu0 0.0
  %3596 = vmatpush2.msra.mxu0 0.0
  %3597 = vmatprep.subr.mxu0 0.0
  %3598 = vmatpush2.msra.mxu0 0.0
  %3599 = vmatprep.subr.mxu0 0.0
  %3600 = vmatpush2.msra.mxu0 0.0
  %3601 = vmatprep.subr.mxu0 0.0
  %3602 = vmatpush2.msra.mxu0 0.0
  %3603 = vmatprep.subr.mxu0 0.0
  %3604 = vmatpush2.msra.mxu0 0.0
  %3605 = vmatprep.subr.mxu0 0.0
  %3606 = vmatpush2.msra.mxu0 0.0
  %3607 = vmatprep.subr.mxu0 0.0
  %3608 = vmatpush2.msra.mxu0 0.0
  %3609 = vmatprep.subr.mxu0 0.0
  %3610 = vmatpush2.msra.mxu0 0.0
  %3611 = vmatprep.subr.mxu0 0.0
  %3612 = vmatpush2.msra.mxu0 0.0
  %3613 = vmatprep.subr.mxu0 0.0
  %3614 = vmatpush2.msra.mxu0 0.0
  %3615 = vmatprep.mubr.f32.mxu0 0.0
  %3616 = vmatmul.mubr.f32.gmra.mxu0 %v3479
  %v3617 = vpop.f32.mrf.mxu0
  %v3618 = vadd.f32 0.0, %v3617
  %v3619 = vpop.f32.mrf.mxu0
  %v3620 = vadd.f32 0.0, %v3619
  %3621 = vdwg.mxu0
  %3622 = vmatprep.subr.mxu0 %v2767
  %3623 = vmatpush1.msra.mxu0 %v2766
  %3624 = vmatprep.subr.mxu0 %v2763
  %3625 = vmatpush1.msra.mxu0 %v2762
  %3626 = vmatprep.subr.mxu0 %v2759
  %3627 = vmatpush1.msra.mxu0 %v2758
  %3628 = vmatprep.subr.mxu0 %v2755
  %3629 = vmatpush1.msra.mxu0 %v2754
  %3630 = vmatprep.subr.mxu0 %v2751
  %3631 = vmatpush1.msra.mxu0 %v2750
  %3632 = vmatprep.subr.mxu0 %v2747
  %3633 = vmatpush1.msra.mxu0 %v2746
  %3634 = vmatprep.subr.mxu0 %v2743
  %3635 = vmatpush1.msra.mxu0 %v2742
  %3636 = vmatprep.subr.mxu0 %v2739
  %3637 = vmatpush1.msra.mxu0 %v2738
  %3638 = vmatprep.subr.mxu0 %v2735
  %3639 = vmatpush1.msra.mxu0 %v2734
  %3640 = vmatprep.subr.mxu0 %v2731
  %3641 = vmatpush1.msra.mxu0 %v2730
  %3642 = vmatprep.subr.mxu0 %v2727
  %3643 = vmatpush1.msra.mxu0 %v2726
  %3644 = vmatprep.subr.mxu0 %v2723
  %3645 = vmatpush1.msra.mxu0 %v2722
  %3646 = vmatprep.subr.mxu0 %v2719
  %3647 = vmatpush1.msra.mxu0 %v2718
  %3648 = vmatprep.subr.mxu0 %v2715
  %3649 = vmatpush1.msra.mxu0 %v2714
  %3650 = vmatprep.subr.mxu0 %v2711
  %3651 = vmatpush1.msra.mxu0 %v2710
  %3652 = vmatprep.subr.mxu0 %v2707
  %3653 = vmatpush1.msra.mxu0 %v2706
  %3654 = vmatprep.subr.mxu0 0.0
  %3655 = vmatpush2.msra.mxu0 0.0
  %3656 = vmatprep.subr.mxu0 0.0
  %3657 = vmatpush2.msra.mxu0 0.0
  %3658 = vmatprep.subr.mxu0 0.0
  %3659 = vmatpush2.msra.mxu0 0.0
  %3660 = vmatprep.subr.mxu0 0.0
  %3661 = vmatpush2.msra.mxu0 0.0
  %3662 = vmatprep.subr.mxu0 0.0
  %3663 = vmatpush2.msra.mxu0 0.0
  %3664 = vmatprep.subr.mxu0 0.0
  %3665 = vmatpush2.msra.mxu0 0.0
  %3666 = vmatprep.subr.mxu0 0.0
  %3667 = vmatpush2.msra.mxu0 0.0
  %3668 = vmatprep.subr.mxu0 0.0
  %3669 = vmatpush2.msra.mxu0 0.0
  %3670 = vmatprep.subr.mxu0 0.0
  %3671 = vmatpush2.msra.mxu0 0.0
  %3672 = vmatprep.subr.mxu0 0.0
  %3673 = vmatpush2.msra.mxu0 0.0
  %3674 = vmatprep.subr.mxu0 0.0
  %3675 = vmatpush2.msra.mxu0 0.0
  %3676 = vmatprep.subr.mxu0 0.0
  %3677 = vmatpush2.msra.mxu0 0.0
  %3678 = vmatprep.subr.mxu0 0.0
  %3679 = vmatpush2.msra.mxu0 0.0
  %3680 = vmatprep.subr.mxu0 0.0
  %3681 = vmatpush2.msra.mxu0 0.0
  %3682 = vmatprep.subr.mxu0 0.0
  %3683 = vmatpush2.msra.mxu0 0.0
  %3684 = vmatprep.subr.mxu0 0.0
  %3685 = vmatpush2.msra.mxu0 0.0
  %3686 = vmatprep.mubr.f32.mxu0 0.0
  %3687 = vmatmul.mubr.f32.gmra.mxu0 %v1115
  %v3688 = vpop.f32.mrf.mxu0
  %v3689 = vadd.f32 %v3547, %v3688
  %v3690 = vpop.f32.mrf.mxu0
  %v3691 = vadd.f32 %v3549, %v3690
  %3692 = vdwg.mxu0
  %3693 = vmatprep.subr.mxu0 %v2769
  %3694 = vmatpush1.msra.mxu0 %v2768
  %3695 = vmatprep.subr.mxu0 %v2765
  %3696 = vmatpush1.msra.mxu0 %v2764
  %3697 = vmatprep.subr.mxu0 %v2761
  %3698 = vmatpush1.msra.mxu0 %v2760
  %3699 = vmatprep.subr.mxu0 %v2757
  %3700 = vmatpush1.msra.mxu0 %v2756
  %3701 = vmatprep.subr.mxu0 %v2753
  %3702 = vmatpush1.msra.mxu0 %v2752
  %3703 = vmatprep.subr.mxu0 %v2749
  %3704 = vmatpush1.msra.mxu0 %v2748
  %3705 = vmatprep.subr.mxu0 %v2745
  %3706 = vmatpush1.msra.mxu0 %v2744
  %3707 = vmatprep.subr.mxu0 %v2741
  %3708 = vmatpush1.msra.mxu0 %v2740
  %3709 = vmatprep.subr.mxu0 %v2737
  %3710 = vmatpush1.msra.mxu0 %v2736
  %3711 = vmatprep.subr.mxu0 %v2733
  %3712 = vmatpush1.msra.mxu0 %v2732
  %3713 = vmatprep.subr.mxu0 %v2729
  %3714 = vmatpush1.msra.mxu0 %v2728
  %3715 = vmatprep.subr.mxu0 %v2725
  %3716 = vmatpush1.msra.mxu0 %v2724
  %3717 = vmatprep.subr.mxu0 %v2721
  %3718 = vmatpush1.msra.mxu0 %v2720
  %3719 = vmatprep.subr.mxu0 %v2717
  %3720 = vmatpush1.msra.mxu0 %v2716
  %3721 = vmatprep.subr.mxu0 %v2713
  %3722 = vmatpush1.msra.mxu0 %v2712
  %3723 = vmatprep.subr.mxu0 %v2709
  %3724 = vmatpush1.msra.mxu0 %v2708
  %3725 = vmatprep.subr.mxu0 0.0
  %3726 = vmatpush2.msra.mxu0 0.0
  %3727 = vmatprep.subr.mxu0 0.0
  %3728 = vmatpush2.msra.mxu0 0.0
  %3729 = vmatprep.subr.mxu0 0.0
  %3730 = vmatpush2.msra.mxu0 0.0
  %3731 = vmatprep.subr.mxu0 0.0
  %3732 = vmatpush2.msra.mxu0 0.0
  %3733 = vmatprep.subr.mxu0 0.0
  %3734 = vmatpush2.msra.mxu0 0.0
  %3735 = vmatprep.subr.mxu0 0.0
  %3736 = vmatpush2.msra.mxu0 0.0
  %3737 = vmatprep.subr.mxu0 0.0
  %3738 = vmatpush2.msra.mxu0 0.0
  %3739 = vmatprep.subr.mxu0 0.0
  %3740 = vmatpush2.msra.mxu0 0.0
  %3741 = vmatprep.subr.mxu0 0.0
  %3742 = vmatpush2.msra.mxu0 0.0
  %3743 = vmatprep.subr.mxu0 0.0
  %3744 = vmatpush2.msra.mxu0 0.0
  %3745 = vmatprep.subr.mxu0 0.0
  %3746 = vmatpush2.msra.mxu0 0.0
  %3747 = vmatprep.subr.mxu0 0.0
  %3748 = vmatpush2.msra.mxu0 0.0
  %3749 = vmatprep.subr.mxu0 0.0
  %3750 = vmatpush2.msra.mxu0 0.0
  %3751 = vmatprep.subr.mxu0 0.0
  %3752 = vmatpush2.msra.mxu0 0.0
  %3753 = vmatprep.subr.mxu0 0.0
  %3754 = vmatpush2.msra.mxu0 0.0
  %3755 = vmatprep.subr.mxu0 0.0
  %3756 = vmatpush2.msra.mxu0 0.0
  %3757 = vmatprep.mubr.f32.mxu0 0.0
  %3758 = vmatmul.mubr.f32.gmra.mxu0 %v1115
  %v3759 = vpop.f32.mrf.mxu0
  %v3760 = vadd.f32 %v3618, %v3759
  %v3761 = vpop.f32.mrf.mxu0
  %v3762 = vadd.f32 %v3620, %v3761
  %3763 = vdwg.mxu0
  %v3764 = vadd.f32 %v3689, %v3123
  %v3765 = vadd.f32 %v3691, %v3127
  %v3766 = vadd.f32 %v3760, %v3131
  %v3767 = vadd.f32 %v3762, %v3135
  %v3768 = vxor.u32 %v3764, 2147483648
  %v3769 = vmul.f32 %v3768, 1.442695
  %v3770 = vpow.pop %v3769
  %v3771 = vadd.f32 %v3770, 1.0
  %v3772 = vrcp.pop %v3771
  %v3773 = vmul.f32 1.0, %v3772
  %v3774 = vxor.u32 %v3765, 2147483648
  %v3775 = vmul.f32 %v3774, 1.442695
  %v3776 = vpow.pop %v3775
  %v3777 = vadd.f32 %v3776, 1.0
  %v3778 = vrcp.pop %v3777
  %v3779 = vmul.f32 1.0, %v3778
  %v3780 = vtanh.pop %v3766
  %v3781 = vxor.u32 %v3767, 2147483648
  %v3782 = vmul.f32 %v3781, 1.442695
  %v3783 = vpow.pop %v3782
  %v3784 = vadd.f32 %v3783, 1.0
  %v3785 = vrcp.pop %v3784
  %v3786 = vmul.f32 1.0, %v3785
  %v3787 = vmul.f32 %v3779, %v3477
  %v3788 = vmul.f32 %v3773, %v3780
  %v3789 = vadd.f32 %v3787, %v3788
  %v3790 = vtanh.pop %v3789
  %v3791 = vmul.f32 %v3786, %v3790
  %3792 = vmatprep.subr.mxu0 %v2831
  %3793 = vmatpush1.msra.mxu0 %v2830
  %3794 = vmatprep.subr.mxu0 %v2827
  %3795 = vmatpush1.msra.mxu0 %v2826
  %3796 = vmatprep.subr.mxu0 %v2823
  %3797 = vmatpush1.msra.mxu0 %v2822
  %3798 = vmatprep.subr.mxu0 %v2819
  %3799 = vmatpush1.msra.mxu0 %v2818
  %3800 = vmatprep.subr.mxu0 %v2815
  %3801 = vmatpush1.msra.mxu0 %v2814
  %3802 = vmatprep.subr.mxu0 %v2811
  %3803 = vmatpush1.msra.mxu0 %v2810
  %3804 = vmatprep.subr.mxu0 %v2807
  %3805 = vmatpush1.msra.mxu0 %v2806
  %3806 = vmatprep.subr.mxu0 %v2803
  %3807 = vmatpush1.msra.mxu0 %v2802
  %3808 = vmatprep.subr.mxu0 %v2799
  %3809 = vmatpush1.msra.mxu0 %v2798
  %3810 = vmatprep.subr.mxu0 %v2795
  %3811 = vmatpush1.msra.mxu0 %v2794
  %3812 = vmatprep.subr.mxu0 %v2791
  %3813 = vmatpush1.msra.mxu0 %v2790
  %3814 = vmatprep.subr.mxu0 %v2787
  %3815 = vmatpush1.msra.mxu0 %v2786
  %3816 = vmatprep.subr.mxu0 %v2783
  %3817 = vmatpush1.msra.mxu0 %v2782
  %3818 = vmatprep.subr.mxu0 %v2779
  %3819 = vmatpush1.msra.mxu0 %v2778
  %3820 = vmatprep.subr.mxu0 %v2775
  %3821 = vmatpush1.msra.mxu0 %v2774
  %3822 = vmatprep.subr.mxu0 %v2771
  %3823 = vmatpush1.msra.mxu0 %v2770
  %3824 = vmatprep.subr.mxu0 0.0
  %3825 = vmatpush2.msra.mxu0 0.0
  %3826 = vmatprep.subr.mxu0 0.0
  %3827 = vmatpush2.msra.mxu0 0.0
  %3828 = vmatprep.subr.mxu0 0.0
  %3829 = vmatpush2.msra.mxu0 0.0
  %3830 = vmatprep.subr.mxu0 0.0
  %3831 = vmatpush2.msra.mxu0 0.0
  %3832 = vmatprep.subr.mxu0 0.0
  %3833 = vmatpush2.msra.mxu0 0.0
  %3834 = vmatprep.subr.mxu0 0.0
  %3835 = vmatpush2.msra.mxu0 0.0
  %3836 = vmatprep.subr.mxu0 0.0
  %3837 = vmatpush2.msra.mxu0 0.0
  %3838 = vmatprep.subr.mxu0 0.0
  %3839 = vmatpush2.msra.mxu0 0.0
  %3840 = vmatprep.subr.mxu0 0.0
  %3841 = vmatpush2.msra.mxu0 0.0
  %3842 = vmatprep.subr.mxu0 0.0
  %3843 = vmatpush2.msra.mxu0 0.0
  %3844 = vmatprep.subr.mxu0 0.0
  %3845 = vmatpush2.msra.mxu0 0.0
  %3846 = vmatprep.subr.mxu0 0.0
  %3847 = vmatpush2.msra.mxu0 0.0
  %3848 = vmatprep.subr.mxu0 0.0
  %3849 = vmatpush2.msra.mxu0 0.0
  %3850 = vmatprep.subr.mxu0 0.0
  %3851 = vmatpush2.msra.mxu0 0.0
  %3852 = vmatprep.subr.mxu0 0.0
  %3853 = vmatpush2.msra.mxu0 0.0
  %3854 = vmatprep.subr.mxu0 0.0
  %3855 = vmatpush2.msra.mxu0 0.0
  %3856 = vmatprep.mubr.f32.mxu0 0.0
  %3857 = vmatmul.mubr.f32.gmra.mxu0 %v3791
  %v3858 = vpop.f32.mrf.mxu0
  %v3859 = vadd.f32 0.0, %v3858
  %v3860 = vpop.f32.mrf.mxu0
  %v3861 = vadd.f32 0.0, %v3860
  %3862 = vdwg.mxu0
  %3863 = vmatprep.subr.mxu0 %v2833
  %3864 = vmatpush1.msra.mxu0 %v2832
  %3865 = vmatprep.subr.mxu0 %v2829
  %3866 = vmatpush1.msra.mxu0 %v2828
  %3867 = vmatprep.subr.mxu0 %v2825
  %3868 = vmatpush1.msra.mxu0 %v2824
  %3869 = vmatprep.subr.mxu0 %v2821
  %3870 = vmatpush1.msra.mxu0 %v2820
  %3871 = vmatprep.subr.mxu0 %v2817
  %3872 = vmatpush1.msra.mxu0 %v2816
  %3873 = vmatprep.subr.mxu0 %v2813
  %3874 = vmatpush1.msra.mxu0 %v2812
  %3875 = vmatprep.subr.mxu0 %v2809
  %3876 = vmatpush1.msra.mxu0 %v2808
  %3877 = vmatprep.subr.mxu0 %v2805
  %3878 = vmatpush1.msra.mxu0 %v2804
  %3879 = vmatprep.subr.mxu0 %v2801
  %3880 = vmatpush1.msra.mxu0 %v2800
  %3881 = vmatprep.subr.mxu0 %v2797
  %3882 = vmatpush1.msra.mxu0 %v2796
  %3883 = vmatprep.subr.mxu0 %v2793
  %3884 = vmatpush1.msra.mxu0 %v2792
  %3885 = vmatprep.subr.mxu0 %v2789
  %3886 = vmatpush1.msra.mxu0 %v2788
  %3887 = vmatprep.subr.mxu0 %v2785
  %3888 = vmatpush1.msra.mxu0 %v2784
  %3889 = vmatprep.subr.mxu0 %v2781
  %3890 = vmatpush1.msra.mxu0 %v2780
  %3891 = vmatprep.subr.mxu0 %v2777
  %3892 = vmatpush1.msra.mxu0 %v2776
  %3893 = vmatprep.subr.mxu0 %v2773
  %3894 = vmatpush1.msra.mxu0 %v2772
  %3895 = vmatprep.subr.mxu0 0.0
  %3896 = vmatpush2.msra.mxu0 0.0
  %3897 = vmatprep.subr.mxu0 0.0
  %3898 = vmatpush2.msra.mxu0 0.0
  %3899 = vmatprep.subr.mxu0 0.0
  %3900 = vmatpush2.msra.mxu0 0.0
  %3901 = vmatprep.subr.mxu0 0.0
  %3902 = vmatpush2.msra.mxu0 0.0
  %3903 = vmatprep.subr.mxu0 0.0
  %3904 = vmatpush2.msra.mxu0 0.0
  %3905 = vmatprep.subr.mxu0 0.0
  %3906 = vmatpush2.msra.mxu0 0.0
  %3907 = vmatprep.subr.mxu0 0.0
  %3908 = vmatpush2.msra.mxu0 0.0
  %3909 = vmatprep.subr.mxu0 0.0
  %3910 = vmatpush2.msra.mxu0 0.0
  %3911 = vmatprep.subr.mxu0 0.0
  %3912 = vmatpush2.msra.mxu0 0.0
  %3913 = vmatprep.subr.mxu0 0.0
  %3914 = vmatpush2.msra.mxu0 0.0
  %3915 = vmatprep.subr.mxu0 0.0
  %3916 = vmatpush2.msra.mxu0 0.0
  %3917 = vmatprep.subr.mxu0 0.0
  %3918 = vmatpush2.msra.mxu0 0.0
  %3919 = vmatprep.subr.mxu0 0.0
  %3920 = vmatpush2.msra.mxu0 0.0
  %3921 = vmatprep.subr.mxu0 0.0
  %3922 = vmatpush2.msra.mxu0 0.0
  %3923 = vmatprep.subr.mxu0 0.0
  %3924 = vmatpush2.msra.mxu0 0.0
  %3925 = vmatprep.subr.mxu0 0.0
  %3926 = vmatpush2.msra.mxu0 0.0
  %3927 = vmatprep.mubr.f32.mxu0 0.0
  %3928 = vmatmul.mubr.f32.gmra.mxu0 %v3791
  %v3929 = vpop.f32.mrf.mxu0
  %v3930 = vadd.f32 0.0, %v3929
  %v3931 = vpop.f32.mrf.mxu0
  %v3932 = vadd.f32 0.0, %v3931
  %3933 = vdwg.mxu0
  %3934 = vmatprep.subr.mxu0 %v2767
  %3935 = vmatpush1.msra.mxu0 %v2766
  %3936 = vmatprep.subr.mxu0 %v2763
  %3937 = vmatpush1.msra.mxu0 %v2762
  %3938 = vmatprep.subr.mxu0 %v2759
  %3939 = vmatpush1.msra.mxu0 %v2758
  %3940 = vmatprep.subr.mxu0 %v2755
  %3941 = vmatpush1.msra.mxu0 %v2754
  %3942 = vmatprep.subr.mxu0 %v2751
  %3943 = vmatpush1.msra.mxu0 %v2750
  %3944 = vmatprep.subr.mxu0 %v2747
  %3945 = vmatpush1.msra.mxu0 %v2746
  %3946 = vmatprep.subr.mxu0 %v2743
  %3947 = vmatpush1.msra.mxu0 %v2742
  %3948 = vmatprep.subr.mxu0 %v2739
  %3949 = vmatpush1.msra.mxu0 %v2738
  %3950 = vmatprep.subr.mxu0 %v2735
  %3951 = vmatpush1.msra.mxu0 %v2734
  %3952 = vmatprep.subr.mxu0 %v2731
  %3953 = vmatpush1.msra.mxu0 %v2730
  %3954 = vmatprep.subr.mxu0 %v2727
  %3955 = vmatpush1.msra.mxu0 %v2726
  %3956 = vmatprep.subr.mxu0 %v2723
  %3957 = vmatpush1.msra.mxu0 %v2722
  %3958 = vmatprep.subr.mxu0 %v2719
  %3959 = vmatpush1.msra.mxu0 %v2718
  %3960 = vmatprep.subr.mxu0 %v2715
  %3961 = vmatpush1.msra.mxu0 %v2714
  %3962 = vmatprep.subr.mxu0 %v2711
  %3963 = vmatpush1.msra.mxu0 %v2710
  %3964 = vmatprep.subr.mxu0 %v2707
  %3965 = vmatpush1.msra.mxu0 %v2706
  %3966 = vmatprep.subr.mxu0 0.0
  %3967 = vmatpush2.msra.mxu0 0.0
  %3968 = vmatprep.subr.mxu0 0.0
  %3969 = vmatpush2.msra.mxu0 0.0
  %3970 = vmatprep.subr.mxu0 0.0
  %3971 = vmatpush2.msra.mxu0 0.0
  %3972 = vmatprep.subr.mxu0 0.0
  %3973 = vmatpush2.msra.mxu0 0.0
  %3974 = vmatprep.subr.mxu0 0.0
  %3975 = vmatpush2.msra.mxu0 0.0
  %3976 = vmatprep.subr.mxu0 0.0
  %3977 = vmatpush2.msra.mxu0 0.0
  %3978 = vmatprep.subr.mxu0 0.0
  %3979 = vmatpush2.msra.mxu0 0.0
  %3980 = vmatprep.subr.mxu0 0.0
  %3981 = vmatpush2.msra.mxu0 0.0
  %3982 = vmatprep.subr.mxu0 0.0
  %3983 = vmatpush2.msra.mxu0 0.0
  %3984 = vmatprep.subr.mxu0 0.0
  %3985 = vmatpush2.msra.mxu0 0.0
  %3986 = vmatprep.subr.mxu0 0.0
  %3987 = vmatpush2.msra.mxu0 0.0
  %3988 = vmatprep.subr.mxu0 0.0
  %3989 = vmatpush2.msra.mxu0 0.0
  %3990 = vmatprep.subr.mxu0 0.0
  %3991 = vmatpush2.msra.mxu0 0.0
  %3992 = vmatprep.subr.mxu0 0.0
  %3993 = vmatpush2.msra.mxu0 0.0
  %3994 = vmatprep.subr.mxu0 0.0
  %3995 = vmatpush2.msra.mxu0 0.0
  %3996 = vmatprep.subr.mxu0 0.0
  %3997 = vmatpush2.msra.mxu0 0.0
  %3998 = vmatprep.mubr.f32.mxu0 0.0
  %3999 = vmatmul.mubr.f32.gmra.mxu0 %v1433
  %v4000 = vpop.f32.mrf.mxu0
  %v4001 = vadd.f32 %v3859, %v4000
  %v4002 = vpop.f32.mrf.mxu0
  %v4003 = vadd.f32 %v3861, %v4002
  %4004 = vdwg.mxu0
  %4005 = vmatprep.subr.mxu0 %v2769
  %4006 = vmatpush1.msra.mxu0 %v2768
  %4007 = vmatprep.subr.mxu0 %v2765
  %4008 = vmatpush1.msra.mxu0 %v2764
  %4009 = vmatprep.subr.mxu0 %v2761
  %4010 = vmatpush1.msra.mxu0 %v2760
  %4011 = vmatprep.subr.mxu0 %v2757
  %4012 = vmatpush1.msra.mxu0 %v2756
  %4013 = vmatprep.subr.mxu0 %v2753
  %4014 = vmatpush1.msra.mxu0 %v2752
  %4015 = vmatprep.subr.mxu0 %v2749
  %4016 = vmatpush1.msra.mxu0 %v2748
  %4017 = vmatprep.subr.mxu0 %v2745
  %4018 = vmatpush1.msra.mxu0 %v2744
  %4019 = vmatprep.subr.mxu0 %v2741
  %4020 = vmatpush1.msra.mxu0 %v2740
  %4021 = vmatprep.subr.mxu0 %v2737
  %4022 = vmatpush1.msra.mxu0 %v2736
  %4023 = vmatprep.subr.mxu0 %v2733
  %4024 = vmatpush1.msra.mxu0 %v2732
  %4025 = vmatprep.subr.mxu0 %v2729
  %4026 = vmatpush1.msra.mxu0 %v2728
  %4027 = vmatprep.subr.mxu0 %v2725
  %4028 = vmatpush1.msra.mxu0 %v2724
  %4029 = vmatprep.subr.mxu0 %v2721
  %4030 = vmatpush1.msra.mxu0 %v2720
  %4031 = vmatprep.subr.mxu0 %v2717
  %4032 = vmatpush1.msra.mxu0 %v2716
  %4033 = vmatprep.subr.mxu0 %v2713
  %4034 = vmatpush1.msra.mxu0 %v2712
  %4035 = vmatprep.subr.mxu0 %v2709
  %4036 = vmatpush1.msra.mxu0 %v2708
  %4037 = vmatprep.subr.mxu0 0.0
  %4038 = vmatpush2.msra.mxu0 0.0
  %4039 = vmatprep.subr.mxu0 0.0
  %4040 = vmatpush2.msra.mxu0 0.0
  %4041 = vmatprep.subr.mxu0 0.0
  %4042 = vmatpush2.msra.mxu0 0.0
  %4043 = vmatprep.subr.mxu0 0.0
  %4044 = vmatpush2.msra.mxu0 0.0
  %4045 = vmatprep.subr.mxu0 0.0
  %4046 = vmatpush2.msra.mxu0 0.0
  %4047 = vmatprep.subr.mxu0 0.0
  %4048 = vmatpush2.msra.mxu0 0.0
  %4049 = vmatprep.subr.mxu0 0.0
  %4050 = vmatpush2.msra.mxu0 0.0
  %4051 = vmatprep.subr.mxu0 0.0
  %4052 = vmatpush2.msra.mxu0 0.0
  %4053 = vmatprep.subr.mxu0 0.0
  %4054 = vmatpush2.msra.mxu0 0.0
  %4055 = vmatprep.subr.mxu0 0.0
  %4056 = vmatpush2.msra.mxu0 0.0
  %4057 = vmatprep.subr.mxu0 0.0
  %4058 = vmatpush2.msra.mxu0 0.0
  %4059 = vmatprep.subr.mxu0 0.0
  %4060 = vmatpush2.msra.mxu0 0.0
  %4061 = vmatprep.subr.mxu0 0.0
  %4062 = vmatpush2.msra.mxu0 0.0
  %4063 = vmatprep.subr.mxu0 0.0
  %4064 = vmatpush2.msra.mxu0 0.0
  %4065 = vmatprep.subr.mxu0 0.0
  %4066 = vmatpush2.msra.mxu0 0.0
  %4067 = vmatprep.subr.mxu0 0.0
  %4068 = vmatpush2.msra.mxu0 0.0
  %4069 = vmatprep.mubr.f32.mxu0 0.0
  %4070 = vmatmul.mubr.f32.gmra.mxu0 %v1433
  %v4071 = vpop.f32.mrf.mxu0
  %v4072 = vadd.f32 %v3930, %v4071
  %v4073 = vpop.f32.mrf.mxu0
  %v4074 = vadd.f32 %v3932, %v4073
  %4075 = vdwg.mxu0
  %v4076 = vadd.f32 %v4001, %v3123
  %v4077 = vadd.f32 %v4003, %v3127
  %v4078 = vadd.f32 %v4072, %v3131
  %v4079 = vadd.f32 %v4074, %v3135
  %v4080 = vxor.u32 %v4076, 2147483648
  %v4081 = vmul.f32 %v4080, 1.442695
  %v4082 = vpow.pop %v4081
  %v4083 = vadd.f32 %v4082, 1.0
  %v4084 = vrcp.pop %v4083
  %v4085 = vmul.f32 1.0, %v4084
  %v4086 = vxor.u32 %v4077, 2147483648
  %v4087 = vmul.f32 %v4086, 1.442695
  %v4088 = vpow.pop %v4087
  %v4089 = vadd.f32 %v4088, 1.0
  %v4090 = vrcp.pop %v4089
  %v4091 = vmul.f32 1.0, %v4090
  %v4092 = vtanh.pop %v4078
  %v4093 = vxor.u32 %v4079, 2147483648
  %v4094 = vmul.f32 %v4093, 1.442695
  %v4095 = vpow.pop %v4094
  %v4096 = vadd.f32 %v4095, 1.0
  %v4097 = vrcp.pop %v4096
  %v4098 = vmul.f32 1.0, %v4097
  %v4099 = vmul.f32 %v4091, %v3789
  %v4100 = vmul.f32 %v4085, %v4092
  %v4101 = vadd.f32 %v4099, %v4100
  %v4102 = vtanh.pop %v4101
  %v4103 = vmul.f32 %v4098, %v4102
  %4104 = vmatprep.subr.mxu0 %v2831
  %4105 = vmatpush1.msra.mxu0 %v2830
  %4106 = vmatprep.subr.mxu0 %v2827
  %4107 = vmatpush1.msra.mxu0 %v2826
  %4108 = vmatprep.subr.mxu0 %v2823
  %4109 = vmatpush1.msra.mxu0 %v2822
  %4110 = vmatprep.subr.mxu0 %v2819
  %4111 = vmatpush1.msra.mxu0 %v2818
  %4112 = vmatprep.subr.mxu0 %v2815
  %4113 = vmatpush1.msra.mxu0 %v2814
  %4114 = vmatprep.subr.mxu0 %v2811
  %4115 = vmatpush1.msra.mxu0 %v2810
  %4116 = vmatprep.subr.mxu0 %v2807
  %4117 = vmatpush1.msra.mxu0 %v2806
  %4118 = vmatprep.subr.mxu0 %v2803
  %4119 = vmatpush1.msra.mxu0 %v2802
  %4120 = vmatprep.subr.mxu0 %v2799
  %4121 = vmatpush1.msra.mxu0 %v2798
  %4122 = vmatprep.subr.mxu0 %v2795
  %4123 = vmatpush1.msra.mxu0 %v2794
  %4124 = vmatprep.subr.mxu0 %v2791
  %4125 = vmatpush1.msra.mxu0 %v2790
  %4126 = vmatprep.subr.mxu0 %v2787
  %4127 = vmatpush1.msra.mxu0 %v2786
  %4128 = vmatprep.subr.mxu0 %v2783
  %4129 = vmatpush1.msra.mxu0 %v2782
  %4130 = vmatprep.subr.mxu0 %v2779
  %4131 = vmatpush1.msra.mxu0 %v2778
  %4132 = vmatprep.subr.mxu0 %v2775
  %4133 = vmatpush1.msra.mxu0 %v2774
  %4134 = vmatprep.subr.mxu0 %v2771
  %4135 = vmatpush1.msra.mxu0 %v2770
  %4136 = vmatprep.subr.mxu0 0.0
  %4137 = vmatpush2.msra.mxu0 0.0
  %4138 = vmatprep.subr.mxu0 0.0
  %4139 = vmatpush2.msra.mxu0 0.0
  %4140 = vmatprep.subr.mxu0 0.0
  %4141 = vmatpush2.msra.mxu0 0.0
  %4142 = vmatprep.subr.mxu0 0.0
  %4143 = vmatpush2.msra.mxu0 0.0
  %4144 = vmatprep.subr.mxu0 0.0
  %4145 = vmatpush2.msra.mxu0 0.0
  %4146 = vmatprep.subr.mxu0 0.0
  %4147 = vmatpush2.msra.mxu0 0.0
  %4148 = vmatprep.subr.mxu0 0.0
  %4149 = vmatpush2.msra.mxu0 0.0
  %4150 = vmatprep.subr.mxu0 0.0
  %4151 = vmatpush2.msra.mxu0 0.0
  %4152 = vmatprep.subr.mxu0 0.0
  %4153 = vmatpush2.msra.mxu0 0.0
  %4154 = vmatprep.subr.mxu0 0.0
  %4155 = vmatpush2.msra.mxu0 0.0
  %4156 = vmatprep.subr.mxu0 0.0
  %4157 = vmatpush2.msra.mxu0 0.0
  %4158 = vmatprep.subr.mxu0 0.0
  %4159 = vmatpush2.msra.mxu0 0.0
  %4160 = vmatprep.subr.mxu0 0.0
  %4161 = vmatpush2.msra.mxu0 0.0
  %4162 = vmatprep.subr.mxu0 0.0
  %4163 = vmatpush2.msra.mxu0 0.0
  %4164 = vmatprep.subr.mxu0 0.0
  %4165 = vmatpush2.msra.mxu0 0.0
  %4166 = vmatprep.subr.mxu0 0.0
  %4167 = vmatpush2.msra.mxu0 0.0
  %4168 = vmatprep.mubr.f32.mxu0 0.0
  %4169 = vmatmul.mubr.f32.gmra.mxu0 %v4103
  %v4170 = vpop.f32.mrf.mxu0
  %v4171 = vadd.f32 0.0, %v4170
  %v4172 = vpop.f32.mrf.mxu0
  %v4173 = vadd.f32 0.0, %v4172
  %4174 = vdwg.mxu0
  %4175 = vmatprep.subr.mxu0 %v2833
  %4176 = vmatpush1.msra.mxu0 %v2832
  %4177 = vmatprep.subr.mxu0 %v2829
  %4178 = vmatpush1.msra.mxu0 %v2828
  %4179 = vmatprep.subr.mxu0 %v2825
  %4180 = vmatpush1.msra.mxu0 %v2824
  %4181 = vmatprep.subr.mxu0 %v2821
  %4182 = vmatpush1.msra.mxu0 %v2820
  %4183 = vmatprep.subr.mxu0 %v2817
  %4184 = vmatpush1.msra.mxu0 %v2816
  %4185 = vmatprep.subr.mxu0 %v2813
  %4186 = vmatpush1.msra.mxu0 %v2812
  %4187 = vmatprep.subr.mxu0 %v2809
  %4188 = vmatpush1.msra.mxu0 %v2808
  %4189 = vmatprep.subr.mxu0 %v2805
  %4190 = vmatpush1.msra.mxu0 %v2804
  %4191 = vmatprep.subr.mxu0 %v2801
  %4192 = vmatpush1.msra.mxu0 %v2800
  %4193 = vmatprep.subr.mxu0 %v2797
  %4194 = vmatpush1.msra.mxu0 %v2796
  %4195 = vmatprep.subr.mxu0 %v2793
  %4196 = vmatpush1.msra.mxu0 %v2792
  %4197 = vmatprep.subr.mxu0 %v2789
  %4198 = vmatpush1.msra.mxu0 %v2788
  %4199 = vmatprep.subr.mxu0 %v2785
  %4200 = vmatpush1.msra.mxu0 %v2784
  %4201 = vmatprep.subr.mxu0 %v2781
  %4202 = vmatpush1.msra.mxu0 %v2780
  %4203 = vmatprep.subr.mxu0 %v2777
  %4204 = vmatpush1.msra.mxu0 %v2776
  %4205 = vmatprep.subr.mxu0 %v2773
  %4206 = vmatpush1.msra.mxu0 %v2772
  %4207 = vmatprep.subr.mxu0 0.0
  %4208 = vmatpush2.msra.mxu0 0.0
  %4209 = vmatprep.subr.mxu0 0.0
  %4210 = vmatpush2.msra.mxu0 0.0
  %4211 = vmatprep.subr.mxu0 0.0
  %4212 = vmatpush2.msra.mxu0 0.0
  %4213 = vmatprep.subr.mxu0 0.0
  %4214 = vmatpush2.msra.mxu0 0.0
  %4215 = vmatprep.subr.mxu0 0.0
  %4216 = vmatpush2.msra.mxu0 0.0
  %4217 = vmatprep.subr.mxu0 0.0
  %4218 = vmatpush2.msra.mxu0 0.0
  %4219 = vmatprep.subr.mxu0 0.0
  %4220 = vmatpush2.msra.mxu0 0.0
  %4221 = vmatprep.subr.mxu0 0.0
  %4222 = vmatpush2.msra.mxu0 0.0
  %4223 = vmatprep.subr.mxu0 0.0
  %4224 = vmatpush2.msra.mxu0 0.0
  %4225 = vmatprep.subr.mxu0 0.0
  %4226 = vmatpush2.msra.mxu0 0.0
  %4227 = vmatprep.subr.mxu0 0.0
  %4228 = vmatpush2.msra.mxu0 0.0
  %4229 = vmatprep.subr.mxu0 0.0
  %4230 = vmatpush2.msra.mxu0 0.0
  %4231 = vmatprep.subr.mxu0 0.0
  %4232 = vmatpush2.msra.mxu0 0.0
  %4233 = vmatprep.subr.mxu0 0.0
  %4234 = vmatpush2.msra.mxu0 0.0
  %4235 = vmatprep.subr.mxu0 0.0
  %4236 = vmatpush2.msra.mxu0 0.0
  %4237 = vmatprep.subr.mxu0 0.0
  %4238 = vmatpush2.msra.mxu0 0.0
  %4239 = vmatprep.mubr.f32.mxu0 0.0
  %4240 = vmatmul.mubr.f32.gmra.mxu0 %v4103
  %v4241 = vpop.f32.mrf.mxu0
  %v4242 = vadd.f32 0.0, %v4241
  %v4243 = vpop.f32.mrf.mxu0
  %v4244 = vadd.f32 0.0, %v4243
  %4245 = vdwg.mxu0
  %4246 = vmatprep.subr.mxu0 %v2767
  %4247 = vmatpush1.msra.mxu0 %v2766
  %4248 = vmatprep.subr.mxu0 %v2763
  %4249 = vmatpush1.msra.mxu0 %v2762
  %4250 = vmatprep.subr.mxu0 %v2759
  %4251 = vmatpush1.msra.mxu0 %v2758
  %4252 = vmatprep.subr.mxu0 %v2755
  %4253 = vmatpush1.msra.mxu0 %v2754
  %4254 = vmatprep.subr.mxu0 %v2751
  %4255 = vmatpush1.msra.mxu0 %v2750
  %4256 = vmatprep.subr.mxu0 %v2747
  %4257 = vmatpush1.msra.mxu0 %v2746
  %4258 = vmatprep.subr.mxu0 %v2743
  %4259 = vmatpush1.msra.mxu0 %v2742
  %4260 = vmatprep.subr.mxu0 %v2739
  %4261 = vmatpush1.msra.mxu0 %v2738
  %4262 = vmatprep.subr.mxu0 %v2735
  %4263 = vmatpush1.msra.mxu0 %v2734
  %4264 = vmatprep.subr.mxu0 %v2731
  %4265 = vmatpush1.msra.mxu0 %v2730
  %4266 = vmatprep.subr.mxu0 %v2727
  %4267 = vmatpush1.msra.mxu0 %v2726
  %4268 = vmatprep.subr.mxu0 %v2723
  %4269 = vmatpush1.msra.mxu0 %v2722
  %4270 = vmatprep.subr.mxu0 %v2719
  %4271 = vmatpush1.msra.mxu0 %v2718
  %4272 = vmatprep.subr.mxu0 %v2715
  %4273 = vmatpush1.msra.mxu0 %v2714
  %4274 = vmatprep.subr.mxu0 %v2711
  %4275 = vmatpush1.msra.mxu0 %v2710
  %4276 = vmatprep.subr.mxu0 %v2707
  %4277 = vmatpush1.msra.mxu0 %v2706
  %4278 = vmatprep.subr.mxu0 0.0
  %4279 = vmatpush2.msra.mxu0 0.0
  %4280 = vmatprep.subr.mxu0 0.0
  %4281 = vmatpush2.msra.mxu0 0.0
  %4282 = vmatprep.subr.mxu0 0.0
  %4283 = vmatpush2.msra.mxu0 0.0
  %4284 = vmatprep.subr.mxu0 0.0
  %4285 = vmatpush2.msra.mxu0 0.0
  %4286 = vmatprep.subr.mxu0 0.0
  %4287 = vmatpush2.msra.mxu0 0.0
  %4288 = vmatprep.subr.mxu0 0.0
  %4289 = vmatpush2.msra.mxu0 0.0
  %4290 = vmatprep.subr.mxu0 0.0
  %4291 = vmatpush2.msra.mxu0 0.0
  %4292 = vmatprep.subr.mxu0 0.0
  %4293 = vmatpush2.msra.mxu0 0.0
  %4294 = vmatprep.subr.mxu0 0.0
  %4295 = vmatpush2.msra.mxu0 0.0
  %4296 = vmatprep.subr.mxu0 0.0
  %4297 = vmatpush2.msra.mxu0 0.0
  %4298 = vmatprep.subr.mxu0 0.0
  %4299 = vmatpush2.msra.mxu0 0.0
  %4300 = vmatprep.subr.mxu0 0.0
  %4301 = vmatpush2.msra.mxu0 0.0
  %4302 = vmatprep.subr.mxu0 0.0
  %4303 = vmatpush2.msra.mxu0 0.0
  %4304 = vmatprep.subr.mxu0 0.0
  %4305 = vmatpush2.msra.mxu0 0.0
  %4306 = vmatprep.subr.mxu0 0.0
  %4307 = vmatpush2.msra.mxu0 0.0
  %4308 = vmatprep.subr.mxu0 0.0
  %4309 = vmatpush2.msra.mxu0 0.0
  %4310 = vmatprep.mubr.f32.mxu0 0.0
  %4311 = vmatmul.mubr.f32.gmra.mxu0 %v1751
  %v4312 = vpop.f32.mrf.mxu0
  %v4313 = vadd.f32 %v4171, %v4312
  %v4314 = vpop.f32.mrf.mxu0
  %v4315 = vadd.f32 %v4173, %v4314
  %4316 = vdwg.mxu0
  %4317 = vmatprep.subr.mxu0 %v2769
  %4318 = vmatpush1.msra.mxu0 %v2768
  %4319 = vmatprep.subr.mxu0 %v2765
  %4320 = vmatpush1.msra.mxu0 %v2764
  %4321 = vmatprep.subr.mxu0 %v2761
  %4322 = vmatpush1.msra.mxu0 %v2760
  %4323 = vmatprep.subr.mxu0 %v2757
  %4324 = vmatpush1.msra.mxu0 %v2756
  %4325 = vmatprep.subr.mxu0 %v2753
  %4326 = vmatpush1.msra.mxu0 %v2752
  %4327 = vmatprep.subr.mxu0 %v2749
  %4328 = vmatpush1.msra.mxu0 %v2748
  %4329 = vmatprep.subr.mxu0 %v2745
  %4330 = vmatpush1.msra.mxu0 %v2744
  %4331 = vmatprep.subr.mxu0 %v2741
  %4332 = vmatpush1.msra.mxu0 %v2740
  %4333 = vmatprep.subr.mxu0 %v2737
  %4334 = vmatpush1.msra.mxu0 %v2736
  %4335 = vmatprep.subr.mxu0 %v2733
  %4336 = vmatpush1.msra.mxu0 %v2732
  %4337 = vmatprep.subr.mxu0 %v2729
  %4338 = vmatpush1.msra.mxu0 %v2728
  %4339 = vmatprep.subr.mxu0 %v2725
  %4340 = vmatpush1.msra.mxu0 %v2724
  %4341 = vmatprep.subr.mxu0 %v2721
  %4342 = vmatpush1.msra.mxu0 %v2720
  %4343 = vmatprep.subr.mxu0 %v2717
  %4344 = vmatpush1.msra.mxu0 %v2716
  %4345 = vmatprep.subr.mxu0 %v2713
  %4346 = vmatpush1.msra.mxu0 %v2712
  %4347 = vmatprep.subr.mxu0 %v2709
  %4348 = vmatpush1.msra.mxu0 %v2708
  %4349 = vmatprep.subr.mxu0 0.0
  %4350 = vmatpush2.msra.mxu0 0.0
  %4351 = vmatprep.subr.mxu0 0.0
  %4352 = vmatpush2.msra.mxu0 0.0
  %4353 = vmatprep.subr.mxu0 0.0
  %4354 = vmatpush2.msra.mxu0 0.0
  %4355 = vmatprep.subr.mxu0 0.0
  %4356 = vmatpush2.msra.mxu0 0.0
  %4357 = vmatprep.subr.mxu0 0.0
  %4358 = vmatpush2.msra.mxu0 0.0
  %4359 = vmatprep.subr.mxu0 0.0
  %4360 = vmatpush2.msra.mxu0 0.0
  %4361 = vmatprep.subr.mxu0 0.0
  %4362 = vmatpush2.msra.mxu0 0.0
  %4363 = vmatprep.subr.mxu0 0.0
  %4364 = vmatpush2.msra.mxu0 0.0
  %4365 = vmatprep.subr.mxu0 0.0
  %4366 = vmatpush2.msra.mxu0 0.0
  %4367 = vmatprep.subr.mxu0 0.0
  %4368 = vmatpush2.msra.mxu0 0.0
  %4369 = vmatprep.subr.mxu0 0.0
  %4370 = vmatpush2.msra.mxu0 0.0
  %4371 = vmatprep.subr.mxu0 0.0
  %4372 = vmatpush2.msra.mxu0 0.0
  %4373 = vmatprep.subr.mxu0 0.0
  %4374 = vmatpush2.msra.mxu0 0.0
  %4375 = vmatprep.subr.mxu0 0.0
  %4376 = vmatpush2.msra.mxu0 0.0
  %4377 = vmatprep.subr.mxu0 0.0
  %4378 = vmatpush2.msra.mxu0 0.0
  %4379 = vmatprep.subr.mxu0 0.0
  %4380 = vmatpush2.msra.mxu0 0.0
  %4381 = vmatprep.mubr.f32.mxu0 0.0
  %4382 = vmatmul.mubr.f32.gmra.mxu0 %v1751
  %v4383 = vpop.f32.mrf.mxu0
  %v4384 = vadd.f32 %v4242, %v4383
  %v4385 = vpop.f32.mrf.mxu0
  %v4386 = vadd.f32 %v4244, %v4385
  %4387 = vdwg.mxu0
  %v4388 = vadd.f32 %v4313, %v3123
  %v4389 = vadd.f32 %v4315, %v3127
  %v4390 = vadd.f32 %v4384, %v3131
  %v4391 = vadd.f32 %v4386, %v3135
  %v4392 = vxor.u32 %v4388, 2147483648
  %v4393 = vmul.f32 %v4392, 1.442695
  %v4394 = vpow.pop %v4393
  %v4395 = vadd.f32 %v4394, 1.0
  %v4396 = vrcp.pop %v4395
  %v4397 = vmul.f32 1.0, %v4396
  %v4398 = vxor.u32 %v4389, 2147483648
  %v4399 = vmul.f32 %v4398, 1.442695
  %v4400 = vpow.pop %v4399
  %v4401 = vadd.f32 %v4400, 1.0
  %v4402 = vrcp.pop %v4401
  %v4403 = vmul.f32 1.0, %v4402
  %v4404 = vtanh.pop %v4390
  %v4405 = vxor.u32 %v4391, 2147483648
  %v4406 = vmul.f32 %v4405, 1.442695
  %v4407 = vpow.pop %v4406
  %v4408 = vadd.f32 %v4407, 1.0
  %v4409 = vrcp.pop %v4408
  %v4410 = vmul.f32 1.0, %v4409
  %v4411 = vmul.f32 %v4403, %v4101
  %v4412 = vmul.f32 %v4397, %v4404
  %v4413 = vadd.f32 %v4411, %v4412
  %v4414 = vtanh.pop %v4413
  %v4415 = vmul.f32 %v4410, %v4414
  %4416 = vmatprep.subr.mxu0 %v2831
  %4417 = vmatpush1.msra.mxu0 %v2830
  %4418 = vmatprep.subr.mxu0 %v2827
  %4419 = vmatpush1.msra.mxu0 %v2826
  %4420 = vmatprep.subr.mxu0 %v2823
  %4421 = vmatpush1.msra.mxu0 %v2822
  %4422 = vmatprep.subr.mxu0 %v2819
  %4423 = vmatpush1.msra.mxu0 %v2818
  %4424 = vmatprep.subr.mxu0 %v2815
  %4425 = vmatpush1.msra.mxu0 %v2814
  %4426 = vmatprep.subr.mxu0 %v2811
  %4427 = vmatpush1.msra.mxu0 %v2810
  %4428 = vmatprep.subr.mxu0 %v2807
  %4429 = vmatpush1.msra.mxu0 %v2806
  %4430 = vmatprep.subr.mxu0 %v2803
  %4431 = vmatpush1.msra.mxu0 %v2802
  %4432 = vmatprep.subr.mxu0 %v2799
  %4433 = vmatpush1.msra.mxu0 %v2798
  %4434 = vmatprep.subr.mxu0 %v2795
  %4435 = vmatpush1.msra.mxu0 %v2794
  %4436 = vmatprep.subr.mxu0 %v2791
  %4437 = vmatpush1.msra.mxu0 %v2790
  %4438 = vmatprep.subr.mxu0 %v2787
  %4439 = vmatpush1.msra.mxu0 %v2786
  %4440 = vmatprep.subr.mxu0 %v2783
  %4441 = vmatpush1.msra.mxu0 %v2782
  %4442 = vmatprep.subr.mxu0 %v2779
  %4443 = vmatpush1.msra.mxu0 %v2778
  %4444 = vmatprep.subr.mxu0 %v2775
  %4445 = vmatpush1.msra.mxu0 %v2774
  %4446 = vmatprep.subr.mxu0 %v2771
  %4447 = vmatpush1.msra.mxu0 %v2770
  %4448 = vmatprep.subr.mxu0 0.0
  %4449 = vmatpush2.msra.mxu0 0.0
  %4450 = vmatprep.subr.mxu0 0.0
  %4451 = vmatpush2.msra.mxu0 0.0
  %4452 = vmatprep.subr.mxu0 0.0
  %4453 = vmatpush2.msra.mxu0 0.0
  %4454 = vmatprep.subr.mxu0 0.0
  %4455 = vmatpush2.msra.mxu0 0.0
  %4456 = vmatprep.subr.mxu0 0.0
  %4457 = vmatpush2.msra.mxu0 0.0
  %4458 = vmatprep.subr.mxu0 0.0
  %4459 = vmatpush2.msra.mxu0 0.0
  %4460 = vmatprep.subr.mxu0 0.0
  %4461 = vmatpush2.msra.mxu0 0.0
  %4462 = vmatprep.subr.mxu0 0.0
  %4463 = vmatpush2.msra.mxu0 0.0
  %4464 = vmatprep.subr.mxu0 0.0
  %4465 = vmatpush2.msra.mxu0 0.0
  %4466 = vmatprep.subr.mxu0 0.0
  %4467 = vmatpush2.msra.mxu0 0.0
  %4468 = vmatprep.subr.mxu0 0.0
  %4469 = vmatpush2.msra.mxu0 0.0
  %4470 = vmatprep.subr.mxu0 0.0
  %4471 = vmatpush2.msra.mxu0 0.0
  %4472 = vmatprep.subr.mxu0 0.0
  %4473 = vmatpush2.msra.mxu0 0.0
  %4474 = vmatprep.subr.mxu0 0.0
  %4475 = vmatpush2.msra.mxu0 0.0
  %4476 = vmatprep.subr.mxu0 0.0
  %4477 = vmatpush2.msra.mxu0 0.0
  %4478 = vmatprep.subr.mxu0 0.0
  %4479 = vmatpush2.msra.mxu0 0.0
  %4480 = vmatprep.mubr.f32.mxu0 0.0
  %4481 = vmatmul.mubr.f32.gmra.mxu0 %v4415
  %v4482 = vpop.f32.mrf.mxu0
  %v4483 = vadd.f32 0.0, %v4482
  %v4484 = vpop.f32.mrf.mxu0
  %v4485 = vadd.f32 0.0, %v4484
  %4486 = vdwg.mxu0
  %4487 = vmatprep.subr.mxu0 %v2833
  %4488 = vmatpush1.msra.mxu0 %v2832
  %4489 = vmatprep.subr.mxu0 %v2829
  %4490 = vmatpush1.msra.mxu0 %v2828
  %4491 = vmatprep.subr.mxu0 %v2825
  %4492 = vmatpush1.msra.mxu0 %v2824
  %4493 = vmatprep.subr.mxu0 %v2821
  %4494 = vmatpush1.msra.mxu0 %v2820
  %4495 = vmatprep.subr.mxu0 %v2817
  %4496 = vmatpush1.msra.mxu0 %v2816
  %4497 = vmatprep.subr.mxu0 %v2813
  %4498 = vmatpush1.msra.mxu0 %v2812
  %4499 = vmatprep.subr.mxu0 %v2809
  %4500 = vmatpush1.msra.mxu0 %v2808
  %4501 = vmatprep.subr.mxu0 %v2805
  %4502 = vmatpush1.msra.mxu0 %v2804
  %4503 = vmatprep.subr.mxu0 %v2801
  %4504 = vmatpush1.msra.mxu0 %v2800
  %4505 = vmatprep.subr.mxu0 %v2797
  %4506 = vmatpush1.msra.mxu0 %v2796
  %4507 = vmatprep.subr.mxu0 %v2793
  %4508 = vmatpush1.msra.mxu0 %v2792
  %4509 = vmatprep.subr.mxu0 %v2789
  %4510 = vmatpush1.msra.mxu0 %v2788
  %4511 = vmatprep.subr.mxu0 %v2785
  %4512 = vmatpush1.msra.mxu0 %v2784
  %4513 = vmatprep.subr.mxu0 %v2781
  %4514 = vmatpush1.msra.mxu0 %v2780
  %4515 = vmatprep.subr.mxu0 %v2777
  %4516 = vmatpush1.msra.mxu0 %v2776
  %4517 = vmatprep.subr.mxu0 %v2773
  %4518 = vmatpush1.msra.mxu0 %v2772
  %4519 = vmatprep.subr.mxu0 0.0
  %4520 = vmatpush2.msra.mxu0 0.0
  %4521 = vmatprep.subr.mxu0 0.0
  %4522 = vmatpush2.msra.mxu0 0.0
  %4523 = vmatprep.subr.mxu0 0.0
  %4524 = vmatpush2.msra.mxu0 0.0
  %4525 = vmatprep.subr.mxu0 0.0
  %4526 = vmatpush2.msra.mxu0 0.0
  %4527 = vmatprep.subr.mxu0 0.0
  %4528 = vmatpush2.msra.mxu0 0.0
  %4529 = vmatprep.subr.mxu0 0.0
  %4530 = vmatpush2.msra.mxu0 0.0
  %4531 = vmatprep.subr.mxu0 0.0
  %4532 = vmatpush2.msra.mxu0 0.0
  %4533 = vmatprep.subr.mxu0 0.0
  %4534 = vmatpush2.msra.mxu0 0.0
  %4535 = vmatprep.subr.mxu0 0.0
  %4536 = vmatpush2.msra.mxu0 0.0
  %4537 = vmatprep.subr.mxu0 0.0
  %4538 = vmatpush2.msra.mxu0 0.0
  %4539 = vmatprep.subr.mxu0 0.0
  %4540 = vmatpush2.msra.mxu0 0.0
  %4541 = vmatprep.subr.mxu0 0.0
  %4542 = vmatpush2.msra.mxu0 0.0
  %4543 = vmatprep.subr.mxu0 0.0
  %4544 = vmatpush2.msra.mxu0 0.0
  %4545 = vmatprep.subr.mxu0 0.0
  %4546 = vmatpush2.msra.mxu0 0.0
  %4547 = vmatprep.subr.mxu0 0.0
  %4548 = vmatpush2.msra.mxu0 0.0
  %4549 = vmatprep.subr.mxu0 0.0
  %4550 = vmatpush2.msra.mxu0 0.0
  %4551 = vmatprep.mubr.f32.mxu0 0.0
  %4552 = vmatmul.mubr.f32.gmra.mxu0 %v4415
  %v4553 = vpop.f32.mrf.mxu0
  %v4554 = vadd.f32 0.0, %v4553
  %v4555 = vpop.f32.mrf.mxu0
  %v4556 = vadd.f32 0.0, %v4555
  %4557 = vdwg.mxu0
  %4558 = vmatprep.subr.mxu0 %v2767
  %4559 = vmatpush1.msra.mxu0 %v2766
  %4560 = vmatprep.subr.mxu0 %v2763
  %4561 = vmatpush1.msra.mxu0 %v2762
  %4562 = vmatprep.subr.mxu0 %v2759
  %4563 = vmatpush1.msra.mxu0 %v2758
  %4564 = vmatprep.subr.mxu0 %v2755
  %4565 = vmatpush1.msra.mxu0 %v2754
  %4566 = vmatprep.subr.mxu0 %v2751
  %4567 = vmatpush1.msra.mxu0 %v2750
  %4568 = vmatprep.subr.mxu0 %v2747
  %4569 = vmatpush1.msra.mxu0 %v2746
  %4570 = vmatprep.subr.mxu0 %v2743
  %4571 = vmatpush1.msra.mxu0 %v2742
  %4572 = vmatprep.subr.mxu0 %v2739
  %4573 = vmatpush1.msra.mxu0 %v2738
  %4574 = vmatprep.subr.mxu0 %v2735
  %4575 = vmatpush1.msra.mxu0 %v2734
  %4576 = vmatprep.subr.mxu0 %v2731
  %4577 = vmatpush1.msra.mxu0 %v2730
  %4578 = vmatprep.subr.mxu0 %v2727
  %4579 = vmatpush1.msra.mxu0 %v2726
  %4580 = vmatprep.subr.mxu0 %v2723
  %4581 = vmatpush1.msra.mxu0 %v2722
  %4582 = vmatprep.subr.mxu0 %v2719
  %4583 = vmatpush1.msra.mxu0 %v2718
  %4584 = vmatprep.subr.mxu0 %v2715
  %4585 = vmatpush1.msra.mxu0 %v2714
  %4586 = vmatprep.subr.mxu0 %v2711
  %4587 = vmatpush1.msra.mxu0 %v2710
  %4588 = vmatprep.subr.mxu0 %v2707
  %4589 = vmatpush1.msra.mxu0 %v2706
  %4590 = vmatprep.subr.mxu0 0.0
  %4591 = vmatpush2.msra.mxu0 0.0
  %4592 = vmatprep.subr.mxu0 0.0
  %4593 = vmatpush2.msra.mxu0 0.0
  %4594 = vmatprep.subr.mxu0 0.0
  %4595 = vmatpush2.msra.mxu0 0.0
  %4596 = vmatprep.subr.mxu0 0.0
  %4597 = vmatpush2.msra.mxu0 0.0
  %4598 = vmatprep.subr.mxu0 0.0
  %4599 = vmatpush2.msra.mxu0 0.0
  %4600 = vmatprep.subr.mxu0 0.0
  %4601 = vmatpush2.msra.mxu0 0.0
  %4602 = vmatprep.subr.mxu0 0.0
  %4603 = vmatpush2.msra.mxu0 0.0
  %4604 = vmatprep.subr.mxu0 0.0
  %4605 = vmatpush2.msra.mxu0 0.0
  %4606 = vmatprep.subr.mxu0 0.0
  %4607 = vmatpush2.msra.mxu0 0.0
  %4608 = vmatprep.subr.mxu0 0.0
  %4609 = vmatpush2.msra.mxu0 0.0
  %4610 = vmatprep.subr.mxu0 0.0
  %4611 = vmatpush2.msra.mxu0 0.0
  %4612 = vmatprep.subr.mxu0 0.0
  %4613 = vmatpush2.msra.mxu0 0.0
  %4614 = vmatprep.subr.mxu0 0.0
  %4615 = vmatpush2.msra.mxu0 0.0
  %4616 = vmatprep.subr.mxu0 0.0
  %4617 = vmatpush2.msra.mxu0 0.0
  %4618 = vmatprep.subr.mxu0 0.0
  %4619 = vmatpush2.msra.mxu0 0.0
  %4620 = vmatprep.subr.mxu0 0.0
  %4621 = vmatpush2.msra.mxu0 0.0
  %4622 = vmatprep.mubr.f32.mxu0 0.0
  %4623 = vmatmul.mubr.f32.gmra.mxu0 %v2069
  %v4624 = vpop.f32.mrf.mxu0
  %v4625 = vadd.f32 %v4483, %v4624
  %v4626 = vpop.f32.mrf.mxu0
  %v4627 = vadd.f32 %v4485, %v4626
  %4628 = vdwg.mxu0
  %4629 = vmatprep.subr.mxu0 %v2769
  %4630 = vmatpush1.msra.mxu0 %v2768
  %4631 = vmatprep.subr.mxu0 %v2765
  %4632 = vmatpush1.msra.mxu0 %v2764
  %4633 = vmatprep.subr.mxu0 %v2761
  %4634 = vmatpush1.msra.mxu0 %v2760
  %4635 = vmatprep.subr.mxu0 %v2757
  %4636 = vmatpush1.msra.mxu0 %v2756
  %4637 = vmatprep.subr.mxu0 %v2753
  %4638 = vmatpush1.msra.mxu0 %v2752
  %4639 = vmatprep.subr.mxu0 %v2749
  %4640 = vmatpush1.msra.mxu0 %v2748
  %4641 = vmatprep.subr.mxu0 %v2745
  %4642 = vmatpush1.msra.mxu0 %v2744
  %4643 = vmatprep.subr.mxu0 %v2741
  %4644 = vmatpush1.msra.mxu0 %v2740
  %4645 = vmatprep.subr.mxu0 %v2737
  %4646 = vmatpush1.msra.mxu0 %v2736
  %4647 = vmatprep.subr.mxu0 %v2733
  %4648 = vmatpush1.msra.mxu0 %v2732
  %4649 = vmatprep.subr.mxu0 %v2729
  %4650 = vmatpush1.msra.mxu0 %v2728
  %4651 = vmatprep.subr.mxu0 %v2725
  %4652 = vmatpush1.msra.mxu0 %v2724
  %4653 = vmatprep.subr.mxu0 %v2721
  %4654 = vmatpush1.msra.mxu0 %v2720
  %4655 = vmatprep.subr.mxu0 %v2717
  %4656 = vmatpush1.msra.mxu0 %v2716
  %4657 = vmatprep.subr.mxu0 %v2713
  %4658 = vmatpush1.msra.mxu0 %v2712
  %4659 = vmatprep.subr.mxu0 %v2709
  %4660 = vmatpush1.msra.mxu0 %v2708
  %4661 = vmatprep.subr.mxu0 0.0
  %4662 = vmatpush2.msra.mxu0 0.0
  %4663 = vmatprep.subr.mxu0 0.0
  %4664 = vmatpush2.msra.mxu0 0.0
  %4665 = vmatprep.subr.mxu0 0.0
  %4666 = vmatpush2.msra.mxu0 0.0
  %4667 = vmatprep.subr.mxu0 0.0
  %4668 = vmatpush2.msra.mxu0 0.0
  %4669 = vmatprep.subr.mxu0 0.0
  %4670 = vmatpush2.msra.mxu0 0.0
  %4671 = vmatprep.subr.mxu0 0.0
  %4672 = vmatpush2.msra.mxu0 0.0
  %4673 = vmatprep.subr.mxu0 0.0
  %4674 = vmatpush2.msra.mxu0 0.0
  %4675 = vmatprep.subr.mxu0 0.0
  %4676 = vmatpush2.msra.mxu0 0.0
  %4677 = vmatprep.subr.mxu0 0.0
  %4678 = vmatpush2.msra.mxu0 0.0
  %4679 = vmatprep.subr.mxu0 0.0
  %4680 = vmatpush2.msra.mxu0 0.0
  %4681 = vmatprep.subr.mxu0 0.0
  %4682 = vmatpush2.msra.mxu0 0.0
  %4683 = vmatprep.subr.mxu0 0.0
  %4684 = vmatpush2.msra.mxu0 0.0
  %4685 = vmatprep.subr.mxu0 0.0
  %4686 = vmatpush2.msra.mxu0 0.0
  %4687 = vmatprep.subr.mxu0 0.0
  %4688 = vmatpush2.msra.mxu0 0.0
  %4689 = vmatprep.subr.mxu0 0.0
  %4690 = vmatpush2.msra.mxu0 0.0
  %4691 = vmatprep.subr.mxu0 0.0
  %4692 = vmatpush2.msra.mxu0 0.0
  %4693 = vmatprep.mubr.f32.mxu0 0.0
  %4694 = vmatmul.mubr.f32.gmra.mxu0 %v2069
  %v4695 = vpop.f32.mrf.mxu0
  %v4696 = vadd.f32 %v4554, %v4695
  %v4697 = vpop.f32.mrf.mxu0
  %v4698 = vadd.f32 %v4556, %v4697
  %4699 = vdwg.mxu0
  %v4700 = vadd.f32 %v4625, %v3123
  %v4701 = vadd.f32 %v4627, %v3127
  %v4702 = vadd.f32 %v4696, %v3131
  %v4703 = vadd.f32 %v4698, %v3135
  %v4704 = vxor.u32 %v4700, 2147483648
  %v4705 = vmul.f32 %v4704, 1.442695
  %v4706 = vpow.pop %v4705
  %v4707 = vadd.f32 %v4706, 1.0
  %v4708 = vrcp.pop %v4707
  %v4709 = vmul.f32 1.0, %v4708
  %v4710 = vxor.u32 %v4701, 2147483648
  %v4711 = vmul.f32 %v4710, 1.442695
  %v4712 = vpow.pop %v4711
  %v4713 = vadd.f32 %v4712, 1.0
  %v4714 = vrcp.pop %v4713
  %v4715 = vmul.f32 1.0, %v4714
  %v4716 = vtanh.pop %v4702
  %v4717 = vxor.u32 %v4703, 2147483648
  %v4718 = vmul.f32 %v4717, 1.442695
  %v4719 = vpow.pop %v4718
  %v4720 = vadd.f32 %v4719, 1.0
  %v4721 = vrcp.pop %v4720
  %v4722 = vmul.f32 1.0, %v4721
  %v4723 = vmul.f32 %v4715, %v4413
  %v4724 = vmul.f32 %v4709, %v4716
  %v4725 = vadd.f32 %v4723, %v4724
  %v4726 = vtanh.pop %v4725
  %v4727 = vmul.f32 %v4722, %v4726
  %4728 = vmatprep.subr.mxu0 %v2831
  %4729 = vmatpush1.msra.mxu0 %v2830
  %4730 = vmatprep.subr.mxu0 %v2827
  %4731 = vmatpush1.msra.mxu0 %v2826
  %4732 = vmatprep.subr.mxu0 %v2823
  %4733 = vmatpush1.msra.mxu0 %v2822
  %4734 = vmatprep.subr.mxu0 %v2819
  %4735 = vmatpush1.msra.mxu0 %v2818
  %4736 = vmatprep.subr.mxu0 %v2815
  %4737 = vmatpush1.msra.mxu0 %v2814
  %4738 = vmatprep.subr.mxu0 %v2811
  %4739 = vmatpush1.msra.mxu0 %v2810
  %4740 = vmatprep.subr.mxu0 %v2807
  %4741 = vmatpush1.msra.mxu0 %v2806
  %4742 = vmatprep.subr.mxu0 %v2803
  %4743 = vmatpush1.msra.mxu0 %v2802
  %4744 = vmatprep.subr.mxu0 %v2799
  %4745 = vmatpush1.msra.mxu0 %v2798
  %4746 = vmatprep.subr.mxu0 %v2795
  %4747 = vmatpush1.msra.mxu0 %v2794
  %4748 = vmatprep.subr.mxu0 %v2791
  %4749 = vmatpush1.msra.mxu0 %v2790
  %4750 = vmatprep.subr.mxu0 %v2787
  %4751 = vmatpush1.msra.mxu0 %v2786
  %4752 = vmatprep.subr.mxu0 %v2783
  %4753 = vmatpush1.msra.mxu0 %v2782
  %4754 = vmatprep.subr.mxu0 %v2779
  %4755 = vmatpush1.msra.mxu0 %v2778
  %4756 = vmatprep.subr.mxu0 %v2775
  %4757 = vmatpush1.msra.mxu0 %v2774
  %4758 = vmatprep.subr.mxu0 %v2771
  %4759 = vmatpush1.msra.mxu0 %v2770
  %4760 = vmatprep.subr.mxu0 0.0
  %4761 = vmatpush2.msra.mxu0 0.0
  %4762 = vmatprep.subr.mxu0 0.0
  %4763 = vmatpush2.msra.mxu0 0.0
  %4764 = vmatprep.subr.mxu0 0.0
  %4765 = vmatpush2.msra.mxu0 0.0
  %4766 = vmatprep.subr.mxu0 0.0
  %4767 = vmatpush2.msra.mxu0 0.0
  %4768 = vmatprep.subr.mxu0 0.0
  %4769 = vmatpush2.msra.mxu0 0.0
  %4770 = vmatprep.subr.mxu0 0.0
  %4771 = vmatpush2.msra.mxu0 0.0
  %4772 = vmatprep.subr.mxu0 0.0
  %4773 = vmatpush2.msra.mxu0 0.0
  %4774 = vmatprep.subr.mxu0 0.0
  %4775 = vmatpush2.msra.mxu0 0.0
  %4776 = vmatprep.subr.mxu0 0.0
  %4777 = vmatpush2.msra.mxu0 0.0
  %4778 = vmatprep.subr.mxu0 0.0
  %4779 = vmatpush2.msra.mxu0 0.0
  %4780 = vmatprep.subr.mxu0 0.0
  %4781 = vmatpush2.msra.mxu0 0.0
  %4782 = vmatprep.subr.mxu0 0.0
  %4783 = vmatpush2.msra.mxu0 0.0
  %4784 = vmatprep.subr.mxu0 0.0
  %4785 = vmatpush2.msra.mxu0 0.0
  %4786 = vmatprep.subr.mxu0 0.0
  %4787 = vmatpush2.msra.mxu0 0.0
  %4788 = vmatprep.subr.mxu0 0.0
  %4789 = vmatpush2.msra.mxu0 0.0
  %4790 = vmatprep.subr.mxu0 0.0
  %4791 = vmatpush2.msra.mxu0 0.0
  %4792 = vmatprep.mubr.f32.mxu0 0.0
  %4793 = vmatmul.mubr.f32.gmra.mxu0 %v4727
  %v4794 = vpop.f32.mrf.mxu0
  %v4795 = vadd.f32 0.0, %v4794
  %v4796 = vpop.f32.mrf.mxu0
  %v4797 = vadd.f32 0.0, %v4796
  %4798 = vdwg.mxu0
  %4799 = vmatprep.subr.mxu0 %v2833
  %4800 = vmatpush1.msra.mxu0 %v2832
  %4801 = vmatprep.subr.mxu0 %v2829
  %4802 = vmatpush1.msra.mxu0 %v2828
  %4803 = vmatprep.subr.mxu0 %v2825
  %4804 = vmatpush1.msra.mxu0 %v2824
  %4805 = vmatprep.subr.mxu0 %v2821
  %4806 = vmatpush1.msra.mxu0 %v2820
  %4807 = vmatprep.subr.mxu0 %v2817
  %4808 = vmatpush1.msra.mxu0 %v2816
  %4809 = vmatprep.subr.mxu0 %v2813
  %4810 = vmatpush1.msra.mxu0 %v2812
  %4811 = vmatprep.subr.mxu0 %v2809
  %4812 = vmatpush1.msra.mxu0 %v2808
  %4813 = vmatprep.subr.mxu0 %v2805
  %4814 = vmatpush1.msra.mxu0 %v2804
  %4815 = vmatprep.subr.mxu0 %v2801
  %4816 = vmatpush1.msra.mxu0 %v2800
  %4817 = vmatprep.subr.mxu0 %v2797
  %4818 = vmatpush1.msra.mxu0 %v2796
  %4819 = vmatprep.subr.mxu0 %v2793
  %4820 = vmatpush1.msra.mxu0 %v2792
  %4821 = vmatprep.subr.mxu0 %v2789
  %4822 = vmatpush1.msra.mxu0 %v2788
  %4823 = vmatprep.subr.mxu0 %v2785
  %4824 = vmatpush1.msra.mxu0 %v2784
  %4825 = vmatprep.subr.mxu0 %v2781
  %4826 = vmatpush1.msra.mxu0 %v2780
  %4827 = vmatprep.subr.mxu0 %v2777
  %4828 = vmatpush1.msra.mxu0 %v2776
  %4829 = vmatprep.subr.mxu0 %v2773
  %4830 = vmatpush1.msra.mxu0 %v2772
  %4831 = vmatprep.subr.mxu0 0.0
  %4832 = vmatpush2.msra.mxu0 0.0
  %4833 = vmatprep.subr.mxu0 0.0
  %4834 = vmatpush2.msra.mxu0 0.0
  %4835 = vmatprep.subr.mxu0 0.0
  %4836 = vmatpush2.msra.mxu0 0.0
  %4837 = vmatprep.subr.mxu0 0.0
  %4838 = vmatpush2.msra.mxu0 0.0
  %4839 = vmatprep.subr.mxu0 0.0
  %4840 = vmatpush2.msra.mxu0 0.0
  %4841 = vmatprep.subr.mxu0 0.0
  %4842 = vmatpush2.msra.mxu0 0.0
  %4843 = vmatprep.subr.mxu0 0.0
  %4844 = vmatpush2.msra.mxu0 0.0
  %4845 = vmatprep.subr.mxu0 0.0
  %4846 = vmatpush2.msra.mxu0 0.0
  %4847 = vmatprep.subr.mxu0 0.0
  %4848 = vmatpush2.msra.mxu0 0.0
  %4849 = vmatprep.subr.mxu0 0.0
  %4850 = vmatpush2.msra.mxu0 0.0
  %4851 = vmatprep.subr.mxu0 0.0
  %4852 = vmatpush2.msra.mxu0 0.0
  %4853 = vmatprep.subr.mxu0 0.0
  %4854 = vmatpush2.msra.mxu0 0.0
  %4855 = vmatprep.subr.mxu0 0.0
  %4856 = vmatpush2.msra.mxu0 0.0
  %4857 = vmatprep.subr.mxu0 0.0
  %4858 = vmatpush2.msra.mxu0 0.0
  %4859 = vmatprep.subr.mxu0 0.0
  %4860 = vmatpush2.msra.mxu0 0.0
  %4861 = vmatprep.subr.mxu0 0.0
  %4862 = vmatpush2.msra.mxu0 0.0
  %4863 = vmatprep.mubr.f32.mxu0 0.0
  %4864 = vmatmul.mubr.f32.gmra.mxu0 %v4727
  %v4865 = vpop.f32.mrf.mxu0
  %v4866 = vadd.f32 0.0, %v4865
  %v4867 = vpop.f32.mrf.mxu0
  %v4868 = vadd.f32 0.0, %v4867
  %4869 = vdwg.mxu0
  %4870 = vmatprep.subr.mxu0 %v2767
  %4871 = vmatpush1.msra.mxu0 %v2766
  %4872 = vmatprep.subr.mxu0 %v2763
  %4873 = vmatpush1.msra.mxu0 %v2762
  %4874 = vmatprep.subr.mxu0 %v2759
  %4875 = vmatpush1.msra.mxu0 %v2758
  %4876 = vmatprep.subr.mxu0 %v2755
  %4877 = vmatpush1.msra.mxu0 %v2754
  %4878 = vmatprep.subr.mxu0 %v2751
  %4879 = vmatpush1.msra.mxu0 %v2750
  %4880 = vmatprep.subr.mxu0 %v2747
  %4881 = vmatpush1.msra.mxu0 %v2746
  %4882 = vmatprep.subr.mxu0 %v2743
  %4883 = vmatpush1.msra.mxu0 %v2742
  %4884 = vmatprep.subr.mxu0 %v2739
  %4885 = vmatpush1.msra.mxu0 %v2738
  %4886 = vmatprep.subr.mxu0 %v2735
  %4887 = vmatpush1.msra.mxu0 %v2734
  %4888 = vmatprep.subr.mxu0 %v2731
  %4889 = vmatpush1.msra.mxu0 %v2730
  %4890 = vmatprep.subr.mxu0 %v2727
  %4891 = vmatpush1.msra.mxu0 %v2726
  %4892 = vmatprep.subr.mxu0 %v2723
  %4893 = vmatpush1.msra.mxu0 %v2722
  %4894 = vmatprep.subr.mxu0 %v2719
  %4895 = vmatpush1.msra.mxu0 %v2718
  %4896 = vmatprep.subr.mxu0 %v2715
  %4897 = vmatpush1.msra.mxu0 %v2714
  %4898 = vmatprep.subr.mxu0 %v2711
  %4899 = vmatpush1.msra.mxu0 %v2710
  %4900 = vmatprep.subr.mxu0 %v2707
  %4901 = vmatpush1.msra.mxu0 %v2706
  %4902 = vmatprep.subr.mxu0 0.0
  %4903 = vmatpush2.msra.mxu0 0.0
  %4904 = vmatprep.subr.mxu0 0.0
  %4905 = vmatpush2.msra.mxu0 0.0
  %4906 = vmatprep.subr.mxu0 0.0
  %4907 = vmatpush2.msra.mxu0 0.0
  %4908 = vmatprep.subr.mxu0 0.0
  %4909 = vmatpush2.msra.mxu0 0.0
  %4910 = vmatprep.subr.mxu0 0.0
  %4911 = vmatpush2.msra.mxu0 0.0
  %4912 = vmatprep.subr.mxu0 0.0
  %4913 = vmatpush2.msra.mxu0 0.0
  %4914 = vmatprep.subr.mxu0 0.0
  %4915 = vmatpush2.msra.mxu0 0.0
  %4916 = vmatprep.subr.mxu0 0.0
  %4917 = vmatpush2.msra.mxu0 0.0
  %4918 = vmatprep.subr.mxu0 0.0
  %4919 = vmatpush2.msra.mxu0 0.0
  %4920 = vmatprep.subr.mxu0 0.0
  %4921 = vmatpush2.msra.mxu0 0.0
  %4922 = vmatprep.subr.mxu0 0.0
  %4923 = vmatpush2.msra.mxu0 0.0
  %4924 = vmatprep.subr.mxu0 0.0
  %4925 = vmatpush2.msra.mxu0 0.0
  %4926 = vmatprep.subr.mxu0 0.0
  %4927 = vmatpush2.msra.mxu0 0.0
  %4928 = vmatprep.subr.mxu0 0.0
  %4929 = vmatpush2.msra.mxu0 0.0
  %4930 = vmatprep.subr.mxu0 0.0
  %4931 = vmatpush2.msra.mxu0 0.0
  %4932 = vmatprep.subr.mxu0 0.0
  %4933 = vmatpush2.msra.mxu0 0.0
  %4934 = vmatprep.mubr.f32.mxu0 0.0
  %4935 = vmatmul.mubr.f32.gmra.mxu0 %v2387
  %v4936 = vpop.f32.mrf.mxu0
  %v4937 = vadd.f32 %v4795, %v4936
  %v4938 = vpop.f32.mrf.mxu0
  %v4939 = vadd.f32 %v4797, %v4938
  %4940 = vdwg.mxu0
  %4941 = vmatprep.subr.mxu0 %v2769
  %4942 = vmatpush1.msra.mxu0 %v2768
  %4943 = vmatprep.subr.mxu0 %v2765
  %4944 = vmatpush1.msra.mxu0 %v2764
  %4945 = vmatprep.subr.mxu0 %v2761
  %4946 = vmatpush1.msra.mxu0 %v2760
  %4947 = vmatprep.subr.mxu0 %v2757
  %4948 = vmatpush1.msra.mxu0 %v2756
  %4949 = vmatprep.subr.mxu0 %v2753
  %4950 = vmatpush1.msra.mxu0 %v2752
  %4951 = vmatprep.subr.mxu0 %v2749
  %4952 = vmatpush1.msra.mxu0 %v2748
  %4953 = vmatprep.subr.mxu0 %v2745
  %4954 = vmatpush1.msra.mxu0 %v2744
  %4955 = vmatprep.subr.mxu0 %v2741
  %4956 = vmatpush1.msra.mxu0 %v2740
  %4957 = vmatprep.subr.mxu0 %v2737
  %4958 = vmatpush1.msra.mxu0 %v2736
  %4959 = vmatprep.subr.mxu0 %v2733
  %4960 = vmatpush1.msra.mxu0 %v2732
  %4961 = vmatprep.subr.mxu0 %v2729
  %4962 = vmatpush1.msra.mxu0 %v2728
  %4963 = vmatprep.subr.mxu0 %v2725
  %4964 = vmatpush1.msra.mxu0 %v2724
  %4965 = vmatprep.subr.mxu0 %v2721
  %4966 = vmatpush1.msra.mxu0 %v2720
  %4967 = vmatprep.subr.mxu0 %v2717
  %4968 = vmatpush1.msra.mxu0 %v2716
  %4969 = vmatprep.subr.mxu0 %v2713
  %4970 = vmatpush1.msra.mxu0 %v2712
  %4971 = vmatprep.subr.mxu0 %v2709
  %4972 = vmatpush1.msra.mxu0 %v2708
  %4973 = vmatprep.subr.mxu0 0.0
  %4974 = vmatpush2.msra.mxu0 0.0
  %4975 = vmatprep.subr.mxu0 0.0
  %4976 = vmatpush2.msra.mxu0 0.0
  %4977 = vmatprep.subr.mxu0 0.0
  %4978 = vmatpush2.msra.mxu0 0.0
  %4979 = vmatprep.subr.mxu0 0.0
  %4980 = vmatpush2.msra.mxu0 0.0
  %4981 = vmatprep.subr.mxu0 0.0
  %4982 = vmatpush2.msra.mxu0 0.0
  %4983 = vmatprep.subr.mxu0 0.0
  %4984 = vmatpush2.msra.mxu0 0.0
  %4985 = vmatprep.subr.mxu0 0.0
  %4986 = vmatpush2.msra.mxu0 0.0
  %4987 = vmatprep.subr.mxu0 0.0
  %4988 = vmatpush2.msra.mxu0 0.0
  %4989 = vmatprep.subr.mxu0 0.0
  %4990 = vmatpush2.msra.mxu0 0.0
  %4991 = vmatprep.subr.mxu0 0.0
  %4992 = vmatpush2.msra.mxu0 0.0
  %4993 = vmatprep.subr.mxu0 0.0
  %4994 = vmatpush2.msra.mxu0 0.0
  %4995 = vmatprep.subr.mxu0 0.0
  %4996 = vmatpush2.msra.mxu0 0.0
  %4997 = vmatprep.subr.mxu0 0.0
  %4998 = vmatpush2.msra.mxu0 0.0
  %4999 = vmatprep.subr.mxu0 0.0
  %5000 = vmatpush2.msra.mxu0 0.0
  %5001 = vmatprep.subr.mxu0 0.0
  %5002 = vmatpush2.msra.mxu0 0.0
  %5003 = vmatprep.subr.mxu0 0.0
  %5004 = vmatpush2.msra.mxu0 0.0
  %5005 = vmatprep.mubr.f32.mxu0 0.0
  %5006 = vmatmul.mubr.f32.gmra.mxu0 %v2387
  %v5007 = vpop.f32.mrf.mxu0
  %v5008 = vadd.f32 %v4866, %v5007
  %v5009 = vpop.f32.mrf.mxu0
  %v5010 = vadd.f32 %v4868, %v5009
  %5011 = vdwg.mxu0
  %v5012 = vadd.f32 %v4937, %v3123
  %v5013 = vadd.f32 %v4939, %v3127
  %v5014 = vadd.f32 %v5008, %v3131
  %v5015 = vadd.f32 %v5010, %v3135
  %v5016 = vxor.u32 %v5012, 2147483648
  %v5017 = vmul.f32 %v5016, 1.442695
  %v5018 = vpow.pop %v5017
  %v5019 = vadd.f32 %v5018, 1.0
  %v5020 = vrcp.pop %v5019
  %v5021 = vmul.f32 1.0, %v5020
  %v5022 = vxor.u32 %v5013, 2147483648
  %v5023 = vmul.f32 %v5022, 1.442695
  %v5024 = vpow.pop %v5023
  %v5025 = vadd.f32 %v5024, 1.0
  %v5026 = vrcp.pop %v5025
  %v5027 = vmul.f32 1.0, %v5026
  %v5028 = vtanh.pop %v5014
  %v5029 = vxor.u32 %v5015, 2147483648
  %v5030 = vmul.f32 %v5029, 1.442695
  %v5031 = vpow.pop %v5030
  %v5032 = vadd.f32 %v5031, 1.0
  %v5033 = vrcp.pop %v5032
  %v5034 = vmul.f32 1.0, %v5033
  %v5035 = vmul.f32 %v5027, %v4725
  %v5036 = vmul.f32 %v5021, %v5028
  %v5037 = vadd.f32 %v5035, %v5036
  %v5038 = vtanh.pop %v5037
  %v5039 = vmul.f32 %v5034, %v5038
  %5040 = vmatprep.subr.mxu0 %v2831
  %5041 = vmatpush1.msra.mxu0 %v2830
  %5042 = vmatprep.subr.mxu0 %v2827
  %5043 = vmatpush1.msra.mxu0 %v2826
  %5044 = vmatprep.subr.mxu0 %v2823
  %5045 = vmatpush1.msra.mxu0 %v2822
  %5046 = vmatprep.subr.mxu0 %v2819
  %5047 = vmatpush1.msra.mxu0 %v2818
  %5048 = vmatprep.subr.mxu0 %v2815
  %5049 = vmatpush1.msra.mxu0 %v2814
  %5050 = vmatprep.subr.mxu0 %v2811
  %5051 = vmatpush1.msra.mxu0 %v2810
  %5052 = vmatprep.subr.mxu0 %v2807
  %5053 = vmatpush1.msra.mxu0 %v2806
  %5054 = vmatprep.subr.mxu0 %v2803
  %5055 = vmatpush1.msra.mxu0 %v2802
  %5056 = vmatprep.subr.mxu0 %v2799
  %5057 = vmatpush1.msra.mxu0 %v2798
  %5058 = vmatprep.subr.mxu0 %v2795
  %5059 = vmatpush1.msra.mxu0 %v2794
  %5060 = vmatprep.subr.mxu0 %v2791
  %5061 = vmatpush1.msra.mxu0 %v2790
  %5062 = vmatprep.subr.mxu0 %v2787
  %5063 = vmatpush1.msra.mxu0 %v2786
  %5064 = vmatprep.subr.mxu0 %v2783
  %5065 = vmatpush1.msra.mxu0 %v2782
  %5066 = vmatprep.subr.mxu0 %v2779
  %5067 = vmatpush1.msra.mxu0 %v2778
  %5068 = vmatprep.subr.mxu0 %v2775
  %5069 = vmatpush1.msra.mxu0 %v2774
  %5070 = vmatprep.subr.mxu0 %v2771
  %5071 = vmatpush1.msra.mxu0 %v2770
  %5072 = vmatprep.subr.mxu0 0.0
  %5073 = vmatpush2.msra.mxu0 0.0
  %5074 = vmatprep.subr.mxu0 0.0
  %5075 = vmatpush2.msra.mxu0 0.0
  %5076 = vmatprep.subr.mxu0 0.0
  %5077 = vmatpush2.msra.mxu0 0.0
  %5078 = vmatprep.subr.mxu0 0.0
  %5079 = vmatpush2.msra.mxu0 0.0
  %5080 = vmatprep.subr.mxu0 0.0
  %5081 = vmatpush2.msra.mxu0 0.0
  %5082 = vmatprep.subr.mxu0 0.0
  %5083 = vmatpush2.msra.mxu0 0.0
  %5084 = vmatprep.subr.mxu0 0.0
  %5085 = vmatpush2.msra.mxu0 0.0
  %5086 = vmatprep.subr.mxu0 0.0
  %5087 = vmatpush2.msra.mxu0 0.0
  %5088 = vmatprep.subr.mxu0 0.0
  %5089 = vmatpush2.msra.mxu0 0.0
  %5090 = vmatprep.subr.mxu0 0.0
  %5091 = vmatpush2.msra.mxu0 0.0
  %5092 = vmatprep.subr.mxu0 0.0
  %5093 = vmatpush2.msra.mxu0 0.0
  %5094 = vmatprep.subr.mxu0 0.0
  %5095 = vmatpush2.msra.mxu0 0.0
  %5096 = vmatprep.subr.mxu0 0.0
  %5097 = vmatpush2.msra.mxu0 0.0
  %5098 = vmatprep.subr.mxu0 0.0
  %5099 = vmatpush2.msra.mxu0 0.0
  %5100 = vmatprep.subr.mxu0 0.0
  %5101 = vmatpush2.msra.mxu0 0.0
  %5102 = vmatprep.subr.mxu0 0.0
  %5103 = vmatpush2.msra.mxu0 0.0
  %5104 = vmatprep.mubr.f32.mxu0 0.0
  %5105 = vmatmul.mubr.f32.gmra.mxu0 %v5039
  %v5106 = vpop.f32.mrf.mxu0
  %v5107 = vadd.f32 0.0, %v5106
  %v5108 = vpop.f32.mrf.mxu0
  %v5109 = vadd.f32 0.0, %v5108
  %5110 = vdwg.mxu0
  %5111 = vmatprep.subr.mxu0 %v2833
  %5112 = vmatpush1.msra.mxu0 %v2832
  %5113 = vmatprep.subr.mxu0 %v2829
  %5114 = vmatpush1.msra.mxu0 %v2828
  %5115 = vmatprep.subr.mxu0 %v2825
  %5116 = vmatpush1.msra.mxu0 %v2824
  %5117 = vmatprep.subr.mxu0 %v2821
  %5118 = vmatpush1.msra.mxu0 %v2820
  %5119 = vmatprep.subr.mxu0 %v2817
  %5120 = vmatpush1.msra.mxu0 %v2816
  %5121 = vmatprep.subr.mxu0 %v2813
  %5122 = vmatpush1.msra.mxu0 %v2812
  %5123 = vmatprep.subr.mxu0 %v2809
  %5124 = vmatpush1.msra.mxu0 %v2808
  %5125 = vmatprep.subr.mxu0 %v2805
  %5126 = vmatpush1.msra.mxu0 %v2804
  %5127 = vmatprep.subr.mxu0 %v2801
  %5128 = vmatpush1.msra.mxu0 %v2800
  %5129 = vmatprep.subr.mxu0 %v2797
  %5130 = vmatpush1.msra.mxu0 %v2796
  %5131 = vmatprep.subr.mxu0 %v2793
  %5132 = vmatpush1.msra.mxu0 %v2792
  %5133 = vmatprep.subr.mxu0 %v2789
  %5134 = vmatpush1.msra.mxu0 %v2788
  %5135 = vmatprep.subr.mxu0 %v2785
  %5136 = vmatpush1.msra.mxu0 %v2784
  %5137 = vmatprep.subr.mxu0 %v2781
  %5138 = vmatpush1.msra.mxu0 %v2780
  %5139 = vmatprep.subr.mxu0 %v2777
  %5140 = vmatpush1.msra.mxu0 %v2776
  %5141 = vmatprep.subr.mxu0 %v2773
  %5142 = vmatpush1.msra.mxu0 %v2772
  %5143 = vmatprep.subr.mxu0 0.0
  %5144 = vmatpush2.msra.mxu0 0.0
  %5145 = vmatprep.subr.mxu0 0.0
  %5146 = vmatpush2.msra.mxu0 0.0
  %5147 = vmatprep.subr.mxu0 0.0
  %5148 = vmatpush2.msra.mxu0 0.0
  %5149 = vmatprep.subr.mxu0 0.0
  %5150 = vmatpush2.msra.mxu0 0.0
  %5151 = vmatprep.subr.mxu0 0.0
  %5152 = vmatpush2.msra.mxu0 0.0
  %5153 = vmatprep.subr.mxu0 0.0
  %5154 = vmatpush2.msra.mxu0 0.0
  %5155 = vmatprep.subr.mxu0 0.0
  %5156 = vmatpush2.msra.mxu0 0.0
  %5157 = vmatprep.subr.mxu0 0.0
  %5158 = vmatpush2.msra.mxu0 0.0
  %5159 = vmatprep.subr.mxu0 0.0
  %5160 = vmatpush2.msra.mxu0 0.0
  %5161 = vmatprep.subr.mxu0 0.0
  %5162 = vmatpush2.msra.mxu0 0.0
  %5163 = vmatprep.subr.mxu0 0.0
  %5164 = vmatpush2.msra.mxu0 0.0
  %5165 = vmatprep.subr.mxu0 0.0
  %5166 = vmatpush2.msra.mxu0 0.0
  %5167 = vmatprep.subr.mxu0 0.0
  %5168 = vmatpush2.msra.mxu0 0.0
  %5169 = vmatprep.subr.mxu0 0.0
  %5170 = vmatpush2.msra.mxu0 0.0
  %5171 = vmatprep.subr.mxu0 0.0
  %5172 = vmatpush2.msra.mxu0 0.0
  %5173 = vmatprep.subr.mxu0 0.0
  %5174 = vmatpush2.msra.mxu0 0.0
  %5175 = vmatprep.mubr.f32.mxu0 0.0
  %5176 = vmatmul.mubr.f32.gmra.mxu0 %v5039
  %v5177 = vpop.f32.mrf.mxu0
  %v5178 = vadd.f32 0.0, %v5177
  %v5179 = vpop.f32.mrf.mxu0
  %v5180 = vadd.f32 0.0, %v5179
  %5181 = vdwg.mxu0
  %5182 = vmatprep.subr.mxu0 %v2767
  %5183 = vmatpush1.msra.mxu0 %v2766
  %5184 = vmatprep.subr.mxu0 %v2763
  %5185 = vmatpush1.msra.mxu0 %v2762
  %5186 = vmatprep.subr.mxu0 %v2759
  %5187 = vmatpush1.msra.mxu0 %v2758
  %5188 = vmatprep.subr.mxu0 %v2755
  %5189 = vmatpush1.msra.mxu0 %v2754
  %5190 = vmatprep.subr.mxu0 %v2751
  %5191 = vmatpush1.msra.mxu0 %v2750
  %5192 = vmatprep.subr.mxu0 %v2747
  %5193 = vmatpush1.msra.mxu0 %v2746
  %5194 = vmatprep.subr.mxu0 %v2743
  %5195 = vmatpush1.msra.mxu0 %v2742
  %5196 = vmatprep.subr.mxu0 %v2739
  %5197 = vmatpush1.msra.mxu0 %v2738
  %5198 = vmatprep.subr.mxu0 %v2735
  %5199 = vmatpush1.msra.mxu0 %v2734
  %5200 = vmatprep.subr.mxu0 %v2731
  %5201 = vmatpush1.msra.mxu0 %v2730
  %5202 = vmatprep.subr.mxu0 %v2727
  %5203 = vmatpush1.msra.mxu0 %v2726
  %5204 = vmatprep.subr.mxu0 %v2723
  %5205 = vmatpush1.msra.mxu0 %v2722
  %5206 = vmatprep.subr.mxu0 %v2719
  %5207 = vmatpush1.msra.mxu0 %v2718
  %5208 = vmatprep.subr.mxu0 %v2715
  %5209 = vmatpush1.msra.mxu0 %v2714
  %5210 = vmatprep.subr.mxu0 %v2711
  %5211 = vmatpush1.msra.mxu0 %v2710
  %5212 = vmatprep.subr.mxu0 %v2707
  %5213 = vmatpush1.msra.mxu0 %v2706
  %5214 = vmatprep.subr.mxu0 0.0
  %5215 = vmatpush2.msra.mxu0 0.0
  %5216 = vmatprep.subr.mxu0 0.0
  %5217 = vmatpush2.msra.mxu0 0.0
  %5218 = vmatprep.subr.mxu0 0.0
  %5219 = vmatpush2.msra.mxu0 0.0
  %5220 = vmatprep.subr.mxu0 0.0
  %5221 = vmatpush2.msra.mxu0 0.0
  %5222 = vmatprep.subr.mxu0 0.0
  %5223 = vmatpush2.msra.mxu0 0.0
  %5224 = vmatprep.subr.mxu0 0.0
  %5225 = vmatpush2.msra.mxu0 0.0
  %5226 = vmatprep.subr.mxu0 0.0
  %5227 = vmatpush2.msra.mxu0 0.0
  %5228 = vmatprep.subr.mxu0 0.0
  %5229 = vmatpush2.msra.mxu0 0.0
  %5230 = vmatprep.subr.mxu0 0.0
  %5231 = vmatpush2.msra.mxu0 0.0
  %5232 = vmatprep.subr.mxu0 0.0
  %5233 = vmatpush2.msra.mxu0 0.0
  %5234 = vmatprep.subr.mxu0 0.0
  %5235 = vmatpush2.msra.mxu0 0.0
  %5236 = vmatprep.subr.mxu0 0.0
  %5237 = vmatpush2.msra.mxu0 0.0
  %5238 = vmatprep.subr.mxu0 0.0
  %5239 = vmatpush2.msra.mxu0 0.0
  %5240 = vmatprep.subr.mxu0 0.0
  %5241 = vmatpush2.msra.mxu0 0.0
  %5242 = vmatprep.subr.mxu0 0.0
  %5243 = vmatpush2.msra.mxu0 0.0
  %5244 = vmatprep.subr.mxu0 0.0
  %5245 = vmatpush2.msra.mxu0 0.0
  %5246 = vmatprep.mubr.f32.mxu0 0.0
  %5247 = vmatmul.mubr.f32.gmra.mxu0 %v2705
  %v5248 = vpop.f32.mrf.mxu0
  %v5249 = vadd.f32 %v5107, %v5248
  %v5250 = vpop.f32.mrf.mxu0
  %v5251 = vadd.f32 %v5109, %v5250
  %5252 = vdwg.mxu0
  %5253 = vmatprep.subr.mxu0 %v2769
  %5254 = vmatpush1.msra.mxu0 %v2768
  %5255 = vmatprep.subr.mxu0 %v2765
  %5256 = vmatpush1.msra.mxu0 %v2764
  %5257 = vmatprep.subr.mxu0 %v2761
  %5258 = vmatpush1.msra.mxu0 %v2760
  %5259 = vmatprep.subr.mxu0 %v2757
  %5260 = vmatpush1.msra.mxu0 %v2756
  %5261 = vmatprep.subr.mxu0 %v2753
  %5262 = vmatpush1.msra.mxu0 %v2752
  %5263 = vmatprep.subr.mxu0 %v2749
  %5264 = vmatpush1.msra.mxu0 %v2748
  %5265 = vmatprep.subr.mxu0 %v2745
  %5266 = vmatpush1.msra.mxu0 %v2744
  %5267 = vmatprep.subr.mxu0 %v2741
  %5268 = vmatpush1.msra.mxu0 %v2740
  %5269 = vmatprep.subr.mxu0 %v2737
  %5270 = vmatpush1.msra.mxu0 %v2736
  %5271 = vmatprep.subr.mxu0 %v2733
  %5272 = vmatpush1.msra.mxu0 %v2732
  %5273 = vmatprep.subr.mxu0 %v2729
  %5274 = vmatpush1.msra.mxu0 %v2728
  %5275 = vmatprep.subr.mxu0 %v2725
  %5276 = vmatpush1.msra.mxu0 %v2724
  %5277 = vmatprep.subr.mxu0 %v2721
  %5278 = vmatpush1.msra.mxu0 %v2720
  %5279 = vmatprep.subr.mxu0 %v2717
  %5280 = vmatpush1.msra.mxu0 %v2716
  %5281 = vmatprep.subr.mxu0 %v2713
  %5282 = vmatpush1.msra.mxu0 %v2712
  %5283 = vmatprep.subr.mxu0 %v2709
  %5284 = vmatpush1.msra.mxu0 %v2708
  %5285 = vmatprep.subr.mxu0 0.0
  %5286 = vmatpush2.msra.mxu0 0.0
  %5287 = vmatprep.subr.mxu0 0.0
  %5288 = vmatpush2.msra.mxu0 0.0
  %5289 = vmatprep.subr.mxu0 0.0
  %5290 = vmatpush2.msra.mxu0 0.0
  %5291 = vmatprep.subr.mxu0 0.0
  %5292 = vmatpush2.msra.mxu0 0.0
  %5293 = vmatprep.subr.mxu0 0.0
  %5294 = vmatpush2.msra.mxu0 0.0
  %5295 = vmatprep.subr.mxu0 0.0
  %5296 = vmatpush2.msra.mxu0 0.0
  %5297 = vmatprep.subr.mxu0 0.0
  %5298 = vmatpush2.msra.mxu0 0.0
  %5299 = vmatprep.subr.mxu0 0.0
  %5300 = vmatpush2.msra.mxu0 0.0
  %5301 = vmatprep.subr.mxu0 0.0
  %5302 = vmatpush2.msra.mxu0 0.0
  %5303 = vmatprep.subr.mxu0 0.0
  %5304 = vmatpush2.msra.mxu0 0.0
  %5305 = vmatprep.subr.mxu0 0.0
  %5306 = vmatpush2.msra.mxu0 0.0
  %5307 = vmatprep.subr.mxu0 0.0
  %5308 = vmatpush2.msra.mxu0 0.0
  %5309 = vmatprep.subr.mxu0 0.0
  %5310 = vmatpush2.msra.mxu0 0.0
  %5311 = vmatprep.subr.mxu0 0.0
  %5312 = vmatpush2.msra.mxu0 0.0
  %5313 = vmatprep.subr.mxu0 0.0
  %5314 = vmatpush2.msra.mxu0 0.0
  %5315 = vmatprep.subr.mxu0 0.0
  %5316 = vmatpush2.msra.mxu0 0.0
  %5317 = vmatprep.mubr.f32.mxu0 0.0
  %5318 = vmatmul.mubr.f32.gmra.mxu0 %v2705
  %v5319 = vpop.f32.mrf.mxu0
  %v5320 = vadd.f32 %v5178, %v5319
  %v5321 = vpop.f32.mrf.mxu0
  %v5322 = vadd.f32 %v5180, %v5321
  %5323 = vdwg.mxu0
  %v5324 = vadd.f32 %v5249, %v3123
  %v5325 = vadd.f32 %v5251, %v3127
  %v5326 = vadd.f32 %v5320, %v3131
  %v5327 = vadd.f32 %v5322, %v3135
  %v5328 = vxor.u32 %v5324, 2147483648
  %v5329 = vmul.f32 %v5328, 1.442695
  %v5330 = vpow.pop %v5329
  %v5331 = vadd.f32 %v5330, 1.0
  %v5332 = vrcp.pop %v5331
  %v5333 = vmul.f32 1.0, %v5332
  %v5334 = vxor.u32 %v5325, 2147483648
  %v5335 = vmul.f32 %v5334, 1.442695
  %v5336 = vpow.pop %v5335
  %v5337 = vadd.f32 %v5336, 1.0
  %v5338 = vrcp.pop %v5337
  %v5339 = vmul.f32 1.0, %v5338
  %v5340 = vtanh.pop %v5326
  %v5341 = vxor.u32 %v5327, 2147483648
  %v5342 = vmul.f32 %v5341, 1.442695
  %v5343 = vpow.pop %v5342
  %v5344 = vadd.f32 %v5343, 1.0
  %v5345 = vrcp.pop %v5344
  %v5346 = vmul.f32 1.0, %v5345
  %v5347 = vmul.f32 %v5339, %v5037
  %v5348 = vmul.f32 %v5333, %v5340
  %v5349 = vadd.f32 %v5347, %v5348
  %v5350 = vtanh.pop %v5349
  %v5351 = vmul.f32 %v5346, %v5350
  %v5352 = vld [vmem:[%s7] sm:$0xff]
  %v5353 = vld [vmem:[%s7 + $0x8] sm:$0xff]
  %v5354 = vld [vmem:[%s7 + $0x10] sm:$0xff]
  %v5355 = vld [vmem:[%s7 + $0x18] sm:$0xff]
  %v5356 = vld [vmem:[%s7 + $0x20] sm:$0xff]
  %v5357 = vld [vmem:[%s7 + $0x28] sm:$0xff]
  %v5358 = vld [vmem:[%s7 + $0x30] sm:$0xff]
  %v5359 = vld [vmem:[%s7 + $0x38] sm:$0xff]
  %v5360 = vld [vmem:[%s7 + $0x40] sm:$0xff]
  %v5361 = vld [vmem:[%s7 + $0x48] sm:$0xff]
  %v5362 = vld [vmem:[%s7 + $0x50] sm:$0xff]
  %v5363 = vld [vmem:[%s7 + $0x58] sm:$0xff]
  %v5364 = vld [vmem:[%s7 + $0x60] sm:$0xff]
  %v5365 = vld [vmem:[%s7 + $0x68] sm:$0xff]
  %v5366 = vld [vmem:[%s7 + $0x70] sm:$0xff]
  %v5367 = vld [vmem:[%s7 + $0x78] sm:$0xff]
  %v5368 = vld [vmem:[%s7 + $0x80] sm:$0xff]
  %v5369 = vld [vmem:[%s7 + $0x88] sm:$0xff]
  %v5370 = vld [vmem:[%s7 + $0x90] sm:$0xff]
  %v5371 = vld [vmem:[%s7 + $0x98] sm:$0xff]
  %v5372 = vld [vmem:[%s7 + $0xa0] sm:$0xff]
  %v5373 = vld [vmem:[%s7 + $0xa8] sm:$0xff]
  %v5374 = vld [vmem:[%s7 + $0xb0] sm:$0xff]
  %v5375 = vld [vmem:[%s7 + $0xb8] sm:$0xff]
  %v5376 = vld [vmem:[%s7 + $0xc0] sm:$0xff]
  %v5377 = vld [vmem:[%s7 + $0xc8] sm:$0xff]
  %v5378 = vld [vmem:[%s7 + $0xd0] sm:$0xff]
  %v5379 = vld [vmem:[%s7 + $0xd8] sm:$0xff]
  %v5380 = vld [vmem:[%s7 + $0xe0] sm:$0xff]
  %v5381 = vld [vmem:[%s7 + $0xe8] sm:$0xff]
  %v5382 = vld [vmem:[%s7 + $0xf0] sm:$0xff]
  %v5383 = vld [vmem:[%s7 + $0xf8] sm:$0xff]
  %v5384 = vld [vmem:[%s7 + $0x100] sm:$0xff]
  %v5385 = vld [vmem:[%s7 + $0x108] sm:$0xff]
  %v5386 = vld [vmem:[%s7 + $0x110] sm:$0xff]
  %v5387 = vld [vmem:[%s7 + $0x118] sm:$0xff]
  %v5388 = vld [vmem:[%s7 + $0x120] sm:$0xff]
  %v5389 = vld [vmem:[%s7 + $0x128] sm:$0xff]
  %v5390 = vld [vmem:[%s7 + $0x130] sm:$0xff]
  %v5391 = vld [vmem:[%s7 + $0x138] sm:$0xff]
  %v5392 = vld [vmem:[%s7 + $0x140] sm:$0xff]
  %v5393 = vld [vmem:[%s7 + $0x148] sm:$0xff]
  %v5394 = vld [vmem:[%s7 + $0x150] sm:$0xff]
  %v5395 = vld [vmem:[%s7 + $0x158] sm:$0xff]
  %v5396 = vld [vmem:[%s7 + $0x160] sm:$0xff]
  %v5397 = vld [vmem:[%s7 + $0x168] sm:$0xff]
  %v5398 = vld [vmem:[%s7 + $0x170] sm:$0xff]
  %v5399 = vld [vmem:[%s7 + $0x178] sm:$0xff]
  %v5400 = vld [vmem:[%s8] sm:$0x7]
  %v5401 = vld [vmem:[%s9] sm:$0xff]
  %v5402 = vld [vmem:[%s9 + $0x8] sm:$0xff]
  %v5403 = vld [vmem:[%s9 + $0x10] sm:$0xff]
  %v5404 = vld [vmem:[%s9 + $0x18] sm:$0xff]
  %v5405 = vld [vmem:[%s9 + $0x20] sm:$0xff]
  %v5406 = vld [vmem:[%s9 + $0x28] sm:$0xff]
  %v5407 = vld [vmem:[%s9 + $0x30] sm:$0xff]
  %v5408 = vld [vmem:[%s9 + $0x38] sm:$0xff]
  %v5409 = vld [vmem:[%s9 + $0x40] sm:$0xff]
  %v5410 = vld [vmem:[%s9 + $0x48] sm:$0xff]
  %v5411 = vld [vmem:[%s9 + $0x50] sm:$0xff]
  %v5412 = vld [vmem:[%s9 + $0x58] sm:$0xff]
  %v5413 = vld [vmem:[%s9 + $0x60] sm:$0xff]
  %v5414 = vld [vmem:[%s9 + $0x68] sm:$0xff]
  %v5415 = vld [vmem:[%s9 + $0x70] sm:$0xff]
  %v5416 = vld [vmem:[%s9 + $0x78] sm:$0xff]
  %v5417 = vld [vmem:[%s9 + $0x80] sm:$0xff]
  %v5418 = vld [vmem:[%s9 + $0x88] sm:$0xff]
  %v5419 = vld [vmem:[%s9 + $0x90] sm:$0xff]
  %v5420 = vld [vmem:[%s9 + $0x98] sm:$0xff]
  %v5421 = vld [vmem:[%s9 + $0xa0] sm:$0xff]
  %v5422 = vld [vmem:[%s9 + $0xa8] sm:$0xff]
  %v5423 = vld [vmem:[%s9 + $0xb0] sm:$0xff]
  %v5424 = vld [vmem:[%s9 + $0xb8] sm:$0xff]
  %v5425 = vld [vmem:[%s9 + $0xc0] sm:$0xff]
  %v5426 = vld [vmem:[%s9 + $0xc8] sm:$0xff]
  %v5427 = vld [vmem:[%s9 + $0xd0] sm:$0xff]
  %v5428 = vld [vmem:[%s9 + $0xd8] sm:$0xff]
  %v5429 = vld [vmem:[%s9 + $0xe0] sm:$0xff]
  %v5430 = vld [vmem:[%s9 + $0xe8] sm:$0xff]
  %v5431 = vld [vmem:[%s9 + $0xf0] sm:$0xff]
  %v5432 = vld [vmem:[%s9 + $0xf8] sm:$0xff]
  %v5433 = vld [vmem:[%s9 + $0x100] sm:$0xff]
  %v5434 = vld [vmem:[%s9 + $0x108] sm:$0xff]
  %v5435 = vld [vmem:[%s9 + $0x110] sm:$0xff]
  %v5436 = vld [vmem:[%s9 + $0x118] sm:$0xff]
  %v5437 = vld [vmem:[%s9 + $0x120] sm:$0xff]
  %v5438 = vld [vmem:[%s9 + $0x128] sm:$0xff]
  %v5439 = vld [vmem:[%s9 + $0x130] sm:$0xff]
  %v5440 = vld [vmem:[%s9 + $0x138] sm:$0xff]
  %v5441 = vld [vmem:[%s9 + $0x140] sm:$0xff]
  %v5442 = vld [vmem:[%s9 + $0x148] sm:$0xff]
  %v5443 = vld [vmem:[%s9 + $0x150] sm:$0xff]
  %v5444 = vld [vmem:[%s9 + $0x158] sm:$0xff]
  %v5445 = vld [vmem:[%s9 + $0x160] sm:$0xff]
  %v5446 = vld [vmem:[%s9 + $0x168] sm:$0xff]
  %v5447 = vld [vmem:[%s9 + $0x170] sm:$0xff]
  %v5448 = vld [vmem:[%s9 + $0x178] sm:$0xff]
  %v5449 = vld [vmem:[%s9 + $0x180] sm:$0xff]
  %v5450 = vld [vmem:[%s9 + $0x188] sm:$0xff]
  %v5451 = vld [vmem:[%s9 + $0x190] sm:$0xff]
  %v5452 = vld [vmem:[%s9 + $0x198] sm:$0xff]
  %v5453 = vld [vmem:[%s9 + $0x1a0] sm:$0xff]
  %v5454 = vld [vmem:[%s9 + $0x1a8] sm:$0xff]
  %v5455 = vld [vmem:[%s9 + $0x1b0] sm:$0xff]
  %v5456 = vld [vmem:[%s9 + $0x1b8] sm:$0xff]
  %v5457 = vld [vmem:[%s9 + $0x1c0] sm:$0xff]
  %v5458 = vld [vmem:[%s9 + $0x1c8] sm:$0xff]
  %v5459 = vld [vmem:[%s9 + $0x1d0] sm:$0xff]
  %v5460 = vld [vmem:[%s9 + $0x1d8] sm:$0xff]
  %v5461 = vld [vmem:[%s9 + $0x1e0] sm:$0xff]
  %v5462 = vld [vmem:[%s9 + $0x1e8] sm:$0xff]
  %v5463 = vld [vmem:[%s9 + $0x1f0] sm:$0xff]
  %v5464 = vld [vmem:[%s9 + $0x1f8] sm:$0xff]
  %v5465 = vld [vmem:[%s9 + $0x200] sm:$0xff]
  %v5466 = vld [vmem:[%s9 + $0x208] sm:$0xff]
  %v5467 = vld [vmem:[%s9 + $0x210] sm:$0xff]
  %v5468 = vld [vmem:[%s9 + $0x218] sm:$0xff]
  %v5469 = vld [vmem:[%s9 + $0x220] sm:$0xff]
  %v5470 = vld [vmem:[%s9 + $0x228] sm:$0xff]
  %v5471 = vld [vmem:[%s9 + $0x230] sm:$0xff]
  %v5472 = vld [vmem:[%s9 + $0x238] sm:$0xff]
  %v5473 = vld [vmem:[%s9 + $0x240] sm:$0xff]
  %v5474 = vld [vmem:[%s9 + $0x248] sm:$0xff]
  %v5475 = vld [vmem:[%s9 + $0x250] sm:$0xff]
  %v5476 = vld [vmem:[%s9 + $0x258] sm:$0xff]
  %v5477 = vld [vmem:[%s9 + $0x260] sm:$0xff]
  %v5478 = vld [vmem:[%s9 + $0x268] sm:$0xff]
  %v5479 = vld [vmem:[%s9 + $0x270] sm:$0xff]
  %v5480 = vld [vmem:[%s9 + $0x278] sm:$0xff]
  %v5481 = vld [vmem:[%s9 + $0x280] sm:$0xff]
  %v5482 = vld [vmem:[%s9 + $0x288] sm:$0xff]
  %v5483 = vld [vmem:[%s9 + $0x290] sm:$0xff]
  %v5484 = vld [vmem:[%s9 + $0x298] sm:$0xff]
  %v5485 = vld [vmem:[%s9 + $0x2a0] sm:$0xff]
  %v5486 = vld [vmem:[%s9 + $0x2a8] sm:$0xff]
  %v5487 = vld [vmem:[%s9 + $0x2b0] sm:$0xff]
  %v5488 = vld [vmem:[%s9 + $0x2b8] sm:$0xff]
  %v5489 = vld [vmem:[%s9 + $0x2c0] sm:$0xff]
  %v5490 = vld [vmem:[%s9 + $0x2c8] sm:$0xff]
  %v5491 = vld [vmem:[%s9 + $0x2d0] sm:$0xff]
  %v5492 = vld [vmem:[%s9 + $0x2d8] sm:$0xff]
  %v5493 = vld [vmem:[%s9 + $0x2e0] sm:$0xff]
  %v5494 = vld [vmem:[%s9 + $0x2e8] sm:$0xff]
  %v5495 = vld [vmem:[%s9 + $0x2f0] sm:$0xff]
  %v5496 = vld [vmem:[%s9 + $0x2f8] sm:$0xff]
  %v5497 = vld [vmem:[%s10] sm:$0x3]
  %v5498 = vld [vmem:[%s11] sm:$0xff]
  %v5499 = vld [vmem:[%s11 + $0x8] sm:$0xff]
  %v5500 = vld [vmem:[%s11 + $0x10] sm:$0xff]
  %v5501 = vld [vmem:[%s11 + $0x18] sm:$0xff]
  %v5502 = vld [vmem:[%s11 + $0x20] sm:$0xff]
  %v5503 = vld [vmem:[%s11 + $0x28] sm:$0xff]
  %v5504 = vld [vmem:[%s11 + $0x30] sm:$0xff]
  %v5505 = vld [vmem:[%s11 + $0x38] sm:$0xff]
  %v5506 = vld [vmem:[%s11 + $0x40] sm:$0xff]
  %v5507 = vld [vmem:[%s11 + $0x48] sm:$0xff]
  %v5508 = vld [vmem:[%s11 + $0x50] sm:$0xff]
  %v5509 = vld [vmem:[%s11 + $0x58] sm:$0xff]
  %v5510 = vld [vmem:[%s11 + $0x60] sm:$0xff]
  %v5511 = vld [vmem:[%s11 + $0x68] sm:$0xff]
  %v5512 = vld [vmem:[%s11 + $0x70] sm:$0xff]
  %v5513 = vld [vmem:[%s11 + $0x78] sm:$0xff]
  %v5514 = vld [vmem:[%s11 + $0x80] sm:$0xff]
  %v5515 = vld [vmem:[%s11 + $0x88] sm:$0xff]
  %v5516 = vld [vmem:[%s11 + $0x90] sm:$0xff]
  %v5517 = vld [vmem:[%s11 + $0x98] sm:$0xff]
  %v5518 = vld [vmem:[%s11 + $0xa0] sm:$0xff]
  %v5519 = vld [vmem:[%s11 + $0xa8] sm:$0xff]
  %v5520 = vld [vmem:[%s11 + $0xb0] sm:$0xff]
  %v5521 = vld [vmem:[%s11 + $0xb8] sm:$0xff]
  %v5522 = vld [vmem:[%s11 + $0xc0] sm:$0xff]
  %v5523 = vld [vmem:[%s11 + $0xc8] sm:$0xff]
  %v5524 = vld [vmem:[%s11 + $0xd0] sm:$0xff]
  %v5525 = vld [vmem:[%s11 + $0xd8] sm:$0xff]
  %v5526 = vld [vmem:[%s11 + $0xe0] sm:$0xff]
  %v5527 = vld [vmem:[%s11 + $0xe8] sm:$0xff]
  %v5528 = vld [vmem:[%s11 + $0xf0] sm:$0xff]
  %v5529 = vld [vmem:[%s11 + $0xf8] sm:$0xff]
  %v5530 = vld [vmem:[%s12] sm:$0x1]
  %v5531 = vld [vmem:[%s13] sm:$0xff]
  %v5532 = vld [vmem:[%s13 + $0x8] sm:$0xff]
  %v5533 = vld [vmem:[%s13 + $0x10] sm:$0xff]
  %v5534 = vld [vmem:[%s13 + $0x18] sm:$0xff]
  %v5535 = vld [vmem:[%s13 + $0x20] sm:$0xff]
  %v5536 = vld [vmem:[%s13 + $0x28] sm:$0xff]
  %v5537 = vld [vmem:[%s13 + $0x30] sm:$0xff]
  %v5538 = vld [vmem:[%s13 + $0x38] sm:$0xff]
  %v5539 = vld [vmem:[%s13 + $0x40] sm:$0xff]
  %v5540 = vld [vmem:[%s13 + $0x48] sm:$0xff]
  %v5541 = vld [vmem:[%s13 + $0x50] sm:$0xff]
  %v5542 = vld [vmem:[%s13 + $0x58] sm:$0xff]
  %v5543 = vld [vmem:[%s13 + $0x60] sm:$0xff]
  %v5544 = vld [vmem:[%s13 + $0x68] sm:$0xff]
  %v5545 = vld [vmem:[%s13 + $0x70] sm:$0xff]
  %v5546 = vld [vmem:[%s13 + $0x78] sm:$0xff]
  %v5547 = vld [vmem:[%s14] sm:$0x1]
  %v5549 = vlaneseq
  %v5550 = vshrl.u32 %v5549, 7
  %v5551 = vsub.s32 0, %v5550
  %v5552 = vrot.slane %v5400, %v5551
  %v5553 = vlaneseq
  %v5554 = vshrl.u32 %v5553, 7
  %v5555 = vsub.s32 1, %v5554
  %v5556 = vrot.slane %v5400, %v5555
  %v5557 = vlaneseq
  %v5558 = vshrl.u32 %v5557, 7
  %v5559 = vsub.s32 2, %v5558
  %v5560 = vrot.slane %v5400, %v5559
  %5564 = vmatprep.subr.mxu0 %v5398
  %5565 = vmatpush1.msra.mxu0 %v5397
  %5566 = vmatprep.subr.mxu0 %v5395
  %5567 = vmatpush1.msra.mxu0 %v5394
  %5568 = vmatprep.subr.mxu0 %v5392
  %5569 = vmatpush1.msra.mxu0 %v5391
  %5570 = vmatprep.subr.mxu0 %v5389
  %5571 = vmatpush1.msra.mxu0 %v5388
  %5572 = vmatprep.subr.mxu0 %v5386
  %5573 = vmatpush1.msra.mxu0 %v5385
  %5574 = vmatprep.subr.mxu0 %v5383
  %5575 = vmatpush1.msra.mxu0 %v5382
  %5576 = vmatprep.subr.mxu0 %v5380
  %5577 = vmatpush1.msra.mxu0 %v5379
  %5578 = vmatprep.subr.mxu0 %v5377
  %5579 = vmatpush1.msra.mxu0 %v5376
  %5580 = vmatprep.subr.mxu0 %v5374
  %5581 = vmatpush1.msra.mxu0 %v5373
  %5582 = vmatprep.subr.mxu0 %v5371
  %5583 = vmatpush1.msra.mxu0 %v5370
  %5584 = vmatprep.subr.mxu0 %v5368
  %5585 = vmatpush1.msra.mxu0 %v5367
  %5586 = vmatprep.subr.mxu0 %v5365
  %5587 = vmatpush1.msra.mxu0 %v5364
  %5588 = vmatprep.subr.mxu0 %v5362
  %5589 = vmatpush1.msra.mxu0 %v5361
  %5590 = vmatprep.subr.mxu0 %v5359
  %5591 = vmatpush1.msra.mxu0 %v5358
  %5592 = vmatprep.subr.mxu0 %v5356
  %5593 = vmatpush1.msra.mxu0 %v5355
  %5594 = vmatprep.subr.mxu0 %v5353
  %5595 = vmatpush1.msra.mxu0 %v5352
  %5596 = vmatprep.subr.mxu0 0.0
  %5597 = vmatpush2.msra.mxu0 0.0
  %5598 = vmatprep.subr.mxu0 0.0
  %5599 = vmatpush2.msra.mxu0 0.0
  %5600 = vmatprep.subr.mxu0 0.0
  %5601 = vmatpush2.msra.mxu0 0.0
  %5602 = vmatprep.subr.mxu0 0.0
  %5603 = vmatpush2.msra.mxu0 0.0
  %5604 = vmatprep.subr.mxu0 0.0
  %5605 = vmatpush2.msra.mxu0 0.0
  %5606 = vmatprep.subr.mxu0 0.0
  %5607 = vmatpush2.msra.mxu0 0.0
  %5608 = vmatprep.subr.mxu0 0.0
  %5609 = vmatpush2.msra.mxu0 0.0
  %5610 = vmatprep.subr.mxu0 0.0
  %5611 = vmatpush2.msra.mxu0 0.0
  %5612 = vmatprep.subr.mxu0 0.0
  %5613 = vmatpush2.msra.mxu0 0.0
  %5614 = vmatprep.subr.mxu0 0.0
  %5615 = vmatpush2.msra.mxu0 0.0
  %5616 = vmatprep.subr.mxu0 0.0
  %5617 = vmatpush2.msra.mxu0 0.0
  %5618 = vmatprep.subr.mxu0 0.0
  %5619 = vmatpush2.msra.mxu0 0.0
  %5620 = vmatprep.subr.mxu0 0.0
  %5621 = vmatpush2.msra.mxu0 0.0
  %5622 = vmatprep.subr.mxu0 0.0
  %5623 = vmatpush2.msra.mxu0 0.0
  %5624 = vmatprep.subr.mxu0 0.0
  %5625 = vmatpush2.msra.mxu0 0.0
  %5626 = vmatprep.subr.mxu0 0.0
  %5627 = vmatpush2.msra.mxu0 0.0
  %5628 = vmatprep.mubr.f32.mxu0 0.0
  %5629 = vmatmul.mubr.f32.gmra.mxu0 %v5351
  %v5630 = vpop.f32.mrf.mxu0
  %v5631 = vadd.f32 %v5552, %v5630
  %v5632 = vpop.f32.mrf.mxu0
  %v5633 = vadd.f32 %v5556, %v5632
  %5634 = vdwg.mxu0
  %5635 = vmatprep.subr.mxu0 0.0
  %5636 = vmatpush1.msra.mxu0 %v5399
  %5637 = vmatprep.subr.mxu0 0.0
  %5638 = vmatpush1.msra.mxu0 %v5396
  %5639 = vmatprep.subr.mxu0 0.0
  %5640 = vmatpush1.msra.mxu0 %v5393
  %5641 = vmatprep.subr.mxu0 0.0
  %5642 = vmatpush1.msra.mxu0 %v5390
  %5643 = vmatprep.subr.mxu0 0.0
  %5644 = vmatpush1.msra.mxu0 %v5387
  %5645 = vmatprep.subr.mxu0 0.0
  %5646 = vmatpush1.msra.mxu0 %v5384
  %5647 = vmatprep.subr.mxu0 0.0
  %5648 = vmatpush1.msra.mxu0 %v5381
  %5649 = vmatprep.subr.mxu0 0.0
  %5650 = vmatpush1.msra.mxu0 %v5378
  %5651 = vmatprep.subr.mxu0 0.0
  %5652 = vmatpush1.msra.mxu0 %v5375
  %5653 = vmatprep.subr.mxu0 0.0
  %5654 = vmatpush1.msra.mxu0 %v5372
  %5655 = vmatprep.subr.mxu0 0.0
  %5656 = vmatpush1.msra.mxu0 %v5369
  %5657 = vmatprep.subr.mxu0 0.0
  %5658 = vmatpush1.msra.mxu0 %v5366
  %5659 = vmatprep.subr.mxu0 0.0
  %5660 = vmatpush1.msra.mxu0 %v5363
  %5661 = vmatprep.subr.mxu0 0.0
  %5662 = vmatpush1.msra.mxu0 %v5360
  %5663 = vmatprep.subr.mxu0 0.0
  %5664 = vmatpush1.msra.mxu0 %v5357
  %5665 = vmatprep.subr.mxu0 0.0
  %5666 = vmatpush1.msra.mxu0 %v5354
  %5667 = vmatprep.subr.mxu0 0.0
  %5668 = vmatpush2.msra.mxu0 0.0
  %5669 = vmatprep.subr.mxu0 0.0
  %5670 = vmatpush2.msra.mxu0 0.0
  %5671 = vmatprep.subr.mxu0 0.0
  %5672 = vmatpush2.msra.mxu0 0.0
  %5673 = vmatprep.subr.mxu0 0.0
  %5674 = vmatpush2.msra.mxu0 0.0
  %5675 = vmatprep.subr.mxu0 0.0
  %5676 = vmatpush2.msra.mxu0 0.0
  %5677 = vmatprep.subr.mxu0 0.0
  %5678 = vmatpush2.msra.mxu0 0.0
  %5679 = vmatprep.subr.mxu0 0.0
  %5680 = vmatpush2.msra.mxu0 0.0
  %5681 = vmatprep.subr.mxu0 0.0
  %5682 = vmatpush2.msra.mxu0 0.0
  %5683 = vmatprep.subr.mxu0 0.0
  %5684 = vmatpush2.msra.mxu0 0.0
  %5685 = vmatprep.subr.mxu0 0.0
  %5686 = vmatpush2.msra.mxu0 0.0
  %5687 = vmatprep.subr.mxu0 0.0
  %5688 = vmatpush2.msra.mxu0 0.0
  %5689 = vmatprep.subr.mxu0 0.0
  %5690 = vmatpush2.msra.mxu0 0.0
  %5691 = vmatprep.subr.mxu0 0.0
  %5692 = vmatpush2.msra.mxu0 0.0
  %5693 = vmatprep.subr.mxu0 0.0
  %5694 = vmatpush2.msra.mxu0 0.0
  %5695 = vmatprep.subr.mxu0 0.0
  %5696 = vmatpush2.msra.mxu0 0.0
  %5697 = vmatprep.subr.mxu0 0.0
  %5698 = vmatpush2.msra.mxu0 0.0
  %5699 = vmatprep.mubr.f32.mxu0 0.0
  %5700 = vmatmul.mubr.f32.gmra.mxu0 %v5351
  %v5701 = vpop.f32.mrf.mxu0
  %v5702 = vadd.f32 %v5560, %v5701
  %v5703 = vpop.f32.mrf.mxu0
  %5704 = vdwg.mxu0
  %v5705 = vmax.f32 %v5631, 0.0
  %v5706 = vmax.f32 %v5633, 0.0
  %v5707 = vmax.f32 %v5702, 0.0
  %v5709 = vlaneseq
  %v5710 = vshrl.u32 %v5709, 7
  %v5711 = vsub.s32 0, %v5710
  %v5712 = vrot.slane %v5497, %v5711
  %v5713 = vlaneseq
  %v5714 = vshrl.u32 %v5713, 7
  %v5715 = vsub.s32 1, %v5714
  %v5716 = vrot.slane %v5497, %v5715
  %5719 = vmatprep.subr.mxu0 %v5432
  %5720 = vmatpush1.msra.mxu0 %v5431
  %5721 = vmatprep.subr.mxu0 %v5430
  %5722 = vmatpush1.msra.mxu0 %v5429
  %5723 = vmatprep.subr.mxu0 %v5428
  %5724 = vmatpush1.msra.mxu0 %v5427
  %5725 = vmatprep.subr.mxu0 %v5426
  %5726 = vmatpush1.msra.mxu0 %v5425
  %5727 = vmatprep.subr.mxu0 %v5424
  %5728 = vmatpush1.msra.mxu0 %v5423
  %5729 = vmatprep.subr.mxu0 %v5422
  %5730 = vmatpush1.msra.mxu0 %v5421
  %5731 = vmatprep.subr.mxu0 %v5420
  %5732 = vmatpush1.msra.mxu0 %v5419
  %5733 = vmatprep.subr.mxu0 %v5418
  %5734 = vmatpush1.msra.mxu0 %v5417
  %5735 = vmatprep.subr.mxu0 %v5416
  %5736 = vmatpush1.msra.mxu0 %v5415
  %5737 = vmatprep.subr.mxu0 %v5414
  %5738 = vmatpush1.msra.mxu0 %v5413
  %5739 = vmatprep.subr.mxu0 %v5412
  %5740 = vmatpush1.msra.mxu0 %v5411
  %5741 = vmatprep.subr.mxu0 %v5410
  %5742 = vmatpush1.msra.mxu0 %v5409
  %5743 = vmatprep.subr.mxu0 %v5408
  %5744 = vmatpush1.msra.mxu0 %v5407
  %5745 = vmatprep.subr.mxu0 %v5406
  %5746 = vmatpush1.msra.mxu0 %v5405
  %5747 = vmatprep.subr.mxu0 %v5404
  %5748 = vmatpush1.msra.mxu0 %v5403
  %5749 = vmatprep.subr.mxu0 %v5402
  %5750 = vmatpush1.msra.mxu0 %v5401
  %5751 = vmatprep.subr.mxu0 %v5464
  %5752 = vmatpush2.msra.mxu0 %v5463
  %5753 = vmatprep.subr.mxu0 %v5462
  %5754 = vmatpush2.msra.mxu0 %v5461
  %5755 = vmatprep.subr.mxu0 %v5460
  %5756 = vmatpush2.msra.mxu0 %v5459
  %5757 = vmatprep.subr.mxu0 %v5458
  %5758 = vmatpush2.msra.mxu0 %v5457
  %5759 = vmatprep.subr.mxu0 %v5456
  %5760 = vmatpush2.msra.mxu0 %v5455
  %5761 = vmatprep.subr.mxu0 %v5454
  %5762 = vmatpush2.msra.mxu0 %v5453
  %5763 = vmatprep.subr.mxu0 %v5452
  %5764 = vmatpush2.msra.mxu0 %v5451
  %5765 = vmatprep.subr.mxu0 %v5450
  %5766 = vmatpush2.msra.mxu0 %v5449
  %5767 = vmatprep.subr.mxu0 %v5448
  %5768 = vmatpush2.msra.mxu0 %v5447
  %5769 = vmatprep.subr.mxu0 %v5446
  %5770 = vmatpush2.msra.mxu0 %v5445
  %5771 = vmatprep.subr.mxu0 %v5444
  %5772 = vmatpush2.msra.mxu0 %v5443
  %5773 = vmatprep.subr.mxu0 %v5442
  %5774 = vmatpush2.msra.mxu0 %v5441
  %5775 = vmatprep.subr.mxu0 %v5440
  %5776 = vmatpush2.msra.mxu0 %v5439
  %5777 = vmatprep.subr.mxu0 %v5438
  %5778 = vmatpush2.msra.mxu0 %v5437
  %5779 = vmatprep.subr.mxu0 %v5436
  %5780 = vmatpush2.msra.mxu0 %v5435
  %5781 = vmatprep.subr.mxu0 %v5434
  %5782 = vmatpush2.msra.mxu0 %v5433
  %5783 = vmatprep.mubr.f32.mxu0 %v5706
  %5784 = vmatmul.mubr.f32.gmra.mxu0 %v5705
  %v5785 = vpop.f32.mrf.mxu0
  %v5786 = vadd.f32 %v5712, %v5785
  %v5787 = vpop.f32.mrf.mxu0
  %v5788 = vadd.f32 %v5716, %v5787
  %5789 = vdwg.mxu0
  %5790 = vmatprep.subr.mxu0 %v5496
  %5791 = vmatpush1.msra.mxu0 %v5495
  %5792 = vmatprep.subr.mxu0 %v5494
  %5793 = vmatpush1.msra.mxu0 %v5493
  %5794 = vmatprep.subr.mxu0 %v5492
  %5795 = vmatpush1.msra.mxu0 %v5491
  %5796 = vmatprep.subr.mxu0 %v5490
  %5797 = vmatpush1.msra.mxu0 %v5489
  %5798 = vmatprep.subr.mxu0 %v5488
  %5799 = vmatpush1.msra.mxu0 %v5487
  %5800 = vmatprep.subr.mxu0 %v5486
  %5801 = vmatpush1.msra.mxu0 %v5485
  %5802 = vmatprep.subr.mxu0 %v5484
  %5803 = vmatpush1.msra.mxu0 %v5483
  %5804 = vmatprep.subr.mxu0 %v5482
  %5805 = vmatpush1.msra.mxu0 %v5481
  %5806 = vmatprep.subr.mxu0 %v5480
  %5807 = vmatpush1.msra.mxu0 %v5479
  %5808 = vmatprep.subr.mxu0 %v5478
  %5809 = vmatpush1.msra.mxu0 %v5477
  %5810 = vmatprep.subr.mxu0 %v5476
  %5811 = vmatpush1.msra.mxu0 %v5475
  %5812 = vmatprep.subr.mxu0 %v5474
  %5813 = vmatpush1.msra.mxu0 %v5473
  %5814 = vmatprep.subr.mxu0 %v5472
  %5815 = vmatpush1.msra.mxu0 %v5471
  %5816 = vmatprep.subr.mxu0 %v5470
  %5817 = vmatpush1.msra.mxu0 %v5469
  %5818 = vmatprep.subr.mxu0 %v5468
  %5819 = vmatpush1.msra.mxu0 %v5467
  %5820 = vmatprep.subr.mxu0 %v5466
  %5821 = vmatpush1.msra.mxu0 %v5465
  %5822 = vmatprep.subr.mxu0 0.0
  %5823 = vmatpush2.msra.mxu0 0.0
  %5824 = vmatprep.subr.mxu0 0.0
  %5825 = vmatpush2.msra.mxu0 0.0
  %5826 = vmatprep.subr.mxu0 0.0
  %5827 = vmatpush2.msra.mxu0 0.0
  %5828 = vmatprep.subr.mxu0 0.0
  %5829 = vmatpush2.msra.mxu0 0.0
  %5830 = vmatprep.subr.mxu0 0.0
  %5831 = vmatpush2.msra.mxu0 0.0
  %5832 = vmatprep.subr.mxu0 0.0
  %5833 = vmatpush2.msra.mxu0 0.0
  %5834 = vmatprep.subr.mxu0 0.0
  %5835 = vmatpush2.msra.mxu0 0.0
  %5836 = vmatprep.subr.mxu0 0.0
  %5837 = vmatpush2.msra.mxu0 0.0
  %5838 = vmatprep.subr.mxu0 0.0
  %5839 = vmatpush2.msra.mxu0 0.0
  %5840 = vmatprep.subr.mxu0 0.0
  %5841 = vmatpush2.msra.mxu0 0.0
  %5842 = vmatprep.subr.mxu0 0.0
  %5843 = vmatpush2.msra.mxu0 0.0
  %5844 = vmatprep.subr.mxu0 0.0
  %5845 = vmatpush2.msra.mxu0 0.0
  %5846 = vmatprep.subr.mxu0 0.0
  %5847 = vmatpush2.msra.mxu0 0.0
  %5848 = vmatprep.subr.mxu0 0.0
  %5849 = vmatpush2.msra.mxu0 0.0
  %5850 = vmatprep.subr.mxu0 0.0
  %5851 = vmatpush2.msra.mxu0 0.0
  %5852 = vmatprep.subr.mxu0 0.0
  %5853 = vmatpush2.msra.mxu0 0.0
  %5854 = vmatprep.mubr.f32.mxu0 0.0
  %5855 = vmatmul.mubr.f32.gmra.mxu0 %v5707
  %v5856 = vpop.f32.mrf.mxu0
  %v5857 = vadd.f32 %v5786, %v5856
  %v5858 = vpop.f32.mrf.mxu0
  %v5859 = vadd.f32 %v5788, %v5858
  %5860 = vdwg.mxu0
  %v5861 = vmax.f32 %v5857, 0.0
  %v5862 = vmax.f32 %v5859, 0.0
  %v5864 = vlaneseq
  %v5865 = vshrl.u32 %v5864, 7
  %v5866 = vsub.s32 0, %v5865
  %v5867 = vrot.slane %v5530, %v5866
  %5869 = vmatprep.subr.mxu0 0.0
  %5870 = vmatpush1.msra.mxu0 %v5513
  %5871 = vmatprep.subr.mxu0 0.0
  %5872 = vmatpush1.msra.mxu0 %v5512
  %5873 = vmatprep.subr.mxu0 0.0
  %5874 = vmatpush1.msra.mxu0 %v5511
  %5875 = vmatprep.subr.mxu0 0.0
  %5876 = vmatpush1.msra.mxu0 %v5510
  %5877 = vmatprep.subr.mxu0 0.0
  %5878 = vmatpush1.msra.mxu0 %v5509
  %5879 = vmatprep.subr.mxu0 0.0
  %5880 = vmatpush1.msra.mxu0 %v5508
  %5881 = vmatprep.subr.mxu0 0.0
  %5882 = vmatpush1.msra.mxu0 %v5507
  %5883 = vmatprep.subr.mxu0 0.0
  %5884 = vmatpush1.msra.mxu0 %v5506
  %5885 = vmatprep.subr.mxu0 0.0
  %5886 = vmatpush1.msra.mxu0 %v5505
  %5887 = vmatprep.subr.mxu0 0.0
  %5888 = vmatpush1.msra.mxu0 %v5504
  %5889 = vmatprep.subr.mxu0 0.0
  %5890 = vmatpush1.msra.mxu0 %v5503
  %5891 = vmatprep.subr.mxu0 0.0
  %5892 = vmatpush1.msra.mxu0 %v5502
  %5893 = vmatprep.subr.mxu0 0.0
  %5894 = vmatpush1.msra.mxu0 %v5501
  %5895 = vmatprep.subr.mxu0 0.0
  %5896 = vmatpush1.msra.mxu0 %v5500
  %5897 = vmatprep.subr.mxu0 0.0
  %5898 = vmatpush1.msra.mxu0 %v5499
  %5899 = vmatprep.subr.mxu0 0.0
  %5900 = vmatpush1.msra.mxu0 %v5498
  %5901 = vmatprep.subr.mxu0 0.0
  %5902 = vmatpush2.msra.mxu0 %v5529
  %5903 = vmatprep.subr.mxu0 0.0
  %5904 = vmatpush2.msra.mxu0 %v5528
  %5905 = vmatprep.subr.mxu0 0.0
  %5906 = vmatpush2.msra.mxu0 %v5527
  %5907 = vmatprep.subr.mxu0 0.0
  %5908 = vmatpush2.msra.mxu0 %v5526
  %5909 = vmatprep.subr.mxu0 0.0
  %5910 = vmatpush2.msra.mxu0 %v5525
  %5911 = vmatprep.subr.mxu0 0.0
  %5912 = vmatpush2.msra.mxu0 %v5524
  %5913 = vmatprep.subr.mxu0 0.0
  %5914 = vmatpush2.msra.mxu0 %v5523
  %5915 = vmatprep.subr.mxu0 0.0
  %5916 = vmatpush2.msra.mxu0 %v5522
  %5917 = vmatprep.subr.mxu0 0.0
  %5918 = vmatpush2.msra.mxu0 %v5521
  %5919 = vmatprep.subr.mxu0 0.0
  %5920 = vmatpush2.msra.mxu0 %v5520
  %5921 = vmatprep.subr.mxu0 0.0
  %5922 = vmatpush2.msra.mxu0 %v5519
  %5923 = vmatprep.subr.mxu0 0.0
  %5924 = vmatpush2.msra.mxu0 %v5518
  %5925 = vmatprep.subr.mxu0 0.0
  %5926 = vmatpush2.msra.mxu0 %v5517
  %5927 = vmatprep.subr.mxu0 0.0
  %5928 = vmatpush2.msra.mxu0 %v5516
  %5929 = vmatprep.subr.mxu0 0.0
  %5930 = vmatpush2.msra.mxu0 %v5515
  %5931 = vmatprep.subr.mxu0 0.0
  %5932 = vmatpush2.msra.mxu0 %v5514
  %5933 = vmatprep.mubr.f32.mxu0 %v5862
  %5934 = vmatmul.mubr.f32.gmra.mxu0 %v5861
  %v5935 = vpop.f32.mrf.mxu0
  %v5936 = vadd.f32 %v5867, %v5935
  %v5937 = vpop.f32.mrf.mxu0
  %5938 = vdwg.mxu0
  %v5939 = vmax.f32 %v5936, 0.0
  %v5941 = vlaneseq
  %v5942 = vshrl.u32 %v5941, 7
  %v5943 = vsub.s32 0, %v5942
  %v5944 = vrot.slane %v5547, %v5943
  %5946 = vmatprep.subr.mxu0 0.0
  %5947 = vmatpush1.msra.mxu0 %v5546
  %5948 = vmatprep.subr.mxu0 0.0
  %5949 = vmatpush1.msra.mxu0 %v5545
  %5950 = vmatprep.subr.mxu0 0.0
  %5951 = vmatpush1.msra.mxu0 %v5544
  %5952 = vmatprep.subr.mxu0 0.0
  %5953 = vmatpush1.msra.mxu0 %v5543
  %5954 = vmatprep.subr.mxu0 0.0
  %5955 = vmatpush1.msra.mxu0 %v5542
  %5956 = vmatprep.subr.mxu0 0.0
  %5957 = vmatpush1.msra.mxu0 %v5541
  %5958 = vmatprep.subr.mxu0 0.0
  %5959 = vmatpush1.msra.mxu0 %v5540
  %5960 = vmatprep.subr.mxu0 0.0
  %5961 = vmatpush1.msra.mxu0 %v5539
  %5962 = vmatprep.subr.mxu0 0.0
  %5963 = vmatpush1.msra.mxu0 %v5538
  %5964 = vmatprep.subr.mxu0 0.0
  %5965 = vmatpush1.msra.mxu0 %v5537
  %5966 = vmatprep.subr.mxu0 0.0
  %5967 = vmatpush1.msra.mxu0 %v5536
  %5968 = vmatprep.subr.mxu0 0.0
  %5969 = vmatpush1.msra.mxu0 %v5535
  %5970 = vmatprep.subr.mxu0 0.0
  %5971 = vmatpush1.msra.mxu0 %v5534
  %5972 = vmatprep.subr.mxu0 0.0
  %5973 = vmatpush1.msra.mxu0 %v5533
  %5974 = vmatprep.subr.mxu0 0.0
  %5975 = vmatpush1.msra.mxu0 %v5532
  %5976 = vmatprep.subr.mxu0 0.0
  %5977 = vmatpush1.msra.mxu0 %v5531
  %5978 = vmatprep.subr.mxu0 0.0
  %5979 = vmatpush2.msra.mxu0 0.0
  %5980 = vmatprep.subr.mxu0 0.0
  %5981 = vmatpush2.msra.mxu0 0.0
  %5982 = vmatprep.subr.mxu0 0.0
  %5983 = vmatpush2.msra.mxu0 0.0
  %5984 = vmatprep.subr.mxu0 0.0
  %5985 = vmatpush2.msra.mxu0 0.0
  %5986 = vmatprep.subr.mxu0 0.0
  %5987 = vmatpush2.msra.mxu0 0.0
  %5988 = vmatprep.subr.mxu0 0.0
  %5989 = vmatpush2.msra.mxu0 0.0
  %5990 = vmatprep.subr.mxu0 0.0
  %5991 = vmatpush2.msra.mxu0 0.0
  %5992 = vmatprep.subr.mxu0 0.0
  %5993 = vmatpush2.msra.mxu0 0.0
  %5994 = vmatprep.subr.mxu0 0.0
  %5995 = vmatpush2.msra.mxu0 0.0
  %5996 = vmatprep.subr.mxu0 0.0
  %5997 = vmatpush2.msra.mxu0 0.0
  %5998 = vmatprep.subr.mxu0 0.0
  %5999 = vmatpush2.msra.mxu0 0.0
  %6000 = vmatprep.subr.mxu0 0.0
  %6001 = vmatpush2.msra.mxu0 0.0
  %6002 = vmatprep.subr.mxu0 0.0
  %6003 = vmatpush2.msra.mxu0 0.0
  %6004 = vmatprep.subr.mxu0 0.0
  %6005 = vmatpush2.msra.mxu0 0.0
  %6006 = vmatprep.subr.mxu0 0.0
  %6007 = vmatpush2.msra.mxu0 0.0
  %6008 = vmatprep.subr.mxu0 0.0
  %6009 = vmatpush2.msra.mxu0 0.0
  %6010 = vmatprep.mubr.f32.mxu0 0.0
  %6011 = vmatmul.mubr.f32.gmra.mxu0 %v5939
  %v6012 = vpop.f32.mrf.mxu0
  %v6013 = vadd.f32 %v5944, %v6012
  %v6014 = vpop.f32.mrf.mxu0
  %6015 = vdwg.mxu0
  %6016 = vst [vmem:[%s15] sm:$0x3] %v6013
  // Predicated region
  $region62: #{distance_estimator_forward.1} parent=0 // pred_check
    _
  $region63: #{distance_estimator_forward.1} parent=0 // pred_check_branch
    %6018 = sbr.rel (0) target = $region65
  $region64: #{distance_estimator_forward.1} parent=0 // pred_region
    _
  $region65: #{distance_estimator_forward.1} parent=0 // pred_fallthru
    _
  // Predicated region
  $region66: #{distance_estimator_forward.1} parent=0 // pred_check
    _
  $region67: #{distance_estimator_forward.1} parent=0 // pred_check_branch
    %6020 = sbr.rel (0) target = $region69
  $region68: #{distance_estimator_forward.1} parent=0 // pred_region
    _
  $region69: #{distance_estimator_forward.1} parent=0 // pred_fallthru
    _

</llo_original>
